<compile_context>
chip_gen: v7x
topology: tpu7x:2x2x1
jax: 0.10.0
libtpu: 0.0.40
codegen_flags: <defaults>
</compile_context>

<pallas_src>
import functools
import math

import jax
import jax.numpy as jnp
from jax.experimental import pallas as pl
from jax.experimental.pallas import tpu as pltpu


# ---------------------------------------------------------------------------
# small helpers shared by kernels
# ---------------------------------------------------------------------------
def _cparams(*sem):
    return pltpu.CompilerParams(dimension_semantics=tuple(sem),
                                vmem_limit_bytes=48 * 1024 * 1024)


def _act(y, act):
    if act == "silu":
        return y * jax.nn.sigmoid(y)
    if act == "sigmoid":
        return jax.nn.sigmoid(y)
    return y


def _mm(x, w):
    # bf16 x bf16 -> f32 accumulation on the MXU.
    return jnp.dot(x.astype(w.dtype), w, preferred_element_type=jnp.float32)


def _ln(x, g, b, eps):
    mu = jnp.mean(x, axis=-1, keepdims=True)
    xc = x - mu
    var = jnp.mean(xc * xc, axis=-1, keepdims=True)
    return xc * jax.lax.rsqrt(var + eps) * g + b


# ---------------------------------------------------------------------------
# Pallas kernel bodies
# ---------------------------------------------------------------------------
def _k_mlp2_ln(x_ref, w1_ref, b1_ref, w2_ref, b2_ref, g_ref, be_ref, o_ref,
               *, eps=1e-5):
    h = _act(_mm(x_ref[...], w1_ref[...]) + b1_ref[...], "silu")
    y = _mm(h, w2_ref[...]) + b2_ref[...]
    o_ref[...] = _ln(y, g_ref[...], be_ref[...], eps).astype(o_ref.dtype)


def _k_dense_ln(x_ref, w_ref, b_ref, g_ref, be_ref, o_ref, *, eps=1e-5):
    y = _mm(x_ref[...], w_ref[...]) + b_ref[...]
    o_ref[...] = _ln(y, g_ref[...], be_ref[...], eps).astype(o_ref.dtype)


def _k_fmlp(x1_ref, x2_ref, g1_ref, b1_ref, w_ref, b_ref, g2_ref, b2_ref,
            o_ref, *, eps=1e-6):
    # f_mlp: LN(concat) -> Linear -> SiLU -> LN ; concat done in-kernel.
    x = jnp.concatenate([x1_ref[...], x2_ref[...]], axis=-1).astype(jnp.float32)
    xn = _ln(x, g1_ref[...], b1_ref[...], eps)
    h = _act(_mm(xn, w_ref[...]) + b_ref[...], "silu")
    o_ref[...] = _ln(h, g2_ref[...], b2_ref[...], eps).astype(o_ref.dtype)


def _k_kv(hj_ref, e_ref, w_ref, b_ref, o_ref):
    # fused k|v projection: concat([h_j, edge]) @ [Wk|Wv] stacked (2H, 2H).
    cat = jnp.concatenate([hj_ref[...], e_ref[...]], axis=-1)
    o_ref[...] = (_mm(cat, w_ref[...]) + b_ref[...]).astype(o_ref.dtype)


def _k_ffn_res_ln_hiwa(x_ref, m_ref, w1_ref, b1_ref, w2_ref, b2_ref, g_ref,
                       be_ref, wa_ref, ba_ref, o_ref, oa_ref, *, eps=1e-5):
    # FFN + residual + LN + node mask, plus hiWa = h_new @ Wa + b_edge (node
    # level contribution of the edge update -- avoids the (N*K, H) broadcast).
    x = x_ref[...].astype(jnp.float32)
    h = _act(_mm(x_ref[...], w1_ref[...]) + b1_ref[...], "silu")
    y = x + _mm(h, w2_ref[...]) + b2_ref[...]
    hn = _ln(y, g_ref[...], be_ref[...], eps) * m_ref[...]
    o_ref[...] = hn.astype(o_ref.dtype)
    oa_ref[...] = (_mm(hn, wa_ref[...]) + ba_ref[...]).astype(oa_ref.dtype)


def _k_attn(node_ref, kv_ref, m_ref, gate_ref, wq_ref, bq_ref, wo_ref, bo_ref,
            g_ref, be_ref, o_ref, *, heads, eps=1e-5):
    # fused: q projection + per-head neighbour attention + Wo + ligand gate +
    # residual + LN.  kv layout: (K, T, 2H); 1/sqrt(dh) folded into Wq/bq.
    nd = node_ref[0]                                   # (T, H) bf16
    kv = kv_ref[0]                                     # (K, T, 2H) bf16
    m = m_ref[0]                                       # (K, T) f32
    T, H = nd.shape
    dh = H // heads
    y = jnp.zeros((T, H), jnp.float32)
    # TODO(synk): per-head loop (heads is small); a lane-segment formulation
    # would remove the remaining k/v lane slices.
    for hd in range(heads):
        qh = _mm(nd, wq_ref[hd]) + bq_ref[hd]                       # (T, dh)
        kh = kv[:, :, hd * dh:(hd + 1) * dh]                        # (K, T, dh)
        vh = kv[:, :, H + hd * dh:H + (hd + 1) * dh]                # (K, T, dh)
        logits = jnp.sum(qh[None, :, :] * kh, axis=-1)              # (K, T)
        logits = jnp.where(m > 0.0, logits, -1e9)
        mx = jnp.max(logits, axis=0, keepdims=True)
        ex = jnp.exp(logits - mx)
        s = jnp.sum(ex, axis=0, keepdims=True)
        a = ex * pl.reciprocal(s, approx=True)                      # (K, T)
        oh = jnp.sum(a[:, :, None] * vh, axis=0)                    # (T, dh)
        y = y + _mm(oh, wo_ref[hd])                                 # accumulate Wo
    y = y + bo_ref[...]
    y = nd.astype(jnp.float32) + gate_ref[0] * y
    o_ref[0] = _ln(y, g_ref[...], be_ref[...], eps).astype(o_ref.dtype)


def _k_edge_upd(e_ref, hj_ref, hiwa_ref, w_ref, g_ref, be_ref, o_ref,
                *, eps=1e-5):
    # edge update: LN(edge + hiWa + concat([edge, h_j]) @ [Wb;Wc])
    e = e_ref[0, 0]                                    # (T, H) bf16
    hj = hj_ref[0, 0]                                  # (T, H) bf16
    cat = jnp.concatenate([e, hj], axis=-1)            # (T, 2H) bf16
    y = (e.astype(jnp.float32) + hiwa_ref[0].astype(jnp.float32)
         + _mm(cat, w_ref[...]))
    o_ref[0, 0] = _ln(y, g_ref[...], be_ref[...], eps).astype(o_ref.dtype)


def _k_out_mlp(x_ref, w1_ref, b1_ref, w2r_ref, b2_ref, o_ref):
    # out_mlp: Linear -> SiLU -> width-1 projection done as a VPU reduction.
    h = _act(_mm(x_ref[...], w1_ref[...]) + b1_ref[...], "silu")
    o_ref[...] = (jnp.sum(h * w2r_ref[...], axis=-1, keepdims=True)
                  + b2_ref[...]).astype(o_ref.dtype)


def _k_pdist(xi_ref, xjt_ref, nj_ref, mi_ref, mj_ref, o_ref, *, eps):
    # masked pairwise squared CA distances (Gram-matrix identity on the MXU).
    # sqrt dropped: monotonic, so top-k neighbour selection is unchanged.
    xi = xi_ref[0]                                      # (T, 3)
    xjt = xjt_ref[0]                                    # (3, L)
    nj = nj_ref[0]                                      # (1, L)
    mi = mi_ref[0]                                      # (T, 1)
    mj = mj_ref[0]                                      # (1, L)
    ni = jnp.sum(xi * xi, axis=-1, keepdims=True)
    cross = jnp.dot(xi, xjt, preferred_element_type=jnp.float32)
    d2 = jnp.maximum(ni + nj - 2.0 * cross, 0.0) + eps
    m2 = mi * mj
    D = m2 * d2
    dmax = jnp.max(D, axis=-1, keepdims=True)
    o_ref[0] = D + (1.0 - m2) * dmax


# ---------------------------------------------------------------------------
# generic row-tiled pallas_call wrapper (no pad / slice round trips)
# ---------------------------------------------------------------------------
def _row_tiled(kernel, row_inputs, param_inputs, out_defs, *, max_tile=1024):
    """Run `kernel` over row blocks of the leading dim.

    row_inputs: arrays whose leading dim is the row dim (streamed, tiled).
    param_inputs: small resident arrays (weights / biases / LN params).
    out_defs: list of (feat, dtype) for the outputs (same row dim).
    """
    n = row_inputs[0].shape[0]
    tile = n if n <= max_tile else max_tile          # full rows or aligned cap
    grid = (pl.cdiv(n, tile),)
    in_specs = []
    for a in row_inputs:
        nrest = a.ndim - 1
        in_specs.append(pl.BlockSpec((tile,) + a.shape[1:],
                                     lambda i, _n=nrest: (i,) + (0,) * _n))
    for p in param_inputs:
        in_specs.append(pl.BlockSpec(p.shape, lambda i, _n=p.ndim: (0,) * _n))
    out_specs = [pl.BlockSpec((tile, f), lambda i: (i, 0)) for f, _ in out_defs]
    out_shape = [jax.ShapeDtypeStruct((n, f), dt) for f, dt in out_defs]
    if len(out_defs) == 1:
        out_specs, out_shape = out_specs[0], out_shape[0]
    return pl.pallas_call(
        kernel,
        grid=grid,
        in_specs=in_specs,
        out_specs=out_specs,
        out_shape=out_shape,
        compiler_params=_cparams("parallel"),
    )(*row_inputs, *param_inputs)


# ---------------------------------------------------------------------------
# dedicated-grid pallas_call wrappers
# ---------------------------------------------------------------------------
def pallas_attention(node, kv, mask_t, gate3, lp, heads, *, eps=1e-5,
                     max_tile=256):
    B, L, H = node.shape
    K = kv.shape[1]
    tile = L if L <= max_tile else max_tile
    kern = functools.partial(_k_attn, heads=heads, eps=eps)
    return pl.pallas_call(
        kern,
        grid=(B, pl.cdiv(L, tile)),
        in_specs=[
            pl.BlockSpec((1, tile, H), lambda b, i: (b, i, 0)),
            pl.BlockSpec((1, K, tile, 2 * H), lambda b, i: (b, 0, i, 0)),
            pl.BlockSpec((1, K, tile), lambda b, i: (b, 0, i)),
            pl.BlockSpec((1, 1, H), lambda b, i: (b, 0, 0)),
            pl.BlockSpec(lp["wq_h"].shape, lambda b, i: (0, 0, 0)),
            pl.BlockSpec(lp["bq_h"].shape, lambda b, i: (0, 0, 0)),
            pl.BlockSpec(lp["wo_h"].shape, lambda b, i: (0, 0, 0)),
            pl.BlockSpec((1, H), lambda b, i: (0, 0)),
            pl.BlockSpec((1, H), lambda b, i: (0, 0)),
            pl.BlockSpec((1, H), lambda b, i: (0, 0)),
        ],
        out_specs=pl.BlockSpec((1, tile, H), lambda b, i: (b, i, 0)),
        out_shape=jax.ShapeDtypeStruct((B, L, H), jnp.bfloat16),
        compiler_params=_cparams("parallel", "parallel"),
    )(node, kv, mask_t, gate3, lp["wq_h"], lp["bq_h"], lp["wo_h"],
      lp["bo"], lp["ln1"]["g"], lp["ln1"]["b"])


def pallas_edge_update(edge_t, hj_t, hiwa, w_ebc, g, be, *, eps=1e-5,
                       max_tile=1024):
    B, K, L, H = edge_t.shape
    tile = L if L <= max_tile else max_tile
    return pl.pallas_call(
        functools.partial(_k_edge_upd, eps=eps),
        grid=(B, pl.cdiv(L, tile), K),
        in_specs=[
            pl.BlockSpec((1, 1, tile, H), lambda b, i, k: (b, k, i, 0)),
            pl.BlockSpec((1, 1, tile, H), lambda b, i, k: (b, k, i, 0)),
            pl.BlockSpec((1, tile, H), lambda b, i, k: (b, i, 0)),
            pl.BlockSpec(w_ebc.shape, lambda b, i, k: (0, 0)),
            pl.BlockSpec((1, H), lambda b, i, k: (0, 0)),
            pl.BlockSpec((1, H), lambda b, i, k: (0, 0)),
        ],
        out_specs=pl.BlockSpec((1, 1, tile, H), lambda b, i, k: (b, k, i, 0)),
        out_shape=jax.ShapeDtypeStruct((B, K, L, H), jnp.bfloat16),
        compiler_params=_cparams("parallel", "parallel", "parallel"),
    )(edge_t, hj_t, hiwa, w_ebc, g, be)


def pallas_pdist2_adjust(ca, mask, eps=1e-6, max_tile=512):
    """Masked pairwise squared CA distances + mask adjustment."""
    B, L, _ = ca.shape
    tile = L if L <= max_tile else max_tile
    xjt = jnp.transpose(ca, (0, 2, 1))                      # (B, 3, L)
    nj = jnp.sum(ca * ca, axis=-1)[:, None, :]              # (B, 1, L)
    mi = mask[:, :, None]                                   # (B, L, 1)
    mj = mask[:, None, :]                                   # (B, 1, L)
    return pl.pallas_call(
        functools.partial(_k_pdist, eps=eps),
        grid=(B, pl.cdiv(L, tile)),
        in_specs=[
            pl.BlockSpec((1, tile, 3), lambda b, i: (b, i, 0)),
            pl.BlockSpec((1, 3, L), lambda b, i: (b, 0, 0)),
            pl.BlockSpec((1, 1, L), lambda b, i: (b, 0, 0)),
            pl.BlockSpec((1, tile, 1), lambda b, i: (b, i, 0)),
            pl.BlockSpec((1, 1, L), lambda b, i: (b, 0, 0)),
        ],
        out_specs=pl.BlockSpec((1, tile, L), lambda b, i: (b, i, 0)),
        out_shape=jax.ShapeDtypeStruct((B, L, L), jnp.float32),
        compiler_params=_cparams("parallel", "parallel"),
    )(ca.astype(jnp.float32), xjt.astype(jnp.float32), nj.astype(jnp.float32),
      mi.astype(jnp.float32), mj.astype(jnp.float32))


# ---------------------------------------------------------------------------
# Geometry glue (plain JAX: gathers / trig / tiny tensors)
# ---------------------------------------------------------------------------
REL_I = jnp.array([0, 0, 0, 0, 0, 1, 1, 1, 1, 2, 2, 2, 3, 3, 4])
REL_J = jnp.array([1, 2, 3, 4, 5, 2, 3, 4, 5, 3, 4, 5, 4, 5, 5])


def l2norm(x, axis=-1, eps=1e-12):
    n = jnp.sqrt(jnp.sum(x * x, axis=axis, keepdims=True))
    return x / jnp.maximum(n, eps)


def gather_nodes(nodes, idx):
    # nodes: (B, L, C), idx: (B, L, K) -> (B, L, K, C)
    B, L, C = nodes.shape
    K = idx.shape[-1]
    flat = idx.reshape(B, L * K)
    g = jnp.take_along_axis(nodes, flat[:, :, None], axis=1)
    return g.reshape(B, L, K, C)


def gather_nodes_t(nodes, e_idx_t):
    # nodes: (B, L, C), e_idx_t: (B, K, L) -> (B, K, L, C) (edge-major layout)
    B, K, L = e_idx_t.shape
    C = nodes.shape[-1]
    flat = e_idx_t.reshape(B, K * L)
    g = jnp.take_along_axis(nodes, flat[:, :, None], axis=1)
    return g.reshape(B, K, L, C)


def gather_atoms(X, idx):
    # X: (B, L, A, 3), idx: (B, L, K) -> (B, L, K, A, 3)
    B, L, A, C = X.shape
    K = idx.shape[-1]
    flat = idx.reshape(B, L * K)
    g = jnp.take_along_axis(X, flat[:, :, None, None], axis=1)
    return g.reshape(B, L, K, A, C)


def rbf(D, rbf_num, D_min=0.0, D_max=20.0):
    mu = jnp.linspace(D_min, D_max, rbf_num)
    sigma = (D_max - D_min) / rbf_num
    return jnp.exp(-(((D[..., None] - mu) / sigma) ** 2))


def node_angle(X, mask, eps=1e-7):
    B, L = X.shape[0], X.shape[1]
    Xb = X[:, :, :3].reshape(B, 3 * L, 3)
    dX = Xb[:, 1:] - Xb[:, :-1]
    U = l2norm(dX)
    u_2, u_1, u_0 = U[:, :-2], U[:, 1:-1], U[:, 2:]
    n_2 = l2norm(jnp.cross(u_2, u_1))
    n_1 = l2norm(jnp.cross(u_1, u_0))
    cosD = jnp.clip(jnp.sum(n_2 * n_1, -1), -1 + eps, 1 - eps)
    D = jnp.sign(jnp.sum(u_2 * n_1, -1)) * jnp.arccos(cosD)
    D = jnp.pad(D, ((0, 0), (1, 2))).reshape(B, L, 3)
    dihedral = jnp.concatenate([jnp.cos(D), jnp.sin(D)], -1)
    cosB = jnp.clip(jnp.sum(u_2 * u_1, -1), -1 + eps, 1 - eps)
    Db = jnp.arccos(cosB)
    Db = jnp.pad(Db, ((0, 0), (1, 2))).reshape(B, L, 3)
    bond = jnp.concatenate([jnp.cos(Db), jnp.sin(Db)], -1)
    ang = jnp.concatenate([dihedral, bond], -1)                    # (B, L, 12)
    last = jnp.sum(mask, axis=-1).astype(jnp.int32) - 1            # (B,)
    zero_row = jnp.arange(L)[None, :] == last[:, None]
    return jnp.where(zero_row[:, :, None], 0.0, ang)


def node_direct(X, e_idx):
    A_n, A_ca, A_c = X[:, :, 0], X[:, :, 1], X[:, :, 2]
    u = l2norm(A_n - A_ca)
    v = l2norm(A_ca - A_c)
    b = l2norm(u - v)
    n = l2norm(jnp.cross(u, v))
    local_frame = jnp.stack([b, n, jnp.cross(b, n)], axis=-1)      # (B, L, 3, 3)
    t = l2norm(X[:, :, jnp.array([0, 2, 3, 4, 5])] - A_ca[:, :, None, :])
    nd = jnp.matmul(t, local_frame).reshape(*t.shape[:2], 15)
    X_neigh = gather_atoms(X, e_idx)                               # (B, L, K, 6, 3)
    te = l2norm(X_neigh - A_ca[:, :, None, None, :])
    ed = jnp.matmul(te, local_frame[:, :, None]).reshape(*te.shape[:3], 18)
    return nd, ed


def node_rbf(X, rbf_num):
    D = jnp.linalg.norm(X[:, :, REL_I] - X[:, :, REL_J], axis=-1)  # (B, L, 15)
    R = rbf(D, rbf_num)
    return R.reshape(*R.shape[:2], -1)


def edge_rbf(X, e_idx, rbf_num):
    X_neigh = gather_atoms(X, e_idx)                               # (B, L, K, 6, 3)
    CaX = X[:, :, 1]
    D = jnp.linalg.norm(X_neigh - CaX[:, :, None, None, :], axis=-1)
    R = rbf(D, rbf_num)
    return R.reshape(*R.shape[:3], -1)


def quaternions(R):
    diag = jnp.diagonal(R, axis1=-2, axis2=-1)
    Rxx, Ryy, Rzz = diag[..., 0], diag[..., 1], diag[..., 2]
    mag = 0.5 * jnp.sqrt(jnp.abs(1.0 + jnp.stack(
        [Rxx - Ryy - Rzz, -Rxx + Ryy - Rzz, -Rxx - Ryy + Rzz], -1)))
    signs = jnp.sign(jnp.stack([
        R[..., 2, 1] - R[..., 1, 2],
        R[..., 0, 2] - R[..., 2, 0],
        R[..., 1, 0] - R[..., 0, 1]], -1))
    xyz = signs * mag
    w = jnp.sqrt(jax.nn.relu(1.0 + jnp.sum(diag, -1, keepdims=True))) / 2.0
    return l2norm(jnp.concatenate([xyz, w], -1))


def edge_orientations(CaX, e_idx):
    B, L, _ = CaX.shape
    dX = CaX[:, 1:] - CaX[:, :-1]
    U = l2norm(dX)
    u_2, u_1 = U[:, :-2], U[:, 1:-1]
    n_2 = l2norm(jnp.cross(u_2, u_1))
    o_1 = l2norm(u_2 - u_1)
    O = jnp.stack([o_1, n_2, jnp.cross(o_1, n_2)], axis=2)         # (B, L-3, 3, 3)
    O = O.reshape(B, L - 3, 9)
    O = jnp.pad(O, ((0, 0), (1, 2), (0, 0)))                       # (B, L, 9)
    O_neigh = gather_nodes(O, e_idx)                               # (B, L, K, 9)
    X_neigh = gather_nodes(CaX, e_idx)                             # (B, L, K, 3)
    Om = O.reshape(B, L, 3, 3)
    On = O_neigh.reshape(B, L, -1, 3, 3)
    dXn = X_neigh - CaX[:, :, None, :]
    dU = l2norm(jnp.matmul(Om[:, :, None], dXn[..., None])[..., 0])
    Rm = jnp.matmul(jnp.swapaxes(Om[:, :, None], -1, -2), On)
    Q = quaternions(Rm)
    return jnp.concatenate([dU, Q], -1)                            # (B, L, K, 7)


# ---------------------------------------------------------------------------
# Parameter construction (deterministic synthetic init, bf16 matmul weights)
# ---------------------------------------------------------------------------
def make_linear_w(key, din, dout, dtype=jnp.bfloat16):
    std = math.sqrt(2.0 / (din + dout))
    w = std * jax.random.normal(key, (din, dout), dtype=jnp.float32)
    return w.astype(dtype)


def init_params(key, rfeat_dim, ligand_dim, hidden_dim, rbf_num, num_layers,
                heads):
    H = hidden_dim
    dh = H // heads
    node_in = rbf_num * 15 + 27
    edge_in = rbf_num * 6 + 25
    ks = iter(jax.random.split(key, 64))

    def lin(din, dout):
        return {"w": make_linear_w(next(ks), din, dout),
                "b": jnp.zeros((1, dout), jnp.float32)}

    def ln(d):
        return {"g": jnp.ones((1, d), jnp.float32),
                "b": jnp.zeros((1, d), jnp.float32)}

    p = {}
    p["in_mlp"] = {"l1": lin(rfeat_dim, rfeat_dim // 2),
                   "l2": lin(rfeat_dim // 2, H), "ln": ln(H)}
    p["lig_mlp"] = {"w": make_linear_w(next(ks), ligand_dim, H, jnp.float32),
                    "b": jnp.zeros((H,), jnp.float32)}
    p["edge_feature"] = {"node_emb": lin(node_in, H), "edge_emb": lin(edge_in, H),
                         "norm_node": ln(H), "norm_edge": ln(H)}
    p["f_mlp"] = {"ln1": ln(2 * H), "lin": lin(2 * H, H), "ln2": ln(H)}

    scale = 1.0 / math.sqrt(dh)
    layers = []
    for _ in range(num_layers):
        wq = make_linear_w(next(ks), H, H, jnp.float32)
        wo = make_linear_w(next(ks), H, H, jnp.float32)
        wkv_h = make_linear_w(next(ks), H, 2 * H, jnp.float32)
        wkv_e = make_linear_w(next(ks), H, 2 * H, jnp.float32)
        wea = make_linear_w(next(ks), H, H, jnp.float32)
        web = make_linear_w(next(ks), H, H, jnp.float32)
        wec = make_linear_w(next(ks), H, H, jnp.float32)
        layers.append({
            # per-head q/o weights; 1/sqrt(dh) folded into Wq (and bq).
            "wq_h": (scale * wq).reshape(H, heads, dh).transpose(1, 0, 2)
                                 .astype(jnp.bfloat16),
            "bq_h": jnp.zeros((heads, 1, dh), jnp.float32),
            "wo_h": wo.reshape(heads, dh, H).astype(jnp.bfloat16),
            "bo": jnp.zeros((1, H), jnp.float32),
            # packed k|v projection applied to concat([h_j, edge]).
            "w_kv": jnp.concatenate([wkv_h, wkv_e], axis=0).astype(jnp.bfloat16),
            "b_kv": jnp.zeros((1, 2 * H), jnp.float32),
            "wgate": make_linear_w(next(ks), H, H, jnp.float32),
            "bgate": jnp.zeros((H,), jnp.float32),
            "ln1": ln(H),
            "ffn1": lin(H, 2 * H), "ffn2": lin(2 * H, H), "ln2": ln(H),
            # edge update: h_i @ Wa (+ shared bias) done at node level;
            # [Wb; Wc] packed for the concat([edge, h_j]) matmul.
            "we_a": wea.astype(jnp.bfloat16),
            "be": jnp.zeros((1, H), jnp.float32),
            "w_ebc": jnp.concatenate([web, wec], axis=0).astype(jnp.bfloat16),
            "ln_e": ln(H),
            "wlig": make_linear_w(next(ks), H, H, jnp.float32),
            "blig": jnp.zeros((H,), jnp.float32),
        })
    p["layers"] = layers
    p["out1"] = lin(H, H // 2)
    p["out2_row"] = make_linear_w(next(ks), H // 2, 1,
                                  jnp.float32).reshape(1, H // 2)
    p["out2_b"] = jnp.zeros((1, 1), jnp.float32)
    return p


# ---------------------------------------------------------------------------
# Model forward
# ---------------------------------------------------------------------------
def graph_transformer_layer(lp, node, edge_t, e_idx_t, ligand, mask,
                            mask_attend_t, heads):
    B, L, H = node.shape
    K = e_idx_t.shape[1]
    R = B * K * L

    # TODO(synk): neighbour gathers stay in XLA; an in-kernel gather via
    # scalar-prefetched e_idx would avoid materialising the (B,K,L,H) tensors.
    h_j = gather_nodes_t(node, e_idx_t)                            # (B,K,L,H) bf16

    # fused k|v projection (one stacked 2H x 2H matmul over [h_j | edge]).
    kv = _row_tiled(_k_kv,
                    [h_j.reshape(R, H), edge_t.reshape(R, H)],
                    [lp["w_kv"], lp["b_kv"]],
                    [(2 * H, jnp.bfloat16)]).reshape(B, K, L, 2 * H)

    # per-batch ligand gate: tiny, plain XLA (kernel launch would dominate).
    gate = jax.nn.sigmoid(ligand @ lp["wgate"] + lp["bgate"])      # (B, H) f32

    # fused q-proj + attention + Wo + gate + residual + LN1
    h1 = pallas_attention(node, kv, mask_attend_t, gate.reshape(B, 1, H),
                          lp, heads)

    # fused FFN + residual + LN2 + node mask, plus hiWa = h_new @ Wa + b_edge
    h2, hiwa = _row_tiled(_k_ffn_res_ln_hiwa,
                          [h1.reshape(B * L, H), mask.reshape(B * L, 1)],
                          [lp["ffn1"]["w"], lp["ffn1"]["b"],
                           lp["ffn2"]["w"], lp["ffn2"]["b"],
                           lp["ln2"]["g"], lp["ln2"]["b"],
                           lp["we_a"], lp["be"]],
                          [(H, jnp.bfloat16), (H, jnp.bfloat16)])
    h = h2.reshape(B, L, H)
    hiwa = hiwa.reshape(B, L, H)

    # fused edge update: LN(edge + hiWa + [edge|h_j] @ [Wb;Wc])
    hj_new = gather_nodes_t(h, e_idx_t)                            # (B,K,L,H) bf16
    e_new = pallas_edge_update(edge_t, hj_new, hiwa, lp["w_ebc"],
                               lp["ln_e"]["g"], lp["ln_e"]["b"])

    # ligand update: ligand + SiLU(pooled @ Wlig + b) (tiny, plain XLA)
    denom = jnp.maximum(jnp.sum(mask, axis=-1, keepdims=True), 1.0)
    pooled = jnp.sum(h.astype(jnp.float32) * mask[..., None], axis=1) / denom
    lig_new = ligand + jax.nn.silu(pooled @ lp["wlig"] + lp["blig"])
    return h, e_new, lig_new


def labind_forward(params, rfeat, ligand, xyz, mask, *, heads, rbf_num, top_k):
    B, L, rf = rfeat.shape
    H = params["out1"]["w"].shape[0]
    N = B * L
    K = top_k

    # in_mlp (LMlp): fused Linear -> SiLU -> Linear -> LayerNorm
    im = params["in_mlp"]
    r = _row_tiled(_k_mlp2_ln, [rfeat.reshape(N, rf).astype(jnp.bfloat16)],
                   [im["l1"]["w"], im["l1"]["b"], im["l2"]["w"], im["l2"]["b"],
                    im["ln"]["g"], im["ln"]["b"]], [(H, jnp.bfloat16)])

    # lig_mlp (easyMLP): tiny (B, .) -> plain XLA
    lm = params["lig_mlp"]
    lig = jax.nn.silu(ligand @ lm["w"] + lm["b"])                  # (B, H) f32

    # EdgeFeature
    CaX = xyz[:, :, 1]
    D2_adjust = pallas_pdist2_adjust(CaX, mask)
    # TODO(synk): top-k neighbour selection has no clean Pallas primitive; XLA.
    _, e_idx = jax.lax.top_k(-D2_adjust, top_k)                    # (B, L, K)
    ang = node_angle(xyz, mask)
    nd_, ed_ = node_direct(xyz, e_idx)
    nrbf = node_rbf(xyz, rbf_num)
    geo_node = jnp.concatenate([nd_, ang, nrbf], -1)               # (B, L, 267)
    erbf = edge_rbf(xyz, e_idx, rbf_num)
    eori = edge_orientations(CaX, e_idx)
    geo_edge = jnp.concatenate([ed_, eori, erbf], -1)              # (B, L, K, 121)
    # edge tensors kept in (B, K, L, .) layout for the rest of the network so
    # per-node terms line up with plain row blocks (no h_i broadcast copies).
    geo_edge_t = jnp.transpose(geo_edge.astype(jnp.bfloat16), (0, 2, 1, 3))

    ef = params["edge_feature"]
    node_geo = _row_tiled(_k_dense_ln,
                          [geo_node.reshape(N, -1).astype(jnp.bfloat16)],
                          [ef["node_emb"]["w"], ef["node_emb"]["b"],
                           ef["norm_node"]["g"], ef["norm_node"]["b"]],
                          [(H, jnp.bfloat16)])
    edge_t = _row_tiled(_k_dense_ln, [geo_edge_t.reshape(B * K * L, -1)],
                        [ef["edge_emb"]["w"], ef["edge_emb"]["b"],
                         ef["norm_edge"]["g"], ef["norm_edge"]["b"]],
                        [(H, jnp.bfloat16)]).reshape(B, K, L, H)

    # f_mlp: LN(1e-6) -> Linear -> SiLU -> LN(1e-6); concat done in-kernel
    fm = params["f_mlp"]
    node = _row_tiled(_k_fmlp, [r, node_geo],
                      [fm["ln1"]["g"], fm["ln1"]["b"],
                       fm["lin"]["w"], fm["lin"]["b"],
                       fm["ln2"]["g"], fm["ln2"]["b"]],
                      [(H, jnp.bfloat16)]).reshape(B, L, H)

    e_idx_t = jnp.transpose(e_idx, (0, 2, 1))                      # (B, K, L)
    mask_attend = mask[..., None] * gather_nodes(mask[..., None], e_idx)[..., 0]
    mask_attend_t = jnp.transpose(mask_attend, (0, 2, 1))          # (B, K, L)

    for lp in params["layers"]:
        node, edge_t, lig = graph_transformer_layer(
            lp, node, edge_t, e_idx_t, lig, mask, mask_attend_t, heads)

    # out_mlp: Linear -> SiLU -> width-1 projection (VPU reduction)
    o1 = params["out1"]
    out = _row_tiled(_k_out_mlp, [node.reshape(N, H)],
                     [o1["w"], o1["b"], params["out2_row"], params["out2_b"]],
                     [(1, jnp.float32)])
    return out.reshape(B, L)


if __name__ == "__main__":
    key = jax.random.PRNGKey(0)
    B, L = 2, 8
    rfeat_dim, ligand_dim, hidden_dim, heads = 64, 16, 32, 4
    rbf_num, top_k, num_layers = 16, 5, 2

    k1, k2, k3, k4 = jax.random.split(key, 4)
    rfeat = jax.random.normal(k1, (B, L, rfeat_dim), dtype=jnp.float32)
    ligand = jax.random.normal(k2, (B, ligand_dim), dtype=jnp.float32)
    xyz = 3.0 * jax.random.normal(k3, (B, L, 6, 3), dtype=jnp.float32)
    mask = jnp.ones((B, L), jnp.float32).at[1, L - 1].set(0.0)

    params = init_params(k4, rfeat_dim, ligand_dim, hidden_dim, rbf_num,
                         num_layers, heads)
    fwd = jax.jit(functools.partial(labind_forward, heads=heads,
                                    rbf_num=rbf_num, top_k=top_k))
    out = fwd(params, rfeat, ligand, xyz, mask)
    jax.block_until_ready(out)
    assert out.shape == (B, L) and out.dtype == jnp.float32
    print("KERNEL_OK")
</pallas_src>

<mosaic_0001>
module attributes {stable_mosaic.version = 11 : i64} {
  func.func @_k_pdist(%arg0: i32, %arg1: i32, %arg2: memref<1x8x3xf32, #tpu.memory_space<vmem>>, %arg3: memref<1x3x8xf32, #tpu.memory_space<vmem>>, %arg4: memref<1x1x8xf32, #tpu.memory_space<vmem>>, %arg5: memref<1x8x1xf32, #tpu.memory_space<vmem>>, %arg6: memref<1x1x8xf32, #tpu.memory_space<vmem>>, %arg7: memref<1x8x8xf32, #tpu.memory_space<vmem>>) attributes {dimension_semantics = [#tpu.dimension_semantics<parallel>, #tpu.dimension_semantics<parallel>], iteration_bounds = array<i64: 2, 1>, scalar_prefetch = 0 : i64, scratch_operands = 0 : i64, tpu.core_type = #tpu.core_type<tc>, window_params = [{transform_indices = @transform_0, window_bounds = array<i64: 1, 8, 3>}, {transform_indices = @transform_1, window_bounds = array<i64: 1, 3, 8>}, {transform_indices = @transform_2, window_bounds = array<i64: 1, 1, 8>}, {transform_indices = @transform_3, window_bounds = array<i64: 1, 8, 1>}, {transform_indices = @transform_4, window_bounds = array<i64: 1, 1, 8>}, {transform_indices = @transform_5, window_bounds = array<i64: 1, 8, 8>}]} {
    %c0 = arith.constant 0 : index
    %c0_0 = arith.constant 0 : index
    %c0_1 = arith.constant 0 : index
    %0 = vector.load %arg2[%c0, %c0_0, %c0_1] : memref<1x8x3xf32, #tpu.memory_space<vmem>>, vector<1x8x3xf32>
    %1 = vector.shape_cast %0 : vector<1x8x3xf32> to vector<8x3xf32>
    %c0_2 = arith.constant 0 : index
    %c0_3 = arith.constant 0 : index
    %c0_4 = arith.constant 0 : index
    %2 = vector.load %arg3[%c0_2, %c0_3, %c0_4] : memref<1x3x8xf32, #tpu.memory_space<vmem>>, vector<1x3x8xf32>
    %3 = vector.shape_cast %2 : vector<1x3x8xf32> to vector<3x8xf32>
    %c0_5 = arith.constant 0 : index
    %c0_6 = arith.constant 0 : index
    %c0_7 = arith.constant 0 : index
    %4 = vector.load %arg4[%c0_5, %c0_6, %c0_7] : memref<1x1x8xf32, #tpu.memory_space<vmem>>, vector<1x1x8xf32>
    %5 = vector.shape_cast %4 : vector<1x1x8xf32> to vector<1x8xf32>
    %c0_8 = arith.constant 0 : index
    %c0_9 = arith.constant 0 : index
    %c0_10 = arith.constant 0 : index
    %6 = vector.load %arg5[%c0_8, %c0_9, %c0_10] : memref<1x8x1xf32, #tpu.memory_space<vmem>>, vector<1x8x1xf32>
    %7 = vector.shape_cast %6 : vector<1x8x1xf32> to vector<8x1xf32>
    %c0_11 = arith.constant 0 : index
    %c0_12 = arith.constant 0 : index
    %c0_13 = arith.constant 0 : index
    %8 = vector.load %arg6[%c0_11, %c0_12, %c0_13] : memref<1x1x8xf32, #tpu.memory_space<vmem>>, vector<1x1x8xf32>
    %9 = vector.shape_cast %8 : vector<1x1x8xf32> to vector<1x8xf32>
    %10 = arith.mulf %1, %1 : vector<8x3xf32>
    %cst = arith.constant dense<0.000000e+00> : vector<8xf32>
    %11 = vector.multi_reduction <add>, %10, %cst [1] : vector<8x3xf32> to vector<8xf32>
    %12 = vector.shape_cast %11 : vector<8xf32> to vector<8x1xf32>
    %cst_14 = arith.constant dense<0.000000e+00> : vector<8x8xf32>
    %13 = tpu.matmul %1, %3, %cst_14 {dimension_numbers = #tpu.dot_dimension_numbers<[1], [0], [0], [1], [0, 0, 1, 1], [], []>} : vector<8x3xf32>, vector<3x8xf32>, vector<8x8xf32> -> vector<8x8xf32>
    %14 = vector.broadcast %12 : vector<8x1xf32> to vector<8x8xf32>
    %15 = vector.broadcast %5 : vector<1x8xf32> to vector<8x8xf32>
    %16 = arith.addf %14, %15 : vector<8x8xf32>
    %cst_15 = arith.constant 2.000000e+00 : f32
    %17 = vector.broadcast %cst_15 : f32 to vector<8x8xf32>
    %18 = arith.mulf %17, %13 : vector<8x8xf32>
    %19 = arith.subf %16, %18 : vector<8x8xf32>
    %cst_16 = arith.constant 0.000000e+00 : f32
    %20 = vector.broadcast %cst_16 : f32 to vector<8x8xf32>
    %21 = arith.maximumf %19, %20 : vector<8x8xf32>
    %cst_17 = arith.constant 9.99999997E-7 : f32
    %22 = vector.broadcast %cst_17 : f32 to vector<8x8xf32>
    %23 = arith.addf %21, %22 : vector<8x8xf32>
    %24 = vector.broadcast %7 : vector<8x1xf32> to vector<8x8xf32>
    %25 = vector.broadcast %9 : vector<1x8xf32> to vector<8x8xf32>
    %26 = arith.mulf %24, %25 : vector<8x8xf32>
    %27 = arith.mulf %26, %23 : vector<8x8xf32>
    %cst_18 = arith.constant dense<0xFF800000> : vector<8xf32>
    %28 = vector.multi_reduction <maximumf>, %27, %cst_18 [1] : vector<8x8xf32> to vector<8xf32>
    %29 = vector.shape_cast %28 : vector<8xf32> to vector<8x1xf32>
    %cst_19 = arith.constant 1.000000e+00 : f32
    %30 = vector.broadcast %cst_19 : f32 to vector<8x8xf32>
    %31 = arith.subf %30, %26 : vector<8x8xf32>
    %32 = vector.broadcast %29 : vector<8x1xf32> to vector<8x8xf32>
    %33 = arith.mulf %31, %32 : vector<8x8xf32>
    %34 = arith.addf %27, %33 : vector<8x8xf32>
    %c0_20 = arith.constant 0 : index
    %c0_21 = arith.constant 0 : index
    %c0_22 = arith.constant 0 : index
    %35 = vector.load %arg7[%c0_20, %c0_21, %c0_22] : memref<1x8x8xf32, #tpu.memory_space<vmem>>, vector<1x8x8xf32>
    %36 = vector.shape_cast %35 : vector<1x8x8xf32> to vector<8x8xf32>
    %37 = vector.shape_cast %34 : vector<8x8xf32> to vector<1x8x8xf32>
    tpu.vector_store %arg7[%c0_20, %c0_21, %c0_22], %37 {strides = array<i32>} : memref<1x8x8xf32, #tpu.memory_space<vmem>>, vector<1x8x8xf32>,
    return
  }
  func.func @transform_0(%arg0: i32, %arg1: i32) -> (i32, i32, i32) {
    %c0_i32 = arith.constant 0 : i32
    %c0_i32_0 = arith.constant 0 : i32
    return %arg0, %arg1, %c0_i32 : i32, i32, i32
  }
  func.func @transform_1(%arg0: i32, %arg1: i32) -> (i32, i32, i32) {
    %c0_i32 = arith.constant 0 : i32
    %c0_i32_0 = arith.constant 0 : i32
    %c0_i32_1 = arith.constant 0 : i32
    return %arg0, %c0_i32, %c0_i32_0 : i32, i32, i32
  }
  func.func @transform_2(%arg0: i32, %arg1: i32) -> (i32, i32, i32) {
    %c0_i32 = arith.constant 0 : i32
    %c0_i32_0 = arith.constant 0 : i32
    %c0_i32_1 = arith.constant 0 : i32
    return %arg0, %c0_i32, %c0_i32_0 : i32, i32, i32
  }
  func.func @transform_3(%arg0: i32, %arg1: i32) -> (i32, i32, i32) {
    %c0_i32 = arith.constant 0 : i32
    %c0_i32_0 = arith.constant 0 : i32
    return %arg0, %arg1, %c0_i32 : i32, i32, i32
  }
  func.func @transform_4(%arg0: i32, %arg1: i32) -> (i32, i32, i32) {
    %c0_i32 = arith.constant 0 : i32
    %c0_i32_0 = arith.constant 0 : i32
    %c0_i32_1 = arith.constant 0 : i32
    return %arg0, %c0_i32, %c0_i32_0 : i32, i32, i32
  }
  func.func @transform_5(%arg0: i32, %arg1: i32) -> (i32, i32, i32) {
    %c0_i32 = arith.constant 0 : i32
    %c0_i32_0 = arith.constant 0 : i32
    return %arg0, %arg1, %c0_i32 : i32, i32, i32
  }
}

module attributes {stable_mosaic.version = 11 : i64} {
  func.func @_k_dense_ln(%arg0: i32, %arg1: memref<80x121xbf16, #tpu.memory_space<vmem>>, %arg2: memref<121x32xbf16, #tpu.memory_space<vmem>>, %arg3: memref<1x32xf32, #tpu.memory_space<vmem>>, %arg4: memref<1x32xf32, #tpu.memory_space<vmem>>, %arg5: memref<1x32xf32, #tpu.memory_space<vmem>>, %arg6: memref<80x32xbf16, #tpu.memory_space<vmem>>) attributes {dimension_semantics = [#tpu.dimension_semantics<parallel>], iteration_bounds = array<i64: 1>, scalar_prefetch = 0 : i64, scratch_operands = 0 : i64, tpu.core_type = #tpu.core_type<tc>, window_params = [{transform_indices = @transform_0, window_bounds = array<i64: 80, 121>}, {pipeline_mode = #tpu.pipeline_mode<synchronous>, transform_indices = @transform_1, window_bounds = array<i64: 121, 32>}, {pipeline_mode = #tpu.pipeline_mode<synchronous>, transform_indices = @transform_2, window_bounds = array<i64: 1, 32>}, {pipeline_mode = #tpu.pipeline_mode<synchronous>, transform_indices = @transform_3, window_bounds = array<i64: 1, 32>}, {pipeline_mode = #tpu.pipeline_mode<synchronous>, transform_indices = @transform_4, window_bounds = array<i64: 1, 32>}, {transform_indices = @transform_5, window_bounds = array<i64: 80, 32>}]} {
    %c0 = arith.constant 0 : index
    %c0_0 = arith.constant 0 : index
    %0 = vector.load %arg1[%c0, %c0_0] : memref<80x121xbf16, #tpu.memory_space<vmem>>, vector<80x121xbf16>
    %c0_1 = arith.constant 0 : index
    %c0_2 = arith.constant 0 : index
    %1 = vector.load %arg2[%c0_1, %c0_2] : memref<121x32xbf16, #tpu.memory_space<vmem>>, vector<121x32xbf16>
    %cst = arith.constant dense<0.000000e+00> : vector<80x32xf32>
    %2 = tpu.matmul %0, %1, %cst {dimension_numbers = #tpu.dot_dimension_numbers<[1], [0], [0], [1], [0, 0, 1, 1], [], []>} : vector<80x121xbf16>, vector<121x32xbf16>, vector<80x32xf32> -> vector<80x32xf32>
    %c0_3 = arith.constant 0 : index
    %c0_4 = arith.constant 0 : index
    %3 = vector.load %arg3[%c0_3, %c0_4] : memref<1x32xf32, #tpu.memory_space<vmem>>, vector<1x32xf32>
    %4 = vector.broadcast %3 : vector<1x32xf32> to vector<80x32xf32>
    %5 = arith.addf %2, %4 : vector<80x32xf32>
    %c0_5 = arith.constant 0 : index
    %c0_6 = arith.constant 0 : index
    %6 = vector.load %arg4[%c0_5, %c0_6] : memref<1x32xf32, #tpu.memory_space<vmem>>, vector<1x32xf32>
    %c0_7 = arith.constant 0 : index
    %c0_8 = arith.constant 0 : index
    %7 = vector.load %arg5[%c0_7, %c0_8] : memref<1x32xf32, #tpu.memory_space<vmem>>, vector<1x32xf32>
    %cst_9 = arith.constant dense<0.000000e+00> : vector<80xf32>
    %8 = vector.multi_reduction <add>, %5, %cst_9 [1] : vector<80x32xf32> to vector<80xf32>
    %9 = vector.shape_cast %8 : vector<80xf32> to vector<80x1xf32>
    %cst_10 = arith.constant 3.200000e+01 : f32
    %10 = vector.broadcast %cst_10 : f32 to vector<80x1xf32>
    %11 = arith.divf %9, %10 : vector<80x1xf32>
    %12 = vector.broadcast %11 : vector<80x1xf32> to vector<80x32xf32>
    %13 = arith.subf %5, %12 : vector<80x32xf32>
    %14 = arith.mulf %13, %13 : vector<80x32xf32>
    %cst_11 = arith.constant dense<0.000000e+00> : vector<80xf32>
    %15 = vector.multi_reduction <add>, %14, %cst_11 [1] : vector<80x32xf32> to vector<80xf32>
    %16 = vector.shape_cast %15 : vector<80xf32> to vector<80x1xf32>
    %cst_12 = arith.constant 3.200000e+01 : f32
    %17 = vector.broadcast %cst_12 : f32 to vector<80x1xf32>
    %18 = arith.divf %16, %17 : vector<80x1xf32>
    %cst_13 = arith.constant 9.99999974E-6 : f32
    %19 = vector.broadcast %cst_13 : f32 to vector<80x1xf32>
    %20 = arith.addf %18, %19 : vector<80x1xf32>
    %21 = math.rsqrt %20 : vector<80x1xf32>
    %22 = vector.broadcast %21 : vector<80x1xf32> to vector<80x32xf32>
    %23 = arith.mulf %13, %22 : vector<80x32xf32>
    %24 = vector.broadcast %6 : vector<1x32xf32> to vector<80x32xf32>
    %25 = arith.mulf %23, %24 : vector<80x32xf32>
    %26 = vector.broadcast %7 : vector<1x32xf32> to vector<80x32xf32>
    %27 = arith.addf %25, %26 : vector<80x32xf32>
    %28 = arith.truncf %27 : vector<80x32xf32> to vector<80x32xbf16>
    %c0_14 = arith.constant 0 : index
    %c0_15 = arith.constant 0 : index
    %29 = vector.load %arg6[%c0_14, %c0_15] : memref<80x32xbf16, #tpu.memory_space<vmem>>, vector<80x32xbf16>
    tpu.vector_store %arg6[%c0_14, %c0_15], %28 {strides = array<i32>} : memref<80x32xbf16, #tpu.memory_space<vmem>>, vector<80x32xbf16>,
    return
  }
  func.func @transform_0(%arg0: i32) -> (i32, i32) {
    %c0_i32 = arith.constant 0 : i32
    %c0_i32_0 = arith.constant 0 : i32
    return %arg0, %c0_i32 : i32, i32
  }
  func.func @transform_1(%arg0: i32) -> (i32, i32) {
    %c0_i32 = arith.constant 0 : i32
    %c0_i32_0 = arith.constant 0 : i32
    %c0_i32_1 = arith.constant 0 : i32
    return %c0_i32, %c0_i32_0 : i32, i32
  }
  func.func @transform_2(%arg0: i32) -> (i32, i32) {
    %c0_i32 = arith.constant 0 : i32
    %c0_i32_0 = arith.constant 0 : i32
    %c0_i32_1 = arith.constant 0 : i32
    return %c0_i32, %c0_i32_0 : i32, i32
  }
  func.func @transform_3(%arg0: i32) -> (i32, i32) {
    %c0_i32 = arith.constant 0 : i32
    %c0_i32_0 = arith.constant 0 : i32
    %c0_i32_1 = arith.constant 0 : i32
    return %c0_i32, %c0_i32_0 : i32, i32
  }
  func.func @transform_4(%arg0: i32) -> (i32, i32) {
    %c0_i32 = arith.constant 0 : i32
    %c0_i32_0 = arith.constant 0 : i32
    %c0_i32_1 = arith.constant 0 : i32
    return %c0_i32, %c0_i32_0 : i32, i32
  }
  func.func @transform_5(%arg0: i32) -> (i32, i32) {
    %c0_i32 = arith.constant 0 : i32
    %c0_i32_0 = arith.constant 0 : i32
    return %arg0, %c0_i32 : i32, i32
  }
}

module attributes {stable_mosaic.version = 11 : i64} {
  func.func @_k_dense_ln(%arg0: i32, %arg1: memref<16x267xbf16, #tpu.memory_space<vmem>>, %arg2: memref<267x32xbf16, #tpu.memory_space<vmem>>, %arg3: memref<1x32xf32, #tpu.memory_space<vmem>>, %arg4: memref<1x32xf32, #tpu.memory_space<vmem>>, %arg5: memref<1x32xf32, #tpu.memory_space<vmem>>, %arg6: memref<16x32xbf16, #tpu.memory_space<vmem>>) attributes {dimension_semantics = [#tpu.dimension_semantics<parallel>], iteration_bounds = array<i64: 1>, scalar_prefetch = 0 : i64, scratch_operands = 0 : i64, tpu.core_type = #tpu.core_type<tc>, window_params = [{transform_indices = @transform_0, window_bounds = array<i64: 16, 267>}, {pipeline_mode = #tpu.pipeline_mode<synchronous>, transform_indices = @transform_1, window_bounds = array<i64: 267, 32>}, {pipeline_mode = #tpu.pipeline_mode<synchronous>, transform_indices = @transform_2, window_bounds = array<i64: 1, 32>}, {pipeline_mode = #tpu.pipeline_mode<synchronous>, transform_indices = @transform_3, window_bounds = array<i64: 1, 32>}, {pipeline_mode = #tpu.pipeline_mode<synchronous>, transform_indices = @transform_4, window_bounds = array<i64: 1, 32>}, {transform_indices = @transform_5, window_bounds = array<i64: 16, 32>}]} {
    %c0 = arith.constant 0 : index
    %c0_0 = arith.constant 0 : index
    %0 = vector.load %arg1[%c0, %c0_0] : memref<16x267xbf16, #tpu.memory_space<vmem>>, vector<16x267xbf16>
    %c0_1 = arith.constant 0 : index
    %c0_2 = arith.constant 0 : index
    %1 = vector.load %arg2[%c0_1, %c0_2] : memref<267x32xbf16, #tpu.memory_space<vmem>>, vector<267x32xbf16>
    %cst = arith.constant dense<0.000000e+00> : vector<16x32xf32>
    %2 = tpu.matmul %0, %1, %cst {dimension_numbers = #tpu.dot_dimension_numbers<[1], [0], [0], [1], [0, 0, 1, 1], [], []>} : vector<16x267xbf16>, vector<267x32xbf16>, vector<16x32xf32> -> vector<16x32xf32>
    %c0_3 = arith.constant 0 : index
    %c0_4 = arith.constant 0 : index
    %3 = vector.load %arg3[%c0_3, %c0_4] : memref<1x32xf32, #tpu.memory_space<vmem>>, vector<1x32xf32>
    %4 = vector.broadcast %3 : vector<1x32xf32> to vector<16x32xf32>
    %5 = arith.addf %2, %4 : vector<16x32xf32>
    %c0_5 = arith.constant 0 : index
    %c0_6 = arith.constant 0 : index
    %6 = vector.load %arg4[%c0_5, %c0_6] : memref<1x32xf32, #tpu.memory_space<vmem>>, vector<1x32xf32>
    %c0_7 = arith.constant 0 : index
    %c0_8 = arith.constant 0 : index
    %7 = vector.load %arg5[%c0_7, %c0_8] : memref<1x32xf32, #tpu.memory_space<vmem>>, vector<1x32xf32>
    %cst_9 = arith.constant dense<0.000000e+00> : vector<16xf32>
    %8 = vector.multi_reduction <add>, %5, %cst_9 [1] : vector<16x32xf32> to vector<16xf32>
    %9 = vector.shape_cast %8 : vector<16xf32> to vector<16x1xf32>
    %cst_10 = arith.constant 3.200000e+01 : f32
    %10 = vector.broadcast %cst_10 : f32 to vector<16x1xf32>
    %11 = arith.divf %9, %10 : vector<16x1xf32>
    %12 = vector.broadcast %11 : vector<16x1xf32> to vector<16x32xf32>
    %13 = arith.subf %5, %12 : vector<16x32xf32>
    %14 = arith.mulf %13, %13 : vector<16x32xf32>
    %cst_11 = arith.constant dense<0.000000e+00> : vector<16xf32>
    %15 = vector.multi_reduction <add>, %14, %cst_11 [1] : vector<16x32xf32> to vector<16xf32>
    %16 = vector.shape_cast %15 : vector<16xf32> to vector<16x1xf32>
    %cst_12 = arith.constant 3.200000e+01 : f32
    %17 = vector.broadcast %cst_12 : f32 to vector<16x1xf32>
    %18 = arith.divf %16, %17 : vector<16x1xf32>
    %cst_13 = arith.constant 9.99999974E-6 : f32
    %19 = vector.broadcast %cst_13 : f32 to vector<16x1xf32>
    %20 = arith.addf %18, %19 : vector<16x1xf32>
    %21 = math.rsqrt %20 : vector<16x1xf32>
    %22 = vector.broadcast %21 : vector<16x1xf32> to vector<16x32xf32>
    %23 = arith.mulf %13, %22 : vector<16x32xf32>
    %24 = vector.broadcast %6 : vector<1x32xf32> to vector<16x32xf32>
    %25 = arith.mulf %23, %24 : vector<16x32xf32>
    %26 = vector.broadcast %7 : vector<1x32xf32> to vector<16x32xf32>
    %27 = arith.addf %25, %26 : vector<16x32xf32>
    %28 = arith.truncf %27 : vector<16x32xf32> to vector<16x32xbf16>
    %c0_14 = arith.constant 0 : index
    %c0_15 = arith.constant 0 : index
    %29 = vector.load %arg6[%c0_14, %c0_15] : memref<16x32xbf16, #tpu.memory_space<vmem>>, vector<16x32xbf16>
    tpu.vector_store %arg6[%c0_14, %c0_15], %28 {strides = array<i32>} : memref<16x32xbf16, #tpu.memory_space<vmem>>, vector<16x32xbf16>,
    return
  }
  func.func @transform_0(%arg0: i32) -> (i32, i32) {
    %c0_i32 = arith.constant 0 : i32
    %c0_i32_0 = arith.constant 0 : i32
    return %arg0, %c0_i32 : i32, i32
  }
  func.func @transform_1(%arg0: i32) -> (i32, i32) {
    %c0_i32 = arith.constant 0 : i32
    %c0_i32_0 = arith.constant 0 : i32
    %c0_i32_1 = arith.constant 0 : i32
    return %c0_i32, %c0_i32_0 : i32, i32
  }
  func.func @transform_2(%arg0: i32) -> (i32, i32) {
    %c0_i32 = arith.constant 0 : i32
    %c0_i32_0 = arith.constant 0 : i32
    %c0_i32_1 = arith.constant 0 : i32
    return %c0_i32, %c0_i32_0 : i32, i32
  }
  func.func @transform_3(%arg0: i32) -> (i32, i32) {
    %c0_i32 = arith.constant 0 : i32
    %c0_i32_0 = arith.constant 0 : i32
    %c0_i32_1 = arith.constant 0 : i32
    return %c0_i32, %c0_i32_0 : i32, i32
  }
  func.func @transform_4(%arg0: i32) -> (i32, i32) {
    %c0_i32 = arith.constant 0 : i32
    %c0_i32_0 = arith.constant 0 : i32
    %c0_i32_1 = arith.constant 0 : i32
    return %c0_i32, %c0_i32_0 : i32, i32
  }
  func.func @transform_5(%arg0: i32) -> (i32, i32) {
    %c0_i32 = arith.constant 0 : i32
    %c0_i32_0 = arith.constant 0 : i32
    return %arg0, %c0_i32 : i32, i32
  }
}

module attributes {stable_mosaic.version = 11 : i64} {
  func.func @_k_fmlp(%arg0: i32, %arg1: memref<16x32xbf16, #tpu.memory_space<vmem>>, %arg2: memref<16x32xbf16, #tpu.memory_space<vmem>>, %arg3: memref<1x64xf32, #tpu.memory_space<vmem>>, %arg4: memref<1x64xf32, #tpu.memory_space<vmem>>, %arg5: memref<64x32xbf16, #tpu.memory_space<vmem>>, %arg6: memref<1x32xf32, #tpu.memory_space<vmem>>, %arg7: memref<1x32xf32, #tpu.memory_space<vmem>>, %arg8: memref<1x32xf32, #tpu.memory_space<vmem>>, %arg9: memref<16x32xbf16, #tpu.memory_space<vmem>>) attributes {dimension_semantics = [#tpu.dimension_semantics<parallel>], iteration_bounds = array<i64: 1>, scalar_prefetch = 0 : i64, scratch_operands = 0 : i64, tpu.core_type = #tpu.core_type<tc>, window_params = [{transform_indices = @transform_0, window_bounds = array<i64: 16, 32>}, {transform_indices = @transform_1, window_bounds = array<i64: 16, 32>}, {pipeline_mode = #tpu.pipeline_mode<synchronous>, transform_indices = @transform_2, window_bounds = array<i64: 1, 64>}, {pipeline_mode = #tpu.pipeline_mode<synchronous>, transform_indices = @transform_3, window_bounds = array<i64: 1, 64>}, {pipeline_mode = #tpu.pipeline_mode<synchronous>, transform_indices = @transform_4, window_bounds = array<i64: 64, 32>}, {pipeline_mode = #tpu.pipeline_mode<synchronous>, transform_indices = @transform_5, window_bounds = array<i64: 1, 32>}, {pipeline_mode = #tpu.pipeline_mode<synchronous>, transform_indices = @transform_6, window_bounds = array<i64: 1, 32>}, {pipeline_mode = #tpu.pipeline_mode<synchronous>, transform_indices = @transform_7, window_bounds = array<i64: 1, 32>}, {transform_indices = @transform_8, window_bounds = array<i64: 16, 32>}]} {
    %c0 = arith.constant 0 : index
    %c0_0 = arith.constant 0 : index
    %0 = vector.load %arg1[%c0, %c0_0] : memref<16x32xbf16, #tpu.memory_space<vmem>>, vector<16x32xbf16>
    %c0_1 = arith.constant 0 : index
    %c0_2 = arith.constant 0 : index
    %1 = vector.load %arg2[%c0_1, %c0_2] : memref<16x32xbf16, #tpu.memory_space<vmem>>, vector<16x32xbf16>
    %2 = tpu.concatenate %0, %1 in 1 : vector<16x32xbf16>, vector<16x32xbf16> -> vector<16x64xbf16>
    %3 = arith.extf %2 : vector<16x64xbf16> to vector<16x64xf32>
    %c0_3 = arith.constant 0 : index
    %c0_4 = arith.constant 0 : index
    %4 = vector.load %arg3[%c0_3, %c0_4] : memref<1x64xf32, #tpu.memory_space<vmem>>, vector<1x64xf32>
    %c0_5 = arith.constant 0 : index
    %c0_6 = arith.constant 0 : index
    %5 = vector.load %arg4[%c0_5, %c0_6] : memref<1x64xf32, #tpu.memory_space<vmem>>, vector<1x64xf32>
    %cst = arith.constant dense<0.000000e+00> : vector<16xf32>
    %6 = vector.multi_reduction <add>, %3, %cst [1] : vector<16x64xf32> to vector<16xf32>
    %7 = vector.shape_cast %6 : vector<16xf32> to vector<16x1xf32>
    %cst_7 = arith.constant 6.400000e+01 : f32
    %8 = vector.broadcast %cst_7 : f32 to vector<16x1xf32>
    %9 = arith.divf %7, %8 : vector<16x1xf32>
    %10 = vector.broadcast %9 : vector<16x1xf32> to vector<16x64xf32>
    %11 = arith.subf %3, %10 : vector<16x64xf32>
    %12 = arith.mulf %11, %11 : vector<16x64xf32>
    %cst_8 = arith.constant dense<0.000000e+00> : vector<16xf32>
    %13 = vector.multi_reduction <add>, %12, %cst_8 [1] : vector<16x64xf32> to vector<16xf32>
    %14 = vector.shape_cast %13 : vector<16xf32> to vector<16x1xf32>
    %cst_9 = arith.constant 6.400000e+01 : f32
    %15 = vector.broadcast %cst_9 : f32 to vector<16x1xf32>
    %16 = arith.divf %14, %15 : vector<16x1xf32>
    %cst_10 = arith.constant 9.99999997E-7 : f32
    %17 = vector.broadcast %cst_10 : f32 to vector<16x1xf32>
    %18 = arith.addf %16, %17 : vector<16x1xf32>
    %19 = math.rsqrt %18 : vector<16x1xf32>
    %20 = vector.broadcast %19 : vector<16x1xf32> to vector<16x64xf32>
    %21 = arith.mulf %11, %20 : vector<16x64xf32>
    %22 = vector.broadcast %4 : vector<1x64xf32> to vector<16x64xf32>
    %23 = arith.mulf %21, %22 : vector<16x64xf32>
    %24 = vector.broadcast %5 : vector<1x64xf32> to vector<16x64xf32>
    %25 = arith.addf %23, %24 : vector<16x64xf32>
    %c0_11 = arith.constant 0 : index
    %c0_12 = arith.constant 0 : index
    %26 = vector.load %arg5[%c0_11, %c0_12] : memref<64x32xbf16, #tpu.memory_space<vmem>>, vector<64x32xbf16>
    %27 = arith.truncf %25 : vector<16x64xf32> to vector<16x64xbf16>
    %cst_13 = arith.constant dense<0.000000e+00> : vector<16x32xf32>
    %28 = tpu.matmul %27, %26, %cst_13 {dimension_numbers = #tpu.dot_dimension_numbers<[1], [0], [0], [1], [0, 0, 1, 1], [], []>} : vector<16x64xbf16>, vector<64x32xbf16>, vector<16x32xf32> -> vector<16x32xf32>
    %c0_14 = arith.constant 0 : index
    %c0_15 = arith.constant 0 : index
    %29 = vector.load %arg6[%c0_14, %c0_15] : memref<1x32xf32, #tpu.memory_space<vmem>>, vector<1x32xf32>
    %30 = vector.broadcast %29 : vector<1x32xf32> to vector<16x32xf32>
    %31 = arith.addf %28, %30 : vector<16x32xf32>
    %32 = arith.negf %31 : vector<16x32xf32>
    %33 = math.exp %32 : vector<16x32xf32>
    %cst_16 = arith.constant 1.000000e+00 : f32
    %34 = vector.broadcast %cst_16 : f32 to vector<16x32xf32>
    %35 = arith.addf %34, %33 : vector<16x32xf32>
    %36 = arith.divf %34, %35 : vector<16x32xf32>
    %37 = arith.mulf %31, %36 : vector<16x32xf32>
    %c0_17 = arith.constant 0 : index
    %c0_18 = arith.constant 0 : index
    %38 = vector.load %arg7[%c0_17, %c0_18] : memref<1x32xf32, #tpu.memory_space<vmem>>, vector<1x32xf32>
    %c0_19 = arith.constant 0 : index
    %c0_20 = arith.constant 0 : index
    %39 = vector.load %arg8[%c0_19, %c0_20] : memref<1x32xf32, #tpu.memory_space<vmem>>, vector<1x32xf32>
    %cst_21 = arith.constant dense<0.000000e+00> : vector<16xf32>
    %40 = vector.multi_reduction <add>, %37, %cst_21 [1] : vector<16x32xf32> to vector<16xf32>
    %41 = vector.shape_cast %40 : vector<16xf32> to vector<16x1xf32>
    %cst_22 = arith.constant 3.200000e+01 : f32
    %42 = vector.broadcast %cst_22 : f32 to vector<16x1xf32>
    %43 = arith.divf %41, %42 : vector<16x1xf32>
    %44 = vector.broadcast %43 : vector<16x1xf32> to vector<16x32xf32>
    %45 = arith.subf %37, %44 : vector<16x32xf32>
    %46 = arith.mulf %45, %45 : vector<16x32xf32>
    %cst_23 = arith.constant dense<0.000000e+00> : vector<16xf32>
    %47 = vector.multi_reduction <add>, %46, %cst_23 [1] : vector<16x32xf32> to vector<16xf32>
    %48 = vector.shape_cast %47 : vector<16xf32> to vector<16x1xf32>
    %cst_24 = arith.constant 3.200000e+01 : f32
    %49 = vector.broadcast %cst_24 : f32 to vector<16x1xf32>
    %50 = arith.divf %48, %49 : vector<16x1xf32>
    %cst_25 = arith.constant 9.99999997E-7 : f32
    %51 = vector.broadcast %cst_25 : f32 to vector<16x1xf32>
    %52 = arith.addf %50, %51 : vector<16x1xf32>
    %53 = math.rsqrt %52 : vector<16x1xf32>
    %54 = vector.broadcast %53 : vector<16x1xf32> to vector<16x32xf32>
    %55 = arith.mulf %45, %54 : vector<16x32xf32>
    %56 = vector.broadcast %38 : vector<1x32xf32> to vector<16x32xf32>
    %57 = arith.mulf %55, %56 : vector<16x32xf32>
    %58 = vector.broadcast %39 : vector<1x32xf32> to vector<16x32xf32>
    %59 = arith.addf %57, %58 : vector<16x32xf32>
    %60 = arith.truncf %59 : vector<16x32xf32> to vector<16x32xbf16>
    %c0_26 = arith.constant 0 : index
    %c0_27 = arith.constant 0 : index
    %61 = vector.load %arg9[%c0_26, %c0_27] : memref<16x32xbf16, #tpu.memory_space<vmem>>, vector<16x32xbf16>
    tpu.vector_store %arg9[%c0_26, %c0_27], %60 {strides = array<i32>} : memref<16x32xbf16, #tpu.memory_space<vmem>>, vector<16x32xbf16>,
    return
  }
  func.func @transform_0(%arg0: i32) -> (i32, i32) {
    %c0_i32 = arith.constant 0 : i32
    %c0_i32_0 = arith.constant 0 : i32
    return %arg0, %c0_i32 : i32, i32
  }
  func.func @transform_1(%arg0: i32) -> (i32, i32) {
    %c0_i32 = arith.constant 0 : i32
    %c0_i32_0 = arith.constant 0 : i32
    return %arg0, %c0_i32 : i32, i32
  }
  func.func @transform_2(%arg0: i32) -> (i32, i32) {
    %c0_i32 = arith.constant 0 : i32
    %c0_i32_0 = arith.constant 0 : i32
    %c0_i32_1 = arith.constant 0 : i32
    return %c0_i32, %c0_i32_0 : i32, i32
  }
  func.func @transform_3(%arg0: i32) -> (i32, i32) {
    %c0_i32 = arith.constant 0 : i32
    %c0_i32_0 = arith.constant 0 : i32
    %c0_i32_1 = arith.constant 0 : i32
    return %c0_i32, %c0_i32_0 : i32, i32
  }
  func.func @transform_4(%arg0: i32) -> (i32, i32) {
    %c0_i32 = arith.constant 0 : i32
    %c0_i32_0 = arith.constant 0 : i32
    %c0_i32_1 = arith.constant 0 : i32
    return %c0_i32, %c0_i32_0 : i32, i32
  }
  func.func @transform_5(%arg0: i32) -> (i32, i32) {
    %c0_i32 = arith.constant 0 : i32
    %c0_i32_0 = arith.constant 0 : i32
    %c0_i32_1 = arith.constant 0 : i32
    return %c0_i32, %c0_i32_0 : i32, i32
  }
  func.func @transform_6(%arg0: i32) -> (i32, i32) {
    %c0_i32 = arith.constant 0 : i32
    %c0_i32_0 = arith.constant 0 : i32
    %c0_i32_1 = arith.constant 0 : i32
    return %c0_i32, %c0_i32_0 : i32, i32
  }
  func.func @transform_7(%arg0: i32) -> (i32, i32) {
    %c0_i32 = arith.constant 0 : i32
    %c0_i32_0 = arith.constant 0 : i32
    %c0_i32_1 = arith.constant 0 : i32
    return %c0_i32, %c0_i32_0 : i32, i32
  }
  func.func @transform_8(%arg0: i32) -> (i32, i32) {
    %c0_i32 = arith.constant 0 : i32
    %c0_i32_0 = arith.constant 0 : i32
    return %arg0, %c0_i32 : i32, i32
  }
}

module attributes {stable_mosaic.version = 11 : i64} {
  func.func @_k_mlp2_ln(%arg0: i32, %arg1: memref<16x64xbf16, #tpu.memory_space<vmem>>, %arg2: memref<64x32xbf16, #tpu.memory_space<vmem>>, %arg3: memref<1x32xf32, #tpu.memory_space<vmem>>, %arg4: memref<32x32xbf16, #tpu.memory_space<vmem>>, %arg5: memref<1x32xf32, #tpu.memory_space<vmem>>, %arg6: memref<1x32xf32, #tpu.memory_space<vmem>>, %arg7: memref<1x32xf32, #tpu.memory_space<vmem>>, %arg8: memref<16x32xbf16, #tpu.memory_space<vmem>>) attributes {dimension_semantics = [#tpu.dimension_semantics<parallel>], iteration_bounds = array<i64: 1>, scalar_prefetch = 0 : i64, scratch_operands = 0 : i64, tpu.core_type = #tpu.core_type<tc>, window_params = [{transform_indices = @transform_0, window_bounds = array<i64: 16, 64>}, {pipeline_mode = #tpu.pipeline_mode<synchronous>, transform_indices = @transform_1, window_bounds = array<i64: 64, 32>}, {pipeline_mode = #tpu.pipeline_mode<synchronous>, transform_indices = @transform_2, window_bounds = array<i64: 1, 32>}, {pipeline_mode = #tpu.pipeline_mode<synchronous>, transform_indices = @transform_3, window_bounds = array<i64: 32, 32>}, {pipeline_mode = #tpu.pipeline_mode<synchronous>, transform_indices = @transform_4, window_bounds = array<i64: 1, 32>}, {pipeline_mode = #tpu.pipeline_mode<synchronous>, transform_indices = @transform_5, window_bounds = array<i64: 1, 32>}, {pipeline_mode = #tpu.pipeline_mode<synchronous>, transform_indices = @transform_6, window_bounds = array<i64: 1, 32>}, {transform_indices = @transform_7, window_bounds = array<i64: 16, 32>}]} {
    %c0 = arith.constant 0 : index
    %c0_0 = arith.constant 0 : index
    %0 = vector.load %arg1[%c0, %c0_0] : memref<16x64xbf16, #tpu.memory_space<vmem>>, vector<16x64xbf16>
    %c0_1 = arith.constant 0 : index
    %c0_2 = arith.constant 0 : index
    %1 = vector.load %arg2[%c0_1, %c0_2] : memref<64x32xbf16, #tpu.memory_space<vmem>>, vector<64x32xbf16>
    %cst = arith.constant dense<0.000000e+00> : vector<16x32xf32>
    %2 = tpu.matmul %0, %1, %cst {dimension_numbers = #tpu.dot_dimension_numbers<[1], [0], [0], [1], [0, 0, 1, 1], [], []>} : vector<16x64xbf16>, vector<64x32xbf16>, vector<16x32xf32> -> vector<16x32xf32>
    %c0_3 = arith.constant 0 : index
    %c0_4 = arith.constant 0 : index
    %3 = vector.load %arg3[%c0_3, %c0_4] : memref<1x32xf32, #tpu.memory_space<vmem>>, vector<1x32xf32>
    %4 = vector.broadcast %3 : vector<1x32xf32> to vector<16x32xf32>
    %5 = arith.addf %2, %4 : vector<16x32xf32>
    %6 = arith.negf %5 : vector<16x32xf32>
    %7 = math.exp %6 : vector<16x32xf32>
    %cst_5 = arith.constant 1.000000e+00 : f32
    %8 = vector.broadcast %cst_5 : f32 to vector<16x32xf32>
    %9 = arith.addf %8, %7 : vector<16x32xf32>
    %10 = arith.divf %8, %9 : vector<16x32xf32>
    %11 = arith.mulf %5, %10 : vector<16x32xf32>
    %c0_6 = arith.constant 0 : index
    %c0_7 = arith.constant 0 : index
    %12 = vector.load %arg4[%c0_6, %c0_7] : memref<32x32xbf16, #tpu.memory_space<vmem>>, vector<32x32xbf16>
    %13 = arith.truncf %11 : vector<16x32xf32> to vector<16x32xbf16>
    %cst_8 = arith.constant dense<0.000000e+00> : vector<16x32xf32>
    %14 = tpu.matmul %13, %12, %cst_8 {dimension_numbers = #tpu.dot_dimension_numbers<[1], [0], [0], [1], [0, 0, 1, 1], [], []>} : vector<16x32xbf16>, vector<32x32xbf16>, vector<16x32xf32> -> vector<16x32xf32>
    %c0_9 = arith.constant 0 : index
    %c0_10 = arith.constant 0 : index
    %15 = vector.load %arg5[%c0_9, %c0_10] : memref<1x32xf32, #tpu.memory_space<vmem>>, vector<1x32xf32>
    %16 = vector.broadcast %15 : vector<1x32xf32> to vector<16x32xf32>
    %17 = arith.addf %14, %16 : vector<16x32xf32>
    %c0_11 = arith.constant 0 : index
    %c0_12 = arith.constant 0 : index
    %18 = vector.load %arg6[%c0_11, %c0_12] : memref<1x32xf32, #tpu.memory_space<vmem>>, vector<1x32xf32>
    %c0_13 = arith.constant 0 : index
    %c0_14 = arith.constant 0 : index
    %19 = vector.load %arg7[%c0_13, %c0_14] : memref<1x32xf32, #tpu.memory_space<vmem>>, vector<1x32xf32>
    %cst_15 = arith.constant dense<0.000000e+00> : vector<16xf32>
    %20 = vector.multi_reduction <add>, %17, %cst_15 [1] : vector<16x32xf32> to vector<16xf32>
    %21 = vector.shape_cast %20 : vector<16xf32> to vector<16x1xf32>
    %cst_16 = arith.constant 3.200000e+01 : f32
    %22 = vector.broadcast %cst_16 : f32 to vector<16x1xf32>
    %23 = arith.divf %21, %22 : vector<16x1xf32>
    %24 = vector.broadcast %23 : vector<16x1xf32> to vector<16x32xf32>
    %25 = arith.subf %17, %24 : vector<16x32xf32>
    %26 = arith.mulf %25, %25 : vector<16x32xf32>
    %cst_17 = arith.constant dense<0.000000e+00> : vector<16xf32>
    %27 = vector.multi_reduction <add>, %26, %cst_17 [1] : vector<16x32xf32> to vector<16xf32>
    %28 = vector.shape_cast %27 : vector<16xf32> to vector<16x1xf32>
    %cst_18 = arith.constant 3.200000e+01 : f32
    %29 = vector.broadcast %cst_18 : f32 to vector<16x1xf32>
    %30 = arith.divf %28, %29 : vector<16x1xf32>
    %cst_19 = arith.constant 9.99999974E-6 : f32
    %31 = vector.broadcast %cst_19 : f32 to vector<16x1xf32>
    %32 = arith.addf %30, %31 : vector<16x1xf32>
    %33 = math.rsqrt %32 : vector<16x1xf32>
    %34 = vector.broadcast %33 : vector<16x1xf32> to vector<16x32xf32>
    %35 = arith.mulf %25, %34 : vector<16x32xf32>
    %36 = vector.broadcast %18 : vector<1x32xf32> to vector<16x32xf32>
    %37 = arith.mulf %35, %36 : vector<16x32xf32>
    %38 = vector.broadcast %19 : vector<1x32xf32> to vector<16x32xf32>
    %39 = arith.addf %37, %38 : vector<16x32xf32>
    %40 = arith.truncf %39 : vector<16x32xf32> to vector<16x32xbf16>
    %c0_20 = arith.constant 0 : index
    %c0_21 = arith.constant 0 : index
    %41 = vector.load %arg8[%c0_20, %c0_21] : memref<16x32xbf16, #tpu.memory_space<vmem>>, vector<16x32xbf16>
    tpu.vector_store %arg8[%c0_20, %c0_21], %40 {strides = array<i32>} : memref<16x32xbf16, #tpu.memory_space<vmem>>, vector<16x32xbf16>,
    return
  }
  func.func @transform_0(%arg0: i32) -> (i32, i32) {
    %c0_i32 = arith.constant 0 : i32
    %c0_i32_0 = arith.constant 0 : i32
    return %arg0, %c0_i32 : i32, i32
  }
  func.func @transform_1(%arg0: i32) -> (i32, i32) {
    %c0_i32 = arith.constant 0 : i32
    %c0_i32_0 = arith.constant 0 : i32
    %c0_i32_1 = arith.constant 0 : i32
    return %c0_i32, %c0_i32_0 : i32, i32
  }
  func.func @transform_2(%arg0: i32) -> (i32, i32) {
    %c0_i32 = arith.constant 0 : i32
    %c0_i32_0 = arith.constant 0 : i32
    %c0_i32_1 = arith.constant 0 : i32
    return %c0_i32, %c0_i32_0 : i32, i32
  }
  func.func @transform_3(%arg0: i32) -> (i32, i32) {
    %c0_i32 = arith.constant 0 : i32
    %c0_i32_0 = arith.constant 0 : i32
    %c0_i32_1 = arith.constant 0 : i32
    return %c0_i32, %c0_i32_0 : i32, i32
  }
  func.func @transform_4(%arg0: i32) -> (i32, i32) {
    %c0_i32 = arith.constant 0 : i32
    %c0_i32_0 = arith.constant 0 : i32
    %c0_i32_1 = arith.constant 0 : i32
    return %c0_i32, %c0_i32_0 : i32, i32
  }
  func.func @transform_5(%arg0: i32) -> (i32, i32) {
    %c0_i32 = arith.constant 0 : i32
    %c0_i32_0 = arith.constant 0 : i32
    %c0_i32_1 = arith.constant 0 : i32
    return %c0_i32, %c0_i32_0 : i32, i32
  }
  func.func @transform_6(%arg0: i32) -> (i32, i32) {
    %c0_i32 = arith.constant 0 : i32
    %c0_i32_0 = arith.constant 0 : i32
    %c0_i32_1 = arith.constant 0 : i32
    return %c0_i32, %c0_i32_0 : i32, i32
  }
  func.func @transform_7(%arg0: i32) -> (i32, i32) {
    %c0_i32 = arith.constant 0 : i32
    %c0_i32_0 = arith.constant 0 : i32
    return %arg0, %c0_i32 : i32, i32
  }
}

module attributes {stable_mosaic.version = 11 : i64} {
  func.func @_k_kv(%arg0: i32, %arg1: memref<80x32xbf16, #tpu.memory_space<vmem>>, %arg2: memref<80x32xbf16, #tpu.memory_space<vmem>>, %arg3: memref<64x64xbf16, #tpu.memory_space<vmem>>, %arg4: memref<1x64xf32, #tpu.memory_space<vmem>>, %arg5: memref<80x64xbf16, #tpu.memory_space<vmem>>) attributes {dimension_semantics = [#tpu.dimension_semantics<parallel>], iteration_bounds = array<i64: 1>, scalar_prefetch = 0 : i64, scratch_operands = 0 : i64, tpu.core_type = #tpu.core_type<tc>, window_params = [{transform_indices = @transform_0, window_bounds = array<i64: 80, 32>}, {transform_indices = @transform_1, window_bounds = array<i64: 80, 32>}, {pipeline_mode = #tpu.pipeline_mode<synchronous>, transform_indices = @transform_2, window_bounds = array<i64: 64, 64>}, {pipeline_mode = #tpu.pipeline_mode<synchronous>, transform_indices = @transform_3, window_bounds = array<i64: 1, 64>}, {transform_indices = @transform_4, window_bounds = array<i64: 80, 64>}]} {
    %c0 = arith.constant 0 : index
    %c0_0 = arith.constant 0 : index
    %0 = vector.load %arg1[%c0, %c0_0] : memref<80x32xbf16, #tpu.memory_space<vmem>>, vector<80x32xbf16>
    %c0_1 = arith.constant 0 : index
    %c0_2 = arith.constant 0 : index
    %1 = vector.load %arg2[%c0_1, %c0_2] : memref<80x32xbf16, #tpu.memory_space<vmem>>, vector<80x32xbf16>
    %2 = tpu.concatenate %0, %1 in 1 : vector<80x32xbf16>, vector<80x32xbf16> -> vector<80x64xbf16>
    %c0_3 = arith.constant 0 : index
    %c0_4 = arith.constant 0 : index
    %3 = vector.load %arg3[%c0_3, %c0_4] : memref<64x64xbf16, #tpu.memory_space<vmem>>, vector<64x64xbf16>
    %cst = arith.constant dense<0.000000e+00> : vector<80x64xf32>
    %4 = tpu.matmul %2, %3, %cst {dimension_numbers = #tpu.dot_dimension_numbers<[1], [0], [0], [1], [0, 0, 1, 1], [], []>} : vector<80x64xbf16>, vector<64x64xbf16>, vector<80x64xf32> -> vector<80x64xf32>
    %c0_5 = arith.constant 0 : index
    %c0_6 = arith.constant 0 : index
    %5 = vector.load %arg4[%c0_5, %c0_6] : memref<1x64xf32, #tpu.memory_space<vmem>>, vector<1x64xf32>
    %6 = vector.broadcast %5 : vector<1x64xf32> to vector<80x64xf32>
    %7 = arith.addf %4, %6 : vector<80x64xf32>
    %8 = arith.truncf %7 : vector<80x64xf32> to vector<80x64xbf16>
    %c0_7 = arith.constant 0 : index
    %c0_8 = arith.constant 0 : index
    %9 = vector.load %arg5[%c0_7, %c0_8] : memref<80x64xbf16, #tpu.memory_space<vmem>>, vector<80x64xbf16>
    tpu.vector_store %arg5[%c0_7, %c0_8], %8 {strides = array<i32>} : memref<80x64xbf16, #tpu.memory_space<vmem>>, vector<80x64xbf16>,
    return
  }
  func.func @transform_0(%arg0: i32) -> (i32, i32) {
    %c0_i32 = arith.constant 0 : i32
    %c0_i32_0 = arith.constant 0 : i32
    return %arg0, %c0_i32 : i32, i32
  }
  func.func @transform_1(%arg0: i32) -> (i32, i32) {
    %c0_i32 = arith.constant 0 : i32
    %c0_i32_0 = arith.constant 0 : i32
    return %arg0, %c0_i32 : i32, i32
  }
  func.func @transform_2(%arg0: i32) -> (i32, i32) {
    %c0_i32 = arith.constant 0 : i32
    %c0_i32_0 = arith.constant 0 : i32
    %c0_i32_1 = arith.constant 0 : i32
    return %c0_i32, %c0_i32_0 : i32, i32
  }
  func.func @transform_3(%arg0: i32) -> (i32, i32) {
    %c0_i32 = arith.constant 0 : i32
    %c0_i32_0 = arith.constant 0 : i32
    %c0_i32_1 = arith.constant 0 : i32
    return %c0_i32, %c0_i32_0 : i32, i32
  }
  func.func @transform_4(%arg0: i32) -> (i32, i32) {
    %c0_i32 = arith.constant 0 : i32
    %c0_i32_0 = arith.constant 0 : i32
    return %arg0, %c0_i32 : i32, i32
  }
}

module attributes {stable_mosaic.version = 11 : i64} {
  func.func @_k_attn(%arg0: i32, %arg1: i32, %arg2: memref<1x8x32xbf16, #tpu.memory_space<vmem>>, %arg3: memref<1x5x8x64xbf16, #tpu.memory_space<vmem>>, %arg4: memref<1x5x8xf32, #tpu.memory_space<vmem>>, %arg5: memref<1x1x32xf32, #tpu.memory_space<vmem>>, %arg6: memref<4x32x8xbf16, #tpu.memory_space<vmem>>, %arg7: memref<4x1x8xf32, #tpu.memory_space<vmem>>, %arg8: memref<4x8x32xbf16, #tpu.memory_space<vmem>>, %arg9: memref<1x32xf32, #tpu.memory_space<vmem>>, %arg10: memref<1x32xf32, #tpu.memory_space<vmem>>, %arg11: memref<1x32xf32, #tpu.memory_space<vmem>>, %arg12: memref<1x8x32xbf16, #tpu.memory_space<vmem>>) attributes {dimension_semantics = [#tpu.dimension_semantics<parallel>, #tpu.dimension_semantics<parallel>], iteration_bounds = array<i64: 2, 1>, scalar_prefetch = 0 : i64, scratch_operands = 0 : i64, tpu.core_type = #tpu.core_type<tc>, window_params = [{transform_indices = @transform_0, window_bounds = array<i64: 1, 8, 32>}, {transform_indices = @transform_1, window_bounds = array<i64: 1, 5, 8, 64>}, {transform_indices = @transform_2, window_bounds = array<i64: 1, 5, 8>}, {transform_indices = @transform_3, window_bounds = array<i64: 1, 1, 32>}, {pipeline_mode = #tpu.pipeline_mode<synchronous>, transform_indices = @transform_4, window_bounds = array<i64: 4, 32, 8>}, {pipeline_mode = #tpu.pipeline_mode<synchronous>, transform_indices = @transform_5, window_bounds = array<i64: 4, 1, 8>}, {pipeline_mode = #tpu.pipeline_mode<synchronous>, transform_indices = @transform_6, window_bounds = array<i64: 4, 8, 32>}, {pipeline_mode = #tpu.pipeline_mode<synchronous>, transform_indices = @transform_7, window_bounds = array<i64: 1, 32>}, {pipeline_mode = #tpu.pipeline_mode<synchronous>, transform_indices = @transform_8, window_bounds = array<i64: 1, 32>}, {pipeline_mode = #tpu.pipeline_mode<synchronous>, transform_indices = @transform_9, window_bounds = array<i64: 1, 32>}, {transform_indices = @transform_10, window_bounds = array<i64: 1, 8, 32>}]} {
    %c0 = arith.constant 0 : index
    %c0_0 = arith.constant 0 : index
    %c0_1 = arith.constant 0 : index
    %0 = vector.load %arg2[%c0, %c0_0, %c0_1] : memref<1x8x32xbf16, #tpu.memory_space<vmem>>, vector<1x8x32xbf16>
    %1 = vector.shape_cast %0 : vector<1x8x32xbf16> to vector<8x32xbf16>
    %c0_2 = arith.constant 0 : index
    %c0_3 = arith.constant 0 : index
    %c0_4 = arith.constant 0 : index
    %c0_5 = arith.constant 0 : index
    %2 = vector.load %arg3[%c0_2, %c0_3, %c0_4, %c0_5] : memref<1x5x8x64xbf16, #tpu.memory_space<vmem>>, vector<1x5x8x64xbf16>
    %3 = vector.shape_cast %2 : vector<1x5x8x64xbf16> to vector<5x8x64xbf16>
    %c0_6 = arith.constant 0 : index
    %c0_7 = arith.constant 0 : index
    %c0_8 = arith.constant 0 : index
    %4 = vector.load %arg4[%c0_6, %c0_7, %c0_8] : memref<1x5x8xf32, #tpu.memory_space<vmem>>, vector<1x5x8xf32>
    %5 = vector.shape_cast %4 : vector<1x5x8xf32> to vector<5x8xf32>
    %cst = arith.constant 0.000000e+00 : f32
    %6 = vector.broadcast %cst : f32 to vector<8x32xf32>
    %c0_9 = arith.constant 0 : index
    %c0_10 = arith.constant 0 : index
    %c0_11 = arith.constant 0 : index
    %7 = vector.load %arg6[%c0_9, %c0_10, %c0_11] : memref<4x32x8xbf16, #tpu.memory_space<vmem>>, vector<1x32x8xbf16>
    %8 = vector.shape_cast %7 : vector<1x32x8xbf16> to vector<32x8xbf16>
    %cst_12 = arith.constant dense<0.000000e+00> : vector<8x8xf32>
    %9 = tpu.matmul %1, %8, %cst_12 {dimension_numbers = #tpu.dot_dimension_numbers<[1], [0], [0], [1], [0, 0, 1, 1], [], []>} : vector<8x32xbf16>, vector<32x8xbf16>, vector<8x8xf32> -> vector<8x8xf32>
    %c0_13 = arith.constant 0 : index
    %c0_14 = arith.constant 0 : index
    %c0_15 = arith.constant 0 : index
    %10 = vector.load %arg7[%c0_13, %c0_14, %c0_15] : memref<4x1x8xf32, #tpu.memory_space<vmem>>, vector<1x1x8xf32>
    %11 = vector.shape_cast %10 : vector<1x1x8xf32> to vector<1x8xf32>
    %12 = vector.broadcast %11 : vector<1x8xf32> to vector<8x8xf32>
    %13 = arith.addf %9, %12 : vector<8x8xf32>
    %14 = vector.extract_strided_slice %3 {offsets = [0, 0, 0], sizes = [5, 8, 8], strides = [1, 1, 1]} : vector<5x8x64xbf16> to vector<5x8x8xbf16>
    %15 = vector.extract_strided_slice %3 {offsets = [0, 0, 32], sizes = [5, 8, 8], strides = [1, 1, 1]} : vector<5x8x64xbf16> to vector<5x8x8xbf16>
    %16 = vector.shape_cast %13 : vector<8x8xf32> to vector<1x8x8xf32>
    %17 = arith.extf %14 : vector<5x8x8xbf16> to vector<5x8x8xf32>
    %18 = vector.broadcast %16 : vector<1x8x8xf32> to vector<5x8x8xf32>
    %19 = arith.mulf %18, %17 : vector<5x8x8xf32>
    %cst_16 = arith.constant dense<0.000000e+00> : vector<5x8xf32>
    %20 = vector.multi_reduction <add>, %19, %cst_16 [2] : vector<5x8x8xf32> to vector<5x8xf32>
    %cst_17 = arith.constant 0.000000e+00 : f32
    %21 = vector.broadcast %cst_17 : f32 to vector<5x8xf32>
    %22 = arith.cmpf ogt, %5, %21 : vector<5x8xf32>
    %cst_18 = arith.constant -1.000000e+09 : f32
    %23 = vector.broadcast %cst_18 : f32 to vector<5x8xf32>
    %24 = arith.select %22, %20, %23 : vector<5x8xi1>, vector<5x8xf32>
    %cst_19 = arith.constant dense<0xFF800000> : vector<8xf32>
    %25 = vector.multi_reduction <maximumf>, %24, %cst_19 [0] : vector<5x8xf32> to vector<8xf32>
    %26 = vector.shape_cast %25 : vector<8xf32> to vector<1x8xf32>
    %27 = vector.broadcast %26 : vector<1x8xf32> to vector<5x8xf32>
    %28 = arith.subf %24, %27 : vector<5x8xf32>
    %29 = math.exp %28 : vector<5x8xf32>
    %cst_20 = arith.constant dense<0.000000e+00> : vector<8xf32>
    %30 = vector.multi_reduction <add>, %29, %cst_20 [0] : vector<5x8xf32> to vector<8xf32>
    %31 = vector.shape_cast %30 : vector<8xf32> to vector<1x8xf32>
    %32 = tpu.reciprocal %31 {approx = true} : vector<1x8xf32> -> vector<1x8xf32>
    %33 = vector.broadcast %32 : vector<1x8xf32> to vector<5x8xf32>
    %34 = arith.mulf %29, %33 : vector<5x8xf32>
    %35 = vector.shape_cast %34 : vector<5x8xf32> to vector<5x8x1xf32>
    %36 = arith.extf %15 : vector<5x8x8xbf16> to vector<5x8x8xf32>
    %37 = vector.broadcast %35 : vector<5x8x1xf32> to vector<5x8x8xf32>
    %38 = arith.mulf %37, %36 : vector<5x8x8xf32>
    %cst_21 = arith.constant dense<0.000000e+00> : vector<8x8xf32>
    %39 = vector.multi_reduction <add>, %38, %cst_21 [0] : vector<5x8x8xf32> to vector<8x8xf32>
    %c0_22 = arith.constant 0 : index
    %c0_23 = arith.constant 0 : index
    %c0_24 = arith.constant 0 : index
    %40 = vector.load %arg8[%c0_22, %c0_23, %c0_24] : memref<4x8x32xbf16, #tpu.memory_space<vmem>>, vector<1x8x32xbf16>
    %41 = vector.shape_cast %40 : vector<1x8x32xbf16> to vector<8x32xbf16>
    %42 = arith.truncf %39 : vector<8x8xf32> to vector<8x8xbf16>
    %cst_25 = arith.constant dense<0.000000e+00> : vector<8x32xf32>
    %43 = tpu.matmul %42, %41, %cst_25 {dimension_numbers = #tpu.dot_dimension_numbers<[1], [0], [0], [1], [0, 0, 1, 1], [], []>} : vector<8x8xbf16>, vector<8x32xbf16>, vector<8x32xf32> -> vector<8x32xf32>
    %44 = arith.addf %6, %43 : vector<8x32xf32>
    %c1 = arith.constant 1 : index
    %c0_26 = arith.constant 0 : index
    %c0_27 = arith.constant 0 : index
    %45 = vector.load %arg6[%c1, %c0_26, %c0_27] : memref<4x32x8xbf16, #tpu.memory_space<vmem>>, vector<1x32x8xbf16>
    %46 = vector.shape_cast %45 : vector<1x32x8xbf16> to vector<32x8xbf16>
    %cst_28 = arith.constant dense<0.000000e+00> : vector<8x8xf32>
    %47 = tpu.matmul %1, %46, %cst_28 {dimension_numbers = #tpu.dot_dimension_numbers<[1], [0], [0], [1], [0, 0, 1, 1], [], []>} : vector<8x32xbf16>, vector<32x8xbf16>, vector<8x8xf32> -> vector<8x8xf32>
    %c1_29 = arith.constant 1 : index
    %c0_30 = arith.constant 0 : index
    %c0_31 = arith.constant 0 : index
    %48 = vector.load %arg7[%c1_29, %c0_30, %c0_31] : memref<4x1x8xf32, #tpu.memory_space<vmem>>, vector<1x1x8xf32>
    %49 = vector.shape_cast %48 : vector<1x1x8xf32> to vector<1x8xf32>
    %50 = vector.broadcast %49 : vector<1x8xf32> to vector<8x8xf32>
    %51 = arith.addf %47, %50 : vector<8x8xf32>
    %52 = vector.extract_strided_slice %3 {offsets = [0, 0, 8], sizes = [5, 8, 8], strides = [1, 1, 1]} : vector<5x8x64xbf16> to vector<5x8x8xbf16>
    %53 = vector.extract_strided_slice %3 {offsets = [0, 0, 40], sizes = [5, 8, 8], strides = [1, 1, 1]} : vector<5x8x64xbf16> to vector<5x8x8xbf16>
    %54 = vector.shape_cast %51 : vector<8x8xf32> to vector<1x8x8xf32>
    %55 = arith.extf %52 : vector<5x8x8xbf16> to vector<5x8x8xf32>
    %56 = vector.broadcast %54 : vector<1x8x8xf32> to vector<5x8x8xf32>
    %57 = arith.mulf %56, %55 : vector<5x8x8xf32>
    %cst_32 = arith.constant dense<0.000000e+00> : vector<5x8xf32>
    %58 = vector.multi_reduction <add>, %57, %cst_32 [2] : vector<5x8x8xf32> to vector<5x8xf32>
    %cst_33 = arith.constant 0.000000e+00 : f32
    %59 = vector.broadcast %cst_33 : f32 to vector<5x8xf32>
    %60 = arith.cmpf ogt, %5, %59 : vector<5x8xf32>
    %cst_34 = arith.constant -1.000000e+09 : f32
    %61 = vector.broadcast %cst_34 : f32 to vector<5x8xf32>
    %62 = arith.select %60, %58, %61 : vector<5x8xi1>, vector<5x8xf32>
    %cst_35 = arith.constant dense<0xFF800000> : vector<8xf32>
    %63 = vector.multi_reduction <maximumf>, %62, %cst_35 [0] : vector<5x8xf32> to vector<8xf32>
    %64 = vector.shape_cast %63 : vector<8xf32> to vector<1x8xf32>
    %65 = vector.broadcast %64 : vector<1x8xf32> to vector<5x8xf32>
    %66 = arith.subf %62, %65 : vector<5x8xf32>
    %67 = math.exp %66 : vector<5x8xf32>
    %cst_36 = arith.constant dense<0.000000e+00> : vector<8xf32>
    %68 = vector.multi_reduction <add>, %67, %cst_36 [0] : vector<5x8xf32> to vector<8xf32>
    %69 = vector.shape_cast %68 : vector<8xf32> to vector<1x8xf32>
    %70 = tpu.reciprocal %69 {approx = true} : vector<1x8xf32> -> vector<1x8xf32>
    %71 = vector.broadcast %70 : vector<1x8xf32> to vector<5x8xf32>
    %72 = arith.mulf %67, %71 : vector<5x8xf32>
    %73 = vector.shape_cast %72 : vector<5x8xf32> to vector<5x8x1xf32>
    %74 = arith.extf %53 : vector<5x8x8xbf16> to vector<5x8x8xf32>
    %75 = vector.broadcast %73 : vector<5x8x1xf32> to vector<5x8x8xf32>
    %76 = arith.mulf %75, %74 : vector<5x8x8xf32>
    %cst_37 = arith.constant dense<0.000000e+00> : vector<8x8xf32>
    %77 = vector.multi_reduction <add>, %76, %cst_37 [0] : vector<5x8x8xf32> to vector<8x8xf32>
    %c1_38 = arith.constant 1 : index
    %c0_39 = arith.constant 0 : index
    %c0_40 = arith.constant 0 : index
    %78 = vector.load %arg8[%c1_38, %c0_39, %c0_40] : memref<4x8x32xbf16, #tpu.memory_space<vmem>>, vector<1x8x32xbf16>
    %79 = vector.shape_cast %78 : vector<1x8x32xbf16> to vector<8x32xbf16>
    %80 = arith.truncf %77 : vector<8x8xf32> to vector<8x8xbf16>
    %cst_41 = arith.constant dense<0.000000e+00> : vector<8x32xf32>
    %81 = tpu.matmul %80, %79, %cst_41 {dimension_numbers = #tpu.dot_dimension_numbers<[1], [0], [0], [1], [0, 0, 1, 1], [], []>} : vector<8x8xbf16>, vector<8x32xbf16>, vector<8x32xf32> -> vector<8x32xf32>
    %82 = arith.addf %44, %81 : vector<8x32xf32>
    %c2 = arith.constant 2 : index
    %c0_42 = arith.constant 0 : index
    %c0_43 = arith.constant 0 : index
    %83 = vector.load %arg6[%c2, %c0_42, %c0_43] : memref<4x32x8xbf16, #tpu.memory_space<vmem>>, vector<1x32x8xbf16>
    %84 = vector.shape_cast %83 : vector<1x32x8xbf16> to vector<32x8xbf16>
    %cst_44 = arith.constant dense<0.000000e+00> : vector<8x8xf32>
    %85 = tpu.matmul %1, %84, %cst_44 {dimension_numbers = #tpu.dot_dimension_numbers<[1], [0], [0], [1], [0, 0, 1, 1], [], []>} : vector<8x32xbf16>, vector<32x8xbf16>, vector<8x8xf32> -> vector<8x8xf32>
    %c2_45 = arith.constant 2 : index
    %c0_46 = arith.constant 0 : index
    %c0_47 = arith.constant 0 : index
    %86 = vector.load %arg7[%c2_45, %c0_46, %c0_47] : memref<4x1x8xf32, #tpu.memory_space<vmem>>, vector<1x1x8xf32>
    %87 = vector.shape_cast %86 : vector<1x1x8xf32> to vector<1x8xf32>
    %88 = vector.broadcast %87 : vector<1x8xf32> to vector<8x8xf32>
    %89 = arith.addf %85, %88 : vector<8x8xf32>
    %90 = vector.extract_strided_slice %3 {offsets = [0, 0, 16], sizes = [5, 8, 8], strides = [1, 1, 1]} : vector<5x8x64xbf16> to vector<5x8x8xbf16>
    %91 = vector.extract_strided_slice %3 {offsets = [0, 0, 48], sizes = [5, 8, 8], strides = [1, 1, 1]} : vector<5x8x64xbf16> to vector<5x8x8xbf16>
    %92 = vector.shape_cast %89 : vector<8x8xf32> to vector<1x8x8xf32>
    %93 = arith.extf %90 : vector<5x8x8xbf16> to vector<5x8x8xf32>
    %94 = vector.broadcast %92 : vector<1x8x8xf32> to vector<5x8x8xf32>
    %95 = arith.mulf %94, %93 : vector<5x8x8xf32>
    %cst_48 = arith.constant dense<0.000000e+00> : vector<5x8xf32>
    %96 = vector.multi_reduction <add>, %95, %cst_48 [2] : vector<5x8x8xf32> to vector<5x8xf32>
    %cst_49 = arith.constant 0.000000e+00 : f32
    %97 = vector.broadcast %cst_49 : f32 to vector<5x8xf32>
    %98 = arith.cmpf ogt, %5, %97 : vector<5x8xf32>
    %cst_50 = arith.constant -1.000000e+09 : f32
    %99 = vector.broadcast %cst_50 : f32 to vector<5x8xf32>
    %100 = arith.select %98, %96, %99 : vector<5x8xi1>, vector<5x8xf32>
    %cst_51 = arith.constant dense<0xFF800000> : vector<8xf32>
    %101 = vector.multi_reduction <maximumf>, %100, %cst_51 [0] : vector<5x8xf32> to vector<8xf32>
    %102 = vector.shape_cast %101 : vector<8xf32> to vector<1x8xf32>
    %103 = vector.broadcast %102 : vector<1x8xf32> to vector<5x8xf32>
    %104 = arith.subf %100, %103 : vector<5x8xf32>
    %105 = math.exp %104 : vector<5x8xf32>
    %cst_52 = arith.constant dense<0.000000e+00> : vector<8xf32>
    %106 = vector.multi_reduction <add>, %105, %cst_52 [0] : vector<5x8xf32> to vector<8xf32>
    %107 = vector.shape_cast %106 : vector<8xf32> to vector<1x8xf32>
    %108 = tpu.reciprocal %107 {approx = true} : vector<1x8xf32> -> vector<1x8xf32>
    %109 = vector.broadcast %108 : vector<1x8xf32> to vector<5x8xf32>
    %110 = arith.mulf %105, %109 : vector<5x8xf32>
    %111 = vector.shape_cast %110 : vector<5x8xf32> to vector<5x8x1xf32>
    %112 = arith.extf %91 : vector<5x8x8xbf16> to vector<5x8x8xf32>
    %113 = vector.broadcast %111 : vector<5x8x1xf32> to vector<5x8x8xf32>
    %114 = arith.mulf %113, %112 : vector<5x8x8xf32>
    %cst_53 = arith.constant dense<0.000000e+00> : vector<8x8xf32>
    %115 = vector.multi_reduction <add>, %114, %cst_53 [0] : vector<5x8x8xf32> to vector<8x8xf32>
    %c2_54 = arith.constant 2 : index
    %c0_55 = arith.constant 0 : index
    %c0_56 = arith.constant 0 : index
    %116 = vector.load %arg8[%c2_54, %c0_55, %c0_56] : memref<4x8x32xbf16, #tpu.memory_space<vmem>>, vector<1x8x32xbf16>
    %117 = vector.shape_cast %116 : vector<1x8x32xbf16> to vector<8x32xbf16>
    %118 = arith.truncf %115 : vector<8x8xf32> to vector<8x8xbf16>
    %cst_57 = arith.constant dense<0.000000e+00> : vector<8x32xf32>
    %119 = tpu.matmul %118, %117, %cst_57 {dimension_numbers = #tpu.dot_dimension_numbers<[1], [0], [0], [1], [0, 0, 1, 1], [], []>} : vector<8x8xbf16>, vector<8x32xbf16>, vector<8x32xf32> -> vector<8x32xf32>
    %120 = arith.addf %82, %119 : vector<8x32xf32>
    %c3 = arith.constant 3 : index
    %c0_58 = arith.constant 0 : index
    %c0_59 = arith.constant 0 : index
    %121 = vector.load %arg6[%c3, %c0_58, %c0_59] : memref<4x32x8xbf16, #tpu.memory_space<vmem>>, vector<1x32x8xbf16>
    %122 = vector.shape_cast %121 : vector<1x32x8xbf16> to vector<32x8xbf16>
    %cst_60 = arith.constant dense<0.000000e+00> : vector<8x8xf32>
    %123 = tpu.matmul %1, %122, %cst_60 {dimension_numbers = #tpu.dot_dimension_numbers<[1], [0], [0], [1], [0, 0, 1, 1], [], []>} : vector<8x32xbf16>, vector<32x8xbf16>, vector<8x8xf32> -> vector<8x8xf32>
    %c3_61 = arith.constant 3 : index
    %c0_62 = arith.constant 0 : index
    %c0_63 = arith.constant 0 : index
    %124 = vector.load %arg7[%c3_61, %c0_62, %c0_63] : memref<4x1x8xf32, #tpu.memory_space<vmem>>, vector<1x1x8xf32>
    %125 = vector.shape_cast %124 : vector<1x1x8xf32> to vector<1x8xf32>
    %126 = vector.broadcast %125 : vector<1x8xf32> to vector<8x8xf32>
    %127 = arith.addf %123, %126 : vector<8x8xf32>
    %128 = vector.extract_strided_slice %3 {offsets = [0, 0, 24], sizes = [5, 8, 8], strides = [1, 1, 1]} : vector<5x8x64xbf16> to vector<5x8x8xbf16>
    %129 = vector.extract_strided_slice %3 {offsets = [0, 0, 56], sizes = [5, 8, 8], strides = [1, 1, 1]} : vector<5x8x64xbf16> to vector<5x8x8xbf16>
    %130 = vector.shape_cast %127 : vector<8x8xf32> to vector<1x8x8xf32>
    %131 = arith.extf %128 : vector<5x8x8xbf16> to vector<5x8x8xf32>
    %132 = vector.broadcast %130 : vector<1x8x8xf32> to vector<5x8x8xf32>
    %133 = arith.mulf %132, %131 : vector<5x8x8xf32>
    %cst_64 = arith.constant dense<0.000000e+00> : vector<5x8xf32>
    %134 = vector.multi_reduction <add>, %133, %cst_64 [2] : vector<5x8x8xf32> to vector<5x8xf32>
    %cst_65 = arith.constant 0.000000e+00 : f32
    %135 = vector.broadcast %cst_65 : f32 to vector<5x8xf32>
    %136 = arith.cmpf ogt, %5, %135 : vector<5x8xf32>
    %cst_66 = arith.constant -1.000000e+09 : f32
    %137 = vector.broadcast %cst_66 : f32 to vector<5x8xf32>
    %138 = arith.select %136, %134, %137 : vector<5x8xi1>, vector<5x8xf32>
    %cst_67 = arith.constant dense<0xFF800000> : vector<8xf32>
    %139 = vector.multi_reduction <maximumf>, %138, %cst_67 [0] : vector<5x8xf32> to vector<8xf32>
    %140 = vector.shape_cast %139 : vector<8xf32> to vector<1x8xf32>
    %141 = vector.broadcast %140 : vector<1x8xf32> to vector<5x8xf32>
    %142 = arith.subf %138, %141 : vector<5x8xf32>
    %143 = math.exp %142 : vector<5x8xf32>
    %cst_68 = arith.constant dense<0.000000e+00> : vector<8xf32>
    %144 = vector.multi_reduction <add>, %143, %cst_68 [0] : vector<5x8xf32> to vector<8xf32>
    %145 = vector.shape_cast %144 : vector<8xf32> to vector<1x8xf32>
    %146 = tpu.reciprocal %145 {approx = true} : vector<1x8xf32> -> vector<1x8xf32>
    %147 = vector.broadcast %146 : vector<1x8xf32> to vector<5x8xf32>
    %148 = arith.mulf %143, %147 : vector<5x8xf32>
    %149 = vector.shape_cast %148 : vector<5x8xf32> to vector<5x8x1xf32>
    %150 = arith.extf %129 : vector<5x8x8xbf16> to vector<5x8x8xf32>
    %151 = vector.broadcast %149 : vector<5x8x1xf32> to vector<5x8x8xf32>
    %152 = arith.mulf %151, %150 : vector<5x8x8xf32>
    %cst_69 = arith.constant dense<0.000000e+00> : vector<8x8xf32>
    %153 = vector.multi_reduction <add>, %152, %cst_69 [0] : vector<5x8x8xf32> to vector<8x8xf32>
    %c3_70 = arith.constant 3 : index
    %c0_71 = arith.constant 0 : index
    %c0_72 = arith.constant 0 : index
    %154 = vector.load %arg8[%c3_70, %c0_71, %c0_72] : memref<4x8x32xbf16, #tpu.memory_space<vmem>>, vector<1x8x32xbf16>
    %155 = vector.shape_cast %154 : vector<1x8x32xbf16> to vector<8x32xbf16>
    %156 = arith.truncf %153 : vector<8x8xf32> to vector<8x8xbf16>
    %cst_73 = arith.constant dense<0.000000e+00> : vector<8x32xf32>
    %157 = tpu.matmul %156, %155, %cst_73 {dimension_numbers = #tpu.dot_dimension_numbers<[1], [0], [0], [1], [0, 0, 1, 1], [], []>} : vector<8x8xbf16>, vector<8x32xbf16>, vector<8x32xf32> -> vector<8x32xf32>
    %158 = arith.addf %120, %157 : vector<8x32xf32>
    %c0_74 = arith.constant 0 : index
    %c0_75 = arith.constant 0 : index
    %159 = vector.load %arg9[%c0_74, %c0_75] : memref<1x32xf32, #tpu.memory_space<vmem>>, vector<1x32xf32>
    %160 = vector.broadcast %159 : vector<1x32xf32> to vector<8x32xf32>
    %161 = arith.addf %158, %160 : vector<8x32xf32>
    %162 = arith.extf %1 : vector<8x32xbf16> to vector<8x32xf32>
    %c0_76 = arith.constant 0 : index
    %c0_77 = arith.constant 0 : index
    %c0_78 = arith.constant 0 : index
    %163 = vector.load %arg5[%c0_76, %c0_77, %c0_78] : memref<1x1x32xf32, #tpu.memory_space<vmem>>, vector<1x1x32xf32>
    %164 = vector.shape_cast %163 : vector<1x1x32xf32> to vector<1x32xf32>
    %165 = vector.broadcast %164 : vector<1x32xf32> to vector<8x32xf32>
    %166 = arith.mulf %165, %161 : vector<8x32xf32>
    %167 = arith.addf %162, %166 : vector<8x32xf32>
    %c0_79 = arith.constant 0 : index
    %c0_80 = arith.constant 0 : index
    %168 = vector.load %arg10[%c0_79, %c0_80] : memref<1x32xf32, #tpu.memory_space<vmem>>, vector<1x32xf32>
    %c0_81 = arith.constant 0 : index
    %c0_82 = arith.constant 0 : index
    %169 = vector.load %arg11[%c0_81, %c0_82] : memref<1x32xf32, #tpu.memory_space<vmem>>, vector<1x32xf32>
    %cst_83 = arith.constant dense<0.000000e+00> : vector<8xf32>
    %170 = vector.multi_reduction <add>, %167, %cst_83 [1] : vector<8x32xf32> to vector<8xf32>
    %171 = vector.shape_cast %170 : vector<8xf32> to vector<8x1xf32>
    %cst_84 = arith.constant 3.200000e+01 : f32
    %172 = vector.broadcast %cst_84 : f32 to vector<8x1xf32>
    %173 = arith.divf %171, %172 : vector<8x1xf32>
    %174 = vector.broadcast %173 : vector<8x1xf32> to vector<8x32xf32>
    %175 = arith.subf %167, %174 : vector<8x32xf32>
    %176 = arith.mulf %175, %175 : vector<8x32xf32>
    %cst_85 = arith.constant dense<0.000000e+00> : vector<8xf32>
    %177 = vector.multi_reduction <add>, %176, %cst_85 [1] : vector<8x32xf32> to vector<8xf32>
    %178 = vector.shape_cast %177 : vector<8xf32> to vector<8x1xf32>
    %cst_86 = arith.constant 3.200000e+01 : f32
    %179 = vector.broadcast %cst_86 : f32 to vector<8x1xf32>
    %180 = arith.divf %178, %179 : vector<8x1xf32>
    %cst_87 = arith.constant 9.99999974E-6 : f32
    %181 = vector.broadcast %cst_87 : f32 to vector<8x1xf32>
    %182 = arith.addf %180, %181 : vector<8x1xf32>
    %183 = math.rsqrt %182 : vector<8x1xf32>
    %184 = vector.broadcast %183 : vector<8x1xf32> to vector<8x32xf32>
    %185 = arith.mulf %175, %184 : vector<8x32xf32>
    %186 = vector.broadcast %168 : vector<1x32xf32> to vector<8x32xf32>
    %187 = arith.mulf %185, %186 : vector<8x32xf32>
    %188 = vector.broadcast %169 : vector<1x32xf32> to vector<8x32xf32>
    %189 = arith.addf %187, %188 : vector<8x32xf32>
    %190 = arith.truncf %189 : vector<8x32xf32> to vector<8x32xbf16>
    %c0_88 = arith.constant 0 : index
    %c0_89 = arith.constant 0 : index
    %c0_90 = arith.constant 0 : index
    %191 = vector.load %arg12[%c0_88, %c0_89, %c0_90] : memref<1x8x32xbf16, #tpu.memory_space<vmem>>, vector<1x8x32xbf16>
    %192 = vector.shape_cast %191 : vector<1x8x32xbf16> to vector<8x32xbf16>
    %193 = vector.shape_cast %190 : vector<8x32xbf16> to vector<1x8x32xbf16>
    tpu.vector_store %arg12[%c0_88, %c0_89, %c0_90], %193 {strides = array<i32>} : memref<1x8x32xbf16, #tpu.memory_space<vmem>>, vector<1x8x32xbf16>,
    return
  }
  func.func @transform_0(%arg0: i32, %arg1: i32) -> (i32, i32, i32) {
    %c0_i32 = arith.constant 0 : i32
    %c0_i32_0 = arith.constant 0 : i32
    return %arg0, %arg1, %c0_i32 : i32, i32, i32
  }
  func.func @transform_1(%arg0: i32, %arg1: i32) -> (i32, i32, i32, i32) {
    %c0_i32 = arith.constant 0 : i32
    %c0_i32_0 = arith.constant 0 : i32
    %c0_i32_1 = arith.constant 0 : i32
    return %arg0, %c0_i32, %arg1, %c0_i32_0 : i32, i32, i32, i32
  }
  func.func @transform_2(%arg0: i32, %arg1: i32) -> (i32, i32, i32) {
    %c0_i32 = arith.constant 0 : i32
    %c0_i32_0 = arith.constant 0 : i32
    return %arg0, %c0_i32, %arg1 : i32, i32, i32
  }
  func.func @transform_3(%arg0: i32, %arg1: i32) -> (i32, i32, i32) {
    %c0_i32 = arith.constant 0 : i32
    %c0_i32_0 = arith.constant 0 : i32
    %c0_i32_1 = arith.constant 0 : i32
    return %arg0, %c0_i32, %c0_i32_0 : i32, i32, i32
  }
  func.func @transform_4(%arg0: i32, %arg1: i32) -> (i32, i32, i32) {
    %c0_i32 = arith.constant 0 : i32
    %c0_i32_0 = arith.constant 0 : i32
    %c0_i32_1 = arith.constant 0 : i32
    %c0_i32_2 = arith.constant 0 : i32
    return %c0_i32, %c0_i32_0, %c0_i32_1 : i32, i32, i32
  }
  func.func @transform_5(%arg0: i32, %arg1: i32) -> (i32, i32, i32) {
    %c0_i32 = arith.constant 0 : i32
    %c0_i32_0 = arith.constant 0 : i32
    %c0_i32_1 = arith.constant 0 : i32
    %c0_i32_2 = arith.constant 0 : i32
    return %c0_i32, %c0_i32_0, %c0_i32_1 : i32, i32, i32
  }
  func.func @transform_6(%arg0: i32, %arg1: i32) -> (i32, i32, i32) {
    %c0_i32 = arith.constant 0 : i32
    %c0_i32_0 = arith.constant 0 : i32
    %c0_i32_1 = arith.constant 0 : i32
    %c0_i32_2 = arith.constant 0 : i32
    return %c0_i32, %c0_i32_0, %c0_i32_1 : i32, i32, i32
  }
  func.func @transform_7(%arg0: i32, %arg1: i32) -> (i32, i32) {
    %c0_i32 = arith.constant 0 : i32
    %c0_i32_0 = arith.constant 0 : i32
    %c0_i32_1 = arith.constant 0 : i32
    return %c0_i32, %c0_i32_0 : i32, i32
  }
  func.func @transform_8(%arg0: i32, %arg1: i32) -> (i32, i32) {
    %c0_i32 = arith.constant 0 : i32
    %c0_i32_0 = arith.constant 0 : i32
    %c0_i32_1 = arith.constant 0 : i32
    return %c0_i32, %c0_i32_0 : i32, i32
  }
  func.func @transform_9(%arg0: i32, %arg1: i32) -> (i32, i32) {
    %c0_i32 = arith.constant 0 : i32
    %c0_i32_0 = arith.constant 0 : i32
    %c0_i32_1 = arith.constant 0 : i32
    return %c0_i32, %c0_i32_0 : i32, i32
  }
  func.func @transform_10(%arg0: i32, %arg1: i32) -> (i32, i32, i32) {
    %c0_i32 = arith.constant 0 : i32
    %c0_i32_0 = arith.constant 0 : i32
    return %arg0, %arg1, %c0_i32 : i32, i32, i32
  }
}

module attributes {stable_mosaic.version = 11 : i64} {
  func.func @_k_ffn_res_ln_hiwa(%arg0: i32, %arg1: memref<16x32xbf16, #tpu.memory_space<vmem>>, %arg2: memref<16x1xf32, #tpu.memory_space<vmem>>, %arg3: memref<32x64xbf16, #tpu.memory_space<vmem>>, %arg4: memref<1x64xf32, #tpu.memory_space<vmem>>, %arg5: memref<64x32xbf16, #tpu.memory_space<vmem>>, %arg6: memref<1x32xf32, #tpu.memory_space<vmem>>, %arg7: memref<1x32xf32, #tpu.memory_space<vmem>>, %arg8: memref<1x32xf32, #tpu.memory_space<vmem>>, %arg9: memref<32x32xbf16, #tpu.memory_space<vmem>>, %arg10: memref<1x32xf32, #tpu.memory_space<vmem>>, %arg11: memref<16x32xbf16, #tpu.memory_space<vmem>>, %arg12: memref<16x32xbf16, #tpu.memory_space<vmem>>) attributes {dimension_semantics = [#tpu.dimension_semantics<parallel>], iteration_bounds = array<i64: 1>, scalar_prefetch = 0 : i64, scratch_operands = 0 : i64, tpu.core_type = #tpu.core_type<tc>, window_params = [{transform_indices = @transform_0, window_bounds = array<i64: 16, 32>}, {transform_indices = @transform_1, window_bounds = array<i64: 16, 1>}, {pipeline_mode = #tpu.pipeline_mode<synchronous>, transform_indices = @transform_2, window_bounds = array<i64: 32, 64>}, {pipeline_mode = #tpu.pipeline_mode<synchronous>, transform_indices = @transform_3, window_bounds = array<i64: 1, 64>}, {pipeline_mode = #tpu.pipeline_mode<synchronous>, transform_indices = @transform_4, window_bounds = array<i64: 64, 32>}, {pipeline_mode = #tpu.pipeline_mode<synchronous>, transform_indices = @transform_5, window_bounds = array<i64: 1, 32>}, {pipeline_mode = #tpu.pipeline_mode<synchronous>, transform_indices = @transform_6, window_bounds = array<i64: 1, 32>}, {pipeline_mode = #tpu.pipeline_mode<synchronous>, transform_indices = @transform_7, window_bounds = array<i64: 1, 32>}, {pipeline_mode = #tpu.pipeline_mode<synchronous>, transform_indices = @transform_8, window_bounds = array<i64: 32, 32>}, {pipeline_mode = #tpu.pipeline_mode<synchronous>, transform_indices = @transform_9, window_bounds = array<i64: 1, 32>}, {transform_indices = @transform_10, window_bounds = array<i64: 16, 32>}, {transform_indices = @transform_11, window_bounds = array<i64: 16, 32>}]} {
    %c0 = arith.constant 0 : index
    %c0_0 = arith.constant 0 : index
    %0 = vector.load %arg1[%c0, %c0_0] : memref<16x32xbf16, #tpu.memory_space<vmem>>, vector<16x32xbf16>
    %1 = arith.extf %0 : vector<16x32xbf16> to vector<16x32xf32>
    %c0_1 = arith.constant 0 : index
    %c0_2 = arith.constant 0 : index
    %2 = vector.load %arg1[%c0_1, %c0_2] : memref<16x32xbf16, #tpu.memory_space<vmem>>, vector<16x32xbf16>
    %c0_3 = arith.constant 0 : index
    %c0_4 = arith.constant 0 : index
    %3 = vector.load %arg3[%c0_3, %c0_4] : memref<32x64xbf16, #tpu.memory_space<vmem>>, vector<32x64xbf16>
    %cst = arith.constant dense<0.000000e+00> : vector<16x64xf32>
    %4 = tpu.matmul %2, %3, %cst {dimension_numbers = #tpu.dot_dimension_numbers<[1], [0], [0], [1], [0, 0, 1, 1], [], []>} : vector<16x32xbf16>, vector<32x64xbf16>, vector<16x64xf32> -> vector<16x64xf32>
    %c0_5 = arith.constant 0 : index
    %c0_6 = arith.constant 0 : index
    %5 = vector.load %arg4[%c0_5, %c0_6] : memref<1x64xf32, #tpu.memory_space<vmem>>, vector<1x64xf32>
    %6 = vector.broadcast %5 : vector<1x64xf32> to vector<16x64xf32>
    %7 = arith.addf %4, %6 : vector<16x64xf32>
    %8 = arith.negf %7 : vector<16x64xf32>
    %9 = math.exp %8 : vector<16x64xf32>
    %cst_7 = arith.constant 1.000000e+00 : f32
    %10 = vector.broadcast %cst_7 : f32 to vector<16x64xf32>
    %11 = arith.addf %10, %9 : vector<16x64xf32>
    %12 = arith.divf %10, %11 : vector<16x64xf32>
    %13 = arith.mulf %7, %12 : vector<16x64xf32>
    %c0_8 = arith.constant 0 : index
    %c0_9 = arith.constant 0 : index
    %14 = vector.load %arg5[%c0_8, %c0_9] : memref<64x32xbf16, #tpu.memory_space<vmem>>, vector<64x32xbf16>
    %15 = arith.truncf %13 : vector<16x64xf32> to vector<16x64xbf16>
    %cst_10 = arith.constant dense<0.000000e+00> : vector<16x32xf32>
    %16 = tpu.matmul %15, %14, %cst_10 {dimension_numbers = #tpu.dot_dimension_numbers<[1], [0], [0], [1], [0, 0, 1, 1], [], []>} : vector<16x64xbf16>, vector<64x32xbf16>, vector<16x32xf32> -> vector<16x32xf32>
    %17 = arith.addf %1, %16 : vector<16x32xf32>
    %c0_11 = arith.constant 0 : index
    %c0_12 = arith.constant 0 : index
    %18 = vector.load %arg6[%c0_11, %c0_12] : memref<1x32xf32, #tpu.memory_space<vmem>>, vector<1x32xf32>
    %19 = vector.broadcast %18 : vector<1x32xf32> to vector<16x32xf32>
    %20 = arith.addf %17, %19 : vector<16x32xf32>
    %c0_13 = arith.constant 0 : index
    %c0_14 = arith.constant 0 : index
    %21 = vector.load %arg7[%c0_13, %c0_14] : memref<1x32xf32, #tpu.memory_space<vmem>>, vector<1x32xf32>
    %c0_15 = arith.constant 0 : index
    %c0_16 = arith.constant 0 : index
    %22 = vector.load %arg8[%c0_15, %c0_16] : memref<1x32xf32, #tpu.memory_space<vmem>>, vector<1x32xf32>
    %cst_17 = arith.constant dense<0.000000e+00> : vector<16xf32>
    %23 = vector.multi_reduction <add>, %20, %cst_17 [1] : vector<16x32xf32> to vector<16xf32>
    %24 = vector.shape_cast %23 : vector<16xf32> to vector<16x1xf32>
    %cst_18 = arith.constant 3.200000e+01 : f32
    %25 = vector.broadcast %cst_18 : f32 to vector<16x1xf32>
    %26 = arith.divf %24, %25 : vector<16x1xf32>
    %27 = vector.broadcast %26 : vector<16x1xf32> to vector<16x32xf32>
    %28 = arith.subf %20, %27 : vector<16x32xf32>
    %29 = arith.mulf %28, %28 : vector<16x32xf32>
    %cst_19 = arith.constant dense<0.000000e+00> : vector<16xf32>
    %30 = vector.multi_reduction <add>, %29, %cst_19 [1] : vector<16x32xf32> to vector<16xf32>
    %31 = vector.shape_cast %30 : vector<16xf32> to vector<16x1xf32>
    %cst_20 = arith.constant 3.200000e+01 : f32
    %32 = vector.broadcast %cst_20 : f32 to vector<16x1xf32>
    %33 = arith.divf %31, %32 : vector<16x1xf32>
    %cst_21 = arith.constant 9.99999974E-6 : f32
    %34 = vector.broadcast %cst_21 : f32 to vector<16x1xf32>
    %35 = arith.addf %33, %34 : vector<16x1xf32>
    %36 = math.rsqrt %35 : vector<16x1xf32>
    %37 = vector.broadcast %36 : vector<16x1xf32> to vector<16x32xf32>
    %38 = arith.mulf %28, %37 : vector<16x32xf32>
    %39 = vector.broadcast %21 : vector<1x32xf32> to vector<16x32xf32>
    %40 = arith.mulf %38, %39 : vector<16x32xf32>
    %41 = vector.broadcast %22 : vector<1x32xf32> to vector<16x32xf32>
    %42 = arith.addf %40, %41 : vector<16x32xf32>
    %c0_22 = arith.constant 0 : index
    %c0_23 = arith.constant 0 : index
    %43 = vector.load %arg2[%c0_22, %c0_23] : memref<16x1xf32, #tpu.memory_space<vmem>>, vector<16x1xf32>
    %44 = vector.broadcast %43 : vector<16x1xf32> to vector<16x32xf32>
    %45 = arith.mulf %42, %44 : vector<16x32xf32>
    %46 = arith.truncf %45 : vector<16x32xf32> to vector<16x32xbf16>
    %c0_24 = arith.constant 0 : index
    %c0_25 = arith.constant 0 : index
    %47 = vector.load %arg11[%c0_24, %c0_25] : memref<16x32xbf16, #tpu.memory_space<vmem>>, vector<16x32xbf16>
    tpu.vector_store %arg11[%c0_24, %c0_25], %46 {strides = array<i32>} : memref<16x32xbf16, #tpu.memory_space<vmem>>, vector<16x32xbf16>,
    %c0_26 = arith.constant 0 : index
    %c0_27 = arith.constant 0 : index
    %48 = vector.load %arg9[%c0_26, %c0_27] : memref<32x32xbf16, #tpu.memory_space<vmem>>, vector<32x32xbf16>
    %49 = arith.truncf %45 : vector<16x32xf32> to vector<16x32xbf16>
    %cst_28 = arith.constant dense<0.000000e+00> : vector<16x32xf32>
    %50 = tpu.matmul %49, %48, %cst_28 {dimension_numbers = #tpu.dot_dimension_numbers<[1], [0], [0], [1], [0, 0, 1, 1], [], []>} : vector<16x32xbf16>, vector<32x32xbf16>, vector<16x32xf32> -> vector<16x32xf32>
    %c0_29 = arith.constant 0 : index
    %c0_30 = arith.constant 0 : index
    %51 = vector.load %arg10[%c0_29, %c0_30] : memref<1x32xf32, #tpu.memory_space<vmem>>, vector<1x32xf32>
    %52 = vector.broadcast %51 : vector<1x32xf32> to vector<16x32xf32>
    %53 = arith.addf %50, %52 : vector<16x32xf32>
    %54 = arith.truncf %53 : vector<16x32xf32> to vector<16x32xbf16>
    %c0_31 = arith.constant 0 : index
    %c0_32 = arith.constant 0 : index
    %55 = vector.load %arg12[%c0_31, %c0_32] : memref<16x32xbf16, #tpu.memory_space<vmem>>, vector<16x32xbf16>
    tpu.vector_store %arg12[%c0_31, %c0_32], %54 {strides = array<i32>} : memref<16x32xbf16, #tpu.memory_space<vmem>>, vector<16x32xbf16>,
    return
  }
  func.func @transform_0(%arg0: i32) -> (i32, i32) {
    %c0_i32 = arith.constant 0 : i32
    %c0_i32_0 = arith.constant 0 : i32
    return %arg0, %c0_i32 : i32, i32
  }
  func.func @transform_1(%arg0: i32) -> (i32, i32) {
    %c0_i32 = arith.constant 0 : i32
    %c0_i32_0 = arith.constant 0 : i32
    return %arg0, %c0_i32 : i32, i32
  }
  func.func @transform_2(%arg0: i32) -> (i32, i32) {
    %c0_i32 = arith.constant 0 : i32
    %c0_i32_0 = arith.constant 0 : i32
    %c0_i32_1 = arith.constant 0 : i32
    return %c0_i32, %c0_i32_0 : i32, i32
  }
  func.func @transform_3(%arg0: i32) -> (i32, i32) {
    %c0_i32 = arith.constant 0 : i32
    %c0_i32_0 = arith.constant 0 : i32
    %c0_i32_1 = arith.constant 0 : i32
    return %c0_i32, %c0_i32_0 : i32, i32
  }
  func.func @transform_4(%arg0: i32) -> (i32, i32) {
    %c0_i32 = arith.constant 0 : i32
    %c0_i32_0 = arith.constant 0 : i32
    %c0_i32_1 = arith.constant 0 : i32
    return %c0_i32, %c0_i32_0 : i32, i32
  }
  func.func @transform_5(%arg0: i32) -> (i32, i32) {
    %c0_i32 = arith.constant 0 : i32
    %c0_i32_0 = arith.constant 0 : i32
    %c0_i32_1 = arith.constant 0 : i32
    return %c0_i32, %c0_i32_0 : i32, i32
  }
  func.func @transform_6(%arg0: i32) -> (i32, i32) {
    %c0_i32 = arith.constant 0 : i32
    %c0_i32_0 = arith.constant 0 : i32
    %c0_i32_1 = arith.constant 0 : i32
    return %c0_i32, %c0_i32_0 : i32, i32
  }
  func.func @transform_7(%arg0: i32) -> (i32, i32) {
    %c0_i32 = arith.constant 0 : i32
    %c0_i32_0 = arith.constant 0 : i32
    %c0_i32_1 = arith.constant 0 : i32
    return %c0_i32, %c0_i32_0 : i32, i32
  }
  func.func @transform_8(%arg0: i32) -> (i32, i32) {
    %c0_i32 = arith.constant 0 : i32
    %c0_i32_0 = arith.constant 0 : i32
    %c0_i32_1 = arith.constant 0 : i32
    return %c0_i32, %c0_i32_0 : i32, i32
  }
  func.func @transform_9(%arg0: i32) -> (i32, i32) {
    %c0_i32 = arith.constant 0 : i32
    %c0_i32_0 = arith.constant 0 : i32
    %c0_i32_1 = arith.constant 0 : i32
    return %c0_i32, %c0_i32_0 : i32, i32
  }
  func.func @transform_10(%arg0: i32) -> (i32, i32) {
    %c0_i32 = arith.constant 0 : i32
    %c0_i32_0 = arith.constant 0 : i32
    return %arg0, %c0_i32 : i32, i32
  }
  func.func @transform_11(%arg0: i32) -> (i32, i32) {
    %c0_i32 = arith.constant 0 : i32
    %c0_i32_0 = arith.constant 0 : i32
    return %arg0, %c0_i32 : i32, i32
  }
}

module attributes {stable_mosaic.version = 11 : i64} {
  func.func @_k_edge_upd(%arg0: i32, %arg1: i32, %arg2: i32, %arg3: memref<1x1x8x32xbf16, #tpu.memory_space<vmem>>, %arg4: memref<1x1x8x32xbf16, #tpu.memory_space<vmem>>, %arg5: memref<1x8x32xbf16, #tpu.memory_space<vmem>>, %arg6: memref<64x32xbf16, #tpu.memory_space<vmem>>, %arg7: memref<1x32xf32, #tpu.memory_space<vmem>>, %arg8: memref<1x32xf32, #tpu.memory_space<vmem>>, %arg9: memref<1x1x8x32xbf16, #tpu.memory_space<vmem>>) attributes {dimension_semantics = [#tpu.dimension_semantics<parallel>, #tpu.dimension_semantics<parallel>, #tpu.dimension_semantics<parallel>], iteration_bounds = array<i64: 2, 1, 5>, scalar_prefetch = 0 : i64, scratch_operands = 0 : i64, tpu.core_type = #tpu.core_type<tc>, window_params = [{transform_indices = @transform_0, window_bounds = array<i64: 1, 1, 8, 32>}, {transform_indices = @transform_1, window_bounds = array<i64: 1, 1, 8, 32>}, {transform_indices = @transform_2, window_bounds = array<i64: 1, 8, 32>}, {pipeline_mode = #tpu.pipeline_mode<synchronous>, transform_indices = @transform_3, window_bounds = array<i64: 64, 32>}, {pipeline_mode = #tpu.pipeline_mode<synchronous>, transform_indices = @transform_4, window_bounds = array<i64: 1, 32>}, {pipeline_mode = #tpu.pipeline_mode<synchronous>, transform_indices = @transform_5, window_bounds = array<i64: 1, 32>}, {transform_indices = @transform_6, window_bounds = array<i64: 1, 1, 8, 32>}]} {
    %c0 = arith.constant 0 : index
    %c0_0 = arith.constant 0 : index
    %c0_1 = arith.constant 0 : index
    %c0_2 = arith.constant 0 : index
    %0 = vector.load %arg3[%c0, %c0_0, %c0_1, %c0_2] : memref<1x1x8x32xbf16, #tpu.memory_space<vmem>>, vector<1x1x8x32xbf16>
    %1 = vector.shape_cast %0 : vector<1x1x8x32xbf16> to vector<8x32xbf16>
    %c0_3 = arith.constant 0 : index
    %c0_4 = arith.constant 0 : index
    %c0_5 = arith.constant 0 : index
    %c0_6 = arith.constant 0 : index
    %2 = vector.load %arg4[%c0_3, %c0_4, %c0_5, %c0_6] : memref<1x1x8x32xbf16, #tpu.memory_space<vmem>>, vector<1x1x8x32xbf16>
    %3 = vector.shape_cast %2 : vector<1x1x8x32xbf16> to vector<8x32xbf16>
    %4 = tpu.concatenate %1, %3 in 1 : vector<8x32xbf16>, vector<8x32xbf16> -> vector<8x64xbf16>
    %5 = arith.extf %1 : vector<8x32xbf16> to vector<8x32xf32>
    %c0_7 = arith.constant 0 : index
    %c0_8 = arith.constant 0 : index
    %c0_9 = arith.constant 0 : index
    %6 = vector.load %arg5[%c0_7, %c0_8, %c0_9] : memref<1x8x32xbf16, #tpu.memory_space<vmem>>, vector<1x8x32xbf16>
    %7 = vector.shape_cast %6 : vector<1x8x32xbf16> to vector<8x32xbf16>
    %8 = arith.extf %7 : vector<8x32xbf16> to vector<8x32xf32>
    %9 = arith.addf %5, %8 : vector<8x32xf32>
    %c0_10 = arith.constant 0 : index
    %c0_11 = arith.constant 0 : index
    %10 = vector.load %arg6[%c0_10, %c0_11] : memref<64x32xbf16, #tpu.memory_space<vmem>>, vector<64x32xbf16>
    %cst = arith.constant dense<0.000000e+00> : vector<8x32xf32>
    %11 = tpu.matmul %4, %10, %cst {dimension_numbers = #tpu.dot_dimension_numbers<[1], [0], [0], [1], [0, 0, 1, 1], [], []>} : vector<8x64xbf16>, vector<64x32xbf16>, vector<8x32xf32> -> vector<8x32xf32>
    %12 = arith.addf %9, %11 : vector<8x32xf32>
    %c0_12 = arith.constant 0 : index
    %c0_13 = arith.constant 0 : index
    %13 = vector.load %arg7[%c0_12, %c0_13] : memref<1x32xf32, #tpu.memory_space<vmem>>, vector<1x32xf32>
    %c0_14 = arith.constant 0 : index
    %c0_15 = arith.constant 0 : index
    %14 = vector.load %arg8[%c0_14, %c0_15] : memref<1x32xf32, #tpu.memory_space<vmem>>, vector<1x32xf32>
    %cst_16 = arith.constant dense<0.000000e+00> : vector<8xf32>
    %15 = vector.multi_reduction <add>, %12, %cst_16 [1] : vector<8x32xf32> to vector<8xf32>
    %16 = vector.shape_cast %15 : vector<8xf32> to vector<8x1xf32>
    %cst_17 = arith.constant 3.200000e+01 : f32
    %17 = vector.broadcast %cst_17 : f32 to vector<8x1xf32>
    %18 = arith.divf %16, %17 : vector<8x1xf32>
    %19 = vector.broadcast %18 : vector<8x1xf32> to vector<8x32xf32>
    %20 = arith.subf %12, %19 : vector<8x32xf32>
    %21 = arith.mulf %20, %20 : vector<8x32xf32>
    %cst_18 = arith.constant dense<0.000000e+00> : vector<8xf32>
    %22 = vector.multi_reduction <add>, %21, %cst_18 [1] : vector<8x32xf32> to vector<8xf32>
    %23 = vector.shape_cast %22 : vector<8xf32> to vector<8x1xf32>
    %cst_19 = arith.constant 3.200000e+01 : f32
    %24 = vector.broadcast %cst_19 : f32 to vector<8x1xf32>
    %25 = arith.divf %23, %24 : vector<8x1xf32>
    %cst_20 = arith.constant 9.99999974E-6 : f32
    %26 = vector.broadcast %cst_20 : f32 to vector<8x1xf32>
    %27 = arith.addf %25, %26 : vector<8x1xf32>
    %28 = math.rsqrt %27 : vector<8x1xf32>
    %29 = vector.broadcast %28 : vector<8x1xf32> to vector<8x32xf32>
    %30 = arith.mulf %20, %29 : vector<8x32xf32>
    %31 = vector.broadcast %13 : vector<1x32xf32> to vector<8x32xf32>
    %32 = arith.mulf %30, %31 : vector<8x32xf32>
    %33 = vector.broadcast %14 : vector<1x32xf32> to vector<8x32xf32>
    %34 = arith.addf %32, %33 : vector<8x32xf32>
    %35 = arith.truncf %34 : vector<8x32xf32> to vector<8x32xbf16>
    %c0_21 = arith.constant 0 : index
    %c0_22 = arith.constant 0 : index
    %c0_23 = arith.constant 0 : index
    %c0_24 = arith.constant 0 : index
    %36 = vector.load %arg9[%c0_21, %c0_22, %c0_23, %c0_24] : memref<1x1x8x32xbf16, #tpu.memory_space<vmem>>, vector<1x1x8x32xbf16>
    %37 = vector.shape_cast %36 : vector<1x1x8x32xbf16> to vector<8x32xbf16>
    %38 = vector.shape_cast %35 : vector<8x32xbf16> to vector<1x1x8x32xbf16>
    tpu.vector_store %arg9[%c0_21, %c0_22, %c0_23, %c0_24], %38 {strides = array<i32>} : memref<1x1x8x32xbf16, #tpu.memory_space<vmem>>, vector<1x1x8x32xbf16>,
    return
  }
  func.func @transform_0(%arg0: i32, %arg1: i32, %arg2: i32) -> (i32, i32, i32, i32) {
    %c0_i32 = arith.constant 0 : i32
    %c0_i32_0 = arith.constant 0 : i32
    return %arg0, %arg2, %arg1, %c0_i32 : i32, i32, i32, i32
  }
  func.func @transform_1(%arg0: i32, %arg1: i32, %arg2: i32) -> (i32, i32, i32, i32) {
    %c0_i32 = arith.constant 0 : i32
    %c0_i32_0 = arith.constant 0 : i32
    return %arg0, %arg2, %arg1, %c0_i32 : i32, i32, i32, i32
  }
  func.func @transform_2(%arg0: i32, %arg1: i32, %arg2: i32) -> (i32, i32, i32) {
    %c0_i32 = arith.constant 0 : i32
    %c0_i32_0 = arith.constant 0 : i32
    return %arg0, %arg1, %c0_i32 : i32, i32, i32
  }
  func.func @transform_3(%arg0: i32, %arg1: i32, %arg2: i32) -> (i32, i32) {
    %c0_i32 = arith.constant 0 : i32
    %c0_i32_0 = arith.constant 0 : i32
    %c0_i32_1 = arith.constant 0 : i32
    return %c0_i32, %c0_i32_0 : i32, i32
  }
  func.func @transform_4(%arg0: i32, %arg1: i32, %arg2: i32) -> (i32, i32) {
    %c0_i32 = arith.constant 0 : i32
    %c0_i32_0 = arith.constant 0 : i32
    %c0_i32_1 = arith.constant 0 : i32
    return %c0_i32, %c0_i32_0 : i32, i32
  }
  func.func @transform_5(%arg0: i32, %arg1: i32, %arg2: i32) -> (i32, i32) {
    %c0_i32 = arith.constant 0 : i32
    %c0_i32_0 = arith.constant 0 : i32
    %c0_i32_1 = arith.constant 0 : i32
    return %c0_i32, %c0_i32_0 : i32, i32
  }
  func.func @transform_6(%arg0: i32, %arg1: i32, %arg2: i32) -> (i32, i32, i32, i32) {
    %c0_i32 = arith.constant 0 : i32
    %c0_i32_0 = arith.constant 0 : i32
    return %arg0, %arg2, %arg1, %c0_i32 : i32, i32, i32, i32
  }
}

module attributes {stable_mosaic.version = 11 : i64} {
  func.func @_k_ffn_res_ln_hiwa(%arg0: i32, %arg1: memref<16x32xbf16, #tpu.memory_space<vmem>>, %arg2: memref<16x1xf32, #tpu.memory_space<vmem>>, %arg3: memref<32x64xbf16, #tpu.memory_space<vmem>>, %arg4: memref<1x64xf32, #tpu.memory_space<vmem>>, %arg5: memref<64x32xbf16, #tpu.memory_space<vmem>>, %arg6: memref<1x32xf32, #tpu.memory_space<vmem>>, %arg7: memref<1x32xf32, #tpu.memory_space<vmem>>, %arg8: memref<1x32xf32, #tpu.memory_space<vmem>>, %arg9: memref<32x32xbf16, #tpu.memory_space<vmem>>, %arg10: memref<1x32xf32, #tpu.memory_space<vmem>>, %arg11: memref<16x32xbf16, #tpu.memory_space<vmem>>, %arg12: memref<16x32xbf16, #tpu.memory_space<vmem>>) attributes {dimension_semantics = [#tpu.dimension_semantics<parallel>], iteration_bounds = array<i64: 1>, scalar_prefetch = 0 : i64, scratch_operands = 0 : i64, tpu.core_type = #tpu.core_type<tc>, window_params = [{transform_indices = @transform_0, window_bounds = array<i64: 16, 32>}, {transform_indices = @transform_1, window_bounds = array<i64: 16, 1>}, {pipeline_mode = #tpu.pipeline_mode<synchronous>, transform_indices = @transform_2, window_bounds = array<i64: 32, 64>}, {pipeline_mode = #tpu.pipeline_mode<synchronous>, transform_indices = @transform_3, window_bounds = array<i64: 1, 64>}, {pipeline_mode = #tpu.pipeline_mode<synchronous>, transform_indices = @transform_4, window_bounds = array<i64: 64, 32>}, {pipeline_mode = #tpu.pipeline_mode<synchronous>, transform_indices = @transform_5, window_bounds = array<i64: 1, 32>}, {pipeline_mode = #tpu.pipeline_mode<synchronous>, transform_indices = @transform_6, window_bounds = array<i64: 1, 32>}, {pipeline_mode = #tpu.pipeline_mode<synchronous>, transform_indices = @transform_7, window_bounds = array<i64: 1, 32>}, {pipeline_mode = #tpu.pipeline_mode<synchronous>, transform_indices = @transform_8, window_bounds = array<i64: 32, 32>}, {pipeline_mode = #tpu.pipeline_mode<synchronous>, transform_indices = @transform_9, window_bounds = array<i64: 1, 32>}, {transform_indices = @transform_10, window_bounds = array<i64: 16, 32>}, {transform_indices = @transform_11, window_bounds = array<i64: 16, 32>}]} {
    %c0 = arith.constant 0 : index
    %c0_0 = arith.constant 0 : index
    %0 = vector.load %arg1[%c0, %c0_0] : memref<16x32xbf16, #tpu.memory_space<vmem>>, vector<16x32xbf16>
    %1 = arith.extf %0 : vector<16x32xbf16> to vector<16x32xf32>
    %c0_1 = arith.constant 0 : index
    %c0_2 = arith.constant 0 : index
    %2 = vector.load %arg1[%c0_1, %c0_2] : memref<16x32xbf16, #tpu.memory_space<vmem>>, vector<16x32xbf16>
    %c0_3 = arith.constant 0 : index
    %c0_4 = arith.constant 0 : index
    %3 = vector.load %arg3[%c0_3, %c0_4] : memref<32x64xbf16, #tpu.memory_space<vmem>>, vector<32x64xbf16>
    %cst = arith.constant dense<0.000000e+00> : vector<16x64xf32>
    %4 = tpu.matmul %2, %3, %cst {dimension_numbers = #tpu.dot_dimension_numbers<[1], [0], [0], [1], [0, 0, 1, 1], [], []>} : vector<16x32xbf16>, vector<32x64xbf16>, vector<16x64xf32> -> vector<16x64xf32>
    %c0_5 = arith.constant 0 : index
    %c0_6 = arith.constant 0 : index
    %5 = vector.load %arg4[%c0_5, %c0_6] : memref<1x64xf32, #tpu.memory_space<vmem>>, vector<1x64xf32>
    %6 = vector.broadcast %5 : vector<1x64xf32> to vector<16x64xf32>
    %7 = arith.addf %4, %6 : vector<16x64xf32>
    %8 = arith.negf %7 : vector<16x64xf32>
    %9 = math.exp %8 : vector<16x64xf32>
    %cst_7 = arith.constant 1.000000e+00 : f32
    %10 = vector.broadcast %cst_7 : f32 to vector<16x64xf32>
    %11 = arith.addf %10, %9 : vector<16x64xf32>
    %12 = arith.divf %10, %11 : vector<16x64xf32>
    %13 = arith.mulf %7, %12 : vector<16x64xf32>
    %c0_8 = arith.constant 0 : index
    %c0_9 = arith.constant 0 : index
    %14 = vector.load %arg5[%c0_8, %c0_9] : memref<64x32xbf16, #tpu.memory_space<vmem>>, vector<64x32xbf16>
    %15 = arith.truncf %13 : vector<16x64xf32> to vector<16x64xbf16>
    %cst_10 = arith.constant dense<0.000000e+00> : vector<16x32xf32>
    %16 = tpu.matmul %15, %14, %cst_10 {dimension_numbers = #tpu.dot_dimension_numbers<[1], [0], [0], [1], [0, 0, 1, 1], [], []>} : vector<16x64xbf16>, vector<64x32xbf16>, vector<16x32xf32> -> vector<16x32xf32>
    %17 = arith.addf %1, %16 : vector<16x32xf32>
    %c0_11 = arith.constant 0 : index
    %c0_12 = arith.constant 0 : index
    %18 = vector.load %arg6[%c0_11, %c0_12] : memref<1x32xf32, #tpu.memory_space<vmem>>, vector<1x32xf32>
    %19 = vector.broadcast %18 : vector<1x32xf32> to vector<16x32xf32>
    %20 = arith.addf %17, %19 : vector<16x32xf32>
    %c0_13 = arith.constant 0 : index
    %c0_14 = arith.constant 0 : index
    %21 = vector.load %arg7[%c0_13, %c0_14] : memref<1x32xf32, #tpu.memory_space<vmem>>, vector<1x32xf32>
    %c0_15 = arith.constant 0 : index
    %c0_16 = arith.constant 0 : index
    %22 = vector.load %arg8[%c0_15, %c0_16] : memref<1x32xf32, #tpu.memory_space<vmem>>, vector<1x32xf32>
    %cst_17 = arith.constant dense<0.000000e+00> : vector<16xf32>
    %23 = vector.multi_reduction <add>, %20, %cst_17 [1] : vector<16x32xf32> to vector<16xf32>
    %24 = vector.shape_cast %23 : vector<16xf32> to vector<16x1xf32>
    %cst_18 = arith.constant 3.200000e+01 : f32
    %25 = vector.broadcast %cst_18 : f32 to vector<16x1xf32>
    %26 = arith.divf %24, %25 : vector<16x1xf32>
    %27 = vector.broadcast %26 : vector<16x1xf32> to vector<16x32xf32>
    %28 = arith.subf %20, %27 : vector<16x32xf32>
    %29 = arith.mulf %28, %28 : vector<16x32xf32>
    %cst_19 = arith.constant dense<0.000000e+00> : vector<16xf32>
    %30 = vector.multi_reduction <add>, %29, %cst_19 [1] : vector<16x32xf32> to vector<16xf32>
    %31 = vector.shape_cast %30 : vector<16xf32> to vector<16x1xf32>
    %cst_20 = arith.constant 3.200000e+01 : f32
    %32 = vector.broadcast %cst_20 : f32 to vector<16x1xf32>
    %33 = arith.divf %31, %32 : vector<16x1xf32>
    %cst_21 = arith.constant 9.99999974E-6 : f32
    %34 = vector.broadcast %cst_21 : f32 to vector<16x1xf32>
    %35 = arith.addf %33, %34 : vector<16x1xf32>
    %36 = math.rsqrt %35 : vector<16x1xf32>
    %37 = vector.broadcast %36 : vector<16x1xf32> to vector<16x32xf32>
    %38 = arith.mulf %28, %37 : vector<16x32xf32>
    %39 = vector.broadcast %21 : vector<1x32xf32> to vector<16x32xf32>
    %40 = arith.mulf %38, %39 : vector<16x32xf32>
    %41 = vector.broadcast %22 : vector<1x32xf32> to vector<16x32xf32>
    %42 = arith.addf %40, %41 : vector<16x32xf32>
    %c0_22 = arith.constant 0 : index
    %c0_23 = arith.constant 0 : index
    %43 = vector.load %arg2[%c0_22, %c0_23] : memref<16x1xf32, #tpu.memory_space<vmem>>, vector<16x1xf32>
    %44 = vector.broadcast %43 : vector<16x1xf32> to vector<16x32xf32>
    %45 = arith.mulf %42, %44 : vector<16x32xf32>
    %46 = arith.truncf %45 : vector<16x32xf32> to vector<16x32xbf16>
    %c0_24 = arith.constant 0 : index
    %c0_25 = arith.constant 0 : index
    %47 = vector.load %arg11[%c0_24, %c0_25] : memref<16x32xbf16, #tpu.memory_space<vmem>>, vector<16x32xbf16>
    tpu.vector_store %arg11[%c0_24, %c0_25], %46 {strides = array<i32>} : memref<16x32xbf16, #tpu.memory_space<vmem>>, vector<16x32xbf16>,
    %c0_26 = arith.constant 0 : index
    %c0_27 = arith.constant 0 : index
    %48 = vector.load %arg9[%c0_26, %c0_27] : memref<32x32xbf16, #tpu.memory_space<vmem>>, vector<32x32xbf16>
    %49 = arith.truncf %45 : vector<16x32xf32> to vector<16x32xbf16>
    %cst_28 = arith.constant dense<0.000000e+00> : vector<16x32xf32>
    %50 = tpu.matmul %49, %48, %cst_28 {dimension_numbers = #tpu.dot_dimension_numbers<[1], [0], [0], [1], [0, 0, 1, 1], [], []>} : vector<16x32xbf16>, vector<32x32xbf16>, vector<16x32xf32> -> vector<16x32xf32>
    %c0_29 = arith.constant 0 : index
    %c0_30 = arith.constant 0 : index
    %51 = vector.load %arg10[%c0_29, %c0_30] : memref<1x32xf32, #tpu.memory_space<vmem>>, vector<1x32xf32>
    %52 = vector.broadcast %51 : vector<1x32xf32> to vector<16x32xf32>
    %53 = arith.addf %50, %52 : vector<16x32xf32>
    %54 = arith.truncf %53 : vector<16x32xf32> to vector<16x32xbf16>
    %c0_31 = arith.constant 0 : index
    %c0_32 = arith.constant 0 : index
    %55 = vector.load %arg12[%c0_31, %c0_32] : memref<16x32xbf16, #tpu.memory_space<vmem>>, vector<16x32xbf16>
    tpu.vector_store %arg12[%c0_31, %c0_32], %54 {strides = array<i32>} : memref<16x32xbf16, #tpu.memory_space<vmem>>, vector<16x32xbf16>,
    return
  }
  func.func @transform_0(%arg0: i32) -> (i32, i32) {
    %c0_i32 = arith.constant 0 : i32
    %c0_i32_0 = arith.constant 0 : i32
    return %arg0, %c0_i32 : i32, i32
  }
  func.func @transform_1(%arg0: i32) -> (i32, i32) {
    %c0_i32 = arith.constant 0 : i32
    %c0_i32_0 = arith.constant 0 : i32
    return %arg0, %c0_i32 : i32, i32
  }
  func.func @transform_2(%arg0: i32) -> (i32, i32) {
    %c0_i32 = arith.constant 0 : i32
    %c0_i32_0 = arith.constant 0 : i32
    %c0_i32_1 = arith.constant 0 : i32
    return %c0_i32, %c0_i32_0 : i32, i32
  }
  func.func @transform_3(%arg0: i32) -> (i32, i32) {
    %c0_i32 = arith.constant 0 : i32
    %c0_i32_0 = arith.constant 0 : i32
    %c0_i32_1 = arith.constant 0 : i32
    return %c0_i32, %c0_i32_0 : i32, i32
  }
  func.func @transform_4(%arg0: i32) -> (i32, i32) {
    %c0_i32 = arith.constant 0 : i32
    %c0_i32_0 = arith.constant 0 : i32
    %c0_i32_1 = arith.constant 0 : i32
    return %c0_i32, %c0_i32_0 : i32, i32
  }
  func.func @transform_5(%arg0: i32) -> (i32, i32) {
    %c0_i32 = arith.constant 0 : i32
    %c0_i32_0 = arith.constant 0 : i32
    %c0_i32_1 = arith.constant 0 : i32
    return %c0_i32, %c0_i32_0 : i32, i32
  }
  func.func @transform_6(%arg0: i32) -> (i32, i32) {
    %c0_i32 = arith.constant 0 : i32
    %c0_i32_0 = arith.constant 0 : i32
    %c0_i32_1 = arith.constant 0 : i32
    return %c0_i32, %c0_i32_0 : i32, i32
  }
  func.func @transform_7(%arg0: i32) -> (i32, i32) {
    %c0_i32 = arith.constant 0 : i32
    %c0_i32_0 = arith.constant 0 : i32
    %c0_i32_1 = arith.constant 0 : i32
    return %c0_i32, %c0_i32_0 : i32, i32
  }
  func.func @transform_8(%arg0: i32) -> (i32, i32) {
    %c0_i32 = arith.constant 0 : i32
    %c0_i32_0 = arith.constant 0 : i32
    %c0_i32_1 = arith.constant 0 : i32
    return %c0_i32, %c0_i32_0 : i32, i32
  }
  func.func @transform_9(%arg0: i32) -> (i32, i32) {
    %c0_i32 = arith.constant 0 : i32
    %c0_i32_0 = arith.constant 0 : i32
    %c0_i32_1 = arith.constant 0 : i32
    return %c0_i32, %c0_i32_0 : i32, i32
  }
  func.func @transform_10(%arg0: i32) -> (i32, i32) {
    %c0_i32 = arith.constant 0 : i32
    %c0_i32_0 = arith.constant 0 : i32
    return %arg0, %c0_i32 : i32, i32
  }
  func.func @transform_11(%arg0: i32) -> (i32, i32) {
    %c0_i32 = arith.constant 0 : i32
    %c0_i32_0 = arith.constant 0 : i32
    return %arg0, %c0_i32 : i32, i32
  }
}

module attributes {stable_mosaic.version = 11 : i64} {
  func.func @_k_out_mlp(%arg0: i32, %arg1: memref<16x32xbf16, #tpu.memory_space<vmem>>, %arg2: memref<32x16xbf16, #tpu.memory_space<vmem>>, %arg3: memref<1x16xf32, #tpu.memory_space<vmem>>, %arg4: memref<1x16xf32, #tpu.memory_space<vmem>>, %arg5: memref<1x1xf32, #tpu.memory_space<vmem>>, %arg6: memref<16x1xf32, #tpu.memory_space<vmem>>) attributes {dimension_semantics = [#tpu.dimension_semantics<parallel>], iteration_bounds = array<i64: 1>, scalar_prefetch = 0 : i64, scratch_operands = 0 : i64, tpu.core_type = #tpu.core_type<tc>, window_params = [{transform_indices = @transform_0, window_bounds = array<i64: 16, 32>}, {pipeline_mode = #tpu.pipeline_mode<synchronous>, transform_indices = @transform_1, window_bounds = array<i64: 32, 16>}, {pipeline_mode = #tpu.pipeline_mode<synchronous>, transform_indices = @transform_2, window_bounds = array<i64: 1, 16>}, {pipeline_mode = #tpu.pipeline_mode<synchronous>, transform_indices = @transform_3, window_bounds = array<i64: 1, 16>}, {pipeline_mode = #tpu.pipeline_mode<synchronous>, transform_indices = @transform_4, window_bounds = array<i64: 1, 1>}, {transform_indices = @transform_5, window_bounds = array<i64: 16, 1>}]} {
    %c0 = arith.constant 0 : index
    %c0_0 = arith.constant 0 : index
    %0 = vector.load %arg1[%c0, %c0_0] : memref<16x32xbf16, #tpu.memory_space<vmem>>, vector<16x32xbf16>
    %c0_1 = arith.constant 0 : index
    %c0_2 = arith.constant 0 : index
    %1 = vector.load %arg2[%c0_1, %c0_2] : memref<32x16xbf16, #tpu.memory_space<vmem>>, vector<32x16xbf16>
    %cst = arith.constant dense<0.000000e+00> : vector<16x16xf32>
    %2 = tpu.matmul %0, %1, %cst {dimension_numbers = #tpu.dot_dimension_numbers<[1], [0], [0], [1], [0, 0, 1, 1], [], []>} : vector<16x32xbf16>, vector<32x16xbf16>, vector<16x16xf32> -> vector<16x16xf32>
    %c0_3 = arith.constant 0 : index
    %c0_4 = arith.constant 0 : index
    %3 = vector.load %arg3[%c0_3, %c0_4] : memref<1x16xf32, #tpu.memory_space<vmem>>, vector<1x16xf32>
    %4 = vector.broadcast %3 : vector<1x16xf32> to vector<16x16xf32>
    %5 = arith.addf %2, %4 : vector<16x16xf32>
    %6 = arith.negf %5 : vector<16x16xf32>
    %7 = math.exp %6 : vector<16x16xf32>
    %cst_5 = arith.constant 1.000000e+00 : f32
    %8 = vector.broadcast %cst_5 : f32 to vector<16x16xf32>
    %9 = arith.addf %8, %7 : vector<16x16xf32>
    %10 = arith.divf %8, %9 : vector<16x16xf32>
    %11 = arith.mulf %5, %10 : vector<16x16xf32>
    %c0_6 = arith.constant 0 : index
    %c0_7 = arith.constant 0 : index
    %12 = vector.load %arg4[%c0_6, %c0_7] : memref<1x16xf32, #tpu.memory_space<vmem>>, vector<1x16xf32>
    %13 = vector.broadcast %12 : vector<1x16xf32> to vector<16x16xf32>
    %14 = arith.mulf %11, %13 : vector<16x16xf32>
    %cst_8 = arith.constant dense<0.000000e+00> : vector<16xf32>
    %15 = vector.multi_reduction <add>, %14, %cst_8 [1] : vector<16x16xf32> to vector<16xf32>
    %16 = vector.shape_cast %15 : vector<16xf32> to vector<16x1xf32>
    %c0_9 = arith.constant 0 : index
    %c0_10 = arith.constant 0 : index
    %17 = vector.load %arg5[%c0_9, %c0_10] : memref<1x1xf32, #tpu.memory_space<vmem>>, vector<1x1xf32>
    %18 = vector.broadcast %17 : vector<1x1xf32> to vector<16x1xf32>
    %19 = arith.addf %16, %18 : vector<16x1xf32>
    %c0_11 = arith.constant 0 : index
    %c0_12 = arith.constant 0 : index
    %20 = vector.load %arg6[%c0_11, %c0_12] : memref<16x1xf32, #tpu.memory_space<vmem>>, vector<16x1xf32>
    tpu.vector_store %arg6[%c0_11, %c0_12], %19 {strides = array<i32>} : memref<16x1xf32, #tpu.memory_space<vmem>>, vector<16x1xf32>,
    return
  }
  func.func @transform_0(%arg0: i32) -> (i32, i32) {
    %c0_i32 = arith.constant 0 : i32
    %c0_i32_0 = arith.constant 0 : i32
    return %arg0, %c0_i32 : i32, i32
  }
  func.func @transform_1(%arg0: i32) -> (i32, i32) {
    %c0_i32 = arith.constant 0 : i32
    %c0_i32_0 = arith.constant 0 : i32
    %c0_i32_1 = arith.constant 0 : i32
    return %c0_i32, %c0_i32_0 : i32, i32
  }
  func.func @transform_2(%arg0: i32) -> (i32, i32) {
    %c0_i32 = arith.constant 0 : i32
    %c0_i32_0 = arith.constant 0 : i32
    %c0_i32_1 = arith.constant 0 : i32
    return %c0_i32, %c0_i32_0 : i32, i32
  }
  func.func @transform_3(%arg0: i32) -> (i32, i32) {
    %c0_i32 = arith.constant 0 : i32
    %c0_i32_0 = arith.constant 0 : i32
    %c0_i32_1 = arith.constant 0 : i32
    return %c0_i32, %c0_i32_0 : i32, i32
  }
  func.func @transform_4(%arg0: i32) -> (i32, i32) {
    %c0_i32 = arith.constant 0 : i32
    %c0_i32_0 = arith.constant 0 : i32
    %c0_i32_1 = arith.constant 0 : i32
    return %c0_i32, %c0_i32_0 : i32, i32
  }
  func.func @transform_5(%arg0: i32) -> (i32, i32) {
    %c0_i32 = arith.constant 0 : i32
    %c0_i32_0 = arith.constant 0 : i32
    return %arg0, %c0_i32 : i32, i32
  }
}

</mosaic_0001>

<llo_original>
// kernel: neg.9
$region0: #{neg.9}
  #allocation0 [shape = 's32[1]{0}', space=sflag, size = 0x4, scoped, tag = 'scoped memory for neg.9']
  %s0 = inlined_call_operand.vmem [shape: f32[2,8,8], index: 0, kind: input, shape index: {}]
  %s1 = inlined_call_operand.vmem [shape: f32[2,8,8], index: 1, kind: output, shape index: {}]
  %v2 = vld [vmem:[%s0] sm:$0xff]
  %3 = xla_tuple %v2
  %4 = xla_tuple %3
  %v5 = vxor.u32 %v2, 2147483648
  %6 = xla_tuple %v5
  %7 = vst [vmem:[%s1] sm:$0xff] %v5
  %s8 = scalar_lea.vmem %s0, 8
  %v9 = vld [vmem:[%s8] sm:$0xff]
  %10 = xla_tuple %v9
  %11 = xla_tuple %10
  %v12 = vxor.u32 %v9, 2147483648
  %13 = xla_tuple %v12
  %s14 = scalar_lea.vmem %s1, 8
  %15 = vst [vmem:[%s14] sm:$0xff] %v12

// kernel: sub.72
$region0: #{sub.72}
  #allocation0 [shape = 's32[1]{0}', space=sflag, size = 0x4, scoped, tag = 'scoped memory for sub.72']
  %s0 = inlined_call_operand.vmem [shape: f32[2,8,3], index: 0, kind: input, shape index: {}]
  %s1 = inlined_call_operand.vmem [shape: f32[2,8,5,3], index: 1, kind: output, shape index: {}]
  // Predicated region
  $region2: #{sub.72} parent=0 // pred_check
    _
  $region3: #{sub.72} parent=0 // pred_check_branch
    %3 = sbr.rel (0) target = $region5
  $region4: #{sub.72} parent=0 // pred_region
    _
  $region5: #{sub.72} parent=0 // pred_fallthru
    _
  %v4 = vld [vmem:[%s0] ss:$0 sm:$0xff]
  %6 = vbcast.lane.b32.xlu0 %v4, 256
  %v7 = vpop.permute.xlu0 %6
  %8 = vst [vmem:[%s1] sm:$0xff] %v7
  %s9 = scalar_lea.vmem %s0, 2
  %v10 = vld [vmem:[%s9] ss:$0 sm:$0xff]
  %12 = vbcast.lane.b32.xlu0 %v10, 256
  %v13 = vpop.permute.xlu0 %12
  %s14 = scalar_lea.vmem %s1, 16
  %15 = vst [vmem:[%s14] sm:$0xff] %v13
  %s16 = scalar_lea.vmem %s0, 4
  %v17 = vld [vmem:[%s16] ss:$0 sm:$0xff]
  %19 = vbcast.lane.b32.xlu0 %v17, 256
  %v20 = vpop.permute.xlu0 %19
  %s21 = scalar_lea.vmem %s1, 32
  %22 = vst [vmem:[%s21] sm:$0xff] %v20
  %s23 = scalar_lea.vmem %s0, 1
  %v24 = vld [vmem:[%s23] ss:$0 sm:$0xff]
  %26 = vbcast.lane.b32.xlu0 %v24, 256
  %v27 = vpop.permute.xlu0 %26
  %s28 = scalar_lea.vmem %s1, 8
  %29 = vst [vmem:[%s28] sm:$0xff] %v27
  %s30 = scalar_lea.vmem %s0, 2
  %s31 = scalar_lea.vmem %s30, 1
  %v32 = vld [vmem:[%s31] ss:$0 sm:$0xff]
  %34 = vbcast.lane.b32.xlu0 %v32, 256
  %v35 = vpop.permute.xlu0 %34
  %s36 = scalar_lea.vmem %s1, 24
  %37 = vst [vmem:[%s36] sm:$0xff] %v35
  %s38 = scalar_lea.vmem %s0, 4
  %s39 = scalar_lea.vmem %s38, 1
  %v40 = vld [vmem:[%s39] ss:$0 sm:$0xff]
  %42 = vbcast.lane.b32.xlu0 %v40, 256
  %v43 = vpop.permute.xlu0 %42
  %s44 = scalar_lea.vmem %s1, 40
  %45 = vst [vmem:[%s44] sm:$0xff] %v43

// kernel: labind_forward.14
$region0: #{labind_forward.14}
  #allocation0 [shape = 'u32[]', space=smem, size = 0x4, offset = 0x4, fixed_abs, tag = 'smem constant byte address 0x4 - core index']
  #allocation1 [shape = 'u32[144,128]{1,0:T(1,128)}', space=vmem, size = 0x12000, scoped, tag = 'internal scratch']
  %s0 = inlined_call_operand.vmem [shape: f32[2,8,3], index: 0, kind: input, shape index: {}]
  %s1 = inlined_call_operand.vmem [shape: f32[2,3,8], index: 1, kind: input, shape index: {}]
  %s2 = inlined_call_operand.vmem [shape: f32[2,1,8], index: 2, kind: input, shape index: {}]
  %s3 = inlined_call_operand.vmem [shape: f32[2,8,1], index: 3, kind: input, shape index: {}]
  %s4 = inlined_call_operand.vmem [shape: f32[2,1,8], index: 4, kind: input, shape index: {}]
  %s5 = inlined_call_operand.vmem [shape: f32[2,8,8], index: 5, kind: output, shape index: {}]
  %s6 = sld [smem:[#allocation0]]
  $region53: #{labind_forward.14} parent=0
    _
  %s8 = ssub.s32 1, %s6
  %s9 = scalar_select 0, %s8, %s6
  loop: start=0, step=1, limit=4
  $region2: #{labind_forward.14} parent=0 // loop_pre_header
    _
  $region3: #{labind_forward.14} parent=0 // loop_header
    %s11 = sphi 0, %s15
    %p12 = scmp.ge.s32.totalorder %s11, 4
    %s18 = sphi 0, %s30
    %s19 = sphi 0, %s26
    %s20 = sphi 0, %s18
    %s21 = sphi 0, %s19
    %s22 = sphi 0, %s20
    %s23 = sphi 0, %s21
    %s35 = sphi 0, %s37
    %s38 = sphi 0, %s35
    %s39 = sphi 0, %s38
    %s55 = sphi 0, %s39
    %s61 = sphi 0, %s63
    %s64 = sphi 0, %s61
    %s65 = sphi 0, %s64
    %s81 = sphi 0, %s65
    %s87 = sphi 0, %s89
    %s90 = sphi 0, %s87
    %s91 = sphi 0, %s90
    %s107 = sphi 0, %s91
    %s115 = sphi 0, %s117
    %s118 = sphi 0, %s115
    %s119 = sphi 0, %s118
    %s135 = sphi 0, %s119
    %s141 = sphi 0, %s143
    %s144 = sphi 0, %s141
    %s145 = sphi 0, %s144
    %s161 = sphi 0, %s145
    %s169 = sphi 0, %s171
    %s172 = sphi 0, %s169
    %s173 = sphi 0, %s172
    %s189 = sphi 0, %s173
  $region4: #{labind_forward.14} parent=0 // loop_header_branch
    %14 = sbr.rel (%p12) target = $region8
  $region5: #{labind_forward.14} parent=0 // loop_body
    %s16 = ssub.s32 %s11, 1
    %s17 = ssub.s32 %s11, 2
    %s24 = sadd.s32 1, %s19
    %p25 = scmp.ge.s32.totalorder %s24, 1
    %s26 = scalar_select %p25, 0, %s24
    %s27 = sadd.s32 1, %s18
    %s28 = scalar_select %p25, %s27, %s18
    %p29 = scmp.ge.s32.totalorder %s28, 2
    %s30 = scalar_select %p29, 0, %s28
    %s31 = ssub.s32 %s18, %s30
    %s32 = ssub.s32 %s19, %s26
    %s33 = sor.u32 %s31, %s32
    %p34 = scmp.eq.s32.totalorder %s33, 0
    %s36 = sadd.s32 %s35, 1
    %s37 = scalar_select %p34, %s35, %s36
    %p40 = pneg %p34
    %p41 = scmp.eq.s32.totalorder %s11, 1
    %p42 = por %p40, %p41
    %p43 = scmp.ne.s32.totalorder %s35, %s38
    %p44 = scmp.eq.s32.totalorder %s11, 0
    %p45 = por %p43, %p44
    %p46 = scmp.ne.s32.totalorder %s35, %s38
    %p47 = scmp.eq.s32.totalorder %s16, 1
    %p48 = por %p46, %p47
    %p49 = scmp.ne.s32.totalorder %s38, %s39
    %p50 = scmp.eq.s32.totalorder %s16, 0
    %p51 = por %p49, %p50
    %p52 = scmp.ne.s32.totalorder %s38, %s39
    %p53 = scmp.eq.s32.totalorder %s17, 1
    %p54 = por %p52, %p53
    %p56 = scmp.ne.s32.totalorder %s39, %s55
    %p57 = scmp.eq.s32.totalorder %s17, 0
    %p58 = por %p56, %p57
    %s59 = ssub.s32 %s18, %s30
    %p60 = scmp.eq.s32.totalorder %s59, 0
    %s62 = sadd.s32 %s61, 1
    %s63 = scalar_select %p60, %s61, %s62
    %p66 = pneg %p60
    %p67 = scmp.eq.s32.totalorder %s11, 1
    %p68 = por %p66, %p67
    %p69 = scmp.ne.s32.totalorder %s61, %s64
    %p70 = scmp.eq.s32.totalorder %s11, 0
    %p71 = por %p69, %p70
    %p72 = scmp.ne.s32.totalorder %s61, %s64
    %p73 = scmp.eq.s32.totalorder %s16, 1
    %p74 = por %p72, %p73
    %p75 = scmp.ne.s32.totalorder %s64, %s65
    %p76 = scmp.eq.s32.totalorder %s16, 0
    %p77 = por %p75, %p76
    %p78 = scmp.ne.s32.totalorder %s64, %s65
    %p79 = scmp.eq.s32.totalorder %s17, 1
    %p80 = por %p78, %p79
    %p82 = scmp.ne.s32.totalorder %s65, %s81
    %p83 = scmp.eq.s32.totalorder %s17, 0
    %p84 = por %p82, %p83
    %s85 = ssub.s32 %s18, %s30
    %p86 = scmp.eq.s32.totalorder %s85, 0
    %s88 = sadd.s32 %s87, 1
    %s89 = scalar_select %p86, %s87, %s88
    %p92 = pneg %p86
    %p93 = scmp.eq.s32.totalorder %s11, 1
    %p94 = por %p92, %p93
    %p95 = scmp.ne.s32.totalorder %s87, %s90
    %p96 = scmp.eq.s32.totalorder %s11, 0
    %p97 = por %p95, %p96
    %p98 = scmp.ne.s32.totalorder %s87, %s90
    %p99 = scmp.eq.s32.totalorder %s16, 1
    %p100 = por %p98, %p99
    %p101 = scmp.ne.s32.totalorder %s90, %s91
    %p102 = scmp.eq.s32.totalorder %s16, 0
    %p103 = por %p101, %p102
    %p104 = scmp.ne.s32.totalorder %s90, %s91
    %p105 = scmp.eq.s32.totalorder %s17, 1
    %p106 = por %p104, %p105
    %p108 = scmp.ne.s32.totalorder %s91, %s107
    %p109 = scmp.eq.s32.totalorder %s17, 0
    %p110 = por %p108, %p109
    %s111 = ssub.s32 %s18, %s30
    %s112 = ssub.s32 %s19, %s26
    %s113 = sor.u32 %s111, %s112
    %p114 = scmp.eq.s32.totalorder %s113, 0
    %s116 = sadd.s32 %s115, 1
    %s117 = scalar_select %p114, %s115, %s116
    %p120 = pneg %p114
    %p121 = scmp.eq.s32.totalorder %s11, 1
    %p122 = por %p120, %p121
    %p123 = scmp.ne.s32.totalorder %s115, %s118
    %p124 = scmp.eq.s32.totalorder %s11, 0
    %p125 = por %p123, %p124
    %p126 = scmp.ne.s32.totalorder %s115, %s118
    %p127 = scmp.eq.s32.totalorder %s16, 1
    %p128 = por %p126, %p127
    %p129 = scmp.ne.s32.totalorder %s118, %s119
    %p130 = scmp.eq.s32.totalorder %s16, 0
    %p131 = por %p129, %p130
    %p132 = scmp.ne.s32.totalorder %s118, %s119
    %p133 = scmp.eq.s32.totalorder %s17, 1
    %p134 = por %p132, %p133
    %p136 = scmp.ne.s32.totalorder %s119, %s135
    %p137 = scmp.eq.s32.totalorder %s17, 0
    %p138 = por %p136, %p137
    %s139 = ssub.s32 %s18, %s30
    %p140 = scmp.eq.s32.totalorder %s139, 0
    %s142 = sadd.s32 %s141, 1
    %s143 = scalar_select %p140, %s141, %s142
    %p146 = pneg %p140
    %p147 = scmp.eq.s32.totalorder %s11, 1
    %p148 = por %p146, %p147
    %p149 = scmp.ne.s32.totalorder %s141, %s144
    %p150 = scmp.eq.s32.totalorder %s11, 0
    %p151 = por %p149, %p150
    %p152 = scmp.ne.s32.totalorder %s141, %s144
    %p153 = scmp.eq.s32.totalorder %s16, 1
    %p154 = por %p152, %p153
    %p155 = scmp.ne.s32.totalorder %s144, %s145
    %p156 = scmp.eq.s32.totalorder %s16, 0
    %p157 = por %p155, %p156
    %p158 = scmp.ne.s32.totalorder %s144, %s145
    %p159 = scmp.eq.s32.totalorder %s17, 1
    %p160 = por %p158, %p159
    %p162 = scmp.ne.s32.totalorder %s145, %s161
    %p163 = scmp.eq.s32.totalorder %s17, 0
    %p164 = por %p162, %p163
    %s165 = ssub.s32 %s18, %s30
    %s166 = ssub.s32 %s19, %s26
    %s167 = sor.u32 %s165, %s166
    %p168 = scmp.eq.s32.totalorder %s167, 0
    %s170 = sadd.s32 %s169, 1
    %s171 = scalar_select %p168, %s169, %s170
    %p174 = pneg %p168
    %p175 = scmp.eq.s32.totalorder %s11, 1
    %p176 = por %p174, %p175
    %p177 = scmp.ne.s32.totalorder %s169, %s172
    %p178 = scmp.eq.s32.totalorder %s11, 0
    %p179 = por %p177, %p178
    %p180 = scmp.ne.s32.totalorder %s169, %s172
    %p181 = scmp.eq.s32.totalorder %s16, 1
    %p182 = por %p180, %p181
    %p183 = scmp.ne.s32.totalorder %s172, %s173
    %p184 = scmp.eq.s32.totalorder %s16, 0
    %p185 = por %p183, %p184
    %p186 = scmp.ne.s32.totalorder %s172, %s173
    %p187 = scmp.eq.s32.totalorder %s17, 1
    %p188 = por %p186, %p187
    %p190 = scmp.ne.s32.totalorder %s173, %s189
    %p191 = scmp.eq.s32.totalorder %s17, 0
    %p192 = por %p190, %p191
    %p193 = scmp.le.s32.totalorder 1, %s11
    %p194 = scmp.lt.s32.totalorder %s11, 3
    %p195 = pnand %p193, %p194
    %p196 = pneg %p195
    // Predicated region
    $region9: #{labind_forward.14} parent=5 // pred_check
      _
    $region10: #{labind_forward.14} parent=5 // pred_check_branch
      %198 = sbr.rel (%p195) target = $region12
    $region11: #{labind_forward.14} parent=5 // pred_region
      %s199 = ssub.s32 %s11, 1
    $region12: #{labind_forward.14} parent=5 // pred_fallthru
      _
    %p200 = scmp.lt.s32.totalorder %s11, 2
    // Predicated region
    $region13: #{labind_forward.14} parent=5 // pred_check
      %p201 = pneg %p200
    $region14: #{labind_forward.14} parent=5 // pred_check_branch
      %203 = sbr.rel (%p201) target = $region16
    $region15: #{labind_forward.14} parent=5 // pred_region
      // Predicated region
      $region17: #{labind_forward.14} parent=15 // pred_check
        %p204 = pneg %p45
      $region18: #{labind_forward.14} parent=15 // pred_check_branch
        %206 = sbr.rel (%p204) target = $region20
      $region19: #{labind_forward.14} parent=15 // pred_region
        %p207 = scmp.lt.s32.totalorder %s18, 1
        %s208 = scalar_select %p207, %s18, 1
        %p209 = scmp.lt.s32.totalorder %s19, 0
        %s210 = scalar_select %p209, %s19, 0
        %s211 = sadd.s32 %s210, %s208
        %s212 = smul.addr %s211, 8
        %s213 = scalar_lea.vmem %s0, %s212
      $region20: #{labind_forward.14} parent=15 // pred_fallthru
        _
      // Predicated region
      $region21: #{labind_forward.14} parent=15 // pred_check
        %p214 = pneg %p71
      $region22: #{labind_forward.14} parent=15 // pred_check_branch
        %216 = sbr.rel (%p214) target = $region24
      $region23: #{labind_forward.14} parent=15 // pred_region
        %p217 = scmp.lt.s32.totalorder %s18, 1
        %s218 = scalar_select %p217, %s18, 1
        %s219 = smul.addr %s218, 4
        %s220 = scalar_lea.vmem %s1, %s219
      $region24: #{labind_forward.14} parent=15 // pred_fallthru
        _
      // Predicated region
      $region25: #{labind_forward.14} parent=15 // pred_check
        %p221 = pneg %p97
      $region26: #{labind_forward.14} parent=15 // pred_check_branch
        %223 = sbr.rel (%p221) target = $region28
      $region27: #{labind_forward.14} parent=15 // pred_region
        %p224 = scmp.lt.s32.totalorder %s18, 1
        %s225 = scalar_select %p224, %s18, 1
        %s226 = scalar_lea.vmem %s2, %s225
      $region28: #{labind_forward.14} parent=15 // pred_fallthru
        _
      // Predicated region
      $region29: #{labind_forward.14} parent=15 // pred_check
        %p227 = pneg %p125
      $region30: #{labind_forward.14} parent=15 // pred_check_branch
        %229 = sbr.rel (%p227) target = $region32
      $region31: #{labind_forward.14} parent=15 // pred_region
        %p230 = scmp.lt.s32.totalorder %s18, 1
        %s231 = scalar_select %p230, %s18, 1
        %p232 = scmp.lt.s32.totalorder %s19, 0
        %s233 = scalar_select %p232, %s19, 0
        %s234 = sadd.s32 %s233, %s231
        %s235 = smul.addr %s234, 8
        %s236 = scalar_lea.vmem %s3, %s235
      $region32: #{labind_forward.14} parent=15 // pred_fallthru
        _
      // Predicated region
      $region33: #{labind_forward.14} parent=15 // pred_check
        %p237 = pneg %p151
      $region34: #{labind_forward.14} parent=15 // pred_check_branch
        %239 = sbr.rel (%p237) target = $region36
      $region35: #{labind_forward.14} parent=15 // pred_region
        %p240 = scmp.lt.s32.totalorder %s18, 1
        %s241 = scalar_select %p240, %s18, 1
        %s242 = scalar_lea.vmem %s4, %s241
      $region36: #{labind_forward.14} parent=15 // pred_fallthru
        _
    $region16: #{labind_forward.14} parent=5 // pred_fallthru
      _
    %p243 = scmp.le.s32.totalorder 1, %s11
    %p244 = scmp.lt.s32.totalorder %s11, 3
    %p245 = pnand %p243, %p244
    %p246 = pneg %p245
    // Predicated region
    $region37: #{labind_forward.14} parent=5 // pred_check
      _
    $region38: #{labind_forward.14} parent=5 // pred_check_branch
      %248 = sbr.rel (%p245) target = $region40
    $region39: #{labind_forward.14} parent=5 // pred_region
      %s249 = ssub.s32 %s11, 1
      %p250 = scmp.lt.s32.totalorder %s20, 1
      %s251 = scalar_select %p250, %s20, 1
      %p252 = scmp.lt.s32.totalorder %s21, 0
      %s253 = scalar_select %p252, %s21, 0
      %s254 = sadd.s32 %s253, %s251
      %s255 = smul.addr %s254, 8
      %s256 = scalar_lea.vmem %s0, %s255
      %p257 = pneg %p51
      %p258 = pneg %p48
      %p259 = scmp.lt.s32.totalorder %s20, 1
      %s260 = scalar_select %p259, %s20, 1
      %s261 = smul.addr %s260, 4
      %s262 = scalar_lea.vmem %s1, %s261
      %p263 = pneg %p77
      %p264 = pneg %p74
      %p265 = scmp.lt.s32.totalorder %s20, 1
      %s266 = scalar_select %p265, %s20, 1
      %s267 = scalar_lea.vmem %s2, %s266
      %p268 = pneg %p103
      %p269 = pneg %p100
      %p270 = scmp.lt.s32.totalorder %s20, 1
      %s271 = scalar_select %p270, %s20, 1
      %p272 = scmp.lt.s32.totalorder %s21, 0
      %s273 = scalar_select %p272, %s21, 0
      %s274 = sadd.s32 %s273, %s271
      %s275 = smul.addr %s274, 8
      %s276 = scalar_lea.vmem %s3, %s275
      %p277 = pneg %p131
      %p278 = pneg %p128
      %p279 = scmp.lt.s32.totalorder %s20, 1
      %s280 = scalar_select %p279, %s20, 1
      %s281 = scalar_lea.vmem %s4, %s280
      %p282 = pneg %p157
      %p283 = pneg %p154
      %p284 = pneg %p185
      %p285 = pneg %p182
      %p286 = scmp.lt.s32.totalorder %s20, 1
      %s287 = scalar_select %p286, %s20, 1
      %p288 = scmp.lt.s32.totalorder %s21, 0
      %s289 = scalar_select %p288, %s21, 0
      %s290 = sadd.s32 %s289, %s287
      %s291 = smul.addr %s290, 8
      %s292 = scalar_lea.vmem %s5, %s291
      %p293 = scmp.lt.s32.totalorder %s20, 1
      %s294 = scalar_select %p293, %s20, 1
      %p295 = scmp.lt.s32.totalorder %s21, 0
      %s296 = scalar_select %p295, %s21, 0
      %s297 = sadd.s32 %s296, %s294
      %s298 = smul.addr %s297, 8
      %s299 = scalar_lea.vmem %s0, %s298
      %p300 = scmp.lt.s32.totalorder %s20, 1
      %s301 = scalar_select %p300, %s20, 1
      %s302 = smul.addr %s301, 4
      %s303 = scalar_lea.vmem %s1, %s302
      %p304 = scmp.lt.s32.totalorder %s20, 1
      %s305 = scalar_select %p304, %s20, 1
      %s306 = scalar_lea.vmem %s2, %s305
      %p307 = scmp.lt.s32.totalorder %s20, 1
      %s308 = scalar_select %p307, %s20, 1
      %p309 = scmp.lt.s32.totalorder %s21, 0
      %s310 = scalar_select %p309, %s21, 0
      %s311 = sadd.s32 %s310, %s308
      %s312 = smul.addr %s311, 8
      %s313 = scalar_lea.vmem %s3, %s312
      %p314 = scmp.lt.s32.totalorder %s20, 1
      %s315 = scalar_select %p314, %s20, 1
      %s316 = scalar_lea.vmem %s4, %s315
      %p317 = scmp.lt.s32.totalorder %s20, 1
      %s318 = scalar_select %p317, %s20, 1
      %p319 = scmp.lt.s32.totalorder %s21, 0
      %s320 = scalar_select %p319, %s21, 0
      %s321 = sadd.s32 %s320, %s318
      %s322 = smul.addr %s321, 8
      %s323 = scalar_lea.vmem %s5, %s322
      %v324 = vld [vmem:[%s299] sm:$0xff]
      %v325 = vld [vmem:[%s303] sm:$0x7]
      %v326 = vld [vmem:[%s306] sm:$0x1]
      %v327 = vld [vmem:[%s313] sm:$0xff]
      %v328 = vld [vmem:[%s316] sm:$0x1]
      %v329 = vmul.f32 %v324, %v324
      %vm330 = vcmask 23552
      %v331 = vsel %vm330, %v329, 0.0
      %332 = vadd.xlane.f32.xlu0 %v331
      %v333 = vpop.xlane.xlu0 %332
      %v335 = vsel %vm330, %v324, 0
      %vm337 = vcmask 1042432
      %v339 = vsel %vm337, %v325, 0
      %341 = vmatprep.subr.mxu0 0.0
      %342 = vmatpush1.msra.mxu0 %v339
      %343 = vmatprep.subr.mxu0 0.0
      %344 = vmatpush1.msra.mxu0 0.0
      %345 = vmatprep.subr.mxu0 0.0
      %346 = vmatpush1.msra.mxu0 0.0
      %347 = vmatprep.subr.mxu0 0.0
      %348 = vmatpush1.msra.mxu0 0.0
      %349 = vmatprep.subr.mxu0 0.0
      %350 = vmatpush1.msra.mxu0 0.0
      %351 = vmatprep.subr.mxu0 0.0
      %352 = vmatpush1.msra.mxu0 0.0
      %353 = vmatprep.subr.mxu0 0.0
      %354 = vmatpush1.msra.mxu0 0.0
      %355 = vmatprep.subr.mxu0 0.0
      %356 = vmatpush1.msra.mxu0 0.0
      %357 = vmatprep.subr.mxu0 0.0
      %358 = vmatpush1.msra.mxu0 0.0
      %359 = vmatprep.subr.mxu0 0.0
      %360 = vmatpush1.msra.mxu0 0.0
      %361 = vmatprep.subr.mxu0 0.0
      %362 = vmatpush1.msra.mxu0 0.0
      %363 = vmatprep.subr.mxu0 0.0
      %364 = vmatpush1.msra.mxu0 0.0
      %365 = vmatprep.subr.mxu0 0.0
      %366 = vmatpush1.msra.mxu0 0.0
      %367 = vmatprep.subr.mxu0 0.0
      %368 = vmatpush1.msra.mxu0 0.0
      %369 = vmatprep.subr.mxu0 0.0
      %370 = vmatpush1.msra.mxu0 0.0
      %371 = vmatprep.subr.mxu0 0.0
      %372 = vmatpush1.msra.mxu0 0.0
      %373 = vmatprep.subr.mxu0 0.0
      %374 = vmatpush1.msra.mxu0 0.0
      %375 = vmatprep.subr.mxu0 0.0
      %376 = vmatpush1.msra.mxu0 0.0
      %377 = vmatprep.subr.mxu0 0.0
      %378 = vmatpush1.msra.mxu0 0.0
      %379 = vmatprep.subr.mxu0 0.0
      %380 = vmatpush1.msra.mxu0 0.0
      %381 = vmatprep.subr.mxu0 0.0
      %382 = vmatpush1.msra.mxu0 0.0
      %383 = vmatprep.subr.mxu0 0.0
      %384 = vmatpush1.msra.mxu0 0.0
      %385 = vmatprep.subr.mxu0 0.0
      %386 = vmatpush1.msra.mxu0 0.0
      %387 = vmatprep.subr.mxu0 0.0
      %388 = vmatpush1.msra.mxu0 0.0
      %389 = vmatprep.subr.mxu0 0.0
      %390 = vmatpush1.msra.mxu0 0.0
      %391 = vmatprep.subr.mxu0 0.0
      %392 = vmatpush1.msra.mxu0 0.0
      %393 = vmatprep.subr.mxu0 0.0
      %394 = vmatpush1.msra.mxu0 0.0
      %395 = vmatprep.subr.mxu0 0.0
      %396 = vmatpush1.msra.mxu0 0.0
      %397 = vmatprep.subr.mxu0 0.0
      %398 = vmatpush1.msra.mxu0 0.0
      %399 = vmatprep.subr.mxu0 0.0
      %400 = vmatpush1.msra.mxu0 0.0
      %401 = vmatprep.subr.mxu0 0.0
      %402 = vmatpush1.msra.mxu0 0.0
      %403 = vmatprep.subr.mxu0 0.0
      %404 = vmatpush1.msra.mxu0 0.0
      %405 = vmatprep.mubr.f32.mxu0 0.0
      %406 = vmatmul.mubr.f32.gmra.mrb[0].mxu0 %v335
      %v407 = vpop.f32.mrb[0].mxu0
      %v408 = vadd.f32 0.0, %v407
      %v409 = vpop.f32.mrb[0].mxu0
      %410 = vdwg.mxu0
      %v412 = vlaneseq
      %v413 = vshrl.u32 %v412, 7
      %v414 = vsub.s32 0, %v413
      %v415 = vrot.slane %v326, %v414
      %v417 = vadd.f32 %v333, %v415
      %v418 = vmul.f32 %v408, 2.0
      %v419 = vsub.f32 %v417, %v418
      %v420 = vmax.f32 %v419, 0.0
      %v421 = vadd.f32 %v420, 1e-06
      %423 = vset.pattern.permute.xlu0 0
      %424 = vperm.xlu0 %423, %v327
      %v425 = vpop.permute.xlu0 %424
      %v428 = vlaneseq
      %v429 = vshrl.u32 %v428, 7
      %v430 = vsub.s32 0, %v429
      %v431 = vrot.slane %v328, %v430
      %v433 = vmul.f32 %v425, %v431
      %v434 = vmul.f32 %v433, %v421
      %vm435 = vcmask 64512
      %v436 = vsel %vm435, %v434, -inf
      %437 = vmax.xlane.f32.xlu0 %v436
      %v438 = vpop.xlane.xlu0 %437
      %v439 = vsub.f32 1.0, %v433
      %v440 = vmul.f32 %v439, %v438
      %v441 = vadd.f32 %v434, %v440
      %442 = vst.msk [vmem:[%s323] sm:$0xff] %vm435, %v441
      %p443 = scmp.lt.s32.totalorder %s20, 1
      %s444 = scalar_select %p443, %s20, 1
      %p445 = scmp.lt.s32.totalorder %s21, 0
      %s446 = scalar_select %p445, %s21, 0
      %s447 = sadd.s32 %s446, %s444
      %s448 = smul.addr %s447, 8
      %s449 = scalar_lea.vmem %s5, %s448
      // Predicated region
      $region41: #{labind_forward.14} parent=39 // pred_check
        %p450 = pneg %p182
      $region42: #{labind_forward.14} parent=39 // pred_check_branch
        %452 = sbr.rel (%p450) target = $region44
      $region43: #{labind_forward.14} parent=39 // pred_region
        _
      $region44: #{labind_forward.14} parent=39 // pred_fallthru
        _
    $region40: #{labind_forward.14} parent=5 // pred_fallthru
      _
    %p453 = scmp.le.s32.totalorder 2, %s11
    // Predicated region
    $region45: #{labind_forward.14} parent=5 // pred_check
      %p454 = pneg %p453
    $region46: #{labind_forward.14} parent=5 // pred_check_branch
      %456 = sbr.rel (%p454) target = $region48
    $region47: #{labind_forward.14} parent=5 // pred_region
      %s457 = ssub.s32 %s11, 2
      // Predicated region
      $region49: #{labind_forward.14} parent=47 // pred_check
        %p458 = pneg %p188
      $region50: #{labind_forward.14} parent=47 // pred_check_branch
        %460 = sbr.rel (%p458) target = $region52
      $region51: #{labind_forward.14} parent=47 // pred_region
        %p461 = scmp.lt.s32.totalorder %s22, 1
        %s462 = scalar_select %p461, %s22, 1
        %p463 = scmp.lt.s32.totalorder %s23, 0
        %s464 = scalar_select %p463, %s23, 0
        %s465 = sadd.s32 %s464, %s462
        %s466 = smul.addr %s465, 8
        %s467 = scalar_lea.vmem %s5, %s466
      $region52: #{labind_forward.14} parent=47 // pred_fallthru
        _
    $region48: #{labind_forward.14} parent=5 // pred_fallthru
      _
  $region6: #{labind_forward.14} parent=0 // loop_footer
    %s15 = sadd.s32 1, %s11
  $region7: #{labind_forward.14} parent=0 // loop_footer_branch
    %10 = sbr.rel target = $region3
  $region8: #{labind_forward.14} parent=0 // loop_exit
    _

// kernel: labind_forward.16
$region0: #{labind_forward.16}
  #allocation0 [shape = 'u32[]', space=smem, size = 0x4, offset = 0x4, fixed_abs, tag = 'smem constant byte address 0x4 - core index']
  #allocation1 [shape = 'u32[144,128]{1,0:T(1,128)}', space=vmem, size = 0x12000, scoped, tag = 'internal scratch']
  %s0 = inlined_call_operand.vmem [shape: bf16[80,121], index: 0, kind: input, shape index: {}]
  %s1 = inlined_call_operand.vmem [shape: bf16[121,32], index: 1, kind: input, shape index: {}]
  %s2 = inlined_call_operand.vmem [shape: f32[1,32], index: 2, kind: input, shape index: {}]
  %s3 = inlined_call_operand.vmem [shape: f32[1,32], index: 3, kind: input, shape index: {}]
  %s4 = inlined_call_operand.vmem [shape: f32[1,32], index: 4, kind: input, shape index: {}]
  %s5 = inlined_call_operand.vmem [shape: bf16[80,32], index: 5, kind: output, shape index: {}]
  %s6 = sld [smem:[#allocation0]]
  $region30: #{labind_forward.16} parent=0
    _
  %s8 = ssub.s32 1, %s6
  %s9 = scalar_select 0, %s8, %s6
  // Predicated region
  $region2: #{labind_forward.16} parent=0 // pred_check
    _
  $region3: #{labind_forward.16} parent=0 // pred_check_branch
    %11 = sbr.rel (0) target = $region5
  $region4: #{labind_forward.16} parent=0 // pred_region
    _
  $region5: #{labind_forward.16} parent=0 // pred_fallthru
    _
  // Predicated region
  $region6: #{labind_forward.16} parent=0 // pred_check
    _
  $region7: #{labind_forward.16} parent=0 // pred_check_branch
    %13 = sbr.rel (0) target = $region9
  $region8: #{labind_forward.16} parent=0 // pred_region
    _
  $region9: #{labind_forward.16} parent=0 // pred_fallthru
    _
  // Predicated region
  $region10: #{labind_forward.16} parent=0 // pred_check
    _
  $region11: #{labind_forward.16} parent=0 // pred_check_branch
    %15 = sbr.rel (0) target = $region13
  $region12: #{labind_forward.16} parent=0 // pred_region
    _
  $region13: #{labind_forward.16} parent=0 // pred_fallthru
    _
  // Predicated region
  $region14: #{labind_forward.16} parent=0 // pred_check
    _
  $region15: #{labind_forward.16} parent=0 // pred_check_branch
    %17 = sbr.rel (0) target = $region17
  $region16: #{labind_forward.16} parent=0 // pred_region
    _
  $region17: #{labind_forward.16} parent=0 // pred_fallthru
    _
  // Predicated region
  $region18: #{labind_forward.16} parent=0 // pred_check
    _
  $region19: #{labind_forward.16} parent=0 // pred_check_branch
    %19 = sbr.rel (0) target = $region21
  $region20: #{labind_forward.16} parent=0 // pred_region
    _
  $region21: #{labind_forward.16} parent=0 // pred_fallthru
    _
  %v21 = vld [vmem:[%s0] sm:$0xf]
  %v22 = vld [vmem:[%s0 + $0x4] sm:$0xf]
  %v23 = vld [vmem:[%s0 + $0x8] sm:$0xf]
  %v24 = vld [vmem:[%s0 + $0xc] sm:$0xf]
  %v25 = vld [vmem:[%s0 + $0x10] sm:$0xf]
  %v26 = vld [vmem:[%s0 + $0x14] sm:$0xf]
  %v27 = vld [vmem:[%s0 + $0x18] sm:$0xf]
  %v28 = vld [vmem:[%s0 + $0x1c] sm:$0xf]
  %v29 = vld [vmem:[%s0 + $0x20] sm:$0xf]
  %v30 = vld [vmem:[%s0 + $0x24] sm:$0xf]
  %v31 = vld [vmem:[%s1] sm:$0xf]
  %v32 = vld [vmem:[%s1 + $0x4] sm:$0xf]
  %v33 = vld [vmem:[%s1 + $0x8] sm:$0xf]
  %v34 = vld [vmem:[%s1 + $0xc] sm:$0xf]
  %v35 = vld [vmem:[%s1 + $0x10] sm:$0xf]
  %v36 = vld [vmem:[%s1 + $0x14] sm:$0xf]
  %v37 = vld [vmem:[%s1 + $0x18] sm:$0xf]
  %v38 = vld [vmem:[%s1 + $0x1c] sm:$0xf]
  %v39 = vld [vmem:[%s1 + $0x20] sm:$0xf]
  %v40 = vld [vmem:[%s1 + $0x24] sm:$0xf]
  %v41 = vld [vmem:[%s1 + $0x28] sm:$0xf]
  %v42 = vld [vmem:[%s1 + $0x2c] sm:$0xf]
  %v43 = vld [vmem:[%s1 + $0x30] sm:$0xf]
  %v44 = vld [vmem:[%s1 + $0x34] sm:$0xf]
  %v45 = vld [vmem:[%s1 + $0x38] sm:$0xf]
  %v46 = vld [vmem:[%s1 + $0x3c] sm:$0x1]
  %v47 = vld [vmem:[%s2] sm:$0x1]
  %v49 = vlaneseq
  %v50 = vshrl.u32 %v49, 7
  %v51 = vsub.s32 0, %v50
  %v52 = vrot.slane %v47, %v51
  %v64 = vunpack.c.l.b16 %v21
  %v65 = vunpack.c.l.b16 %v22
  %v66 = vunpack.c.l.b16 %v23
  %v67 = vunpack.c.l.b16 %v24
  %v68 = vunpack.c.l.b16 %v25
  %v69 = vunpack.c.l.b16 %v26
  %v70 = vunpack.c.l.b16 %v27
  %v71 = vunpack.c.l.b16 %v28
  %v72 = vunpack.c.l.b16 %v29
  %v73 = vunpack.c.l.b16 %v30
  %v74 = vpack.c.b16 %v65, %v64
  %v75 = vpack.c.b16 %v67, %v66
  %v76 = vpack.c.b16 %v69, %v68
  %v77 = vpack.c.b16 %v71, %v70
  %v78 = vpack.c.b16 %v73, %v72
  %v95 = vunpack.c.l.b16 %v31
  %v96 = vunpack.c.l.b16 %v32
  %v97 = vunpack.c.l.b16 %v33
  %v98 = vunpack.c.l.b16 %v34
  %v99 = vunpack.c.l.b16 %v35
  %v100 = vunpack.c.l.b16 %v36
  %v101 = vunpack.c.l.b16 %v37
  %v102 = vunpack.c.l.b16 %v38
  %v103 = vunpack.c.l.b16 %v39
  %v104 = vunpack.c.l.b16 %v40
  %v105 = vunpack.c.l.b16 %v41
  %v106 = vunpack.c.l.b16 %v42
  %v107 = vunpack.c.l.b16 %v43
  %v108 = vunpack.c.l.b16 %v44
  %v109 = vunpack.c.l.b16 %v45
  %v110 = vunpack.c.l.b16 %v46
  %v111 = vpack.c.b16 %v96, %v95
  %v112 = vpack.c.b16 %v98, %v97
  %v113 = vpack.c.b16 %v100, %v99
  %v114 = vpack.c.b16 %v102, %v101
  %v115 = vpack.c.b16 %v104, %v103
  %v116 = vpack.c.b16 %v106, %v105
  %v117 = vpack.c.b16 %v108, %v107
  %v118 = vpack.c.b16 %v110, %v109
  %vm126 = vcmask 990208
  %v128 = vsel %vm126, %v74, 0
  %v131 = vsel %vm126, %v75, 0
  %v134 = vsel %vm126, %v76, 0
  %v137 = vsel %vm126, %v77, 0
  %v140 = vsel %vm126, %v78, 0
  %vm142 = vcmask 1043456
  %vm143 = vcmask 1044480
  %v144 = vsel %vm142, 4294967295, 65535
  %v145 = vsel %vm143, %v144, 0
  %v147 = vand.u32 %v118, %v145
  %149 = vmatprep.subr.bf16.mxu0 0
  %150 = vmatpush1.bf16.msra.mxu0 %v111
  %151 = vmatprep.subr.bf16.mxu0 0
  %152 = vmatpush1.bf16.msra.mxu0 %v112
  %153 = vmatprep.subr.bf16.mxu0 0
  %154 = vmatpush1.bf16.msra.mxu0 %v113
  %155 = vmatprep.subr.bf16.mxu0 0
  %156 = vmatpush1.bf16.msra.mxu0 %v114
  %157 = vmatprep.subr.bf16.mxu0 0
  %158 = vmatpush1.bf16.msra.mxu0 %v115
  %159 = vmatprep.subr.bf16.mxu0 0
  %160 = vmatpush1.bf16.msra.mxu0 %v116
  %161 = vmatprep.subr.bf16.mxu0 0
  %162 = vmatpush1.bf16.msra.mxu0 %v117
  %163 = vmatprep.subr.bf16.mxu0 0
  %164 = vmatpush1.bf16.msra.mxu0 %v147
  %165 = vmatprep.subr.bf16.mxu0 0
  %166 = vmatpush1.bf16.msra.mxu0 0
  %167 = vmatprep.subr.bf16.mxu0 0
  %168 = vmatpush1.bf16.msra.mxu0 0
  %169 = vmatprep.subr.bf16.mxu0 0
  %170 = vmatpush1.bf16.msra.mxu0 0
  %171 = vmatprep.subr.bf16.mxu0 0
  %172 = vmatpush1.bf16.msra.mxu0 0
  %173 = vmatprep.subr.bf16.mxu0 0
  %174 = vmatpush1.bf16.msra.mxu0 0
  %175 = vmatprep.subr.bf16.mxu0 0
  %176 = vmatpush1.bf16.msra.mxu0 0
  %177 = vmatprep.subr.bf16.mxu0 0
  %178 = vmatpush1.bf16.msra.mxu0 0
  %179 = vmatprep.subr.bf16.mxu0 0
  %180 = vmatpush1.bf16.msra.mxu0 0
  %181 = vmatprep.mubr.bf16.mxu0 0
  %182 = vmatmul.mubr.bf16.gmra.mrb[0].mxu0 %v128
  %v183 = vpop.f32.mrb[0].mxu0
  %v184 = vadd.f32 %v52, %v183
  %v185 = vpop.f32.mrb[0].mxu0
  %v186 = vpop.f32.mrb[0].mxu0
  %v187 = vadd.f32 %v52, %v186
  %v188 = vpop.f32.mrb[0].mxu0
  %189 = vmatprep.mubr.bf16.mxu0 0
  %190 = vmatmul.mubr.bf16.gmra.mrb[0].mxu0 %v131
  %v191 = vpop.f32.mrb[0].mxu0
  %v192 = vadd.f32 %v52, %v191
  %v193 = vpop.f32.mrb[0].mxu0
  %v194 = vpop.f32.mrb[0].mxu0
  %v195 = vadd.f32 %v52, %v194
  %v196 = vpop.f32.mrb[0].mxu0
  %197 = vmatprep.mubr.bf16.mxu0 0
  %198 = vmatmul.mubr.bf16.gmra.mrb[0].mxu0 %v134
  %v199 = vpop.f32.mrb[0].mxu0
  %v200 = vadd.f32 %v52, %v199
  %v201 = vpop.f32.mrb[0].mxu0
  %v202 = vpop.f32.mrb[0].mxu0
  %v203 = vadd.f32 %v52, %v202
  %v204 = vpop.f32.mrb[0].mxu0
  %205 = vmatprep.mubr.bf16.mxu0 0
  %206 = vmatmul.mubr.bf16.gmra.mrb[0].mxu0 %v137
  %v207 = vpop.f32.mrb[0].mxu0
  %v208 = vadd.f32 %v52, %v207
  %v209 = vpop.f32.mrb[0].mxu0
  %v210 = vpop.f32.mrb[0].mxu0
  %v211 = vadd.f32 %v52, %v210
  %v212 = vpop.f32.mrb[0].mxu0
  %213 = vmatprep.mubr.bf16.mxu0 0
  %214 = vmatmul.mubr.bf16.gmra.mrb[0].mxu0 %v140
  %v215 = vpop.f32.mrb[0].mxu0
  %v216 = vadd.f32 %v52, %v215
  %v217 = vpop.f32.mrb[0].mxu0
  %v218 = vpop.f32.mrb[0].mxu0
  %v219 = vadd.f32 %v52, %v218
  %v220 = vpop.f32.mrb[0].mxu0
  %221 = vdwg.mxu0
  %v222 = vld [vmem:[%s3] sm:$0x1]
  %v223 = vld [vmem:[%s4] sm:$0x1]
  %vm224 = vcmask 261120
  %v225 = vsel %vm224, %v184, 0.0
  %226 = vadd.xlane.f32.xlu0 %v225
  %v227 = vpop.xlane.xlu0 %226
  %v228 = vsel %vm224, %v187, 0.0
  %229 = vadd.xlane.f32.xlu0 %v228
  %v230 = vpop.xlane.xlu0 %229
  %v231 = vsel %vm224, %v192, 0.0
  %232 = vadd.xlane.f32.xlu0 %v231
  %v233 = vpop.xlane.xlu0 %232
  %v234 = vsel %vm224, %v195, 0.0
  %235 = vadd.xlane.f32.xlu0 %v234
  %v236 = vpop.xlane.xlu0 %235
  %v237 = vsel %vm224, %v200, 0.0
  %238 = vadd.xlane.f32.xlu0 %v237
  %v239 = vpop.xlane.xlu0 %238
  %v240 = vsel %vm224, %v203, 0.0
  %241 = vadd.xlane.f32.xlu0 %v240
  %v242 = vpop.xlane.xlu0 %241
  %v243 = vsel %vm224, %v208, 0.0
  %244 = vadd.xlane.f32.xlu0 %v243
  %v245 = vpop.xlane.xlu0 %244
  %v246 = vsel %vm224, %v211, 0.0
  %247 = vadd.xlane.f32.xlu0 %v246
  %v248 = vpop.xlane.xlu0 %247
  %v249 = vsel %vm224, %v216, 0.0
  %250 = vadd.xlane.f32.xlu0 %v249
  %v251 = vpop.xlane.xlu0 %250
  %v252 = vsel %vm224, %v219, 0.0
  %253 = vadd.xlane.f32.xlu0 %v252
  %v254 = vpop.xlane.xlu0 %253
  %v255 = vrcp.pop 32.0
  %v256 = vmul.f32 %v227, %v255
  %v257 = vmul.f32 %v230, %v255
  %v258 = vmul.f32 %v233, %v255
  %v259 = vmul.f32 %v236, %v255
  %v260 = vmul.f32 %v239, %v255
  %v261 = vmul.f32 %v242, %v255
  %v262 = vmul.f32 %v245, %v255
  %v263 = vmul.f32 %v248, %v255
  %v264 = vmul.f32 %v251, %v255
  %v265 = vmul.f32 %v254, %v255
  %v266 = vsub.f32 %v184, %v256
  %v267 = vsub.f32 %v187, %v257
  %v268 = vsub.f32 %v192, %v258
  %v269 = vsub.f32 %v195, %v259
  %v270 = vsub.f32 %v200, %v260
  %v271 = vsub.f32 %v203, %v261
  %v272 = vsub.f32 %v208, %v262
  %v273 = vsub.f32 %v211, %v263
  %v274 = vsub.f32 %v216, %v264
  %v275 = vsub.f32 %v219, %v265
  %v276 = vmul.f32 %v266, %v266
  %v277 = vmul.f32 %v267, %v267
  %v278 = vmul.f32 %v268, %v268
  %v279 = vmul.f32 %v269, %v269
  %v280 = vmul.f32 %v270, %v270
  %v281 = vmul.f32 %v271, %v271
  %v282 = vmul.f32 %v272, %v272
  %v283 = vmul.f32 %v273, %v273
  %v284 = vmul.f32 %v274, %v274
  %v285 = vmul.f32 %v275, %v275
  %v286 = vsel %vm224, %v276, 0.0
  %287 = vadd.xlane.f32.xlu0 %v286
  %v288 = vpop.xlane.xlu0 %287
  %v289 = vsel %vm224, %v277, 0.0
  %290 = vadd.xlane.f32.xlu0 %v289
  %v291 = vpop.xlane.xlu0 %290
  %v292 = vsel %vm224, %v278, 0.0
  %293 = vadd.xlane.f32.xlu0 %v292
  %v294 = vpop.xlane.xlu0 %293
  %v295 = vsel %vm224, %v279, 0.0
  %296 = vadd.xlane.f32.xlu0 %v295
  %v297 = vpop.xlane.xlu0 %296
  %v298 = vsel %vm224, %v280, 0.0
  %299 = vadd.xlane.f32.xlu0 %v298
  %v300 = vpop.xlane.xlu0 %299
  %v301 = vsel %vm224, %v281, 0.0
  %302 = vadd.xlane.f32.xlu0 %v301
  %v303 = vpop.xlane.xlu0 %302
  %v304 = vsel %vm224, %v282, 0.0
  %305 = vadd.xlane.f32.xlu0 %v304
  %v306 = vpop.xlane.xlu0 %305
  %v307 = vsel %vm224, %v283, 0.0
  %308 = vadd.xlane.f32.xlu0 %v307
  %v309 = vpop.xlane.xlu0 %308
  %v310 = vsel %vm224, %v284, 0.0
  %311 = vadd.xlane.f32.xlu0 %v310
  %v312 = vpop.xlane.xlu0 %311
  %v313 = vsel %vm224, %v285, 0.0
  %314 = vadd.xlane.f32.xlu0 %v313
  %v315 = vpop.xlane.xlu0 %314
  %v316 = vmul.f32 %v288, %v255
  %v317 = vmul.f32 %v291, %v255
  %v318 = vmul.f32 %v294, %v255
  %v319 = vmul.f32 %v297, %v255
  %v320 = vmul.f32 %v300, %v255
  %v321 = vmul.f32 %v303, %v255
  %v322 = vmul.f32 %v306, %v255
  %v323 = vmul.f32 %v309, %v255
  %v324 = vmul.f32 %v312, %v255
  %v325 = vmul.f32 %v315, %v255
  %v326 = vadd.f32 %v316, 1e-05
  %v327 = vadd.f32 %v317, 1e-05
  %v328 = vadd.f32 %v318, 1e-05
  %v329 = vadd.f32 %v319, 1e-05
  %v330 = vadd.f32 %v320, 1e-05
  %v331 = vadd.f32 %v321, 1e-05
  %v332 = vadd.f32 %v322, 1e-05
  %v333 = vadd.f32 %v323, 1e-05
  %v334 = vadd.f32 %v324, 1e-05
  %v335 = vadd.f32 %v325, 1e-05
  %v336 = vrsqrt.pop %v326
  %v337 = vrsqrt.pop %v327
  %v338 = vrsqrt.pop %v328
  %v339 = vrsqrt.pop %v329
  %v340 = vrsqrt.pop %v330
  %v341 = vrsqrt.pop %v331
  %v342 = vrsqrt.pop %v332
  %v343 = vrsqrt.pop %v333
  %v344 = vrsqrt.pop %v334
  %v345 = vrsqrt.pop %v335
  %v346 = vmul.f32 %v266, %v336
  %v347 = vmul.f32 %v267, %v337
  %v348 = vmul.f32 %v268, %v338
  %v349 = vmul.f32 %v269, %v339
  %v350 = vmul.f32 %v270, %v340
  %v351 = vmul.f32 %v271, %v341
  %v352 = vmul.f32 %v272, %v342
  %v353 = vmul.f32 %v273, %v343
  %v354 = vmul.f32 %v274, %v344
  %v355 = vmul.f32 %v275, %v345
  %v357 = vlaneseq
  %v358 = vshrl.u32 %v357, 7
  %v359 = vsub.s32 0, %v358
  %v360 = vrot.slane %v222, %v359
  %v362 = vmul.f32 %v346, %v360
  %v363 = vmul.f32 %v347, %v360
  %v364 = vmul.f32 %v348, %v360
  %v365 = vmul.f32 %v349, %v360
  %v366 = vmul.f32 %v350, %v360
  %v367 = vmul.f32 %v351, %v360
  %v368 = vmul.f32 %v352, %v360
  %v369 = vmul.f32 %v353, %v360
  %v370 = vmul.f32 %v354, %v360
  %v371 = vmul.f32 %v355, %v360
  %v373 = vlaneseq
  %v374 = vshrl.u32 %v373, 7
  %v375 = vsub.s32 0, %v374
  %v376 = vrot.slane %v223, %v375
  %v378 = vadd.f32 %v362, %v376
  %v379 = vadd.f32 %v363, %v376
  %v380 = vadd.f32 %v364, %v376
  %v381 = vadd.f32 %v365, %v376
  %v382 = vadd.f32 %v366, %v376
  %v383 = vadd.f32 %v367, %v376
  %v384 = vadd.f32 %v368, %v376
  %v385 = vadd.f32 %v369, %v376
  %v386 = vadd.f32 %v370, %v376
  %v387 = vadd.f32 %v371, %v376
  %v388 = vpack.c.bf16 %v379, %v378
  %v389 = vpack.c.bf16 %v381, %v380
  %v390 = vpack.c.bf16 %v383, %v382
  %v391 = vpack.c.bf16 %v385, %v384
  %v392 = vpack.c.bf16 %v387, %v386
  %v398 = vunpack.c.l.b16 %v388
  %v399 = vunpack.c.h.b16 %v388
  %v400 = vunpack.c.l.b16 %v389
  %v401 = vunpack.c.h.b16 %v389
  %v402 = vunpack.c.l.b16 %v390
  %v403 = vunpack.c.h.b16 %v390
  %v404 = vunpack.c.l.b16 %v391
  %v405 = vunpack.c.h.b16 %v391
  %v406 = vunpack.c.l.b16 %v392
  %v407 = vunpack.c.h.b16 %v392
  %v408 = vpack.c.b16 %v398, %v398
  %v409 = vpack.c.b16 %v399, %v399
  %v410 = vpack.c.b16 %v400, %v400
  %v411 = vpack.c.b16 %v401, %v401
  %v412 = vpack.c.b16 %v402, %v402
  %v413 = vpack.c.b16 %v403, %v403
  %v414 = vpack.c.b16 %v404, %v404
  %v415 = vpack.c.b16 %v405, %v405
  %v416 = vpack.c.b16 %v406, %v406
  %v417 = vpack.c.b16 %v407, %v407
  %vm428 = vcmask 257024
  %429 = vst.msk [vmem:[%s5] sm:$0xf] %vm428, %v408
  %430 = vst.msk [vmem:[%s5 + $0x4] sm:$0xf] %vm428, %v409
  %431 = vst.msk [vmem:[%s5 + $0x8] sm:$0xf] %vm428, %v410
  %432 = vst.msk [vmem:[%s5 + $0xc] sm:$0xf] %vm428, %v411
  %433 = vst.msk [vmem:[%s5 + $0x10] sm:$0xf] %vm428, %v412
  %434 = vst.msk [vmem:[%s5 + $0x14] sm:$0xf] %vm428, %v413
  %435 = vst.msk [vmem:[%s5 + $0x18] sm:$0xf] %vm428, %v414
  %436 = vst.msk [vmem:[%s5 + $0x1c] sm:$0xf] %vm428, %v415
  %437 = vst.msk [vmem:[%s5 + $0x20] sm:$0xf] %vm428, %v416
  %438 = vst.msk [vmem:[%s5 + $0x24] sm:$0xf] %vm428, %v417
  // Predicated region
  $region22: #{labind_forward.16} parent=0 // pred_check
    _
  $region23: #{labind_forward.16} parent=0 // pred_check_branch
    %440 = sbr.rel (0) target = $region25
  $region24: #{labind_forward.16} parent=0 // pred_region
    _
  $region25: #{labind_forward.16} parent=0 // pred_fallthru
    _
  // Predicated region
  $region26: #{labind_forward.16} parent=0 // pred_check
    _
  $region27: #{labind_forward.16} parent=0 // pred_check_branch
    %442 = sbr.rel (0) target = $region29
  $region28: #{labind_forward.16} parent=0 // pred_region
    _
  $region29: #{labind_forward.16} parent=0 // pred_fallthru
    _

// kernel: labind_forward.15
$region0: #{labind_forward.15}
  #allocation0 [shape = 'u32[]', space=smem, size = 0x4, offset = 0x4, fixed_abs, tag = 'smem constant byte address 0x4 - core index']
  #allocation1 [shape = 'u32[144,128]{1,0:T(1,128)}', space=vmem, size = 0x12000, scoped, tag = 'internal scratch']
  %s0 = inlined_call_operand.vmem [shape: bf16[16,267], index: 0, kind: input, shape index: {}]
  %s1 = inlined_call_operand.vmem [shape: bf16[267,32], index: 1, kind: input, shape index: {}]
  %s2 = inlined_call_operand.vmem [shape: f32[1,32], index: 2, kind: input, shape index: {}]
  %s3 = inlined_call_operand.vmem [shape: f32[1,32], index: 3, kind: input, shape index: {}]
  %s4 = inlined_call_operand.vmem [shape: f32[1,32], index: 4, kind: input, shape index: {}]
  %s5 = inlined_call_operand.vmem [shape: bf16[16,32], index: 5, kind: output, shape index: {}]
  %s6 = sld [smem:[#allocation0]]
  $region30: #{labind_forward.15} parent=0
    _
  %s8 = ssub.s32 1, %s6
  %s9 = scalar_select 0, %s8, %s6
  // Predicated region
  $region2: #{labind_forward.15} parent=0 // pred_check
    _
  $region3: #{labind_forward.15} parent=0 // pred_check_branch
    %11 = sbr.rel (0) target = $region5
  $region4: #{labind_forward.15} parent=0 // pred_region
    _
  $region5: #{labind_forward.15} parent=0 // pred_fallthru
    _
  // Predicated region
  $region6: #{labind_forward.15} parent=0 // pred_check
    _
  $region7: #{labind_forward.15} parent=0 // pred_check_branch
    %13 = sbr.rel (0) target = $region9
  $region8: #{labind_forward.15} parent=0 // pred_region
    _
  $region9: #{labind_forward.15} parent=0 // pred_fallthru
    _
  // Predicated region
  $region10: #{labind_forward.15} parent=0 // pred_check
    _
  $region11: #{labind_forward.15} parent=0 // pred_check_branch
    %15 = sbr.rel (0) target = $region13
  $region12: #{labind_forward.15} parent=0 // pred_region
    _
  $region13: #{labind_forward.15} parent=0 // pred_fallthru
    _
  // Predicated region
  $region14: #{labind_forward.15} parent=0 // pred_check
    _
  $region15: #{labind_forward.15} parent=0 // pred_check_branch
    %17 = sbr.rel (0) target = $region17
  $region16: #{labind_forward.15} parent=0 // pred_region
    _
  $region17: #{labind_forward.15} parent=0 // pred_fallthru
    _
  // Predicated region
  $region18: #{labind_forward.15} parent=0 // pred_check
    _
  $region19: #{labind_forward.15} parent=0 // pred_check_branch
    %19 = sbr.rel (0) target = $region21
  $region20: #{labind_forward.15} parent=0 // pred_region
    _
  $region21: #{labind_forward.15} parent=0 // pred_fallthru
    _
  %v21 = vld [vmem:[%s0] sm:$0xff]
  %v22 = vld [vmem:[%s0 + $0x8] sm:$0xf]
  %v23 = vld [vmem:[%s0 + $0xc] sm:$0xff]
  %v24 = vld [vmem:[%s0 + $0x14] sm:$0xf]
  %v25 = vld [vmem:[%s1] sm:$0xf]
  %v26 = vld [vmem:[%s1 + $0x4] sm:$0xf]
  %v27 = vld [vmem:[%s1 + $0x8] sm:$0xf]
  %v28 = vld [vmem:[%s1 + $0xc] sm:$0xf]
  %v29 = vld [vmem:[%s1 + $0x10] sm:$0xf]
  %v30 = vld [vmem:[%s1 + $0x14] sm:$0xf]
  %v31 = vld [vmem:[%s1 + $0x18] sm:$0xf]
  %v32 = vld [vmem:[%s1 + $0x1c] sm:$0xf]
  %v33 = vld [vmem:[%s1 + $0x20] sm:$0xf]
  %v34 = vld [vmem:[%s1 + $0x24] sm:$0xf]
  %v35 = vld [vmem:[%s1 + $0x28] sm:$0xf]
  %v36 = vld [vmem:[%s1 + $0x2c] sm:$0xf]
  %v37 = vld [vmem:[%s1 + $0x30] sm:$0xf]
  %v38 = vld [vmem:[%s1 + $0x34] sm:$0xf]
  %v39 = vld [vmem:[%s1 + $0x38] sm:$0xf]
  %v40 = vld [vmem:[%s1 + $0x3c] sm:$0xf]
  %v41 = vld [vmem:[%s1 + $0x40] sm:$0xf]
  %v42 = vld [vmem:[%s1 + $0x44] sm:$0xf]
  %v43 = vld [vmem:[%s1 + $0x48] sm:$0xf]
  %v44 = vld [vmem:[%s1 + $0x4c] sm:$0xf]
  %v45 = vld [vmem:[%s1 + $0x50] sm:$0xf]
  %v46 = vld [vmem:[%s1 + $0x54] sm:$0xf]
  %v47 = vld [vmem:[%s1 + $0x58] sm:$0xf]
  %v48 = vld [vmem:[%s1 + $0x5c] sm:$0xf]
  %v49 = vld [vmem:[%s1 + $0x60] sm:$0xf]
  %v50 = vld [vmem:[%s1 + $0x64] sm:$0xf]
  %v51 = vld [vmem:[%s1 + $0x68] sm:$0xf]
  %v52 = vld [vmem:[%s1 + $0x6c] sm:$0xf]
  %v53 = vld [vmem:[%s1 + $0x70] sm:$0xf]
  %v54 = vld [vmem:[%s1 + $0x74] sm:$0xf]
  %v55 = vld [vmem:[%s1 + $0x78] sm:$0xf]
  %v56 = vld [vmem:[%s1 + $0x7c] sm:$0xf]
  %v57 = vld [vmem:[%s1 + $0x80] sm:$0xf]
  %v58 = vld [vmem:[%s1 + $0x84] sm:$0x3]
  %v59 = vld [vmem:[%s2] sm:$0x1]
  %v61 = vlaneseq
  %v62 = vshrl.u32 %v61, 7
  %v63 = vsub.s32 0, %v62
  %v64 = vrot.slane %v59, %v63
  %v70 = vunpack.c.l.b16 %v21
  %v71 = vunpack.c.h.b16 %v21
  %v72 = vunpack.c.l.b16 %v22
  %v73 = vunpack.c.l.b16 %v23
  %v74 = vunpack.c.h.b16 %v23
  %v75 = vunpack.c.l.b16 %v24
  %v76 = vpack.c.b16 %v73, %v70
  %v77 = vpack.c.b16 %v74, %v71
  %v78 = vpack.c.b16 %v75, %v72
  %v115 = vunpack.c.l.b16 %v25
  %v116 = vunpack.c.l.b16 %v26
  %v117 = vunpack.c.l.b16 %v27
  %v118 = vunpack.c.l.b16 %v28
  %v119 = vunpack.c.l.b16 %v29
  %v120 = vunpack.c.l.b16 %v30
  %v121 = vunpack.c.l.b16 %v31
  %v122 = vunpack.c.l.b16 %v32
  %v123 = vunpack.c.l.b16 %v33
  %v124 = vunpack.c.l.b16 %v34
  %v125 = vunpack.c.l.b16 %v35
  %v126 = vunpack.c.l.b16 %v36
  %v127 = vunpack.c.l.b16 %v37
  %v128 = vunpack.c.l.b16 %v38
  %v129 = vunpack.c.l.b16 %v39
  %v130 = vunpack.c.l.b16 %v40
  %v131 = vunpack.c.l.b16 %v41
  %v132 = vunpack.c.l.b16 %v42
  %v133 = vunpack.c.l.b16 %v43
  %v134 = vunpack.c.l.b16 %v44
  %v135 = vunpack.c.l.b16 %v45
  %v136 = vunpack.c.l.b16 %v46
  %v137 = vunpack.c.l.b16 %v47
  %v138 = vunpack.c.l.b16 %v48
  %v139 = vunpack.c.l.b16 %v49
  %v140 = vunpack.c.l.b16 %v50
  %v141 = vunpack.c.l.b16 %v51
  %v142 = vunpack.c.l.b16 %v52
  %v143 = vunpack.c.l.b16 %v53
  %v144 = vunpack.c.l.b16 %v54
  %v145 = vunpack.c.l.b16 %v55
  %v146 = vunpack.c.l.b16 %v56
  %v147 = vunpack.c.l.b16 %v57
  %v148 = vunpack.c.l.b16 %v58
  %v149 = vpack.c.b16 %v116, %v115
  %v150 = vpack.c.b16 %v118, %v117
  %v151 = vpack.c.b16 %v120, %v119
  %v152 = vpack.c.b16 %v122, %v121
  %v153 = vpack.c.b16 %v124, %v123
  %v154 = vpack.c.b16 %v126, %v125
  %v155 = vpack.c.b16 %v128, %v127
  %v156 = vpack.c.b16 %v130, %v129
  %v157 = vpack.c.b16 %v132, %v131
  %v158 = vpack.c.b16 %v134, %v133
  %v159 = vpack.c.b16 %v136, %v135
  %v160 = vpack.c.b16 %v138, %v137
  %v161 = vpack.c.b16 %v140, %v139
  %v162 = vpack.c.b16 %v142, %v141
  %v163 = vpack.c.b16 %v144, %v143
  %v164 = vpack.c.b16 %v146, %v145
  %v165 = vpack.c.b16 %v148, %v147
  %vm182 = vcmask 89088
  %v184 = vsel %vm182, %v78, 0
  %vm186 = vcmask 1044480
  %vm187 = vcmask 1045504
  %v188 = vsel %vm186, 4294967295, 65535
  %v189 = vsel %vm187, %v188, 0
  %v191 = vand.u32 %v165, %v189
  %193 = vmatprep.subr.bf16.mxu0 0
  %194 = vmatpush1.bf16.msra.mxu0 %v149
  %195 = vmatprep.subr.bf16.mxu0 0
  %196 = vmatpush1.bf16.msra.mxu0 %v150
  %197 = vmatprep.subr.bf16.mxu0 0
  %198 = vmatpush1.bf16.msra.mxu0 %v151
  %199 = vmatprep.subr.bf16.mxu0 0
  %200 = vmatpush1.bf16.msra.mxu0 %v152
  %201 = vmatprep.subr.bf16.mxu0 0
  %202 = vmatpush1.bf16.msra.mxu0 %v153
  %203 = vmatprep.subr.bf16.mxu0 0
  %204 = vmatpush1.bf16.msra.mxu0 %v154
  %205 = vmatprep.subr.bf16.mxu0 0
  %206 = vmatpush1.bf16.msra.mxu0 %v155
  %207 = vmatprep.subr.bf16.mxu0 0
  %208 = vmatpush1.bf16.msra.mxu0 %v156
  %209 = vmatprep.subr.bf16.mxu0 0
  %210 = vmatpush1.bf16.msra.mxu0 %v157
  %211 = vmatprep.subr.bf16.mxu0 0
  %212 = vmatpush1.bf16.msra.mxu0 %v158
  %213 = vmatprep.subr.bf16.mxu0 0
  %214 = vmatpush1.bf16.msra.mxu0 %v159
  %215 = vmatprep.subr.bf16.mxu0 0
  %216 = vmatpush1.bf16.msra.mxu0 %v160
  %217 = vmatprep.subr.bf16.mxu0 0
  %218 = vmatpush1.bf16.msra.mxu0 %v161
  %219 = vmatprep.subr.bf16.mxu0 0
  %220 = vmatpush1.bf16.msra.mxu0 %v162
  %221 = vmatprep.subr.bf16.mxu0 0
  %222 = vmatpush1.bf16.msra.mxu0 %v163
  %223 = vmatprep.subr.bf16.mxu0 0
  %224 = vmatpush1.bf16.msra.mxu0 %v164
  %225 = vmatprep.mubr.bf16.mxu0 %v77
  %226 = vmatmul.mubr.bf16.gmra.mrb[0].mxu0 %v76
  %v227 = vpop.f32.mrb[0].mxu0
  %v228 = vadd.f32 %v64, %v227
  %v229 = vpop.f32.mrb[0].mxu0
  %v230 = vpop.f32.mrb[0].mxu0
  %v231 = vadd.f32 %v64, %v230
  %v232 = vpop.f32.mrb[0].mxu0
  %233 = vdwg.mxu0
  %234 = vmatprep.subr.bf16.mxu0 0
  %235 = vmatpush1.bf16.msra.mxu0 %v191
  %236 = vmatprep.subr.bf16.mxu0 0
  %237 = vmatpush1.bf16.msra.mxu0 0
  %238 = vmatprep.subr.bf16.mxu0 0
  %239 = vmatpush1.bf16.msra.mxu0 0
  %240 = vmatprep.subr.bf16.mxu0 0
  %241 = vmatpush1.bf16.msra.mxu0 0
  %242 = vmatprep.subr.bf16.mxu0 0
  %243 = vmatpush1.bf16.msra.mxu0 0
  %244 = vmatprep.subr.bf16.mxu0 0
  %245 = vmatpush1.bf16.msra.mxu0 0
  %246 = vmatprep.subr.bf16.mxu0 0
  %247 = vmatpush1.bf16.msra.mxu0 0
  %248 = vmatprep.subr.bf16.mxu0 0
  %249 = vmatpush1.bf16.msra.mxu0 0
  %250 = vmatprep.subr.bf16.mxu0 0
  %251 = vmatpush1.bf16.msra.mxu0 0
  %252 = vmatprep.subr.bf16.mxu0 0
  %253 = vmatpush1.bf16.msra.mxu0 0
  %254 = vmatprep.subr.bf16.mxu0 0
  %255 = vmatpush1.bf16.msra.mxu0 0
  %256 = vmatprep.subr.bf16.mxu0 0
  %257 = vmatpush1.bf16.msra.mxu0 0
  %258 = vmatprep.subr.bf16.mxu0 0
  %259 = vmatpush1.bf16.msra.mxu0 0
  %260 = vmatprep.subr.bf16.mxu0 0
  %261 = vmatpush1.bf16.msra.mxu0 0
  %262 = vmatprep.subr.bf16.mxu0 0
  %263 = vmatpush1.bf16.msra.mxu0 0
  %264 = vmatprep.subr.bf16.mxu0 0
  %265 = vmatpush1.bf16.msra.mxu0 0
  %266 = vmatprep.mubr.bf16.mxu0 0
  %267 = vmatmul.mubr.bf16.gmra.mrb[0].mxu0 %v184
  %v268 = vpop.f32.mrb[0].mxu0
  %v269 = vadd.f32 %v228, %v268
  %v270 = vpop.f32.mrb[0].mxu0
  %v271 = vpop.f32.mrb[0].mxu0
  %v272 = vadd.f32 %v231, %v271
  %v273 = vpop.f32.mrb[0].mxu0
  %274 = vdwg.mxu0
  %v275 = vld [vmem:[%s3] sm:$0x1]
  %v276 = vld [vmem:[%s4] sm:$0x1]
  %vm277 = vcmask 261120
  %v278 = vsel %vm277, %v269, 0.0
  %279 = vadd.xlane.f32.xlu0 %v278
  %v280 = vpop.xlane.xlu0 %279
  %v281 = vsel %vm277, %v272, 0.0
  %282 = vadd.xlane.f32.xlu0 %v281
  %v283 = vpop.xlane.xlu0 %282
  %v284 = vrcp.pop 32.0
  %v285 = vmul.f32 %v280, %v284
  %v286 = vmul.f32 %v283, %v284
  %v287 = vsub.f32 %v269, %v285
  %v288 = vsub.f32 %v272, %v286
  %v289 = vmul.f32 %v287, %v287
  %v290 = vmul.f32 %v288, %v288
  %v291 = vsel %vm277, %v289, 0.0
  %292 = vadd.xlane.f32.xlu0 %v291
  %v293 = vpop.xlane.xlu0 %292
  %v294 = vsel %vm277, %v290, 0.0
  %295 = vadd.xlane.f32.xlu0 %v294
  %v296 = vpop.xlane.xlu0 %295
  %v297 = vmul.f32 %v293, %v284
  %v298 = vmul.f32 %v296, %v284
  %v299 = vadd.f32 %v297, 1e-05
  %v300 = vadd.f32 %v298, 1e-05
  %v301 = vrsqrt.pop %v299
  %v302 = vrsqrt.pop %v300
  %v303 = vmul.f32 %v287, %v301
  %v304 = vmul.f32 %v288, %v302
  %v306 = vlaneseq
  %v307 = vshrl.u32 %v306, 7
  %v308 = vsub.s32 0, %v307
  %v309 = vrot.slane %v275, %v308
  %v311 = vmul.f32 %v303, %v309
  %v312 = vmul.f32 %v304, %v309
  %v314 = vlaneseq
  %v315 = vshrl.u32 %v314, 7
  %v316 = vsub.s32 0, %v315
  %v317 = vrot.slane %v276, %v316
  %v319 = vadd.f32 %v311, %v317
  %v320 = vadd.f32 %v312, %v317
  %v321 = vpack.c.bf16 %v320, %v319
  %v323 = vunpack.c.l.b16 %v321
  %v324 = vunpack.c.h.b16 %v321
  %v325 = vpack.c.b16 %v323, %v323
  %v326 = vpack.c.b16 %v324, %v324
  %vm329 = vcmask 257024
  %330 = vst.msk [vmem:[%s5] sm:$0xf] %vm329, %v325
  %331 = vst.msk [vmem:[%s5 + $0x4] sm:$0xf] %vm329, %v326
  // Predicated region
  $region22: #{labind_forward.15} parent=0 // pred_check
    _
  $region23: #{labind_forward.15} parent=0 // pred_check_branch
    %333 = sbr.rel (0) target = $region25
  $region24: #{labind_forward.15} parent=0 // pred_region
    _
  $region25: #{labind_forward.15} parent=0 // pred_fallthru
    _
  // Predicated region
  $region26: #{labind_forward.15} parent=0 // pred_check
    _
  $region27: #{labind_forward.15} parent=0 // pred_check_branch
    %335 = sbr.rel (0) target = $region29
  $region28: #{labind_forward.15} parent=0 // pred_region
    _
  $region29: #{labind_forward.15} parent=0 // pred_fallthru
    _

// kernel: labind_forward.17
$region0: #{labind_forward.17}
  #allocation0 [shape = 'u32[]', space=smem, size = 0x4, offset = 0x4, fixed_abs, tag = 'smem constant byte address 0x4 - core index']
  #allocation1 [shape = 'u32[144,128]{1,0:T(1,128)}', space=vmem, size = 0x12000, scoped, tag = 'internal scratch']
  %s0 = inlined_call_operand.vmem [shape: bf16[16,32], index: 0, kind: input, shape index: {}]
  %s1 = inlined_call_operand.vmem [shape: bf16[16,32], index: 1, kind: input, shape index: {}]
  %s2 = inlined_call_operand.vmem [shape: f32[1,64], index: 2, kind: input, shape index: {}]
  %s3 = inlined_call_operand.vmem [shape: f32[1,64], index: 3, kind: input, shape index: {}]
  %s4 = inlined_call_operand.vmem [shape: bf16[64,32], index: 4, kind: input, shape index: {}]
  %s5 = inlined_call_operand.vmem [shape: f32[1,32], index: 5, kind: input, shape index: {}]
  %s6 = inlined_call_operand.vmem [shape: f32[1,32], index: 6, kind: input, shape index: {}]
  %s7 = inlined_call_operand.vmem [shape: f32[1,32], index: 7, kind: input, shape index: {}]
  %s8 = inlined_call_operand.vmem [shape: bf16[16,32], index: 8, kind: output, shape index: {}]
  %s9 = sld [smem:[#allocation0]]
  $region42: #{labind_forward.17} parent=0
    _
  %s11 = ssub.s32 1, %s9
  %s12 = scalar_select 0, %s11, %s9
  // Predicated region
  $region2: #{labind_forward.17} parent=0 // pred_check
    _
  $region3: #{labind_forward.17} parent=0 // pred_check_branch
    %14 = sbr.rel (0) target = $region5
  $region4: #{labind_forward.17} parent=0 // pred_region
    _
  $region5: #{labind_forward.17} parent=0 // pred_fallthru
    _
  // Predicated region
  $region6: #{labind_forward.17} parent=0 // pred_check
    _
  $region7: #{labind_forward.17} parent=0 // pred_check_branch
    %16 = sbr.rel (0) target = $region9
  $region8: #{labind_forward.17} parent=0 // pred_region
    _
  $region9: #{labind_forward.17} parent=0 // pred_fallthru
    _
  // Predicated region
  $region10: #{labind_forward.17} parent=0 // pred_check
    _
  $region11: #{labind_forward.17} parent=0 // pred_check_branch
    %18 = sbr.rel (0) target = $region13
  $region12: #{labind_forward.17} parent=0 // pred_region
    _
  $region13: #{labind_forward.17} parent=0 // pred_fallthru
    _
  // Predicated region
  $region14: #{labind_forward.17} parent=0 // pred_check
    _
  $region15: #{labind_forward.17} parent=0 // pred_check_branch
    %20 = sbr.rel (0) target = $region17
  $region16: #{labind_forward.17} parent=0 // pred_region
    _
  $region17: #{labind_forward.17} parent=0 // pred_fallthru
    _
  // Predicated region
  $region18: #{labind_forward.17} parent=0 // pred_check
    _
  $region19: #{labind_forward.17} parent=0 // pred_check_branch
    %22 = sbr.rel (0) target = $region21
  $region20: #{labind_forward.17} parent=0 // pred_region
    _
  $region21: #{labind_forward.17} parent=0 // pred_fallthru
    _
  // Predicated region
  $region22: #{labind_forward.17} parent=0 // pred_check
    _
  $region23: #{labind_forward.17} parent=0 // pred_check_branch
    %24 = sbr.rel (0) target = $region25
  $region24: #{labind_forward.17} parent=0 // pred_region
    _
  $region25: #{labind_forward.17} parent=0 // pred_fallthru
    _
  // Predicated region
  $region26: #{labind_forward.17} parent=0 // pred_check
    _
  $region27: #{labind_forward.17} parent=0 // pred_check_branch
    %26 = sbr.rel (0) target = $region29
  $region28: #{labind_forward.17} parent=0 // pred_region
    _
  $region29: #{labind_forward.17} parent=0 // pred_fallthru
    _
  // Predicated region
  $region30: #{labind_forward.17} parent=0 // pred_check
    _
  $region31: #{labind_forward.17} parent=0 // pred_check_branch
    %28 = sbr.rel (0) target = $region33
  $region32: #{labind_forward.17} parent=0 // pred_region
    _
  $region33: #{labind_forward.17} parent=0 // pred_fallthru
    _
  %v30 = vld [vmem:[%s0] sm:$0xf]
  %v31 = vld [vmem:[%s0 + $0x4] sm:$0xf]
  %v32 = vld [vmem:[%s1] sm:$0xf]
  %v33 = vld [vmem:[%s1 + $0x4] sm:$0xf]
  %v36 = vunpack.c.l.b16 %v30
  %v37 = vunpack.c.l.b16 %v31
  %v38 = vpack.c.b16 %v37, %v36
  %v41 = vunpack.c.l.b16 %v32
  %v42 = vunpack.c.l.b16 %v33
  %v43 = vpack.c.b16 %v42, %v41
  %44 = vrot.lane.b32.xlu0 %v43, 32
  %v45 = vpop.permute.xlu0 %44
  %vm46 = vcmask 261120
  %v49 = vsel %vm46, %v38, %v45
  %v51 = vunpack.c.l.bf16 %v49
  %v52 = vunpack.c.h.bf16 %v49
  %v53 = vld [vmem:[%s2] sm:$0x1]
  %v54 = vld [vmem:[%s3] sm:$0x1]
  %vm55 = vcmask 523264
  %v56 = vsel %vm55, %v51, 0.0
  %57 = vadd.xlane.f32.xlu0 %v56
  %v58 = vpop.xlane.xlu0 %57
  %v59 = vsel %vm55, %v52, 0.0
  %60 = vadd.xlane.f32.xlu0 %v59
  %v61 = vpop.xlane.xlu0 %60
  %v62 = vrcp.pop 64.0
  %v63 = vmul.f32 %v58, %v62
  %v64 = vmul.f32 %v61, %v62
  %v65 = vsub.f32 %v51, %v63
  %v66 = vsub.f32 %v52, %v64
  %v67 = vmul.f32 %v65, %v65
  %v68 = vmul.f32 %v66, %v66
  %v69 = vsel %vm55, %v67, 0.0
  %70 = vadd.xlane.f32.xlu0 %v69
  %v71 = vpop.xlane.xlu0 %70
  %v72 = vsel %vm55, %v68, 0.0
  %73 = vadd.xlane.f32.xlu0 %v72
  %v74 = vpop.xlane.xlu0 %73
  %v75 = vmul.f32 %v71, %v62
  %v76 = vmul.f32 %v74, %v62
  %v77 = vadd.f32 %v75, 1e-06
  %v78 = vadd.f32 %v76, 1e-06
  %v79 = vrsqrt.pop %v77
  %v80 = vrsqrt.pop %v78
  %v81 = vmul.f32 %v65, %v79
  %v82 = vmul.f32 %v66, %v80
  %v84 = vlaneseq
  %v85 = vshrl.u32 %v84, 7
  %v86 = vsub.s32 0, %v85
  %v87 = vrot.slane %v53, %v86
  %v89 = vmul.f32 %v81, %v87
  %v90 = vmul.f32 %v82, %v87
  %v92 = vlaneseq
  %v93 = vshrl.u32 %v92, 7
  %v94 = vsub.s32 0, %v93
  %v95 = vrot.slane %v54, %v94
  %v97 = vadd.f32 %v89, %v95
  %v98 = vadd.f32 %v90, %v95
  %v99 = vld [vmem:[%s4] sm:$0xf]
  %v100 = vld [vmem:[%s4 + $0x4] sm:$0xf]
  %v101 = vld [vmem:[%s4 + $0x8] sm:$0xf]
  %v102 = vld [vmem:[%s4 + $0xc] sm:$0xf]
  %v103 = vld [vmem:[%s4 + $0x10] sm:$0xf]
  %v104 = vld [vmem:[%s4 + $0x14] sm:$0xf]
  %v105 = vld [vmem:[%s4 + $0x18] sm:$0xf]
  %v106 = vld [vmem:[%s4 + $0x1c] sm:$0xf]
  %v107 = vpack.c.bf16 %v98, %v97
  %v108 = vld [vmem:[%s5] sm:$0x1]
  %v110 = vlaneseq
  %v111 = vshrl.u32 %v110, 7
  %v112 = vsub.s32 0, %v111
  %v113 = vrot.slane %v108, %v112
  %v123 = vunpack.c.l.b16 %v99
  %v124 = vunpack.c.l.b16 %v100
  %v125 = vunpack.c.l.b16 %v101
  %v126 = vunpack.c.l.b16 %v102
  %v127 = vunpack.c.l.b16 %v103
  %v128 = vunpack.c.l.b16 %v104
  %v129 = vunpack.c.l.b16 %v105
  %v130 = vunpack.c.l.b16 %v106
  %v131 = vpack.c.b16 %v124, %v123
  %v132 = vpack.c.b16 %v126, %v125
  %v133 = vpack.c.b16 %v128, %v127
  %v134 = vpack.c.b16 %v130, %v129
  %v140 = vsel %vm55, %v107, 0
  %142 = vmatprep.subr.bf16.mxu0 0
  %143 = vmatpush1.bf16.msra.mxu0 %v131
  %144 = vmatprep.subr.bf16.mxu0 0
  %145 = vmatpush1.bf16.msra.mxu0 %v132
  %146 = vmatprep.subr.bf16.mxu0 0
  %147 = vmatpush1.bf16.msra.mxu0 %v133
  %148 = vmatprep.subr.bf16.mxu0 0
  %149 = vmatpush1.bf16.msra.mxu0 %v134
  %150 = vmatprep.subr.bf16.mxu0 0
  %151 = vmatpush1.bf16.msra.mxu0 0
  %152 = vmatprep.subr.bf16.mxu0 0
  %153 = vmatpush1.bf16.msra.mxu0 0
  %154 = vmatprep.subr.bf16.mxu0 0
  %155 = vmatpush1.bf16.msra.mxu0 0
  %156 = vmatprep.subr.bf16.mxu0 0
  %157 = vmatpush1.bf16.msra.mxu0 0
  %158 = vmatprep.subr.bf16.mxu0 0
  %159 = vmatpush1.bf16.msra.mxu0 0
  %160 = vmatprep.subr.bf16.mxu0 0
  %161 = vmatpush1.bf16.msra.mxu0 0
  %162 = vmatprep.subr.bf16.mxu0 0
  %163 = vmatpush1.bf16.msra.mxu0 0
  %164 = vmatprep.subr.bf16.mxu0 0
  %165 = vmatpush1.bf16.msra.mxu0 0
  %166 = vmatprep.subr.bf16.mxu0 0
  %167 = vmatpush1.bf16.msra.mxu0 0
  %168 = vmatprep.subr.bf16.mxu0 0
  %169 = vmatpush1.bf16.msra.mxu0 0
  %170 = vmatprep.subr.bf16.mxu0 0
  %171 = vmatpush1.bf16.msra.mxu0 0
  %172 = vmatprep.subr.bf16.mxu0 0
  %173 = vmatpush1.bf16.msra.mxu0 0
  %174 = vmatprep.mubr.bf16.mxu0 0
  %175 = vmatmul.mubr.bf16.gmra.mrb[0].mxu0 %v140
  %v176 = vpop.f32.mrb[0].mxu0
  %v177 = vadd.f32 %v113, %v176
  %v178 = vpop.f32.mrb[0].mxu0
  %v179 = vpop.f32.mrb[0].mxu0
  %v180 = vadd.f32 %v113, %v179
  %v181 = vpop.f32.mrb[0].mxu0
  %182 = vdwg.mxu0
  %v183 = vxor.u32 %v177, 2147483648
  %v184 = vxor.u32 %v180, 2147483648
  %v185 = vmul.f32 %v183, 1.442695
  %v186 = vpow.pop %v185
  %v187 = vmul.f32 %v184, 1.442695
  %v188 = vpow.pop %v187
  %v189 = vadd.f32 %v186, 1.0
  %v190 = vadd.f32 %v188, 1.0
  %v191 = vrcp.pop %v189
  %v192 = vmul.f32 1.0, %v191
  %v193 = vrcp.pop %v190
  %v194 = vmul.f32 1.0, %v193
  %v195 = vmul.f32 %v177, %v192
  %v196 = vmul.f32 %v180, %v194
  %v197 = vld [vmem:[%s6] sm:$0x1]
  %v198 = vld [vmem:[%s7] sm:$0x1]
  %v199 = vsel %vm46, %v195, 0.0
  %200 = vadd.xlane.f32.xlu0 %v199
  %v201 = vpop.xlane.xlu0 %200
  %v202 = vsel %vm46, %v196, 0.0
  %203 = vadd.xlane.f32.xlu0 %v202
  %v204 = vpop.xlane.xlu0 %203
  %v205 = vrcp.pop 32.0
  %v206 = vmul.f32 %v201, %v205
  %v207 = vmul.f32 %v204, %v205
  %v208 = vsub.f32 %v195, %v206
  %v209 = vsub.f32 %v196, %v207
  %v210 = vmul.f32 %v208, %v208
  %v211 = vmul.f32 %v209, %v209
  %v212 = vsel %vm46, %v210, 0.0
  %213 = vadd.xlane.f32.xlu0 %v212
  %v214 = vpop.xlane.xlu0 %213
  %v215 = vsel %vm46, %v211, 0.0
  %216 = vadd.xlane.f32.xlu0 %v215
  %v217 = vpop.xlane.xlu0 %216
  %v218 = vmul.f32 %v214, %v205
  %v219 = vmul.f32 %v217, %v205
  %v220 = vadd.f32 %v218, 1e-06
  %v221 = vadd.f32 %v219, 1e-06
  %v222 = vrsqrt.pop %v220
  %v223 = vrsqrt.pop %v221
  %v224 = vmul.f32 %v208, %v222
  %v225 = vmul.f32 %v209, %v223
  %v227 = vlaneseq
  %v228 = vshrl.u32 %v227, 7
  %v229 = vsub.s32 0, %v228
  %v230 = vrot.slane %v197, %v229
  %v232 = vmul.f32 %v224, %v230
  %v233 = vmul.f32 %v225, %v230
  %v235 = vlaneseq
  %v236 = vshrl.u32 %v235, 7
  %v237 = vsub.s32 0, %v236
  %v238 = vrot.slane %v198, %v237
  %v240 = vadd.f32 %v232, %v238
  %v241 = vadd.f32 %v233, %v238
  %v242 = vpack.c.bf16 %v241, %v240
  %v244 = vunpack.c.l.b16 %v242
  %v245 = vunpack.c.h.b16 %v242
  %v246 = vpack.c.b16 %v244, %v244
  %v247 = vpack.c.b16 %v245, %v245
  %vm250 = vcmask 257024
  %251 = vst.msk [vmem:[%s8] sm:$0xf] %vm250, %v246
  %252 = vst.msk [vmem:[%s8 + $0x4] sm:$0xf] %vm250, %v247
  // Predicated region
  $region34: #{labind_forward.17} parent=0 // pred_check
    _
  $region35: #{labind_forward.17} parent=0 // pred_check_branch
    %254 = sbr.rel (0) target = $region37
  $region36: #{labind_forward.17} parent=0 // pred_region
    _
  $region37: #{labind_forward.17} parent=0 // pred_fallthru
    _
  // Predicated region
  $region38: #{labind_forward.17} parent=0 // pred_check
    _
  $region39: #{labind_forward.17} parent=0 // pred_check_branch
    %256 = sbr.rel (0) target = $region41
  $region40: #{labind_forward.17} parent=0 // pred_region
    _
  $region41: #{labind_forward.17} parent=0 // pred_fallthru
    _

// kernel: labind_forward.13
$region0: #{labind_forward.13}
  #allocation0 [shape = 'u32[]', space=smem, size = 0x4, offset = 0x4, fixed_abs, tag = 'smem constant byte address 0x4 - core index']
  #allocation1 [shape = 'u32[144,128]{1,0:T(1,128)}', space=vmem, size = 0x12000, scoped, tag = 'internal scratch']
  %s0 = inlined_call_operand.vmem [shape: bf16[16,64], index: 0, kind: input, shape index: {}]
  %s1 = inlined_call_operand.vmem [shape: bf16[64,32], index: 1, kind: input, shape index: {}]
  %s2 = inlined_call_operand.vmem [shape: f32[1,32], index: 2, kind: input, shape index: {}]
  %s3 = inlined_call_operand.vmem [shape: bf16[32,32], index: 3, kind: input, shape index: {}]
  %s4 = inlined_call_operand.vmem [shape: f32[1,32], index: 4, kind: input, shape index: {}]
  %s5 = inlined_call_operand.vmem [shape: f32[1,32], index: 5, kind: input, shape index: {}]
  %s6 = inlined_call_operand.vmem [shape: f32[1,32], index: 6, kind: input, shape index: {}]
  %s7 = inlined_call_operand.vmem [shape: bf16[16,32], index: 7, kind: output, shape index: {}]
  %s8 = sld [smem:[#allocation0]]
  $region38: #{labind_forward.13} parent=0
    _
  %s10 = ssub.s32 1, %s8
  %s11 = scalar_select 0, %s10, %s8
  // Predicated region
  $region2: #{labind_forward.13} parent=0 // pred_check
    _
  $region3: #{labind_forward.13} parent=0 // pred_check_branch
    %13 = sbr.rel (0) target = $region5
  $region4: #{labind_forward.13} parent=0 // pred_region
    _
  $region5: #{labind_forward.13} parent=0 // pred_fallthru
    _
  // Predicated region
  $region6: #{labind_forward.13} parent=0 // pred_check
    _
  $region7: #{labind_forward.13} parent=0 // pred_check_branch
    %15 = sbr.rel (0) target = $region9
  $region8: #{labind_forward.13} parent=0 // pred_region
    _
  $region9: #{labind_forward.13} parent=0 // pred_fallthru
    _
  // Predicated region
  $region10: #{labind_forward.13} parent=0 // pred_check
    _
  $region11: #{labind_forward.13} parent=0 // pred_check_branch
    %17 = sbr.rel (0) target = $region13
  $region12: #{labind_forward.13} parent=0 // pred_region
    _
  $region13: #{labind_forward.13} parent=0 // pred_fallthru
    _
  // Predicated region
  $region14: #{labind_forward.13} parent=0 // pred_check
    _
  $region15: #{labind_forward.13} parent=0 // pred_check_branch
    %19 = sbr.rel (0) target = $region17
  $region16: #{labind_forward.13} parent=0 // pred_region
    _
  $region17: #{labind_forward.13} parent=0 // pred_fallthru
    _
  // Predicated region
  $region18: #{labind_forward.13} parent=0 // pred_check
    _
  $region19: #{labind_forward.13} parent=0 // pred_check_branch
    %21 = sbr.rel (0) target = $region21
  $region20: #{labind_forward.13} parent=0 // pred_region
    _
  $region21: #{labind_forward.13} parent=0 // pred_fallthru
    _
  // Predicated region
  $region22: #{labind_forward.13} parent=0 // pred_check
    _
  $region23: #{labind_forward.13} parent=0 // pred_check_branch
    %23 = sbr.rel (0) target = $region25
  $region24: #{labind_forward.13} parent=0 // pred_region
    _
  $region25: #{labind_forward.13} parent=0 // pred_fallthru
    _
  // Predicated region
  $region26: #{labind_forward.13} parent=0 // pred_check
    _
  $region27: #{labind_forward.13} parent=0 // pred_check_branch
    %25 = sbr.rel (0) target = $region29
  $region28: #{labind_forward.13} parent=0 // pred_region
    _
  $region29: #{labind_forward.13} parent=0 // pred_fallthru
    _
  %v27 = vld [vmem:[%s0] sm:$0xf]
  %v28 = vld [vmem:[%s0 + $0x4] sm:$0xf]
  %v29 = vld [vmem:[%s1] sm:$0xf]
  %v30 = vld [vmem:[%s1 + $0x4] sm:$0xf]
  %v31 = vld [vmem:[%s1 + $0x8] sm:$0xf]
  %v32 = vld [vmem:[%s1 + $0xc] sm:$0xf]
  %v33 = vld [vmem:[%s1 + $0x10] sm:$0xf]
  %v34 = vld [vmem:[%s1 + $0x14] sm:$0xf]
  %v35 = vld [vmem:[%s1 + $0x18] sm:$0xf]
  %v36 = vld [vmem:[%s1 + $0x1c] sm:$0xf]
  %v37 = vld [vmem:[%s2] sm:$0x1]
  %v39 = vlaneseq
  %v40 = vshrl.u32 %v39, 7
  %v41 = vsub.s32 0, %v40
  %v42 = vrot.slane %v37, %v41
  %v46 = vunpack.c.l.b16 %v27
  %v47 = vunpack.c.l.b16 %v28
  %v48 = vpack.c.b16 %v47, %v46
  %v57 = vunpack.c.l.b16 %v29
  %v58 = vunpack.c.l.b16 %v30
  %v59 = vunpack.c.l.b16 %v31
  %v60 = vunpack.c.l.b16 %v32
  %v61 = vunpack.c.l.b16 %v33
  %v62 = vunpack.c.l.b16 %v34
  %v63 = vunpack.c.l.b16 %v35
  %v64 = vunpack.c.l.b16 %v36
  %v65 = vpack.c.b16 %v58, %v57
  %v66 = vpack.c.b16 %v60, %v59
  %v67 = vpack.c.b16 %v62, %v61
  %v68 = vpack.c.b16 %v64, %v63
  %vm73 = vcmask 523264
  %v75 = vsel %vm73, %v48, 0
  %77 = vmatprep.subr.bf16.mxu0 0
  %78 = vmatpush1.bf16.msra.mxu0 %v65
  %79 = vmatprep.subr.bf16.mxu0 0
  %80 = vmatpush1.bf16.msra.mxu0 %v66
  %81 = vmatprep.subr.bf16.mxu0 0
  %82 = vmatpush1.bf16.msra.mxu0 %v67
  %83 = vmatprep.subr.bf16.mxu0 0
  %84 = vmatpush1.bf16.msra.mxu0 %v68
  %85 = vmatprep.subr.bf16.mxu0 0
  %86 = vmatpush1.bf16.msra.mxu0 0
  %87 = vmatprep.subr.bf16.mxu0 0
  %88 = vmatpush1.bf16.msra.mxu0 0
  %89 = vmatprep.subr.bf16.mxu0 0
  %90 = vmatpush1.bf16.msra.mxu0 0
  %91 = vmatprep.subr.bf16.mxu0 0
  %92 = vmatpush1.bf16.msra.mxu0 0
  %93 = vmatprep.subr.bf16.mxu0 0
  %94 = vmatpush1.bf16.msra.mxu0 0
  %95 = vmatprep.subr.bf16.mxu0 0
  %96 = vmatpush1.bf16.msra.mxu0 0
  %97 = vmatprep.subr.bf16.mxu0 0
  %98 = vmatpush1.bf16.msra.mxu0 0
  %99 = vmatprep.subr.bf16.mxu0 0
  %100 = vmatpush1.bf16.msra.mxu0 0
  %101 = vmatprep.subr.bf16.mxu0 0
  %102 = vmatpush1.bf16.msra.mxu0 0
  %103 = vmatprep.subr.bf16.mxu0 0
  %104 = vmatpush1.bf16.msra.mxu0 0
  %105 = vmatprep.subr.bf16.mxu0 0
  %106 = vmatpush1.bf16.msra.mxu0 0
  %107 = vmatprep.subr.bf16.mxu0 0
  %108 = vmatpush1.bf16.msra.mxu0 0
  %109 = vmatprep.mubr.bf16.mxu0 0
  %110 = vmatmul.mubr.bf16.gmra.mrb[0].mxu0 %v75
  %v111 = vpop.f32.mrb[0].mxu0
  %v112 = vadd.f32 %v42, %v111
  %v113 = vpop.f32.mrb[0].mxu0
  %v114 = vpop.f32.mrb[0].mxu0
  %v115 = vadd.f32 %v42, %v114
  %v116 = vpop.f32.mrb[0].mxu0
  %117 = vdwg.mxu0
  %v118 = vxor.u32 %v112, 2147483648
  %v119 = vxor.u32 %v115, 2147483648
  %v120 = vmul.f32 %v118, 1.442695
  %v121 = vpow.pop %v120
  %v122 = vmul.f32 %v119, 1.442695
  %v123 = vpow.pop %v122
  %v124 = vadd.f32 %v121, 1.0
  %v125 = vadd.f32 %v123, 1.0
  %v126 = vrcp.pop %v124
  %v127 = vmul.f32 1.0, %v126
  %v128 = vrcp.pop %v125
  %v129 = vmul.f32 1.0, %v128
  %v130 = vmul.f32 %v112, %v127
  %v131 = vmul.f32 %v115, %v129
  %v132 = vld [vmem:[%s3] sm:$0xf]
  %v133 = vld [vmem:[%s3 + $0x4] sm:$0xf]
  %v134 = vld [vmem:[%s3 + $0x8] sm:$0xf]
  %v135 = vld [vmem:[%s3 + $0xc] sm:$0xf]
  %v136 = vpack.c.bf16 %v131, %v130
  %v137 = vld [vmem:[%s4] sm:$0x1]
  %v139 = vlaneseq
  %v140 = vshrl.u32 %v139, 7
  %v141 = vsub.s32 0, %v140
  %v142 = vrot.slane %v137, %v141
  %v148 = vunpack.c.l.b16 %v132
  %v149 = vunpack.c.l.b16 %v133
  %v150 = vunpack.c.l.b16 %v134
  %v151 = vunpack.c.l.b16 %v135
  %v152 = vpack.c.b16 %v149, %v148
  %v153 = vpack.c.b16 %v151, %v150
  %vm156 = vcmask 261120
  %v158 = vsel %vm156, %v136, 0
  %160 = vmatprep.subr.bf16.mxu0 0
  %161 = vmatpush1.bf16.msra.mxu0 %v152
  %162 = vmatprep.subr.bf16.mxu0 0
  %163 = vmatpush1.bf16.msra.mxu0 %v153
  %164 = vmatprep.subr.bf16.mxu0 0
  %165 = vmatpush1.bf16.msra.mxu0 0
  %166 = vmatprep.subr.bf16.mxu0 0
  %167 = vmatpush1.bf16.msra.mxu0 0
  %168 = vmatprep.subr.bf16.mxu0 0
  %169 = vmatpush1.bf16.msra.mxu0 0
  %170 = vmatprep.subr.bf16.mxu0 0
  %171 = vmatpush1.bf16.msra.mxu0 0
  %172 = vmatprep.subr.bf16.mxu0 0
  %173 = vmatpush1.bf16.msra.mxu0 0
  %174 = vmatprep.subr.bf16.mxu0 0
  %175 = vmatpush1.bf16.msra.mxu0 0
  %176 = vmatprep.subr.bf16.mxu0 0
  %177 = vmatpush1.bf16.msra.mxu0 0
  %178 = vmatprep.subr.bf16.mxu0 0
  %179 = vmatpush1.bf16.msra.mxu0 0
  %180 = vmatprep.subr.bf16.mxu0 0
  %181 = vmatpush1.bf16.msra.mxu0 0
  %182 = vmatprep.subr.bf16.mxu0 0
  %183 = vmatpush1.bf16.msra.mxu0 0
  %184 = vmatprep.subr.bf16.mxu0 0
  %185 = vmatpush1.bf16.msra.mxu0 0
  %186 = vmatprep.subr.bf16.mxu0 0
  %187 = vmatpush1.bf16.msra.mxu0 0
  %188 = vmatprep.subr.bf16.mxu0 0
  %189 = vmatpush1.bf16.msra.mxu0 0
  %190 = vmatprep.subr.bf16.mxu0 0
  %191 = vmatpush1.bf16.msra.mxu0 0
  %192 = vmatprep.mubr.bf16.mxu0 0
  %193 = vmatmul.mubr.bf16.gmra.mrb[0].mxu0 %v158
  %v194 = vpop.f32.mrb[0].mxu0
  %v195 = vadd.f32 %v142, %v194
  %v196 = vpop.f32.mrb[0].mxu0
  %v197 = vpop.f32.mrb[0].mxu0
  %v198 = vadd.f32 %v142, %v197
  %v199 = vpop.f32.mrb[0].mxu0
  %200 = vdwg.mxu0
  %v201 = vld [vmem:[%s5] sm:$0x1]
  %v202 = vld [vmem:[%s6] sm:$0x1]
  %v203 = vsel %vm156, %v195, 0.0
  %204 = vadd.xlane.f32.xlu0 %v203
  %v205 = vpop.xlane.xlu0 %204
  %v206 = vsel %vm156, %v198, 0.0
  %207 = vadd.xlane.f32.xlu0 %v206
  %v208 = vpop.xlane.xlu0 %207
  %v209 = vrcp.pop 32.0
  %v210 = vmul.f32 %v205, %v209
  %v211 = vmul.f32 %v208, %v209
  %v212 = vsub.f32 %v195, %v210
  %v213 = vsub.f32 %v198, %v211
  %v214 = vmul.f32 %v212, %v212
  %v215 = vmul.f32 %v213, %v213
  %v216 = vsel %vm156, %v214, 0.0
  %217 = vadd.xlane.f32.xlu0 %v216
  %v218 = vpop.xlane.xlu0 %217
  %v219 = vsel %vm156, %v215, 0.0
  %220 = vadd.xlane.f32.xlu0 %v219
  %v221 = vpop.xlane.xlu0 %220
  %v222 = vmul.f32 %v218, %v209
  %v223 = vmul.f32 %v221, %v209
  %v224 = vadd.f32 %v222, 1e-05
  %v225 = vadd.f32 %v223, 1e-05
  %v226 = vrsqrt.pop %v224
  %v227 = vrsqrt.pop %v225
  %v228 = vmul.f32 %v212, %v226
  %v229 = vmul.f32 %v213, %v227
  %v231 = vlaneseq
  %v232 = vshrl.u32 %v231, 7
  %v233 = vsub.s32 0, %v232
  %v234 = vrot.slane %v201, %v233
  %v236 = vmul.f32 %v228, %v234
  %v237 = vmul.f32 %v229, %v234
  %v239 = vlaneseq
  %v240 = vshrl.u32 %v239, 7
  %v241 = vsub.s32 0, %v240
  %v242 = vrot.slane %v202, %v241
  %v244 = vadd.f32 %v236, %v242
  %v245 = vadd.f32 %v237, %v242
  %v246 = vpack.c.bf16 %v245, %v244
  %v248 = vunpack.c.l.b16 %v246
  %v249 = vunpack.c.h.b16 %v246
  %v250 = vpack.c.b16 %v248, %v248
  %v251 = vpack.c.b16 %v249, %v249
  %vm254 = vcmask 257024
  %255 = vst.msk [vmem:[%s7] sm:$0xf] %vm254, %v250
  %256 = vst.msk [vmem:[%s7 + $0x4] sm:$0xf] %vm254, %v251
  // Predicated region
  $region30: #{labind_forward.13} parent=0 // pred_check
    _
  $region31: #{labind_forward.13} parent=0 // pred_check_branch
    %258 = sbr.rel (0) target = $region33
  $region32: #{labind_forward.13} parent=0 // pred_region
    _
  $region33: #{labind_forward.13} parent=0 // pred_fallthru
    _
  // Predicated region
  $region34: #{labind_forward.13} parent=0 // pred_check
    _
  $region35: #{labind_forward.13} parent=0 // pred_check_branch
    %260 = sbr.rel (0) target = $region37
  $region36: #{labind_forward.13} parent=0 // pred_region
    _
  $region37: #{labind_forward.13} parent=0 // pred_fallthru
    _

// kernel: labind_forward.18
$region0: #{labind_forward.18}
  #allocation0 [shape = 'u32[]', space=smem, size = 0x4, offset = 0x4, fixed_abs, tag = 'smem constant byte address 0x4 - core index']
  #allocation1 [shape = 'u32[144,128]{1,0:T(1,128)}', space=vmem, size = 0x12000, scoped, tag = 'internal scratch']
  %s0 = inlined_call_operand.vmem [shape: bf16[80,32], index: 0, kind: input, shape index: {}]
  %s1 = inlined_call_operand.vmem [shape: bf16[80,32], index: 1, kind: input, shape index: {}]
  %s2 = inlined_call_operand.vmem [shape: bf16[64,64], index: 2, kind: input, shape index: {}]
  %s3 = inlined_call_operand.vmem [shape: f32[1,64], index: 3, kind: input, shape index: {}]
  %s4 = inlined_call_operand.vmem [shape: bf16[80,64], index: 4, kind: output, shape index: {}]
  %s5 = sld [smem:[#allocation0]]
  $region26: #{labind_forward.18} parent=0
    _
  %s7 = ssub.s32 1, %s5
  %s8 = scalar_select 0, %s7, %s5
  // Predicated region
  $region2: #{labind_forward.18} parent=0 // pred_check
    _
  $region3: #{labind_forward.18} parent=0 // pred_check_branch
    %10 = sbr.rel (0) target = $region5
  $region4: #{labind_forward.18} parent=0 // pred_region
    _
  $region5: #{labind_forward.18} parent=0 // pred_fallthru
    _
  // Predicated region
  $region6: #{labind_forward.18} parent=0 // pred_check
    _
  $region7: #{labind_forward.18} parent=0 // pred_check_branch
    %12 = sbr.rel (0) target = $region9
  $region8: #{labind_forward.18} parent=0 // pred_region
    _
  $region9: #{labind_forward.18} parent=0 // pred_fallthru
    _
  // Predicated region
  $region10: #{labind_forward.18} parent=0 // pred_check
    _
  $region11: #{labind_forward.18} parent=0 // pred_check_branch
    %14 = sbr.rel (0) target = $region13
  $region12: #{labind_forward.18} parent=0 // pred_region
    _
  $region13: #{labind_forward.18} parent=0 // pred_fallthru
    _
  // Predicated region
  $region14: #{labind_forward.18} parent=0 // pred_check
    _
  $region15: #{labind_forward.18} parent=0 // pred_check_branch
    %16 = sbr.rel (0) target = $region17
  $region16: #{labind_forward.18} parent=0 // pred_region
    _
  $region17: #{labind_forward.18} parent=0 // pred_fallthru
    _
  %v18 = vld [vmem:[%s0] sm:$0xf]
  %v19 = vld [vmem:[%s0 + $0x4] sm:$0xf]
  %v20 = vld [vmem:[%s0 + $0x8] sm:$0xf]
  %v21 = vld [vmem:[%s0 + $0xc] sm:$0xf]
  %v22 = vld [vmem:[%s0 + $0x10] sm:$0xf]
  %v23 = vld [vmem:[%s0 + $0x14] sm:$0xf]
  %v24 = vld [vmem:[%s0 + $0x18] sm:$0xf]
  %v25 = vld [vmem:[%s0 + $0x1c] sm:$0xf]
  %v26 = vld [vmem:[%s0 + $0x20] sm:$0xf]
  %v27 = vld [vmem:[%s0 + $0x24] sm:$0xf]
  %v28 = vld [vmem:[%s1] sm:$0xf]
  %v29 = vld [vmem:[%s1 + $0x4] sm:$0xf]
  %v30 = vld [vmem:[%s1 + $0x8] sm:$0xf]
  %v31 = vld [vmem:[%s1 + $0xc] sm:$0xf]
  %v32 = vld [vmem:[%s1 + $0x10] sm:$0xf]
  %v33 = vld [vmem:[%s1 + $0x14] sm:$0xf]
  %v34 = vld [vmem:[%s1 + $0x18] sm:$0xf]
  %v35 = vld [vmem:[%s1 + $0x1c] sm:$0xf]
  %v36 = vld [vmem:[%s1 + $0x20] sm:$0xf]
  %v37 = vld [vmem:[%s1 + $0x24] sm:$0xf]
  %v48 = vunpack.c.l.b16 %v18
  %v49 = vunpack.c.l.b16 %v19
  %v50 = vunpack.c.l.b16 %v20
  %v51 = vunpack.c.l.b16 %v21
  %v52 = vunpack.c.l.b16 %v22
  %v53 = vunpack.c.l.b16 %v23
  %v54 = vunpack.c.l.b16 %v24
  %v55 = vunpack.c.l.b16 %v25
  %v56 = vunpack.c.l.b16 %v26
  %v57 = vunpack.c.l.b16 %v27
  %v58 = vpack.c.b16 %v49, %v48
  %v59 = vpack.c.b16 %v51, %v50
  %v60 = vpack.c.b16 %v53, %v52
  %v61 = vpack.c.b16 %v55, %v54
  %v62 = vpack.c.b16 %v57, %v56
  %v73 = vunpack.c.l.b16 %v28
  %v74 = vunpack.c.l.b16 %v29
  %v75 = vunpack.c.l.b16 %v30
  %v76 = vunpack.c.l.b16 %v31
  %v77 = vunpack.c.l.b16 %v32
  %v78 = vunpack.c.l.b16 %v33
  %v79 = vunpack.c.l.b16 %v34
  %v80 = vunpack.c.l.b16 %v35
  %v81 = vunpack.c.l.b16 %v36
  %v82 = vunpack.c.l.b16 %v37
  %v83 = vpack.c.b16 %v74, %v73
  %v84 = vpack.c.b16 %v76, %v75
  %v85 = vpack.c.b16 %v78, %v77
  %v86 = vpack.c.b16 %v80, %v79
  %v87 = vpack.c.b16 %v82, %v81
  %88 = vrot.lane.b32.xlu0 %v83, 32
  %v89 = vpop.permute.xlu0 %88
  %90 = vrot.lane.b32.xlu0 %v84, 32
  %v91 = vpop.permute.xlu0 %90
  %92 = vrot.lane.b32.xlu0 %v85, 32
  %v93 = vpop.permute.xlu0 %92
  %94 = vrot.lane.b32.xlu0 %v86, 32
  %v95 = vpop.permute.xlu0 %94
  %96 = vrot.lane.b32.xlu0 %v87, 32
  %v97 = vpop.permute.xlu0 %96
  %vm98 = vcmask 261120
  %v101 = vsel %vm98, %v58, %v89
  %v104 = vsel %vm98, %v59, %v91
  %v107 = vsel %vm98, %v60, %v93
  %v110 = vsel %vm98, %v61, %v95
  %v113 = vsel %vm98, %v62, %v97
  %v114 = vld [vmem:[%s2] sm:$0xf]
  %v115 = vld [vmem:[%s2 + $0x4] sm:$0xf]
  %v116 = vld [vmem:[%s2 + $0x8] sm:$0xf]
  %v117 = vld [vmem:[%s2 + $0xc] sm:$0xf]
  %v118 = vld [vmem:[%s2 + $0x10] sm:$0xf]
  %v119 = vld [vmem:[%s2 + $0x14] sm:$0xf]
  %v120 = vld [vmem:[%s2 + $0x18] sm:$0xf]
  %v121 = vld [vmem:[%s2 + $0x1c] sm:$0xf]
  %v122 = vld [vmem:[%s3] sm:$0x1]
  %v124 = vlaneseq
  %v125 = vshrl.u32 %v124, 7
  %v126 = vsub.s32 0, %v125
  %v127 = vrot.slane %v122, %v126
  %v137 = vunpack.c.l.b16 %v114
  %v138 = vunpack.c.l.b16 %v115
  %v139 = vunpack.c.l.b16 %v116
  %v140 = vunpack.c.l.b16 %v117
  %v141 = vunpack.c.l.b16 %v118
  %v142 = vunpack.c.l.b16 %v119
  %v143 = vunpack.c.l.b16 %v120
  %v144 = vunpack.c.l.b16 %v121
  %v145 = vpack.c.b16 %v138, %v137
  %v146 = vpack.c.b16 %v140, %v139
  %v147 = vpack.c.b16 %v142, %v141
  %v148 = vpack.c.b16 %v144, %v143
  %vm153 = vcmask 523264
  %v154 = vsel %vm153, %v101, 0
  %v156 = vsel %vm153, %v104, 0
  %v158 = vsel %vm153, %v107, 0
  %v160 = vsel %vm153, %v110, 0
  %v162 = vsel %vm153, %v113, 0
  %164 = vmatprep.subr.bf16.mxu0 0
  %165 = vmatpush1.bf16.msra.mxu0 %v145
  %166 = vmatprep.subr.bf16.mxu0 0
  %167 = vmatpush1.bf16.msra.mxu0 %v146
  %168 = vmatprep.subr.bf16.mxu0 0
  %169 = vmatpush1.bf16.msra.mxu0 %v147
  %170 = vmatprep.subr.bf16.mxu0 0
  %171 = vmatpush1.bf16.msra.mxu0 %v148
  %172 = vmatprep.subr.bf16.mxu0 0
  %173 = vmatpush1.bf16.msra.mxu0 0
  %174 = vmatprep.subr.bf16.mxu0 0
  %175 = vmatpush1.bf16.msra.mxu0 0
  %176 = vmatprep.subr.bf16.mxu0 0
  %177 = vmatpush1.bf16.msra.mxu0 0
  %178 = vmatprep.subr.bf16.mxu0 0
  %179 = vmatpush1.bf16.msra.mxu0 0
  %180 = vmatprep.subr.bf16.mxu0 0
  %181 = vmatpush1.bf16.msra.mxu0 0
  %182 = vmatprep.subr.bf16.mxu0 0
  %183 = vmatpush1.bf16.msra.mxu0 0
  %184 = vmatprep.subr.bf16.mxu0 0
  %185 = vmatpush1.bf16.msra.mxu0 0
  %186 = vmatprep.subr.bf16.mxu0 0
  %187 = vmatpush1.bf16.msra.mxu0 0
  %188 = vmatprep.subr.bf16.mxu0 0
  %189 = vmatpush1.bf16.msra.mxu0 0
  %190 = vmatprep.subr.bf16.mxu0 0
  %191 = vmatpush1.bf16.msra.mxu0 0
  %192 = vmatprep.subr.bf16.mxu0 0
  %193 = vmatpush1.bf16.msra.mxu0 0
  %194 = vmatprep.subr.bf16.mxu0 0
  %195 = vmatpush1.bf16.msra.mxu0 0
  %196 = vmatprep.mubr.bf16.mxu0 0
  %197 = vmatmul.mubr.bf16.gmra.mrb[0].mxu0 %v154
  %v198 = vpop.f32.mrb[0].mxu0
  %v199 = vadd.f32 %v127, %v198
  %v200 = vpop.f32.mrb[0].mxu0
  %v201 = vpop.f32.mrb[0].mxu0
  %v202 = vadd.f32 %v127, %v201
  %v203 = vpop.f32.mrb[0].mxu0
  %204 = vmatprep.mubr.bf16.mxu0 0
  %205 = vmatmul.mubr.bf16.gmra.mrb[0].mxu0 %v156
  %v206 = vpop.f32.mrb[0].mxu0
  %v207 = vadd.f32 %v127, %v206
  %v208 = vpop.f32.mrb[0].mxu0
  %v209 = vpop.f32.mrb[0].mxu0
  %v210 = vadd.f32 %v127, %v209
  %v211 = vpop.f32.mrb[0].mxu0
  %212 = vmatprep.mubr.bf16.mxu0 0
  %213 = vmatmul.mubr.bf16.gmra.mrb[0].mxu0 %v158
  %v214 = vpop.f32.mrb[0].mxu0
  %v215 = vadd.f32 %v127, %v214
  %v216 = vpop.f32.mrb[0].mxu0
  %v217 = vpop.f32.mrb[0].mxu0
  %v218 = vadd.f32 %v127, %v217
  %v219 = vpop.f32.mrb[0].mxu0
  %220 = vmatprep.mubr.bf16.mxu0 0
  %221 = vmatmul.mubr.bf16.gmra.mrb[0].mxu0 %v160
  %v222 = vpop.f32.mrb[0].mxu0
  %v223 = vadd.f32 %v127, %v222
  %v224 = vpop.f32.mrb[0].mxu0
  %v225 = vpop.f32.mrb[0].mxu0
  %v226 = vadd.f32 %v127, %v225
  %v227 = vpop.f32.mrb[0].mxu0
  %228 = vmatprep.mubr.bf16.mxu0 0
  %229 = vmatmul.mubr.bf16.gmra.mrb[0].mxu0 %v162
  %v230 = vpop.f32.mrb[0].mxu0
  %v231 = vadd.f32 %v127, %v230
  %v232 = vpop.f32.mrb[0].mxu0
  %v233 = vpop.f32.mrb[0].mxu0
  %v234 = vadd.f32 %v127, %v233
  %v235 = vpop.f32.mrb[0].mxu0
  %236 = vdwg.mxu0
  %v237 = vpack.c.bf16 %v202, %v199
  %v238 = vpack.c.bf16 %v210, %v207
  %v239 = vpack.c.bf16 %v218, %v215
  %v240 = vpack.c.bf16 %v226, %v223
  %v241 = vpack.c.bf16 %v234, %v231
  %v247 = vunpack.c.l.b16 %v237
  %v248 = vunpack.c.h.b16 %v237
  %v249 = vunpack.c.l.b16 %v238
  %v250 = vunpack.c.h.b16 %v238
  %v251 = vunpack.c.l.b16 %v239
  %v252 = vunpack.c.h.b16 %v239
  %v253 = vunpack.c.l.b16 %v240
  %v254 = vunpack.c.h.b16 %v240
  %v255 = vunpack.c.l.b16 %v241
  %v256 = vunpack.c.h.b16 %v241
  %v257 = vpack.c.b16 %v247, %v247
  %v258 = vpack.c.b16 %v248, %v248
  %v259 = vpack.c.b16 %v249, %v249
  %v260 = vpack.c.b16 %v250, %v250
  %v261 = vpack.c.b16 %v251, %v251
  %v262 = vpack.c.b16 %v252, %v252
  %v263 = vpack.c.b16 %v253, %v253
  %v264 = vpack.c.b16 %v254, %v254
  %v265 = vpack.c.b16 %v255, %v255
  %v266 = vpack.c.b16 %v256, %v256
  %vm277 = vcmask 519168
  %278 = vst.msk [vmem:[%s4] sm:$0xf] %vm277, %v257
  %279 = vst.msk [vmem:[%s4 + $0x4] sm:$0xf] %vm277, %v258
  %280 = vst.msk [vmem:[%s4 + $0x8] sm:$0xf] %vm277, %v259
  %281 = vst.msk [vmem:[%s4 + $0xc] sm:$0xf] %vm277, %v260
  %282 = vst.msk [vmem:[%s4 + $0x10] sm:$0xf] %vm277, %v261
  %283 = vst.msk [vmem:[%s4 + $0x14] sm:$0xf] %vm277, %v262
  %284 = vst.msk [vmem:[%s4 + $0x18] sm:$0xf] %vm277, %v263
  %285 = vst.msk [vmem:[%s4 + $0x1c] sm:$0xf] %vm277, %v264
  %286 = vst.msk [vmem:[%s4 + $0x20] sm:$0xf] %vm277, %v265
  %287 = vst.msk [vmem:[%s4 + $0x24] sm:$0xf] %vm277, %v266
  // Predicated region
  $region18: #{labind_forward.18} parent=0 // pred_check
    _
  $region19: #{labind_forward.18} parent=0 // pred_check_branch
    %289 = sbr.rel (0) target = $region21
  $region20: #{labind_forward.18} parent=0 // pred_region
    _
  $region21: #{labind_forward.18} parent=0 // pred_fallthru
    _
  // Predicated region
  $region22: #{labind_forward.18} parent=0 // pred_check
    _
  $region23: #{labind_forward.18} parent=0 // pred_check_branch
    %291 = sbr.rel (0) target = $region25
  $region24: #{labind_forward.18} parent=0 // pred_region
    _
  $region25: #{labind_forward.18} parent=0 // pred_fallthru
    _

// kernel: labind_forward.20
$region0: #{labind_forward.20}
  #allocation0 [shape = 'u32[]', space=smem, size = 0x4, offset = 0x4, fixed_abs, tag = 'smem constant byte address 0x4 - core index']
  #allocation1 [shape = 'u32[144,128]{1,0:T(1,128)}', space=vmem, size = 0x12000, scoped, tag = 'internal scratch']
  %s0 = inlined_call_operand.vmem [shape: bf16[16,32], index: 0, kind: input, shape index: {}]
  %s1 = inlined_call_operand.vmem [shape: f32[16,1], index: 1, kind: input, shape index: {}]
  %s2 = inlined_call_operand.vmem [shape: bf16[32,64], index: 2, kind: input, shape index: {}]
  %s3 = inlined_call_operand.vmem [shape: f32[1,64], index: 3, kind: input, shape index: {}]
  %s4 = inlined_call_operand.vmem [shape: bf16[64,32], index: 4, kind: input, shape index: {}]
  %s5 = inlined_call_operand.vmem [shape: f32[1,32], index: 5, kind: input, shape index: {}]
  %s6 = inlined_call_operand.vmem [shape: f32[1,32], index: 6, kind: input, shape index: {}]
  %s7 = inlined_call_operand.vmem [shape: f32[1,32], index: 7, kind: input, shape index: {}]
  %s8 = inlined_call_operand.vmem [shape: bf16[32,32], index: 8, kind: input, shape index: {}]
  %s9 = inlined_call_operand.vmem [shape: f32[1,32], index: 9, kind: input, shape index: {}]
  %s10 = inlined_call_operand.vmem [shape: bf16[16,32], index: 10, kind: output, shape index: {0}]
  %s11 = inlined_call_operand.vmem [shape: bf16[16,32], index: 11, kind: output, shape index: {1}]
  %12 = xla_tuple %s10, %s11
  %s13 = sld [smem:[#allocation0]]
  $region58: #{labind_forward.20} parent=0
    _
  %s15 = ssub.s32 1, %s13
  %s16 = scalar_select 0, %s15, %s13
  // Predicated region
  $region2: #{labind_forward.20} parent=0 // pred_check
    _
  $region3: #{labind_forward.20} parent=0 // pred_check_branch
    %18 = sbr.rel (0) target = $region5
  $region4: #{labind_forward.20} parent=0 // pred_region
    _
  $region5: #{labind_forward.20} parent=0 // pred_fallthru
    _
  // Predicated region
  $region6: #{labind_forward.20} parent=0 // pred_check
    _
  $region7: #{labind_forward.20} parent=0 // pred_check_branch
    %20 = sbr.rel (0) target = $region9
  $region8: #{labind_forward.20} parent=0 // pred_region
    _
  $region9: #{labind_forward.20} parent=0 // pred_fallthru
    _
  // Predicated region
  $region10: #{labind_forward.20} parent=0 // pred_check
    _
  $region11: #{labind_forward.20} parent=0 // pred_check_branch
    %22 = sbr.rel (0) target = $region13
  $region12: #{labind_forward.20} parent=0 // pred_region
    _
  $region13: #{labind_forward.20} parent=0 // pred_fallthru
    _
  // Predicated region
  $region14: #{labind_forward.20} parent=0 // pred_check
    _
  $region15: #{labind_forward.20} parent=0 // pred_check_branch
    %24 = sbr.rel (0) target = $region17
  $region16: #{labind_forward.20} parent=0 // pred_region
    _
  $region17: #{labind_forward.20} parent=0 // pred_fallthru
    _
  // Predicated region
  $region18: #{labind_forward.20} parent=0 // pred_check
    _
  $region19: #{labind_forward.20} parent=0 // pred_check_branch
    %26 = sbr.rel (0) target = $region21
  $region20: #{labind_forward.20} parent=0 // pred_region
    _
  $region21: #{labind_forward.20} parent=0 // pred_fallthru
    _
  // Predicated region
  $region22: #{labind_forward.20} parent=0 // pred_check
    _
  $region23: #{labind_forward.20} parent=0 // pred_check_branch
    %28 = sbr.rel (0) target = $region25
  $region24: #{labind_forward.20} parent=0 // pred_region
    _
  $region25: #{labind_forward.20} parent=0 // pred_fallthru
    _
  // Predicated region
  $region26: #{labind_forward.20} parent=0 // pred_check
    _
  $region27: #{labind_forward.20} parent=0 // pred_check_branch
    %30 = sbr.rel (0) target = $region29
  $region28: #{labind_forward.20} parent=0 // pred_region
    _
  $region29: #{labind_forward.20} parent=0 // pred_fallthru
    _
  // Predicated region
  $region30: #{labind_forward.20} parent=0 // pred_check
    _
  $region31: #{labind_forward.20} parent=0 // pred_check_branch
    %32 = sbr.rel (0) target = $region33
  $region32: #{labind_forward.20} parent=0 // pred_region
    _
  $region33: #{labind_forward.20} parent=0 // pred_fallthru
    _
  // Predicated region
  $region34: #{labind_forward.20} parent=0 // pred_check
    _
  $region35: #{labind_forward.20} parent=0 // pred_check_branch
    %34 = sbr.rel (0) target = $region37
  $region36: #{labind_forward.20} parent=0 // pred_region
    _
  $region37: #{labind_forward.20} parent=0 // pred_fallthru
    _
  // Predicated region
  $region38: #{labind_forward.20} parent=0 // pred_check
    _
  $region39: #{labind_forward.20} parent=0 // pred_check_branch
    %36 = sbr.rel (0) target = $region41
  $region40: #{labind_forward.20} parent=0 // pred_region
    _
  $region41: #{labind_forward.20} parent=0 // pred_fallthru
    _
  %v38 = vld [vmem:[%s0] sm:$0xf]
  %v39 = vld [vmem:[%s0 + $0x4] sm:$0xf]
  %v40 = vunpack.c.l.bf16 %v38
  %v41 = vunpack.c.l.bf16 %v39
  %v42 = vld [vmem:[%s2] sm:$0xf]
  %v43 = vld [vmem:[%s2 + $0x4] sm:$0xf]
  %v44 = vld [vmem:[%s2 + $0x8] sm:$0xf]
  %v45 = vld [vmem:[%s2 + $0xc] sm:$0xf]
  %v46 = vld [vmem:[%s3] sm:$0x1]
  %v48 = vlaneseq
  %v49 = vshrl.u32 %v48, 7
  %v50 = vsub.s32 0, %v49
  %v51 = vrot.slane %v46, %v50
  %v55 = vunpack.c.l.b16 %v38
  %v56 = vunpack.c.l.b16 %v39
  %v57 = vpack.c.b16 %v56, %v55
  %v62 = vunpack.c.l.b16 %v42
  %v63 = vunpack.c.l.b16 %v43
  %v64 = vunpack.c.l.b16 %v44
  %v65 = vunpack.c.l.b16 %v45
  %v66 = vpack.c.b16 %v63, %v62
  %v67 = vpack.c.b16 %v65, %v64
  %vm70 = vcmask 261120
  %v72 = vsel %vm70, %v57, 0
  %74 = vmatprep.subr.bf16.mxu0 0
  %75 = vmatpush1.bf16.msra.mxu0 %v66
  %76 = vmatprep.subr.bf16.mxu0 0
  %77 = vmatpush1.bf16.msra.mxu0 %v67
  %78 = vmatprep.subr.bf16.mxu0 0
  %79 = vmatpush1.bf16.msra.mxu0 0
  %80 = vmatprep.subr.bf16.mxu0 0
  %81 = vmatpush1.bf16.msra.mxu0 0
  %82 = vmatprep.subr.bf16.mxu0 0
  %83 = vmatpush1.bf16.msra.mxu0 0
  %84 = vmatprep.subr.bf16.mxu0 0
  %85 = vmatpush1.bf16.msra.mxu0 0
  %86 = vmatprep.subr.bf16.mxu0 0
  %87 = vmatpush1.bf16.msra.mxu0 0
  %88 = vmatprep.subr.bf16.mxu0 0
  %89 = vmatpush1.bf16.msra.mxu0 0
  %90 = vmatprep.subr.bf16.mxu0 0
  %91 = vmatpush1.bf16.msra.mxu0 0
  %92 = vmatprep.subr.bf16.mxu0 0
  %93 = vmatpush1.bf16.msra.mxu0 0
  %94 = vmatprep.subr.bf16.mxu0 0
  %95 = vmatpush1.bf16.msra.mxu0 0
  %96 = vmatprep.subr.bf16.mxu0 0
  %97 = vmatpush1.bf16.msra.mxu0 0
  %98 = vmatprep.subr.bf16.mxu0 0
  %99 = vmatpush1.bf16.msra.mxu0 0
  %100 = vmatprep.subr.bf16.mxu0 0
  %101 = vmatpush1.bf16.msra.mxu0 0
  %102 = vmatprep.subr.bf16.mxu0 0
  %103 = vmatpush1.bf16.msra.mxu0 0
  %104 = vmatprep.subr.bf16.mxu0 0
  %105 = vmatpush1.bf16.msra.mxu0 0
  %106 = vmatprep.mubr.bf16.mxu0 0
  %107 = vmatmul.mubr.bf16.gmra.mrb[0].mxu0 %v72
  %v108 = vpop.f32.mrb[0].mxu0
  %v109 = vadd.f32 %v51, %v108
  %v110 = vpop.f32.mrb[0].mxu0
  %v111 = vpop.f32.mrb[0].mxu0
  %v112 = vadd.f32 %v51, %v111
  %v113 = vpop.f32.mrb[0].mxu0
  %114 = vdwg.mxu0
  %v115 = vxor.u32 %v109, 2147483648
  %v116 = vxor.u32 %v112, 2147483648
  %v117 = vmul.f32 %v115, 1.442695
  %v118 = vpow.pop %v117
  %v119 = vmul.f32 %v116, 1.442695
  %v120 = vpow.pop %v119
  %v121 = vadd.f32 %v118, 1.0
  %v122 = vadd.f32 %v120, 1.0
  %v123 = vrcp.pop %v121
  %v124 = vmul.f32 1.0, %v123
  %v125 = vrcp.pop %v122
  %v126 = vmul.f32 1.0, %v125
  %v127 = vmul.f32 %v109, %v124
  %v128 = vmul.f32 %v112, %v126
  %v129 = vld [vmem:[%s4] sm:$0xf]
  %v130 = vld [vmem:[%s4 + $0x4] sm:$0xf]
  %v131 = vld [vmem:[%s4 + $0x8] sm:$0xf]
  %v132 = vld [vmem:[%s4 + $0xc] sm:$0xf]
  %v133 = vld [vmem:[%s4 + $0x10] sm:$0xf]
  %v134 = vld [vmem:[%s4 + $0x14] sm:$0xf]
  %v135 = vld [vmem:[%s4 + $0x18] sm:$0xf]
  %v136 = vld [vmem:[%s4 + $0x1c] sm:$0xf]
  %v137 = vpack.c.bf16 %v128, %v127
  %v146 = vunpack.c.l.b16 %v129
  %v147 = vunpack.c.l.b16 %v130
  %v148 = vunpack.c.l.b16 %v131
  %v149 = vunpack.c.l.b16 %v132
  %v150 = vunpack.c.l.b16 %v133
  %v151 = vunpack.c.l.b16 %v134
  %v152 = vunpack.c.l.b16 %v135
  %v153 = vunpack.c.l.b16 %v136
  %v154 = vpack.c.b16 %v147, %v146
  %v155 = vpack.c.b16 %v149, %v148
  %v156 = vpack.c.b16 %v151, %v150
  %v157 = vpack.c.b16 %v153, %v152
  %vm162 = vcmask 523264
  %v164 = vsel %vm162, %v137, 0
  %166 = vmatprep.subr.bf16.mxu0 0
  %167 = vmatpush1.bf16.msra.mxu0 %v154
  %168 = vmatprep.subr.bf16.mxu0 0
  %169 = vmatpush1.bf16.msra.mxu0 %v155
  %170 = vmatprep.subr.bf16.mxu0 0
  %171 = vmatpush1.bf16.msra.mxu0 %v156
  %172 = vmatprep.subr.bf16.mxu0 0
  %173 = vmatpush1.bf16.msra.mxu0 %v157
  %174 = vmatprep.subr.bf16.mxu0 0
  %175 = vmatpush1.bf16.msra.mxu0 0
  %176 = vmatprep.subr.bf16.mxu0 0
  %177 = vmatpush1.bf16.msra.mxu0 0
  %178 = vmatprep.subr.bf16.mxu0 0
  %179 = vmatpush1.bf16.msra.mxu0 0
  %180 = vmatprep.subr.bf16.mxu0 0
  %181 = vmatpush1.bf16.msra.mxu0 0
  %182 = vmatprep.subr.bf16.mxu0 0
  %183 = vmatpush1.bf16.msra.mxu0 0
  %184 = vmatprep.subr.bf16.mxu0 0
  %185 = vmatpush1.bf16.msra.mxu0 0
  %186 = vmatprep.subr.bf16.mxu0 0
  %187 = vmatpush1.bf16.msra.mxu0 0
  %188 = vmatprep.subr.bf16.mxu0 0
  %189 = vmatpush1.bf16.msra.mxu0 0
  %190 = vmatprep.subr.bf16.mxu0 0
  %191 = vmatpush1.bf16.msra.mxu0 0
  %192 = vmatprep.subr.bf16.mxu0 0
  %193 = vmatpush1.bf16.msra.mxu0 0
  %194 = vmatprep.subr.bf16.mxu0 0
  %195 = vmatpush1.bf16.msra.mxu0 0
  %196 = vmatprep.subr.bf16.mxu0 0
  %197 = vmatpush1.bf16.msra.mxu0 0
  %198 = vmatprep.mubr.bf16.mxu0 0
  %199 = vmatmul.mubr.bf16.gmra.mrb[0].mxu0 %v164
  %v200 = vpop.f32.mrb[0].mxu0
  %v201 = vadd.f32 0.0, %v200
  %v202 = vpop.f32.mrb[0].mxu0
  %v203 = vpop.f32.mrb[0].mxu0
  %v204 = vadd.f32 0.0, %v203
  %v205 = vpop.f32.mrb[0].mxu0
  %206 = vdwg.mxu0
  %v207 = vadd.f32 %v40, %v201
  %v208 = vadd.f32 %v41, %v204
  %v209 = vld [vmem:[%s5] sm:$0x1]
  %v211 = vlaneseq
  %v212 = vshrl.u32 %v211, 7
  %v213 = vsub.s32 0, %v212
  %v214 = vrot.slane %v209, %v213
  %v216 = vadd.f32 %v207, %v214
  %v217 = vadd.f32 %v208, %v214
  %v218 = vld [vmem:[%s6] sm:$0x1]
  %v219 = vld [vmem:[%s7] sm:$0x1]
  %v220 = vsel %vm70, %v216, 0.0
  %221 = vadd.xlane.f32.xlu0 %v220
  %v222 = vpop.xlane.xlu0 %221
  %v223 = vsel %vm70, %v217, 0.0
  %224 = vadd.xlane.f32.xlu0 %v223
  %v225 = vpop.xlane.xlu0 %224
  %v226 = vrcp.pop 32.0
  %v227 = vmul.f32 %v222, %v226
  %v228 = vmul.f32 %v225, %v226
  %v229 = vsub.f32 %v216, %v227
  %v230 = vsub.f32 %v217, %v228
  %v231 = vmul.f32 %v229, %v229
  %v232 = vmul.f32 %v230, %v230
  %v233 = vsel %vm70, %v231, 0.0
  %234 = vadd.xlane.f32.xlu0 %v233
  %v235 = vpop.xlane.xlu0 %234
  %v236 = vsel %vm70, %v232, 0.0
  %237 = vadd.xlane.f32.xlu0 %v236
  %v238 = vpop.xlane.xlu0 %237
  %v239 = vmul.f32 %v235, %v226
  %v240 = vmul.f32 %v238, %v226
  %v241 = vadd.f32 %v239, 1e-05
  %v242 = vadd.f32 %v240, 1e-05
  %v243 = vrsqrt.pop %v241
  %v244 = vrsqrt.pop %v242
  %v245 = vmul.f32 %v229, %v243
  %v246 = vmul.f32 %v230, %v244
  %v248 = vlaneseq
  %v249 = vshrl.u32 %v248, 7
  %v250 = vsub.s32 0, %v249
  %v251 = vrot.slane %v218, %v250
  %v253 = vmul.f32 %v245, %v251
  %v254 = vmul.f32 %v246, %v251
  %v256 = vlaneseq
  %v257 = vshrl.u32 %v256, 7
  %v258 = vsub.s32 0, %v257
  %v259 = vrot.slane %v219, %v258
  %v261 = vadd.f32 %v253, %v259
  %v262 = vadd.f32 %v254, %v259
  %v263 = vld [vmem:[%s1] sm:$0xff]
  %v264 = vld [vmem:[%s1 + $0x8] sm:$0xff]
  %266 = vset.pattern.permute.xlu0 0
  %267 = vperm.xlu0 %266, %v263
  %v268 = vpop.permute.xlu0 %267
  %271 = vset.pattern.permute.xlu0 0
  %272 = vperm.xlu0 %271, %v264
  %v273 = vpop.permute.xlu0 %272
  %v275 = vmul.f32 %v261, %v268
  %v276 = vmul.f32 %v262, %v273
  %v277 = vpack.c.bf16 %v276, %v275
  %v279 = vunpack.c.l.b16 %v277
  %v280 = vunpack.c.h.b16 %v277
  %v281 = vpack.c.b16 %v279, %v279
  %v282 = vpack.c.b16 %v280, %v280
  %vm285 = vcmask 257024
  %286 = vst.msk [vmem:[%s10] sm:$0xf] %vm285, %v281
  %287 = vst.msk [vmem:[%s10 + $0x4] sm:$0xf] %vm285, %v282
  %v288 = vld [vmem:[%s8] sm:$0xf]
  %v289 = vld [vmem:[%s8 + $0x4] sm:$0xf]
  %v290 = vld [vmem:[%s8 + $0x8] sm:$0xf]
  %v291 = vld [vmem:[%s8 + $0xc] sm:$0xf]
  %v292 = vld [vmem:[%s9] sm:$0x1]
  %v294 = vlaneseq
  %v295 = vshrl.u32 %v294, 7
  %v296 = vsub.s32 0, %v295
  %v297 = vrot.slane %v292, %v296
  %v303 = vunpack.c.l.b16 %v288
  %v304 = vunpack.c.l.b16 %v289
  %v305 = vunpack.c.l.b16 %v290
  %v306 = vunpack.c.l.b16 %v291
  %v307 = vpack.c.b16 %v304, %v303
  %v308 = vpack.c.b16 %v306, %v305
  %v312 = vsel %vm70, %v277, 0
  %314 = vmatprep.subr.bf16.mxu0 0
  %315 = vmatpush1.bf16.msra.mxu0 %v307
  %316 = vmatprep.subr.bf16.mxu0 0
  %317 = vmatpush1.bf16.msra.mxu0 %v308
  %318 = vmatprep.subr.bf16.mxu0 0
  %319 = vmatpush1.bf16.msra.mxu0 0
  %320 = vmatprep.subr.bf16.mxu0 0
  %321 = vmatpush1.bf16.msra.mxu0 0
  %322 = vmatprep.subr.bf16.mxu0 0
  %323 = vmatpush1.bf16.msra.mxu0 0
  %324 = vmatprep.subr.bf16.mxu0 0
  %325 = vmatpush1.bf16.msra.mxu0 0
  %326 = vmatprep.subr.bf16.mxu0 0
  %327 = vmatpush1.bf16.msra.mxu0 0
  %328 = vmatprep.subr.bf16.mxu0 0
  %329 = vmatpush1.bf16.msra.mxu0 0
  %330 = vmatprep.subr.bf16.mxu0 0
  %331 = vmatpush1.bf16.msra.mxu0 0
  %332 = vmatprep.subr.bf16.mxu0 0
  %333 = vmatpush1.bf16.msra.mxu0 0
  %334 = vmatprep.subr.bf16.mxu0 0
  %335 = vmatpush1.bf16.msra.mxu0 0
  %336 = vmatprep.subr.bf16.mxu0 0
  %337 = vmatpush1.bf16.msra.mxu0 0
  %338 = vmatprep.subr.bf16.mxu0 0
  %339 = vmatpush1.bf16.msra.mxu0 0
  %340 = vmatprep.subr.bf16.mxu0 0
  %341 = vmatpush1.bf16.msra.mxu0 0
  %342 = vmatprep.subr.bf16.mxu0 0
  %343 = vmatpush1.bf16.msra.mxu0 0
  %344 = vmatprep.subr.bf16.mxu0 0
  %345 = vmatpush1.bf16.msra.mxu0 0
  %346 = vmatprep.mubr.bf16.mxu0 0
  %347 = vmatmul.mubr.bf16.gmra.mrb[0].mxu0 %v312
  %v348 = vpop.f32.mrb[0].mxu0
  %v349 = vadd.f32 %v297, %v348
  %v350 = vpop.f32.mrb[0].mxu0
  %v351 = vpop.f32.mrb[0].mxu0
  %v352 = vadd.f32 %v297, %v351
  %v353 = vpop.f32.mrb[0].mxu0
  %354 = vdwg.mxu0
  %v355 = vpack.c.bf16 %v352, %v349
  %v357 = vunpack.c.l.b16 %v355
  %v358 = vunpack.c.h.b16 %v355
  %v359 = vpack.c.b16 %v357, %v357
  %v360 = vpack.c.b16 %v358, %v358
  %363 = vst.msk [vmem:[%s11] sm:$0xf] %vm285, %v359
  %364 = vst.msk [vmem:[%s11 + $0x4] sm:$0xf] %vm285, %v360
  // Predicated region
  $region42: #{labind_forward.20} parent=0 // pred_check
    _
  $region43: #{labind_forward.20} parent=0 // pred_check_branch
    %366 = sbr.rel (0) target = $region45
  $region44: #{labind_forward.20} parent=0 // pred_region
    _
  $region45: #{labind_forward.20} parent=0 // pred_fallthru
    _
  // Predicated region
  $region46: #{labind_forward.20} parent=0 // pred_check
    _
  $region47: #{labind_forward.20} parent=0 // pred_check_branch
    %368 = sbr.rel (0) target = $region49
  $region48: #{labind_forward.20} parent=0 // pred_region
    _
  $region49: #{labind_forward.20} parent=0 // pred_fallthru
    _
  // Predicated region
  $region50: #{labind_forward.20} parent=0 // pred_check
    _
  $region51: #{labind_forward.20} parent=0 // pred_check_branch
    %370 = sbr.rel (0) target = $region53
  $region52: #{labind_forward.20} parent=0 // pred_region
    _
  $region53: #{labind_forward.20} parent=0 // pred_fallthru
    _
  // Predicated region
  $region54: #{labind_forward.20} parent=0 // pred_check
    _
  $region55: #{labind_forward.20} parent=0 // pred_check_branch
    %372 = sbr.rel (0) target = $region57
  $region56: #{labind_forward.20} parent=0 // pred_region
    _
  $region57: #{labind_forward.20} parent=0 // pred_fallthru
    _

// kernel: labind_forward.19
$region0: #{labind_forward.19}
  #allocation0 [shape = 'u32[]', space=smem, size = 0x4, offset = 0x4, fixed_abs, tag = 'smem constant byte address 0x4 - core index']
  #allocation1 [shape = 'u32[144,128]{1,0:T(1,128)}', space=vmem, size = 0x12000, scoped, tag = 'internal scratch']
  %s0 = inlined_call_operand.vmem [shape: bf16[2,8,32], index: 0, kind: input, shape index: {}]
  %s1 = inlined_call_operand.vmem [shape: bf16[2,5,8,64], index: 1, kind: input, shape index: {}]
  %s2 = inlined_call_operand.vmem [shape: f32[2,5,8], index: 2, kind: input, shape index: {}]
  %s3 = inlined_call_operand.vmem [shape: f32[2,1,32], index: 3, kind: input, shape index: {}]
  %s4 = inlined_call_operand.vmem [shape: bf16[4,32,8], index: 4, kind: input, shape index: {}]
  %s5 = inlined_call_operand.vmem [shape: f32[4,1,8], index: 5, kind: input, shape index: {}]
  %s6 = inlined_call_operand.vmem [shape: bf16[4,8,32], index: 6, kind: input, shape index: {}]
  %s7 = inlined_call_operand.vmem [shape: f32[1,32], index: 7, kind: input, shape index: {}]
  %s8 = inlined_call_operand.vmem [shape: f32[1,32], index: 8, kind: input, shape index: {}]
  %s9 = inlined_call_operand.vmem [shape: f32[1,32], index: 9, kind: input, shape index: {}]
  %s10 = inlined_call_operand.vmem [shape: bf16[2,8,32], index: 10, kind: output, shape index: {}]
  %s11 = sld [smem:[#allocation0]]
  $region73: #{labind_forward.19} parent=0
    _
  %s13 = ssub.s32 1, %s11
  %s14 = scalar_select 0, %s13, %s11
  loop: start=0, step=1, limit=4
  $region2: #{labind_forward.19} parent=0 // loop_pre_header
    _
  $region3: #{labind_forward.19} parent=0 // loop_header
    %s16 = sphi 0, %s20
    %p17 = scmp.ge.s32.totalorder %s16, 4
    %s23 = sphi 0, %s35
    %s24 = sphi 0, %s31
    %s25 = sphi 0, %s23
    %s26 = sphi 0, %s24
    %s27 = sphi 0, %s25
    %s28 = sphi 0, %s26
    %s40 = sphi 0, %s42
    %s43 = sphi 0, %s40
    %s44 = sphi 0, %s43
    %s60 = sphi 0, %s44
    %s68 = sphi 0, %s70
    %s71 = sphi 0, %s68
    %s72 = sphi 0, %s71
    %s88 = sphi 0, %s72
    %s96 = sphi 0, %s98
    %s99 = sphi 0, %s96
    %s100 = sphi 0, %s99
    %s116 = sphi 0, %s100
    %s122 = sphi 0, %s124
    %s125 = sphi 0, %s122
    %s126 = sphi 0, %s125
    %s142 = sphi 0, %s126
    %s146 = sphi 0, %s146
    %s148 = sphi 0, %s146
    %s149 = sphi 0, %s148
    %s163 = sphi 0, %s149
    %s167 = sphi 0, %s167
    %s169 = sphi 0, %s167
    %s170 = sphi 0, %s169
    %s184 = sphi 0, %s170
    %s188 = sphi 0, %s188
    %s190 = sphi 0, %s188
    %s191 = sphi 0, %s190
    %s205 = sphi 0, %s191
    %s209 = sphi 0, %s209
    %s211 = sphi 0, %s209
    %s212 = sphi 0, %s211
    %s226 = sphi 0, %s212
    %s230 = sphi 0, %s230
    %s232 = sphi 0, %s230
    %s233 = sphi 0, %s232
    %s247 = sphi 0, %s233
    %s251 = sphi 0, %s251
    %s253 = sphi 0, %s251
    %s254 = sphi 0, %s253
    %s268 = sphi 0, %s254
    %s276 = sphi 0, %s278
    %s279 = sphi 0, %s276
    %s280 = sphi 0, %s279
    %s296 = sphi 0, %s280
  $region4: #{labind_forward.19} parent=0 // loop_header_branch
    %19 = sbr.rel (%p17) target = $region8
  $region5: #{labind_forward.19} parent=0 // loop_body
    %s21 = ssub.s32 %s16, 1
    %s22 = ssub.s32 %s16, 2
    %s29 = sadd.s32 1, %s24
    %p30 = scmp.ge.s32.totalorder %s29, 1
    %s31 = scalar_select %p30, 0, %s29
    %s32 = sadd.s32 1, %s23
    %s33 = scalar_select %p30, %s32, %s23
    %p34 = scmp.ge.s32.totalorder %s33, 2
    %s35 = scalar_select %p34, 0, %s33
    %s36 = ssub.s32 %s23, %s35
    %s37 = ssub.s32 %s24, %s31
    %s38 = sor.u32 %s36, %s37
    %p39 = scmp.eq.s32.totalorder %s38, 0
    %s41 = sadd.s32 %s40, 1
    %s42 = scalar_select %p39, %s40, %s41
    %p45 = pneg %p39
    %p46 = scmp.eq.s32.totalorder %s16, 1
    %p47 = por %p45, %p46
    %p48 = scmp.ne.s32.totalorder %s40, %s43
    %p49 = scmp.eq.s32.totalorder %s16, 0
    %p50 = por %p48, %p49
    %p51 = scmp.ne.s32.totalorder %s40, %s43
    %p52 = scmp.eq.s32.totalorder %s21, 1
    %p53 = por %p51, %p52
    %p54 = scmp.ne.s32.totalorder %s43, %s44
    %p55 = scmp.eq.s32.totalorder %s21, 0
    %p56 = por %p54, %p55
    %p57 = scmp.ne.s32.totalorder %s43, %s44
    %p58 = scmp.eq.s32.totalorder %s22, 1
    %p59 = por %p57, %p58
    %p61 = scmp.ne.s32.totalorder %s44, %s60
    %p62 = scmp.eq.s32.totalorder %s22, 0
    %p63 = por %p61, %p62
    %s64 = ssub.s32 %s23, %s35
    %s65 = ssub.s32 %s24, %s31
    %s66 = sor.u32 %s64, %s65
    %p67 = scmp.eq.s32.totalorder %s66, 0
    %s69 = sadd.s32 %s68, 1
    %s70 = scalar_select %p67, %s68, %s69
    %p73 = pneg %p67
    %p74 = scmp.eq.s32.totalorder %s16, 1
    %p75 = por %p73, %p74
    %p76 = scmp.ne.s32.totalorder %s68, %s71
    %p77 = scmp.eq.s32.totalorder %s16, 0
    %p78 = por %p76, %p77
    %p79 = scmp.ne.s32.totalorder %s68, %s71
    %p80 = scmp.eq.s32.totalorder %s21, 1
    %p81 = por %p79, %p80
    %p82 = scmp.ne.s32.totalorder %s71, %s72
    %p83 = scmp.eq.s32.totalorder %s21, 0
    %p84 = por %p82, %p83
    %p85 = scmp.ne.s32.totalorder %s71, %s72
    %p86 = scmp.eq.s32.totalorder %s22, 1
    %p87 = por %p85, %p86
    %p89 = scmp.ne.s32.totalorder %s72, %s88
    %p90 = scmp.eq.s32.totalorder %s22, 0
    %p91 = por %p89, %p90
    %s92 = ssub.s32 %s23, %s35
    %s93 = ssub.s32 %s24, %s31
    %s94 = sor.u32 %s92, %s93
    %p95 = scmp.eq.s32.totalorder %s94, 0
    %s97 = sadd.s32 %s96, 1
    %s98 = scalar_select %p95, %s96, %s97
    %p101 = pneg %p95
    %p102 = scmp.eq.s32.totalorder %s16, 1
    %p103 = por %p101, %p102
    %p104 = scmp.ne.s32.totalorder %s96, %s99
    %p105 = scmp.eq.s32.totalorder %s16, 0
    %p106 = por %p104, %p105
    %p107 = scmp.ne.s32.totalorder %s96, %s99
    %p108 = scmp.eq.s32.totalorder %s21, 1
    %p109 = por %p107, %p108
    %p110 = scmp.ne.s32.totalorder %s99, %s100
    %p111 = scmp.eq.s32.totalorder %s21, 0
    %p112 = por %p110, %p111
    %p113 = scmp.ne.s32.totalorder %s99, %s100
    %p114 = scmp.eq.s32.totalorder %s22, 1
    %p115 = por %p113, %p114
    %p117 = scmp.ne.s32.totalorder %s100, %s116
    %p118 = scmp.eq.s32.totalorder %s22, 0
    %p119 = por %p117, %p118
    %s120 = ssub.s32 %s23, %s35
    %p121 = scmp.eq.s32.totalorder %s120, 0
    %s123 = sadd.s32 %s122, 1
    %s124 = scalar_select %p121, %s122, %s123
    %p127 = pneg %p121
    %p128 = scmp.eq.s32.totalorder %s16, 1
    %p129 = por %p127, %p128
    %p130 = scmp.ne.s32.totalorder %s122, %s125
    %p131 = scmp.eq.s32.totalorder %s16, 0
    %p132 = por %p130, %p131
    %p133 = scmp.ne.s32.totalorder %s122, %s125
    %p134 = scmp.eq.s32.totalorder %s21, 1
    %p135 = por %p133, %p134
    %p136 = scmp.ne.s32.totalorder %s125, %s126
    %p137 = scmp.eq.s32.totalorder %s21, 0
    %p138 = por %p136, %p137
    %p139 = scmp.ne.s32.totalorder %s125, %s126
    %p140 = scmp.eq.s32.totalorder %s22, 1
    %p141 = por %p139, %p140
    %p143 = scmp.ne.s32.totalorder %s126, %s142
    %p144 = scmp.eq.s32.totalorder %s22, 0
    %p145 = por %p143, %p144
    %s147 = sadd.s32 %s146, 1
    %p150 = scmp.eq.s32.totalorder %s16, 1
    %p151 = scmp.ne.s32.totalorder %s146, %s148
    %p152 = scmp.eq.s32.totalorder %s16, 0
    %p153 = por %p151, %p152
    %p154 = scmp.ne.s32.totalorder %s146, %s148
    %p155 = scmp.eq.s32.totalorder %s21, 1
    %p156 = por %p154, %p155
    %p157 = scmp.ne.s32.totalorder %s148, %s149
    %p158 = scmp.eq.s32.totalorder %s21, 0
    %p159 = por %p157, %p158
    %p160 = scmp.ne.s32.totalorder %s148, %s149
    %p161 = scmp.eq.s32.totalorder %s22, 1
    %p162 = por %p160, %p161
    %p164 = scmp.ne.s32.totalorder %s149, %s163
    %p165 = scmp.eq.s32.totalorder %s22, 0
    %p166 = por %p164, %p165
    %s168 = sadd.s32 %s167, 1
    %p171 = scmp.eq.s32.totalorder %s16, 1
    %p172 = scmp.ne.s32.totalorder %s167, %s169
    %p173 = scmp.eq.s32.totalorder %s16, 0
    %p174 = por %p172, %p173
    %p175 = scmp.ne.s32.totalorder %s167, %s169
    %p176 = scmp.eq.s32.totalorder %s21, 1
    %p177 = por %p175, %p176
    %p178 = scmp.ne.s32.totalorder %s169, %s170
    %p179 = scmp.eq.s32.totalorder %s21, 0
    %p180 = por %p178, %p179
    %p181 = scmp.ne.s32.totalorder %s169, %s170
    %p182 = scmp.eq.s32.totalorder %s22, 1
    %p183 = por %p181, %p182
    %p185 = scmp.ne.s32.totalorder %s170, %s184
    %p186 = scmp.eq.s32.totalorder %s22, 0
    %p187 = por %p185, %p186
    %s189 = sadd.s32 %s188, 1
    %p192 = scmp.eq.s32.totalorder %s16, 1
    %p193 = scmp.ne.s32.totalorder %s188, %s190
    %p194 = scmp.eq.s32.totalorder %s16, 0
    %p195 = por %p193, %p194
    %p196 = scmp.ne.s32.totalorder %s188, %s190
    %p197 = scmp.eq.s32.totalorder %s21, 1
    %p198 = por %p196, %p197
    %p199 = scmp.ne.s32.totalorder %s190, %s191
    %p200 = scmp.eq.s32.totalorder %s21, 0
    %p201 = por %p199, %p200
    %p202 = scmp.ne.s32.totalorder %s190, %s191
    %p203 = scmp.eq.s32.totalorder %s22, 1
    %p204 = por %p202, %p203
    %p206 = scmp.ne.s32.totalorder %s191, %s205
    %p207 = scmp.eq.s32.totalorder %s22, 0
    %p208 = por %p206, %p207
    %s210 = sadd.s32 %s209, 1
    %p213 = scmp.eq.s32.totalorder %s16, 1
    %p214 = scmp.ne.s32.totalorder %s209, %s211
    %p215 = scmp.eq.s32.totalorder %s16, 0
    %p216 = por %p214, %p215
    %p217 = scmp.ne.s32.totalorder %s209, %s211
    %p218 = scmp.eq.s32.totalorder %s21, 1
    %p219 = por %p217, %p218
    %p220 = scmp.ne.s32.totalorder %s211, %s212
    %p221 = scmp.eq.s32.totalorder %s21, 0
    %p222 = por %p220, %p221
    %p223 = scmp.ne.s32.totalorder %s211, %s212
    %p224 = scmp.eq.s32.totalorder %s22, 1
    %p225 = por %p223, %p224
    %p227 = scmp.ne.s32.totalorder %s212, %s226
    %p228 = scmp.eq.s32.totalorder %s22, 0
    %p229 = por %p227, %p228
    %s231 = sadd.s32 %s230, 1
    %p234 = scmp.eq.s32.totalorder %s16, 1
    %p235 = scmp.ne.s32.totalorder %s230, %s232
    %p236 = scmp.eq.s32.totalorder %s16, 0
    %p237 = por %p235, %p236
    %p238 = scmp.ne.s32.totalorder %s230, %s232
    %p239 = scmp.eq.s32.totalorder %s21, 1
    %p240 = por %p238, %p239
    %p241 = scmp.ne.s32.totalorder %s232, %s233
    %p242 = scmp.eq.s32.totalorder %s21, 0
    %p243 = por %p241, %p242
    %p244 = scmp.ne.s32.totalorder %s232, %s233
    %p245 = scmp.eq.s32.totalorder %s22, 1
    %p246 = por %p244, %p245
    %p248 = scmp.ne.s32.totalorder %s233, %s247
    %p249 = scmp.eq.s32.totalorder %s22, 0
    %p250 = por %p248, %p249
    %s252 = sadd.s32 %s251, 1
    %p255 = scmp.eq.s32.totalorder %s16, 1
    %p256 = scmp.ne.s32.totalorder %s251, %s253
    %p257 = scmp.eq.s32.totalorder %s16, 0
    %p258 = por %p256, %p257
    %p259 = scmp.ne.s32.totalorder %s251, %s253
    %p260 = scmp.eq.s32.totalorder %s21, 1
    %p261 = por %p259, %p260
    %p262 = scmp.ne.s32.totalorder %s253, %s254
    %p263 = scmp.eq.s32.totalorder %s21, 0
    %p264 = por %p262, %p263
    %p265 = scmp.ne.s32.totalorder %s253, %s254
    %p266 = scmp.eq.s32.totalorder %s22, 1
    %p267 = por %p265, %p266
    %p269 = scmp.ne.s32.totalorder %s254, %s268
    %p270 = scmp.eq.s32.totalorder %s22, 0
    %p271 = por %p269, %p270
    %s272 = ssub.s32 %s23, %s35
    %s273 = ssub.s32 %s24, %s31
    %s274 = sor.u32 %s272, %s273
    %p275 = scmp.eq.s32.totalorder %s274, 0
    %s277 = sadd.s32 %s276, 1
    %s278 = scalar_select %p275, %s276, %s277
    %p281 = pneg %p275
    %p282 = scmp.eq.s32.totalorder %s16, 1
    %p283 = por %p281, %p282
    %p284 = scmp.ne.s32.totalorder %s276, %s279
    %p285 = scmp.eq.s32.totalorder %s16, 0
    %p286 = por %p284, %p285
    %p287 = scmp.ne.s32.totalorder %s276, %s279
    %p288 = scmp.eq.s32.totalorder %s21, 1
    %p289 = por %p287, %p288
    %p290 = scmp.ne.s32.totalorder %s279, %s280
    %p291 = scmp.eq.s32.totalorder %s21, 0
    %p292 = por %p290, %p291
    %p293 = scmp.ne.s32.totalorder %s279, %s280
    %p294 = scmp.eq.s32.totalorder %s22, 1
    %p295 = por %p293, %p294
    %p297 = scmp.ne.s32.totalorder %s280, %s296
    %p298 = scmp.eq.s32.totalorder %s22, 0
    %p299 = por %p297, %p298
    %p300 = scmp.le.s32.totalorder 1, %s16
    %p301 = scmp.lt.s32.totalorder %s16, 3
    %p302 = pnand %p300, %p301
    %p303 = pneg %p302
    // Predicated region
    $region9: #{labind_forward.19} parent=5 // pred_check
      _
    $region10: #{labind_forward.19} parent=5 // pred_check_branch
      %305 = sbr.rel (%p302) target = $region12
    $region11: #{labind_forward.19} parent=5 // pred_region
      %s306 = ssub.s32 %s16, 1
      // Predicated region
      $region13: #{labind_forward.19} parent=11 // pred_check
        %p307 = pneg %p159
      $region14: #{labind_forward.19} parent=11 // pred_check_branch
        %309 = sbr.rel (%p307) target = $region16
      $region15: #{labind_forward.19} parent=11 // pred_region
        _
      $region16: #{labind_forward.19} parent=11 // pred_fallthru
        _
      // Predicated region
      $region17: #{labind_forward.19} parent=11 // pred_check
        %p310 = pneg %p180
      $region18: #{labind_forward.19} parent=11 // pred_check_branch
        %312 = sbr.rel (%p310) target = $region20
      $region19: #{labind_forward.19} parent=11 // pred_region
        _
      $region20: #{labind_forward.19} parent=11 // pred_fallthru
        _
      // Predicated region
      $region21: #{labind_forward.19} parent=11 // pred_check
        %p313 = pneg %p201
      $region22: #{labind_forward.19} parent=11 // pred_check_branch
        %315 = sbr.rel (%p313) target = $region24
      $region23: #{labind_forward.19} parent=11 // pred_region
        _
      $region24: #{labind_forward.19} parent=11 // pred_fallthru
        _
      // Predicated region
      $region25: #{labind_forward.19} parent=11 // pred_check
        %p316 = pneg %p222
      $region26: #{labind_forward.19} parent=11 // pred_check_branch
        %318 = sbr.rel (%p316) target = $region28
      $region27: #{labind_forward.19} parent=11 // pred_region
        _
      $region28: #{labind_forward.19} parent=11 // pred_fallthru
        _
      // Predicated region
      $region29: #{labind_forward.19} parent=11 // pred_check
        %p319 = pneg %p243
      $region30: #{labind_forward.19} parent=11 // pred_check_branch
        %321 = sbr.rel (%p319) target = $region32
      $region31: #{labind_forward.19} parent=11 // pred_region
        _
      $region32: #{labind_forward.19} parent=11 // pred_fallthru
        _
      // Predicated region
      $region33: #{labind_forward.19} parent=11 // pred_check
        %p322 = pneg %p264
      $region34: #{labind_forward.19} parent=11 // pred_check_branch
        %324 = sbr.rel (%p322) target = $region36
      $region35: #{labind_forward.19} parent=11 // pred_region
        _
      $region36: #{labind_forward.19} parent=11 // pred_fallthru
        _
    $region12: #{labind_forward.19} parent=5 // pred_fallthru
      _
    %p325 = scmp.lt.s32.totalorder %s16, 2
    // Predicated region
    $region37: #{labind_forward.19} parent=5 // pred_check
      %p326 = pneg %p325
    $region38: #{labind_forward.19} parent=5 // pred_check_branch
      %328 = sbr.rel (%p326) target = $region40
    $region39: #{labind_forward.19} parent=5 // pred_region
      // Predicated region
      $region41: #{labind_forward.19} parent=39 // pred_check
        %p329 = pneg %p50
      $region42: #{labind_forward.19} parent=39 // pred_check_branch
        %331 = sbr.rel (%p329) target = $region44
      $region43: #{labind_forward.19} parent=39 // pred_region
        %p332 = scmp.lt.s32.totalorder %s23, 1
        %s333 = scalar_select %p332, %s23, 1
        %p334 = scmp.lt.s32.totalorder %s24, 0
        %s335 = scalar_select %p334, %s24, 0
        %s336 = sadd.s32 %s335, %s333
        %s337 = smul.addr %s336, 4
        %s338 = scalar_lea.vmem %s0, %s337
      $region44: #{labind_forward.19} parent=39 // pred_fallthru
        _
      // Predicated region
      $region45: #{labind_forward.19} parent=39 // pred_check
        %p339 = pneg %p78
      $region46: #{labind_forward.19} parent=39 // pred_check_branch
        %341 = sbr.rel (%p339) target = $region48
      $region47: #{labind_forward.19} parent=39 // pred_region
        %p342 = scmp.lt.s32.totalorder %s23, 1
        %s343 = scalar_select %p342, %s23, 1
        %p344 = scmp.lt.s32.totalorder %s24, 0
        %s345 = scalar_select %p344, %s24, 0
        %s346 = smul.addr %s343, 5
        %s347 = sadd.s32 %s345, %s346
        %s348 = smul.addr %s347, 4
        %s349 = scalar_lea.vmem %s1, %s348
      $region48: #{labind_forward.19} parent=39 // pred_fallthru
        _
      // Predicated region
      $region49: #{labind_forward.19} parent=39 // pred_check
        %p350 = pneg %p106
      $region50: #{labind_forward.19} parent=39 // pred_check_branch
        %352 = sbr.rel (%p350) target = $region52
      $region51: #{labind_forward.19} parent=39 // pred_region
        %p353 = scmp.lt.s32.totalorder %s23, 1
        %s354 = scalar_select %p353, %s23, 1
        %p355 = scmp.lt.s32.totalorder %s24, 0
        %s356 = scalar_select %p355, %s24, 0
        %s357 = sadd.s32 %s356, %s354
        %s358 = smul.addr %s357, 8
        %s359 = scalar_lea.vmem %s2, %s358
      $region52: #{labind_forward.19} parent=39 // pred_fallthru
        _
      // Predicated region
      $region53: #{labind_forward.19} parent=39 // pred_check
        %p360 = pneg %p132
      $region54: #{labind_forward.19} parent=39 // pred_check_branch
        %362 = sbr.rel (%p360) target = $region56
      $region55: #{labind_forward.19} parent=39 // pred_region
        %p363 = scmp.lt.s32.totalorder %s23, 1
        %s364 = scalar_select %p363, %s23, 1
        %s365 = scalar_lea.vmem %s3, %s364
      $region56: #{labind_forward.19} parent=39 // pred_fallthru
        _
    $region40: #{labind_forward.19} parent=5 // pred_fallthru
      _
    %p366 = scmp.le.s32.totalorder 1, %s16
    %p367 = scmp.lt.s32.totalorder %s16, 3
    %p368 = pnand %p366, %p367
    %p369 = pneg %p368
    // Predicated region
    $region57: #{labind_forward.19} parent=5 // pred_check
      _
    $region58: #{labind_forward.19} parent=5 // pred_check_branch
      %371 = sbr.rel (%p368) target = $region60
    $region59: #{labind_forward.19} parent=5 // pred_region
      %s372 = ssub.s32 %s16, 1
      %p373 = scmp.lt.s32.totalorder %s25, 1
      %s374 = scalar_select %p373, %s25, 1
      %p375 = scmp.lt.s32.totalorder %s26, 0
      %s376 = scalar_select %p375, %s26, 0
      %s377 = sadd.s32 %s376, %s374
      %s378 = smul.addr %s377, 4
      %s379 = scalar_lea.vmem %s0, %s378
      %p380 = pneg %p56
      %p381 = pneg %p53
      %p382 = scmp.lt.s32.totalorder %s25, 1
      %s383 = scalar_select %p382, %s25, 1
      %p384 = scmp.lt.s32.totalorder %s26, 0
      %s385 = scalar_select %p384, %s26, 0
      %s386 = smul.addr %s383, 5
      %s387 = sadd.s32 %s385, %s386
      %s388 = smul.addr %s387, 4
      %s389 = scalar_lea.vmem %s1, %s388
      %p390 = pneg %p84
      %p391 = pneg %p81
      %p392 = scmp.lt.s32.totalorder %s25, 1
      %s393 = scalar_select %p392, %s25, 1
      %p394 = scmp.lt.s32.totalorder %s26, 0
      %s395 = scalar_select %p394, %s26, 0
      %s396 = sadd.s32 %s395, %s393
      %s397 = smul.addr %s396, 8
      %s398 = scalar_lea.vmem %s2, %s397
      %p399 = pneg %p112
      %p400 = pneg %p109
      %p401 = scmp.lt.s32.totalorder %s25, 1
      %s402 = scalar_select %p401, %s25, 1
      %s403 = scalar_lea.vmem %s3, %s402
      %p404 = pneg %p138
      %p405 = pneg %p135
      %p406 = pneg %p159
      %p407 = pneg %p156
      %p408 = pneg %p180
      %p409 = pneg %p177
      %p410 = pneg %p201
      %p411 = pneg %p198
      %p412 = pneg %p222
      %p413 = pneg %p219
      %p414 = pneg %p243
      %p415 = pneg %p240
      %p416 = pneg %p264
      %p417 = pneg %p261
      %p418 = pneg %p292
      %p419 = pneg %p289
      %p420 = scmp.lt.s32.totalorder %s25, 1
      %s421 = scalar_select %p420, %s25, 1
      %p422 = scmp.lt.s32.totalorder %s26, 0
      %s423 = scalar_select %p422, %s26, 0
      %s424 = sadd.s32 %s423, %s421
      %s425 = smul.addr %s424, 4
      %s426 = scalar_lea.vmem %s10, %s425
      %p427 = scmp.lt.s32.totalorder %s25, 1
      %s428 = scalar_select %p427, %s25, 1
      %p429 = scmp.lt.s32.totalorder %s26, 0
      %s430 = scalar_select %p429, %s26, 0
      %s431 = sadd.s32 %s430, %s428
      %s432 = smul.addr %s431, 4
      %s433 = scalar_lea.vmem %s0, %s432
      %p434 = scmp.lt.s32.totalorder %s25, 1
      %s435 = scalar_select %p434, %s25, 1
      %p436 = scmp.lt.s32.totalorder %s26, 0
      %s437 = scalar_select %p436, %s26, 0
      %s438 = smul.addr %s435, 5
      %s439 = sadd.s32 %s437, %s438
      %s440 = smul.addr %s439, 4
      %s441 = scalar_lea.vmem %s1, %s440
      %p442 = scmp.lt.s32.totalorder %s25, 1
      %s443 = scalar_select %p442, %s25, 1
      %p444 = scmp.lt.s32.totalorder %s26, 0
      %s445 = scalar_select %p444, %s26, 0
      %s446 = sadd.s32 %s445, %s443
      %s447 = smul.addr %s446, 8
      %s448 = scalar_lea.vmem %s2, %s447
      %p449 = scmp.lt.s32.totalorder %s25, 1
      %s450 = scalar_select %p449, %s25, 1
      %s451 = scalar_lea.vmem %s3, %s450
      %p452 = scmp.lt.s32.totalorder %s25, 1
      %s453 = scalar_select %p452, %s25, 1
      %p454 = scmp.lt.s32.totalorder %s26, 0
      %s455 = scalar_select %p454, %s26, 0
      %s456 = sadd.s32 %s455, %s453
      %s457 = smul.addr %s456, 4
      %s458 = scalar_lea.vmem %s10, %s457
      %v460 = vld [vmem:[%s433] sm:$0xf]
      %v461 = vld [vmem:[%s441] sm:$0xf]
      %v462 = vld [vmem:[%s441 + $0x4] sm:$0xf]
      %v463 = vld [vmem:[%s441 + $0x8] sm:$0xf]
      %v464 = vld [vmem:[%s441 + $0xc] sm:$0xf]
      %v465 = vld [vmem:[%s441 + $0x10] sm:$0xf]
      %v466 = vld [vmem:[%s448] sm:$0x1f]
      %v467 = vld [vmem:[%s4] sm:$0xf]
      %v468 = vld [vmem:[%s4 + $0x4] sm:$0xf]
      %v469 = vld [vmem:[%s4 + $0x8] sm:$0xf]
      %v470 = vld [vmem:[%s4 + $0xc] sm:$0xf]
      %v471 = vld [vmem:[%s5] sm:$0x1]
      %v473 = vlaneseq
      %v474 = vshrl.u32 %v473, 7
      %v475 = vsub.s32 0, %v474
      %v476 = vrot.slane %v471, %v475
      %v482 = vunpack.c.l.b16 %v467
      %v483 = vunpack.c.l.b16 %v468
      %v484 = vunpack.c.l.b16 %v469
      %v485 = vunpack.c.l.b16 %v470
      %v486 = vpack.c.b16 %v483, %v482
      %v487 = vpack.c.b16 %v485, %v484
      %vm490 = vcmask 261120
      %v492 = vsel %vm490, %v460, 0
      %494 = vmatprep.subr.bf16.mxu0 0
      %495 = vmatpush1.bf16.msra.mxu0 %v486
      %496 = vmatprep.subr.bf16.mxu0 0
      %497 = vmatpush1.bf16.msra.mxu0 %v487
      %498 = vmatprep.subr.bf16.mxu0 0
      %499 = vmatpush1.bf16.msra.mxu0 0
      %500 = vmatprep.subr.bf16.mxu0 0
      %501 = vmatpush1.bf16.msra.mxu0 0
      %502 = vmatprep.subr.bf16.mxu0 0
      %503 = vmatpush1.bf16.msra.mxu0 0
      %504 = vmatprep.subr.bf16.mxu0 0
      %505 = vmatpush1.bf16.msra.mxu0 0
      %506 = vmatprep.subr.bf16.mxu0 0
      %507 = vmatpush1.bf16.msra.mxu0 0
      %508 = vmatprep.subr.bf16.mxu0 0
      %509 = vmatpush1.bf16.msra.mxu0 0
      %510 = vmatprep.subr.bf16.mxu0 0
      %511 = vmatpush1.bf16.msra.mxu0 0
      %512 = vmatprep.subr.bf16.mxu0 0
      %513 = vmatpush1.bf16.msra.mxu0 0
      %514 = vmatprep.subr.bf16.mxu0 0
      %515 = vmatpush1.bf16.msra.mxu0 0
      %516 = vmatprep.subr.bf16.mxu0 0
      %517 = vmatpush1.bf16.msra.mxu0 0
      %518 = vmatprep.subr.bf16.mxu0 0
      %519 = vmatpush1.bf16.msra.mxu0 0
      %520 = vmatprep.subr.bf16.mxu0 0
      %521 = vmatpush1.bf16.msra.mxu0 0
      %522 = vmatprep.subr.bf16.mxu0 0
      %523 = vmatpush1.bf16.msra.mxu0 0
      %524 = vmatprep.subr.bf16.mxu0 0
      %525 = vmatpush1.bf16.msra.mxu0 0
      %526 = vmatprep.mubr.bf16.mxu0 0
      %527 = vmatmul.mubr.bf16.gmra.mrb[0].mxu0 %v492
      %v528 = vpop.f32.mrb[0].mxu0
      %v529 = vadd.f32 %v476, %v528
      %v530 = vpop.f32.mrb[0].mxu0
      %v531 = vpop.f32.mrb[0].mxu0
      %v532 = vpop.f32.mrb[0].mxu0
      %533 = vdwg.mxu0
      %v534 = vunpack.c.l.bf16 %v461
      %v535 = vunpack.c.l.bf16 %v462
      %v536 = vunpack.c.l.bf16 %v463
      %v537 = vunpack.c.l.bf16 %v464
      %v538 = vunpack.c.l.bf16 %v465
      %v539 = vmul.f32 %v529, %v534
      %v540 = vmul.f32 %v529, %v535
      %v541 = vmul.f32 %v529, %v536
      %v542 = vmul.f32 %v529, %v537
      %v543 = vmul.f32 %v529, %v538
      %vm544 = vcmask 64512
      %v545 = vsel %vm544, %v539, 0.0
      %546 = vadd.xlane.f32.xlu0 %v545
      %v547 = vpop.xlane.xlu0 %546
      %v548 = vsel %vm544, %v540, 0.0
      %549 = vadd.xlane.f32.xlu0 %v548
      %v550 = vpop.xlane.xlu0 %549
      %v551 = vsel %vm544, %v541, 0.0
      %552 = vadd.xlane.f32.xlu0 %v551
      %v553 = vpop.xlane.xlu0 %552
      %v554 = vsel %vm544, %v542, 0.0
      %555 = vadd.xlane.f32.xlu0 %v554
      %v556 = vpop.xlane.xlu0 %555
      %v557 = vsel %vm544, %v543, 0.0
      %558 = vadd.xlane.f32.xlu0 %v557
      %v559 = vpop.xlane.xlu0 %558
      %vm560 = vcmp.gt.f32.partialorder %v466, 0.0
      %v566 = vlaneseq
      %v567 = vand.u32 %v566, 127
      %v568 = vlaneseq
      %v569 = vshrl.u32 %v568, 7
      %v570 = vsub.s32 %v567, %v569
      %v571 = vrot.slane %v547, %v570
      %v572 = vlaneseq
      %v573 = vshrl.u32 %v572, 7
      %v574 = vsub.s32 %v567, %v573
      %v575 = vrot.slane %v550, %v574
      %v576 = vlaneseq
      %v577 = vshrl.u32 %v576, 7
      %v578 = vsub.s32 %v567, %v577
      %v579 = vrot.slane %v553, %v578
      %v580 = vlaneseq
      %v581 = vshrl.u32 %v580, 7
      %v582 = vsub.s32 %v567, %v581
      %v583 = vrot.slane %v556, %v582
      %v584 = vlaneseq
      %v585 = vshrl.u32 %v584, 7
      %v586 = vsub.s32 %v567, %v585
      %v587 = vrot.slane %v559, %v586
      %vm588 = vcmask 1041409
      %v589 = vsel %vm588, %v575, %v571
      %vm590 = vcmask 1042434
      %v591 = vsel %vm590, %v579, %v589
      %vm592 = vcmask 1043459
      %v593 = vsel %vm592, %v583, %v591
      %vm594 = vcmask 1044484
      %v595 = vsel %vm594, %v587, %v593
      %v597 = vsel %vm560, %v595, -1e+09
      %vm598 = vcmask 61440
      %v599 = vsel %vm598, %v597, -inf
      %v600 = vrot.slane %v599, 4
      %v601 = vmax.f32 %v599, %v600
      %v602 = vrot.slane %v601, 2
      %v603 = vmax.f32 %v601, %v602
      %v604 = vrot.slane %v603, 1
      %v605 = vmax.f32 %v603, %v604
      %v606 = vsub.f32 %v597, %v605
      %v607 = vmul.f32 %v606, 1.442695
      %v608 = vpow.pop %v607
      %v609 = vsel %vm598, %v608, 0.0
      %v610 = vrot.slane %v609, 4
      %v611 = vadd.f32 %v609, %v610
      %v612 = vrot.slane %v611, 2
      %v613 = vadd.f32 %v611, %v612
      %v614 = vrot.slane %v613, 1
      %v615 = vadd.f32 %v613, %v614
      %v616 = vrcp.pop %v615
      %v617 = vmul.f32 %v608, %v616
      %v618 = vlaneseq
      %v619 = vshrl.u32 %v618, 7
      %v620 = vsub.s32 0, %v619
      %v621 = vrot.slane %v617, %v620
      %623 = vbcast.lane.b32.xlu0 %v621, 256
      %v624 = vpop.permute.xlu0 %623
      %v625 = vlaneseq
      %v626 = vshrl.u32 %v625, 7
      %v627 = vsub.s32 1, %v626
      %v628 = vrot.slane %v617, %v627
      %630 = vbcast.lane.b32.xlu0 %v628, 256
      %v631 = vpop.permute.xlu0 %630
      %v632 = vlaneseq
      %v633 = vshrl.u32 %v632, 7
      %v634 = vsub.s32 2, %v633
      %v635 = vrot.slane %v617, %v634
      %637 = vbcast.lane.b32.xlu0 %v635, 256
      %v638 = vpop.permute.xlu0 %637
      %v639 = vlaneseq
      %v640 = vshrl.u32 %v639, 7
      %v641 = vsub.s32 3, %v640
      %v642 = vrot.slane %v617, %v641
      %644 = vbcast.lane.b32.xlu0 %v642, 256
      %v645 = vpop.permute.xlu0 %644
      %v646 = vlaneseq
      %v647 = vshrl.u32 %v646, 7
      %v648 = vsub.s32 4, %v647
      %v649 = vrot.slane %v617, %v648
      %651 = vbcast.lane.b32.xlu0 %v649, 256
      %v652 = vpop.permute.xlu0 %651
      %v653 = vmul.f32 %v624, %v534
      %v654 = vmul.f32 %v631, %v535
      %v655 = vmul.f32 %v638, %v536
      %v656 = vmul.f32 %v645, %v537
      %v657 = vmul.f32 %v652, %v538
      %vm658 = vcmask 326912
      %v659 = vsel %vm658, %v653, 0.0
      %v660 = vsel %vm658, %v654, 0.0
      %v661 = vadd.f32 %v659, %v660
      %v662 = vsel %vm658, %v655, 0.0
      %v663 = vadd.f32 %v661, %v662
      %v664 = vsel %vm658, %v656, 0.0
      %v665 = vadd.f32 %v663, %v664
      %v666 = vsel %vm658, %v657, 0.0
      %v667 = vadd.f32 %v665, %v666
      %v668 = vld [vmem:[%s6] sm:$0xf]
      %v669 = vpack.c.bf16 %v667, %v667
      %s670 = scalar_lea.vmem %s4, 16
      %v671 = vld [vmem:[%s670] sm:$0xf]
      %v672 = vld [vmem:[%s670 + $0x4] sm:$0xf]
      %v673 = vld [vmem:[%s670 + $0x8] sm:$0xf]
      %v674 = vld [vmem:[%s670 + $0xc] sm:$0xf]
      %s675 = scalar_lea.vmem %s5, 1
      %v676 = vld [vmem:[%s675] sm:$0x1]
      %v678 = vlaneseq
      %v679 = vshrl.u32 %v678, 7
      %v680 = vsub.s32 0, %v679
      %v681 = vrot.slane %v676, %v680
      %v687 = vunpack.c.l.b16 %v671
      %v688 = vunpack.c.l.b16 %v672
      %v689 = vunpack.c.l.b16 %v673
      %v690 = vunpack.c.l.b16 %v674
      %v691 = vpack.c.b16 %v688, %v687
      %v692 = vpack.c.b16 %v690, %v689
      %695 = vmatprep.subr.bf16.mxu0 0
      %696 = vmatpush1.bf16.msra.mxu0 %v691
      %697 = vmatprep.subr.bf16.mxu0 0
      %698 = vmatpush1.bf16.msra.mxu0 %v692
      %699 = vmatprep.subr.bf16.mxu0 0
      %700 = vmatpush1.bf16.msra.mxu0 0
      %701 = vmatprep.subr.bf16.mxu0 0
      %702 = vmatpush1.bf16.msra.mxu0 0
      %703 = vmatprep.subr.bf16.mxu0 0
      %704 = vmatpush1.bf16.msra.mxu0 0
      %705 = vmatprep.subr.bf16.mxu0 0
      %706 = vmatpush1.bf16.msra.mxu0 0
      %707 = vmatprep.subr.bf16.mxu0 0
      %708 = vmatpush1.bf16.msra.mxu0 0
      %709 = vmatprep.subr.bf16.mxu0 0
      %710 = vmatpush1.bf16.msra.mxu0 0
      %711 = vmatprep.subr.bf16.mxu0 0
      %712 = vmatpush1.bf16.msra.mxu0 0
      %713 = vmatprep.subr.bf16.mxu0 0
      %714 = vmatpush1.bf16.msra.mxu0 0
      %715 = vmatprep.subr.bf16.mxu0 0
      %716 = vmatpush1.bf16.msra.mxu0 0
      %717 = vmatprep.subr.bf16.mxu0 0
      %718 = vmatpush1.bf16.msra.mxu0 0
      %719 = vmatprep.subr.bf16.mxu0 0
      %720 = vmatpush1.bf16.msra.mxu0 0
      %721 = vmatprep.subr.bf16.mxu0 0
      %722 = vmatpush1.bf16.msra.mxu0 0
      %723 = vmatprep.subr.bf16.mxu0 0
      %724 = vmatpush1.bf16.msra.mxu0 0
      %725 = vmatprep.subr.bf16.mxu0 0
      %726 = vmatpush1.bf16.msra.mxu0 0
      %727 = vmatprep.mubr.bf16.mxu0 0
      %728 = vmatmul.mubr.bf16.gmra.mrb[0].mxu0 %v492
      %v729 = vpop.f32.mrb[0].mxu0
      %v730 = vadd.f32 %v681, %v729
      %v731 = vpop.f32.mrb[0].mxu0
      %v732 = vpop.f32.mrb[0].mxu0
      %v733 = vpop.f32.mrb[0].mxu0
      %734 = vdwg.mxu0
      %740 = vrot.lane.b32.xlu0 %v534, 120
      %v741 = vpop.permute.xlu0 %740
      %742 = vrot.lane.b32.xlu0 %v535, 120
      %v743 = vpop.permute.xlu0 %742
      %744 = vrot.lane.b32.xlu0 %v536, 120
      %v745 = vpop.permute.xlu0 %744
      %746 = vrot.lane.b32.xlu0 %v537, 120
      %v747 = vpop.permute.xlu0 %746
      %748 = vrot.lane.b32.xlu0 %v538, 120
      %v749 = vpop.permute.xlu0 %748
      %v755 = vmul.f32 %v730, %v741
      %v756 = vmul.f32 %v730, %v743
      %v757 = vmul.f32 %v730, %v745
      %v758 = vmul.f32 %v730, %v747
      %v759 = vmul.f32 %v730, %v749
      %v760 = vsel %vm544, %v755, 0.0
      %761 = vadd.xlane.f32.xlu0 %v760
      %v762 = vpop.xlane.xlu0 %761
      %v763 = vsel %vm544, %v756, 0.0
      %764 = vadd.xlane.f32.xlu0 %v763
      %v765 = vpop.xlane.xlu0 %764
      %v766 = vsel %vm544, %v757, 0.0
      %767 = vadd.xlane.f32.xlu0 %v766
      %v768 = vpop.xlane.xlu0 %767
      %v769 = vsel %vm544, %v758, 0.0
      %770 = vadd.xlane.f32.xlu0 %v769
      %v771 = vpop.xlane.xlu0 %770
      %v772 = vsel %vm544, %v759, 0.0
      %773 = vadd.xlane.f32.xlu0 %v772
      %v774 = vpop.xlane.xlu0 %773
      %v780 = vlaneseq
      %v781 = vshrl.u32 %v780, 7
      %v782 = vsub.s32 %v567, %v781
      %v783 = vrot.slane %v762, %v782
      %v784 = vlaneseq
      %v785 = vshrl.u32 %v784, 7
      %v786 = vsub.s32 %v567, %v785
      %v787 = vrot.slane %v765, %v786
      %v788 = vlaneseq
      %v789 = vshrl.u32 %v788, 7
      %v790 = vsub.s32 %v567, %v789
      %v791 = vrot.slane %v768, %v790
      %v792 = vlaneseq
      %v793 = vshrl.u32 %v792, 7
      %v794 = vsub.s32 %v567, %v793
      %v795 = vrot.slane %v771, %v794
      %v796 = vlaneseq
      %v797 = vshrl.u32 %v796, 7
      %v798 = vsub.s32 %v567, %v797
      %v799 = vrot.slane %v774, %v798
      %v800 = vsel %vm588, %v787, %v783
      %v801 = vsel %vm590, %v791, %v800
      %v802 = vsel %vm592, %v795, %v801
      %v803 = vsel %vm594, %v799, %v802
      %v805 = vsel %vm560, %v803, -1e+09
      %v806 = vsel %vm598, %v805, -inf
      %v807 = vrot.slane %v806, 4
      %v808 = vmax.f32 %v806, %v807
      %v809 = vrot.slane %v808, 2
      %v810 = vmax.f32 %v808, %v809
      %v811 = vrot.slane %v810, 1
      %v812 = vmax.f32 %v810, %v811
      %v813 = vsub.f32 %v805, %v812
      %v814 = vmul.f32 %v813, 1.442695
      %v815 = vpow.pop %v814
      %v816 = vsel %vm598, %v815, 0.0
      %v817 = vrot.slane %v816, 4
      %v818 = vadd.f32 %v816, %v817
      %v819 = vrot.slane %v818, 2
      %v820 = vadd.f32 %v818, %v819
      %v821 = vrot.slane %v820, 1
      %v822 = vadd.f32 %v820, %v821
      %v823 = vrcp.pop %v822
      %v824 = vmul.f32 %v815, %v823
      %v825 = vlaneseq
      %v826 = vshrl.u32 %v825, 7
      %v827 = vsub.s32 0, %v826
      %v828 = vrot.slane %v824, %v827
      %830 = vbcast.lane.b32.xlu0 %v828, 256
      %v831 = vpop.permute.xlu0 %830
      %v832 = vlaneseq
      %v833 = vshrl.u32 %v832, 7
      %v834 = vsub.s32 1, %v833
      %v835 = vrot.slane %v824, %v834
      %837 = vbcast.lane.b32.xlu0 %v835, 256
      %v838 = vpop.permute.xlu0 %837
      %v839 = vlaneseq
      %v840 = vshrl.u32 %v839, 7
      %v841 = vsub.s32 2, %v840
      %v842 = vrot.slane %v824, %v841
      %844 = vbcast.lane.b32.xlu0 %v842, 256
      %v845 = vpop.permute.xlu0 %844
      %v846 = vlaneseq
      %v847 = vshrl.u32 %v846, 7
      %v848 = vsub.s32 3, %v847
      %v849 = vrot.slane %v824, %v848
      %851 = vbcast.lane.b32.xlu0 %v849, 256
      %v852 = vpop.permute.xlu0 %851
      %v853 = vlaneseq
      %v854 = vshrl.u32 %v853, 7
      %v855 = vsub.s32 4, %v854
      %v856 = vrot.slane %v824, %v855
      %858 = vbcast.lane.b32.xlu0 %v856, 256
      %v859 = vpop.permute.xlu0 %858
      %v860 = vmul.f32 %v831, %v534
      %v861 = vmul.f32 %v838, %v535
      %v862 = vmul.f32 %v845, %v536
      %v863 = vmul.f32 %v852, %v537
      %v864 = vmul.f32 %v859, %v538
      %vm865 = vcmask 392512
      %v866 = vsel %vm865, %v860, 0.0
      %v867 = vsel %vm865, %v861, 0.0
      %v868 = vadd.f32 %v866, %v867
      %v869 = vsel %vm865, %v862, 0.0
      %v870 = vadd.f32 %v868, %v869
      %v871 = vsel %vm865, %v863, 0.0
      %v872 = vadd.f32 %v870, %v871
      %v873 = vsel %vm865, %v864, 0.0
      %v874 = vadd.f32 %v872, %v873
      %s875 = scalar_lea.vmem %s6, 4
      %v876 = vld [vmem:[%s875] sm:$0xf]
      %v877 = vpack.c.bf16 %v874, %v874
      %879 = vrot.lane.b32.xlu0 %v877, 88
      %v880 = vpop.permute.xlu0 %879
      %v882 = vsel %vm544, %v880, 0
      %vm884 = vcmask 1043456
      %v886 = vsel %vm884, %v876, 0
      %888 = vmatprep.subr.bf16.mxu0 0
      %889 = vmatpush1.bf16.msra.mxu0 %v886
      %890 = vmatprep.subr.bf16.mxu0 0
      %891 = vmatpush1.bf16.msra.mxu0 0
      %892 = vmatprep.subr.bf16.mxu0 0
      %893 = vmatpush1.bf16.msra.mxu0 0
      %894 = vmatprep.subr.bf16.mxu0 0
      %895 = vmatpush1.bf16.msra.mxu0 0
      %896 = vmatprep.subr.bf16.mxu0 0
      %897 = vmatpush1.bf16.msra.mxu0 0
      %898 = vmatprep.subr.bf16.mxu0 0
      %899 = vmatpush1.bf16.msra.mxu0 0
      %900 = vmatprep.subr.bf16.mxu0 0
      %901 = vmatpush1.bf16.msra.mxu0 0
      %902 = vmatprep.subr.bf16.mxu0 0
      %903 = vmatpush1.bf16.msra.mxu0 0
      %904 = vmatprep.subr.bf16.mxu0 0
      %905 = vmatpush1.bf16.msra.mxu0 0
      %906 = vmatprep.subr.bf16.mxu0 0
      %907 = vmatpush1.bf16.msra.mxu0 0
      %908 = vmatprep.subr.bf16.mxu0 0
      %909 = vmatpush1.bf16.msra.mxu0 0
      %910 = vmatprep.subr.bf16.mxu0 0
      %911 = vmatpush1.bf16.msra.mxu0 0
      %912 = vmatprep.subr.bf16.mxu0 0
      %913 = vmatpush1.bf16.msra.mxu0 0
      %914 = vmatprep.subr.bf16.mxu0 0
      %915 = vmatpush1.bf16.msra.mxu0 0
      %916 = vmatprep.subr.bf16.mxu0 0
      %917 = vmatpush1.bf16.msra.mxu0 0
      %918 = vmatprep.subr.bf16.mxu0 0
      %919 = vmatpush1.bf16.msra.mxu0 0
      %920 = vmatprep.mubr.bf16.mxu0 0
      %921 = vmatmul.mubr.bf16.gmra.mrb[0].mxu0 %v882
      %v922 = vpop.f32.mrb[0].mxu0
      %v923 = vadd.f32 0.0, %v922
      %v924 = vpop.f32.mrb[0].mxu0
      %v925 = vpop.f32.mrb[0].mxu0
      %v926 = vpop.f32.mrb[0].mxu0
      %927 = vdwg.mxu0
      %929 = vrot.lane.b32.xlu0 %v669, 96
      %v930 = vpop.permute.xlu0 %929
      %v932 = vsel %vm544, %v930, 0
      %v935 = vsel %vm884, %v668, 0
      %937 = vmatprep.subr.bf16.mxu0 0
      %938 = vmatpush1.bf16.msra.mxu0 %v935
      %939 = vmatprep.subr.bf16.mxu0 0
      %940 = vmatpush1.bf16.msra.mxu0 0
      %941 = vmatprep.subr.bf16.mxu0 0
      %942 = vmatpush1.bf16.msra.mxu0 0
      %943 = vmatprep.subr.bf16.mxu0 0
      %944 = vmatpush1.bf16.msra.mxu0 0
      %945 = vmatprep.subr.bf16.mxu0 0
      %946 = vmatpush1.bf16.msra.mxu0 0
      %947 = vmatprep.subr.bf16.mxu0 0
      %948 = vmatpush1.bf16.msra.mxu0 0
      %949 = vmatprep.subr.bf16.mxu0 0
      %950 = vmatpush1.bf16.msra.mxu0 0
      %951 = vmatprep.subr.bf16.mxu0 0
      %952 = vmatpush1.bf16.msra.mxu0 0
      %953 = vmatprep.subr.bf16.mxu0 0
      %954 = vmatpush1.bf16.msra.mxu0 0
      %955 = vmatprep.subr.bf16.mxu0 0
      %956 = vmatpush1.bf16.msra.mxu0 0
      %957 = vmatprep.subr.bf16.mxu0 0
      %958 = vmatpush1.bf16.msra.mxu0 0
      %959 = vmatprep.subr.bf16.mxu0 0
      %960 = vmatpush1.bf16.msra.mxu0 0
      %961 = vmatprep.subr.bf16.mxu0 0
      %962 = vmatpush1.bf16.msra.mxu0 0
      %963 = vmatprep.subr.bf16.mxu0 0
      %964 = vmatpush1.bf16.msra.mxu0 0
      %965 = vmatprep.subr.bf16.mxu0 0
      %966 = vmatpush1.bf16.msra.mxu0 0
      %967 = vmatprep.subr.bf16.mxu0 0
      %968 = vmatpush1.bf16.msra.mxu0 0
      %969 = vmatprep.mubr.bf16.mxu0 0
      %970 = vmatmul.mubr.bf16.gmra.mrb[0].mxu0 %v932
      %v971 = vpop.f32.mrb[0].mxu0
      %v972 = vadd.f32 %v923, %v971
      %v973 = vpop.f32.mrb[0].mxu0
      %v974 = vpop.f32.mrb[0].mxu0
      %v975 = vpop.f32.mrb[0].mxu0
      %976 = vdwg.mxu0
      %s977 = scalar_lea.vmem %s4, 32
      %v978 = vld [vmem:[%s977] sm:$0xf]
      %v979 = vld [vmem:[%s977 + $0x4] sm:$0xf]
      %v980 = vld [vmem:[%s977 + $0x8] sm:$0xf]
      %v981 = vld [vmem:[%s977 + $0xc] sm:$0xf]
      %s982 = scalar_lea.vmem %s5, 2
      %v983 = vld [vmem:[%s982] sm:$0x1]
      %v985 = vlaneseq
      %v986 = vshrl.u32 %v985, 7
      %v987 = vsub.s32 0, %v986
      %v988 = vrot.slane %v983, %v987
      %v994 = vunpack.c.l.b16 %v978
      %v995 = vunpack.c.l.b16 %v979
      %v996 = vunpack.c.l.b16 %v980
      %v997 = vunpack.c.l.b16 %v981
      %v998 = vpack.c.b16 %v995, %v994
      %v999 = vpack.c.b16 %v997, %v996
      %1002 = vmatprep.subr.bf16.mxu0 0
      %1003 = vmatpush1.bf16.msra.mxu0 %v998
      %1004 = vmatprep.subr.bf16.mxu0 0
      %1005 = vmatpush1.bf16.msra.mxu0 %v999
      %1006 = vmatprep.subr.bf16.mxu0 0
      %1007 = vmatpush1.bf16.msra.mxu0 0
      %1008 = vmatprep.subr.bf16.mxu0 0
      %1009 = vmatpush1.bf16.msra.mxu0 0
      %1010 = vmatprep.subr.bf16.mxu0 0
      %1011 = vmatpush1.bf16.msra.mxu0 0
      %1012 = vmatprep.subr.bf16.mxu0 0
      %1013 = vmatpush1.bf16.msra.mxu0 0
      %1014 = vmatprep.subr.bf16.mxu0 0
      %1015 = vmatpush1.bf16.msra.mxu0 0
      %1016 = vmatprep.subr.bf16.mxu0 0
      %1017 = vmatpush1.bf16.msra.mxu0 0
      %1018 = vmatprep.subr.bf16.mxu0 0
      %1019 = vmatpush1.bf16.msra.mxu0 0
      %1020 = vmatprep.subr.bf16.mxu0 0
      %1021 = vmatpush1.bf16.msra.mxu0 0
      %1022 = vmatprep.subr.bf16.mxu0 0
      %1023 = vmatpush1.bf16.msra.mxu0 0
      %1024 = vmatprep.subr.bf16.mxu0 0
      %1025 = vmatpush1.bf16.msra.mxu0 0
      %1026 = vmatprep.subr.bf16.mxu0 0
      %1027 = vmatpush1.bf16.msra.mxu0 0
      %1028 = vmatprep.subr.bf16.mxu0 0
      %1029 = vmatpush1.bf16.msra.mxu0 0
      %1030 = vmatprep.subr.bf16.mxu0 0
      %1031 = vmatpush1.bf16.msra.mxu0 0
      %1032 = vmatprep.subr.bf16.mxu0 0
      %1033 = vmatpush1.bf16.msra.mxu0 0
      %1034 = vmatprep.mubr.bf16.mxu0 0
      %1035 = vmatmul.mubr.bf16.gmra.mrb[0].mxu0 %v492
      %v1036 = vpop.f32.mrb[0].mxu0
      %v1037 = vadd.f32 %v988, %v1036
      %v1038 = vpop.f32.mrb[0].mxu0
      %v1039 = vpop.f32.mrb[0].mxu0
      %v1040 = vpop.f32.mrb[0].mxu0
      %1041 = vdwg.mxu0
      %1042 = vrot.lane.b32.xlu0 %v534, 112
      %v1043 = vpop.permute.xlu0 %1042
      %1044 = vrot.lane.b32.xlu0 %v535, 112
      %v1045 = vpop.permute.xlu0 %1044
      %1046 = vrot.lane.b32.xlu0 %v536, 112
      %v1047 = vpop.permute.xlu0 %1046
      %1048 = vrot.lane.b32.xlu0 %v537, 112
      %v1049 = vpop.permute.xlu0 %1048
      %1050 = vrot.lane.b32.xlu0 %v538, 112
      %v1051 = vpop.permute.xlu0 %1050
      %v1057 = vmul.f32 %v1037, %v1043
      %v1058 = vmul.f32 %v1037, %v1045
      %v1059 = vmul.f32 %v1037, %v1047
      %v1060 = vmul.f32 %v1037, %v1049
      %v1061 = vmul.f32 %v1037, %v1051
      %v1062 = vsel %vm544, %v1057, 0.0
      %1063 = vadd.xlane.f32.xlu0 %v1062
      %v1064 = vpop.xlane.xlu0 %1063
      %v1065 = vsel %vm544, %v1058, 0.0
      %1066 = vadd.xlane.f32.xlu0 %v1065
      %v1067 = vpop.xlane.xlu0 %1066
      %v1068 = vsel %vm544, %v1059, 0.0
      %1069 = vadd.xlane.f32.xlu0 %v1068
      %v1070 = vpop.xlane.xlu0 %1069
      %v1071 = vsel %vm544, %v1060, 0.0
      %1072 = vadd.xlane.f32.xlu0 %v1071
      %v1073 = vpop.xlane.xlu0 %1072
      %v1074 = vsel %vm544, %v1061, 0.0
      %1075 = vadd.xlane.f32.xlu0 %v1074
      %v1076 = vpop.xlane.xlu0 %1075
      %v1082 = vlaneseq
      %v1083 = vshrl.u32 %v1082, 7
      %v1084 = vsub.s32 %v567, %v1083
      %v1085 = vrot.slane %v1064, %v1084
      %v1086 = vlaneseq
      %v1087 = vshrl.u32 %v1086, 7
      %v1088 = vsub.s32 %v567, %v1087
      %v1089 = vrot.slane %v1067, %v1088
      %v1090 = vlaneseq
      %v1091 = vshrl.u32 %v1090, 7
      %v1092 = vsub.s32 %v567, %v1091
      %v1093 = vrot.slane %v1070, %v1092
      %v1094 = vlaneseq
      %v1095 = vshrl.u32 %v1094, 7
      %v1096 = vsub.s32 %v567, %v1095
      %v1097 = vrot.slane %v1073, %v1096
      %v1098 = vlaneseq
      %v1099 = vshrl.u32 %v1098, 7
      %v1100 = vsub.s32 %v567, %v1099
      %v1101 = vrot.slane %v1076, %v1100
      %v1102 = vsel %vm588, %v1089, %v1085
      %v1103 = vsel %vm590, %v1093, %v1102
      %v1104 = vsel %vm592, %v1097, %v1103
      %v1105 = vsel %vm594, %v1101, %v1104
      %v1107 = vsel %vm560, %v1105, -1e+09
      %v1108 = vsel %vm598, %v1107, -inf
      %v1109 = vrot.slane %v1108, 4
      %v1110 = vmax.f32 %v1108, %v1109
      %v1111 = vrot.slane %v1110, 2
      %v1112 = vmax.f32 %v1110, %v1111
      %v1113 = vrot.slane %v1112, 1
      %v1114 = vmax.f32 %v1112, %v1113
      %v1115 = vsub.f32 %v1107, %v1114
      %v1116 = vmul.f32 %v1115, 1.442695
      %v1117 = vpow.pop %v1116
      %v1118 = vsel %vm598, %v1117, 0.0
      %v1119 = vrot.slane %v1118, 4
      %v1120 = vadd.f32 %v1118, %v1119
      %v1121 = vrot.slane %v1120, 2
      %v1122 = vadd.f32 %v1120, %v1121
      %v1123 = vrot.slane %v1122, 1
      %v1124 = vadd.f32 %v1122, %v1123
      %v1125 = vrcp.pop %v1124
      %v1126 = vmul.f32 %v1117, %v1125
      %v1127 = vlaneseq
      %v1128 = vshrl.u32 %v1127, 7
      %v1129 = vsub.s32 0, %v1128
      %v1130 = vrot.slane %v1126, %v1129
      %1132 = vbcast.lane.b32.xlu0 %v1130, 256
      %v1133 = vpop.permute.xlu0 %1132
      %v1134 = vlaneseq
      %v1135 = vshrl.u32 %v1134, 7
      %v1136 = vsub.s32 1, %v1135
      %v1137 = vrot.slane %v1126, %v1136
      %1139 = vbcast.lane.b32.xlu0 %v1137, 256
      %v1140 = vpop.permute.xlu0 %1139
      %v1141 = vlaneseq
      %v1142 = vshrl.u32 %v1141, 7
      %v1143 = vsub.s32 2, %v1142
      %v1144 = vrot.slane %v1126, %v1143
      %1146 = vbcast.lane.b32.xlu0 %v1144, 256
      %v1147 = vpop.permute.xlu0 %1146
      %v1148 = vlaneseq
      %v1149 = vshrl.u32 %v1148, 7
      %v1150 = vsub.s32 3, %v1149
      %v1151 = vrot.slane %v1126, %v1150
      %1153 = vbcast.lane.b32.xlu0 %v1151, 256
      %v1154 = vpop.permute.xlu0 %1153
      %v1155 = vlaneseq
      %v1156 = vshrl.u32 %v1155, 7
      %v1157 = vsub.s32 4, %v1156
      %v1158 = vrot.slane %v1126, %v1157
      %1160 = vbcast.lane.b32.xlu0 %v1158, 256
      %v1161 = vpop.permute.xlu0 %1160
      %v1162 = vmul.f32 %v1133, %v534
      %v1163 = vmul.f32 %v1140, %v535
      %v1164 = vmul.f32 %v1147, %v536
      %v1165 = vmul.f32 %v1154, %v537
      %v1166 = vmul.f32 %v1161, %v538
      %vm1167 = vcmask 458112
      %v1168 = vsel %vm1167, %v1162, 0.0
      %v1169 = vsel %vm1167, %v1163, 0.0
      %v1170 = vadd.f32 %v1168, %v1169
      %v1171 = vsel %vm1167, %v1164, 0.0
      %v1172 = vadd.f32 %v1170, %v1171
      %v1173 = vsel %vm1167, %v1165, 0.0
      %v1174 = vadd.f32 %v1172, %v1173
      %v1175 = vsel %vm1167, %v1166, 0.0
      %v1176 = vadd.f32 %v1174, %v1175
      %s1177 = scalar_lea.vmem %s6, 8
      %v1178 = vld [vmem:[%s1177] sm:$0xf]
      %v1179 = vpack.c.bf16 %v1176, %v1176
      %1181 = vrot.lane.b32.xlu0 %v1179, 80
      %v1182 = vpop.permute.xlu0 %1181
      %v1184 = vsel %vm544, %v1182, 0
      %v1187 = vsel %vm884, %v1178, 0
      %1189 = vmatprep.subr.bf16.mxu0 0
      %1190 = vmatpush1.bf16.msra.mxu0 %v1187
      %1191 = vmatprep.subr.bf16.mxu0 0
      %1192 = vmatpush1.bf16.msra.mxu0 0
      %1193 = vmatprep.subr.bf16.mxu0 0
      %1194 = vmatpush1.bf16.msra.mxu0 0
      %1195 = vmatprep.subr.bf16.mxu0 0
      %1196 = vmatpush1.bf16.msra.mxu0 0
      %1197 = vmatprep.subr.bf16.mxu0 0
      %1198 = vmatpush1.bf16.msra.mxu0 0
      %1199 = vmatprep.subr.bf16.mxu0 0
      %1200 = vmatpush1.bf16.msra.mxu0 0
      %1201 = vmatprep.subr.bf16.mxu0 0
      %1202 = vmatpush1.bf16.msra.mxu0 0
      %1203 = vmatprep.subr.bf16.mxu0 0
      %1204 = vmatpush1.bf16.msra.mxu0 0
      %1205 = vmatprep.subr.bf16.mxu0 0
      %1206 = vmatpush1.bf16.msra.mxu0 0
      %1207 = vmatprep.subr.bf16.mxu0 0
      %1208 = vmatpush1.bf16.msra.mxu0 0
      %1209 = vmatprep.subr.bf16.mxu0 0
      %1210 = vmatpush1.bf16.msra.mxu0 0
      %1211 = vmatprep.subr.bf16.mxu0 0
      %1212 = vmatpush1.bf16.msra.mxu0 0
      %1213 = vmatprep.subr.bf16.mxu0 0
      %1214 = vmatpush1.bf16.msra.mxu0 0
      %1215 = vmatprep.subr.bf16.mxu0 0
      %1216 = vmatpush1.bf16.msra.mxu0 0
      %1217 = vmatprep.subr.bf16.mxu0 0
      %1218 = vmatpush1.bf16.msra.mxu0 0
      %1219 = vmatprep.subr.bf16.mxu0 0
      %1220 = vmatpush1.bf16.msra.mxu0 0
      %1221 = vmatprep.mubr.bf16.mxu0 0
      %1222 = vmatmul.mubr.bf16.gmra.mrb[0].mxu0 %v1184
      %v1223 = vpop.f32.mrb[0].mxu0
      %v1224 = vadd.f32 0.0, %v1223
      %v1225 = vpop.f32.mrb[0].mxu0
      %v1226 = vpop.f32.mrb[0].mxu0
      %v1227 = vpop.f32.mrb[0].mxu0
      %1228 = vdwg.mxu0
      %v1229 = vadd.f32 %v972, %v1224
      %s1230 = scalar_lea.vmem %s4, 48
      %v1231 = vld [vmem:[%s1230] sm:$0xf]
      %v1232 = vld [vmem:[%s1230 + $0x4] sm:$0xf]
      %v1233 = vld [vmem:[%s1230 + $0x8] sm:$0xf]
      %v1234 = vld [vmem:[%s1230 + $0xc] sm:$0xf]
      %s1235 = scalar_lea.vmem %s5, 3
      %v1236 = vld [vmem:[%s1235] sm:$0x1]
      %v1238 = vlaneseq
      %v1239 = vshrl.u32 %v1238, 7
      %v1240 = vsub.s32 0, %v1239
      %v1241 = vrot.slane %v1236, %v1240
      %v1247 = vunpack.c.l.b16 %v1231
      %v1248 = vunpack.c.l.b16 %v1232
      %v1249 = vunpack.c.l.b16 %v1233
      %v1250 = vunpack.c.l.b16 %v1234
      %v1251 = vpack.c.b16 %v1248, %v1247
      %v1252 = vpack.c.b16 %v1250, %v1249
      %1255 = vmatprep.subr.bf16.mxu0 0
      %1256 = vmatpush1.bf16.msra.mxu0 %v1251
      %1257 = vmatprep.subr.bf16.mxu0 0
      %1258 = vmatpush1.bf16.msra.mxu0 %v1252
      %1259 = vmatprep.subr.bf16.mxu0 0
      %1260 = vmatpush1.bf16.msra.mxu0 0
      %1261 = vmatprep.subr.bf16.mxu0 0
      %1262 = vmatpush1.bf16.msra.mxu0 0
      %1263 = vmatprep.subr.bf16.mxu0 0
      %1264 = vmatpush1.bf16.msra.mxu0 0
      %1265 = vmatprep.subr.bf16.mxu0 0
      %1266 = vmatpush1.bf16.msra.mxu0 0
      %1267 = vmatprep.subr.bf16.mxu0 0
      %1268 = vmatpush1.bf16.msra.mxu0 0
      %1269 = vmatprep.subr.bf16.mxu0 0
      %1270 = vmatpush1.bf16.msra.mxu0 0
      %1271 = vmatprep.subr.bf16.mxu0 0
      %1272 = vmatpush1.bf16.msra.mxu0 0
      %1273 = vmatprep.subr.bf16.mxu0 0
      %1274 = vmatpush1.bf16.msra.mxu0 0
      %1275 = vmatprep.subr.bf16.mxu0 0
      %1276 = vmatpush1.bf16.msra.mxu0 0
      %1277 = vmatprep.subr.bf16.mxu0 0
      %1278 = vmatpush1.bf16.msra.mxu0 0
      %1279 = vmatprep.subr.bf16.mxu0 0
      %1280 = vmatpush1.bf16.msra.mxu0 0
      %1281 = vmatprep.subr.bf16.mxu0 0
      %1282 = vmatpush1.bf16.msra.mxu0 0
      %1283 = vmatprep.subr.bf16.mxu0 0
      %1284 = vmatpush1.bf16.msra.mxu0 0
      %1285 = vmatprep.subr.bf16.mxu0 0
      %1286 = vmatpush1.bf16.msra.mxu0 0
      %1287 = vmatprep.mubr.bf16.mxu0 0
      %1288 = vmatmul.mubr.bf16.gmra.mrb[0].mxu0 %v492
      %v1289 = vpop.f32.mrb[0].mxu0
      %v1290 = vadd.f32 %v1241, %v1289
      %v1291 = vpop.f32.mrb[0].mxu0
      %v1292 = vpop.f32.mrb[0].mxu0
      %v1293 = vpop.f32.mrb[0].mxu0
      %1294 = vdwg.mxu0
      %1295 = vrot.lane.b32.xlu0 %v534, 104
      %v1296 = vpop.permute.xlu0 %1295
      %1297 = vrot.lane.b32.xlu0 %v535, 104
      %v1298 = vpop.permute.xlu0 %1297
      %1299 = vrot.lane.b32.xlu0 %v536, 104
      %v1300 = vpop.permute.xlu0 %1299
      %1301 = vrot.lane.b32.xlu0 %v537, 104
      %v1302 = vpop.permute.xlu0 %1301
      %1303 = vrot.lane.b32.xlu0 %v538, 104
      %v1304 = vpop.permute.xlu0 %1303
      %v1310 = vmul.f32 %v1290, %v1296
      %v1311 = vmul.f32 %v1290, %v1298
      %v1312 = vmul.f32 %v1290, %v1300
      %v1313 = vmul.f32 %v1290, %v1302
      %v1314 = vmul.f32 %v1290, %v1304
      %v1315 = vsel %vm544, %v1310, 0.0
      %1316 = vadd.xlane.f32.xlu0 %v1315
      %v1317 = vpop.xlane.xlu0 %1316
      %v1318 = vsel %vm544, %v1311, 0.0
      %1319 = vadd.xlane.f32.xlu0 %v1318
      %v1320 = vpop.xlane.xlu0 %1319
      %v1321 = vsel %vm544, %v1312, 0.0
      %1322 = vadd.xlane.f32.xlu0 %v1321
      %v1323 = vpop.xlane.xlu0 %1322
      %v1324 = vsel %vm544, %v1313, 0.0
      %1325 = vadd.xlane.f32.xlu0 %v1324
      %v1326 = vpop.xlane.xlu0 %1325
      %v1327 = vsel %vm544, %v1314, 0.0
      %1328 = vadd.xlane.f32.xlu0 %v1327
      %v1329 = vpop.xlane.xlu0 %1328
      %v1335 = vlaneseq
      %v1336 = vshrl.u32 %v1335, 7
      %v1337 = vsub.s32 %v567, %v1336
      %v1338 = vrot.slane %v1317, %v1337
      %v1339 = vlaneseq
      %v1340 = vshrl.u32 %v1339, 7
      %v1341 = vsub.s32 %v567, %v1340
      %v1342 = vrot.slane %v1320, %v1341
      %v1343 = vlaneseq
      %v1344 = vshrl.u32 %v1343, 7
      %v1345 = vsub.s32 %v567, %v1344
      %v1346 = vrot.slane %v1323, %v1345
      %v1347 = vlaneseq
      %v1348 = vshrl.u32 %v1347, 7
      %v1349 = vsub.s32 %v567, %v1348
      %v1350 = vrot.slane %v1326, %v1349
      %v1351 = vlaneseq
      %v1352 = vshrl.u32 %v1351, 7
      %v1353 = vsub.s32 %v567, %v1352
      %v1354 = vrot.slane %v1329, %v1353
      %v1355 = vsel %vm588, %v1342, %v1338
      %v1356 = vsel %vm590, %v1346, %v1355
      %v1357 = vsel %vm592, %v1350, %v1356
      %v1358 = vsel %vm594, %v1354, %v1357
      %v1360 = vsel %vm560, %v1358, -1e+09
      %v1361 = vsel %vm598, %v1360, -inf
      %v1362 = vrot.slane %v1361, 4
      %v1363 = vmax.f32 %v1361, %v1362
      %v1364 = vrot.slane %v1363, 2
      %v1365 = vmax.f32 %v1363, %v1364
      %v1366 = vrot.slane %v1365, 1
      %v1367 = vmax.f32 %v1365, %v1366
      %v1368 = vsub.f32 %v1360, %v1367
      %v1369 = vmul.f32 %v1368, 1.442695
      %v1370 = vpow.pop %v1369
      %v1371 = vsel %vm598, %v1370, 0.0
      %v1372 = vrot.slane %v1371, 4
      %v1373 = vadd.f32 %v1371, %v1372
      %v1374 = vrot.slane %v1373, 2
      %v1375 = vadd.f32 %v1373, %v1374
      %v1376 = vrot.slane %v1375, 1
      %v1377 = vadd.f32 %v1375, %v1376
      %v1378 = vrcp.pop %v1377
      %v1379 = vmul.f32 %v1370, %v1378
      %v1380 = vlaneseq
      %v1381 = vshrl.u32 %v1380, 7
      %v1382 = vsub.s32 0, %v1381
      %v1383 = vrot.slane %v1379, %v1382
      %1385 = vbcast.lane.b32.xlu0 %v1383, 256
      %v1386 = vpop.permute.xlu0 %1385
      %v1387 = vlaneseq
      %v1388 = vshrl.u32 %v1387, 7
      %v1389 = vsub.s32 1, %v1388
      %v1390 = vrot.slane %v1379, %v1389
      %1392 = vbcast.lane.b32.xlu0 %v1390, 256
      %v1393 = vpop.permute.xlu0 %1392
      %v1394 = vlaneseq
      %v1395 = vshrl.u32 %v1394, 7
      %v1396 = vsub.s32 2, %v1395
      %v1397 = vrot.slane %v1379, %v1396
      %1399 = vbcast.lane.b32.xlu0 %v1397, 256
      %v1400 = vpop.permute.xlu0 %1399
      %v1401 = vlaneseq
      %v1402 = vshrl.u32 %v1401, 7
      %v1403 = vsub.s32 3, %v1402
      %v1404 = vrot.slane %v1379, %v1403
      %1406 = vbcast.lane.b32.xlu0 %v1404, 256
      %v1407 = vpop.permute.xlu0 %1406
      %v1408 = vlaneseq
      %v1409 = vshrl.u32 %v1408, 7
      %v1410 = vsub.s32 4, %v1409
      %v1411 = vrot.slane %v1379, %v1410
      %1413 = vbcast.lane.b32.xlu0 %v1411, 256
      %v1414 = vpop.permute.xlu0 %1413
      %v1415 = vmul.f32 %v1386, %v534
      %v1416 = vmul.f32 %v1393, %v535
      %v1417 = vmul.f32 %v1400, %v536
      %v1418 = vmul.f32 %v1407, %v537
      %v1419 = vmul.f32 %v1414, %v538
      %vm1420 = vcmask 523712
      %v1421 = vsel %vm1420, %v1415, 0.0
      %v1422 = vsel %vm1420, %v1416, 0.0
      %v1423 = vadd.f32 %v1421, %v1422
      %v1424 = vsel %vm1420, %v1417, 0.0
      %v1425 = vadd.f32 %v1423, %v1424
      %v1426 = vsel %vm1420, %v1418, 0.0
      %v1427 = vadd.f32 %v1425, %v1426
      %v1428 = vsel %vm1420, %v1419, 0.0
      %v1429 = vadd.f32 %v1427, %v1428
      %s1430 = scalar_lea.vmem %s6, 12
      %v1431 = vld [vmem:[%s1430] sm:$0xf]
      %v1432 = vpack.c.bf16 %v1429, %v1429
      %1434 = vrot.lane.b32.xlu0 %v1432, 72
      %v1435 = vpop.permute.xlu0 %1434
      %v1437 = vsel %vm544, %v1435, 0
      %v1440 = vsel %vm884, %v1431, 0
      %1442 = vmatprep.subr.bf16.mxu0 0
      %1443 = vmatpush1.bf16.msra.mxu0 %v1440
      %1444 = vmatprep.subr.bf16.mxu0 0
      %1445 = vmatpush1.bf16.msra.mxu0 0
      %1446 = vmatprep.subr.bf16.mxu0 0
      %1447 = vmatpush1.bf16.msra.mxu0 0
      %1448 = vmatprep.subr.bf16.mxu0 0
      %1449 = vmatpush1.bf16.msra.mxu0 0
      %1450 = vmatprep.subr.bf16.mxu0 0
      %1451 = vmatpush1.bf16.msra.mxu0 0
      %1452 = vmatprep.subr.bf16.mxu0 0
      %1453 = vmatpush1.bf16.msra.mxu0 0
      %1454 = vmatprep.subr.bf16.mxu0 0
      %1455 = vmatpush1.bf16.msra.mxu0 0
      %1456 = vmatprep.subr.bf16.mxu0 0
      %1457 = vmatpush1.bf16.msra.mxu0 0
      %1458 = vmatprep.subr.bf16.mxu0 0
      %1459 = vmatpush1.bf16.msra.mxu0 0
      %1460 = vmatprep.subr.bf16.mxu0 0
      %1461 = vmatpush1.bf16.msra.mxu0 0
      %1462 = vmatprep.subr.bf16.mxu0 0
      %1463 = vmatpush1.bf16.msra.mxu0 0
      %1464 = vmatprep.subr.bf16.mxu0 0
      %1465 = vmatpush1.bf16.msra.mxu0 0
      %1466 = vmatprep.subr.bf16.mxu0 0
      %1467 = vmatpush1.bf16.msra.mxu0 0
      %1468 = vmatprep.subr.bf16.mxu0 0
      %1469 = vmatpush1.bf16.msra.mxu0 0
      %1470 = vmatprep.subr.bf16.mxu0 0
      %1471 = vmatpush1.bf16.msra.mxu0 0
      %1472 = vmatprep.subr.bf16.mxu0 0
      %1473 = vmatpush1.bf16.msra.mxu0 0
      %1474 = vmatprep.mubr.bf16.mxu0 0
      %1475 = vmatmul.mubr.bf16.gmra.mrb[0].mxu0 %v1437
      %v1476 = vpop.f32.mrb[0].mxu0
      %v1477 = vadd.f32 0.0, %v1476
      %v1478 = vpop.f32.mrb[0].mxu0
      %v1479 = vpop.f32.mrb[0].mxu0
      %v1480 = vpop.f32.mrb[0].mxu0
      %1481 = vdwg.mxu0
      %v1482 = vadd.f32 %v1229, %v1477
      %v1483 = vld [vmem:[%s7] sm:$0x1]
      %v1485 = vlaneseq
      %v1486 = vshrl.u32 %v1485, 7
      %v1487 = vsub.s32 0, %v1486
      %v1488 = vrot.slane %v1483, %v1487
      %v1490 = vadd.f32 %v1482, %v1488
      %v1491 = vunpack.c.l.bf16 %v460
      %v1492 = vld [vmem:[%s451] sm:$0x1]
      %v1494 = vlaneseq
      %v1495 = vshrl.u32 %v1494, 7
      %v1496 = vsub.s32 0, %v1495
      %v1497 = vrot.slane %v1492, %v1496
      %v1499 = vmul.f32 %v1497, %v1490
      %v1500 = vadd.f32 %v1491, %v1499
      %v1501 = vld [vmem:[%s8] sm:$0x1]
      %v1502 = vld [vmem:[%s9] sm:$0x1]
      %v1503 = vsel %vm490, %v1500, 0.0
      %1504 = vadd.xlane.f32.xlu0 %v1503
      %v1505 = vpop.xlane.xlu0 %1504
      %v1506 = vrcp.pop 32.0
      %v1507 = vmul.f32 %v1505, %v1506
      %v1508 = vsub.f32 %v1500, %v1507
      %v1509 = vmul.f32 %v1508, %v1508
      %v1510 = vsel %vm490, %v1509, 0.0
      %1511 = vadd.xlane.f32.xlu0 %v1510
      %v1512 = vpop.xlane.xlu0 %1511
      %v1513 = vmul.f32 %v1512, %v1506
      %v1514 = vadd.f32 %v1513, 1e-05
      %v1515 = vrsqrt.pop %v1514
      %v1516 = vmul.f32 %v1508, %v1515
      %v1518 = vlaneseq
      %v1519 = vshrl.u32 %v1518, 7
      %v1520 = vsub.s32 0, %v1519
      %v1521 = vrot.slane %v1501, %v1520
      %v1523 = vmul.f32 %v1516, %v1521
      %v1525 = vlaneseq
      %v1526 = vshrl.u32 %v1525, 7
      %v1527 = vsub.s32 0, %v1526
      %v1528 = vrot.slane %v1502, %v1527
      %v1530 = vadd.f32 %v1523, %v1528
      %v1531 = vpack.c.bf16 %v1530, %v1530
      %vm1532 = vcmask 257024
      %1533 = vst.msk [vmem:[%s458] sm:$0xf] %vm1532, %v1531
      %p1534 = scmp.lt.s32.totalorder %s25, 1
      %s1535 = scalar_select %p1534, %s25, 1
      %p1536 = scmp.lt.s32.totalorder %s26, 0
      %s1537 = scalar_select %p1536, %s26, 0
      %s1538 = sadd.s32 %s1537, %s1535
      %s1539 = smul.addr %s1538, 4
      %s1540 = scalar_lea.vmem %s10, %s1539
      // Predicated region
      $region61: #{labind_forward.19} parent=59 // pred_check
        %p1541 = pneg %p289
      $region62: #{labind_forward.19} parent=59 // pred_check_branch
        %1543 = sbr.rel (%p1541) target = $region64
      $region63: #{labind_forward.19} parent=59 // pred_region
        _
      $region64: #{labind_forward.19} parent=59 // pred_fallthru
        _
    $region60: #{labind_forward.19} parent=5 // pred_fallthru
      _
    %p1544 = scmp.le.s32.totalorder 2, %s16
    // Predicated region
    $region65: #{labind_forward.19} parent=5 // pred_check
      %p1545 = pneg %p1544
    $region66: #{labind_forward.19} parent=5 // pred_check_branch
      %1547 = sbr.rel (%p1545) target = $region68
    $region67: #{labind_forward.19} parent=5 // pred_region
      %s1548 = ssub.s32 %s16, 2
      // Predicated region
      $region69: #{labind_forward.19} parent=67 // pred_check
        %p1549 = pneg %p295
      $region70: #{labind_forward.19} parent=67 // pred_check_branch
        %1551 = sbr.rel (%p1549) target = $region72
      $region71: #{labind_forward.19} parent=67 // pred_region
        %p1552 = scmp.lt.s32.totalorder %s27, 1
        %s1553 = scalar_select %p1552, %s27, 1
        %p1554 = scmp.lt.s32.totalorder %s28, 0
        %s1555 = scalar_select %p1554, %s28, 0
        %s1556 = sadd.s32 %s1555, %s1553
        %s1557 = smul.addr %s1556, 4
        %s1558 = scalar_lea.vmem %s10, %s1557
      $region72: #{labind_forward.19} parent=67 // pred_fallthru
        _
    $region68: #{labind_forward.19} parent=5 // pred_fallthru
      _
  $region6: #{labind_forward.19} parent=0 // loop_footer
    %s20 = sadd.s32 1, %s16
  $region7: #{labind_forward.19} parent=0 // loop_footer_branch
    %15 = sbr.rel target = $region3
  $region8: #{labind_forward.19} parent=0 // loop_exit
    _

// kernel: labind_forward.21
$region0: #{labind_forward.21}
  #allocation0 [shape = 'u32[]', space=smem, size = 0x4, offset = 0x4, fixed_abs, tag = 'smem constant byte address 0x4 - core index']
  #allocation1 [shape = 'u32[144,128]{1,0:T(1,128)}', space=vmem, size = 0x12000, scoped, tag = 'internal scratch']
  %s0 = inlined_call_operand.vmem [shape: bf16[2,5,8,32], index: 0, kind: input, shape index: {}]
  %s1 = inlined_call_operand.vmem [shape: bf16[2,5,8,32], index: 1, kind: input, shape index: {}]
  %s2 = inlined_call_operand.vmem [shape: bf16[2,8,32], index: 2, kind: input, shape index: {}]
  %s3 = inlined_call_operand.vmem [shape: bf16[64,32], index: 3, kind: input, shape index: {}]
  %s4 = inlined_call_operand.vmem [shape: f32[1,32], index: 4, kind: input, shape index: {}]
  %s5 = inlined_call_operand.vmem [shape: f32[1,32], index: 5, kind: input, shape index: {}]
  %s6 = inlined_call_operand.vmem [shape: bf16[2,5,8,32], index: 6, kind: output, shape index: {}]
  %s7 = sld [smem:[#allocation0]]
  $region57: #{labind_forward.21} parent=0
    _
  %s9 = ssub.s32 1, %s7
  %s10 = scalar_select 0, %s9, %s7
  loop: start=0, step=1, limit=12
  $region2: #{labind_forward.21} parent=0 // loop_pre_header
    _
  $region3: #{labind_forward.21} parent=0 // loop_header
    %s12 = sphi 0, %s16
    %p13 = scmp.ge.s32.totalorder %s12, 12
    %s19 = sphi 0, %s38
    %s20 = sphi 0, %s34
    %s21 = sphi 0, %s30
    %s22 = sphi 0, %s19
    %s23 = sphi 0, %s20
    %s24 = sphi 0, %s21
    %s25 = sphi 0, %s22
    %s26 = sphi 0, %s23
    %s27 = sphi 0, %s24
    %s45 = sphi 0, %s47
    %s48 = sphi 0, %s45
    %s49 = sphi 0, %s48
    %s65 = sphi 0, %s49
    %s75 = sphi 0, %s77
    %s78 = sphi 0, %s75
    %s79 = sphi 0, %s78
    %s95 = sphi 0, %s79
    %s103 = sphi 0, %s105
    %s106 = sphi 0, %s103
    %s107 = sphi 0, %s106
    %s123 = sphi 0, %s107
    %s127 = sphi 0, %s127
    %s129 = sphi 0, %s127
    %s130 = sphi 0, %s129
    %s144 = sphi 0, %s130
    %s148 = sphi 0, %s148
    %s150 = sphi 0, %s148
    %s151 = sphi 0, %s150
    %s165 = sphi 0, %s151
    %s169 = sphi 0, %s169
    %s171 = sphi 0, %s169
    %s172 = sphi 0, %s171
    %s186 = sphi 0, %s172
    %s196 = sphi 0, %s198
    %s199 = sphi 0, %s196
    %s200 = sphi 0, %s199
    %s216 = sphi 0, %s200
  $region4: #{labind_forward.21} parent=0 // loop_header_branch
    %15 = sbr.rel (%p13) target = $region8
  $region5: #{labind_forward.21} parent=0 // loop_body
    %s17 = ssub.s32 %s12, 1
    %s18 = ssub.s32 %s12, 2
    %s28 = sadd.s32 1, %s21
    %p29 = scmp.ge.s32.totalorder %s28, 5
    %s30 = scalar_select %p29, 0, %s28
    %s31 = sadd.s32 1, %s20
    %s32 = scalar_select %p29, %s31, %s20
    %p33 = scmp.ge.s32.totalorder %s32, 1
    %s34 = scalar_select %p33, 0, %s32
    %s35 = sadd.s32 1, %s19
    %s36 = scalar_select %p33, %s35, %s19
    %p37 = scmp.ge.s32.totalorder %s36, 2
    %s38 = scalar_select %p37, 0, %s36
    %s39 = ssub.s32 %s19, %s38
    %s40 = ssub.s32 %s21, %s30
    %s41 = sor.u32 %s39, %s40
    %s42 = ssub.s32 %s20, %s34
    %s43 = sor.u32 %s41, %s42
    %p44 = scmp.eq.s32.totalorder %s43, 0
    %s46 = sadd.s32 %s45, 1
    %s47 = scalar_select %p44, %s45, %s46
    %p50 = pneg %p44
    %p51 = scmp.eq.s32.totalorder %s12, 9
    %p52 = por %p50, %p51
    %p53 = scmp.ne.s32.totalorder %s45, %s48
    %p54 = scmp.eq.s32.totalorder %s12, 0
    %p55 = por %p53, %p54
    %p56 = scmp.ne.s32.totalorder %s45, %s48
    %p57 = scmp.eq.s32.totalorder %s17, 9
    %p58 = por %p56, %p57
    %p59 = scmp.ne.s32.totalorder %s48, %s49
    %p60 = scmp.eq.s32.totalorder %s17, 0
    %p61 = por %p59, %p60
    %p62 = scmp.ne.s32.totalorder %s48, %s49
    %p63 = scmp.eq.s32.totalorder %s18, 9
    %p64 = por %p62, %p63
    %p66 = scmp.ne.s32.totalorder %s49, %s65
    %p67 = scmp.eq.s32.totalorder %s18, 0
    %p68 = por %p66, %p67
    %s69 = ssub.s32 %s19, %s38
    %s70 = ssub.s32 %s21, %s30
    %s71 = sor.u32 %s69, %s70
    %s72 = ssub.s32 %s20, %s34
    %s73 = sor.u32 %s71, %s72
    %p74 = scmp.eq.s32.totalorder %s73, 0
    %s76 = sadd.s32 %s75, 1
    %s77 = scalar_select %p74, %s75, %s76
    %p80 = pneg %p74
    %p81 = scmp.eq.s32.totalorder %s12, 9
    %p82 = por %p80, %p81
    %p83 = scmp.ne.s32.totalorder %s75, %s78
    %p84 = scmp.eq.s32.totalorder %s12, 0
    %p85 = por %p83, %p84
    %p86 = scmp.ne.s32.totalorder %s75, %s78
    %p87 = scmp.eq.s32.totalorder %s17, 9
    %p88 = por %p86, %p87
    %p89 = scmp.ne.s32.totalorder %s78, %s79
    %p90 = scmp.eq.s32.totalorder %s17, 0
    %p91 = por %p89, %p90
    %p92 = scmp.ne.s32.totalorder %s78, %s79
    %p93 = scmp.eq.s32.totalorder %s18, 9
    %p94 = por %p92, %p93
    %p96 = scmp.ne.s32.totalorder %s79, %s95
    %p97 = scmp.eq.s32.totalorder %s18, 0
    %p98 = por %p96, %p97
    %s99 = ssub.s32 %s19, %s38
    %s100 = ssub.s32 %s20, %s34
    %s101 = sor.u32 %s99, %s100
    %p102 = scmp.eq.s32.totalorder %s101, 0
    %s104 = sadd.s32 %s103, 1
    %s105 = scalar_select %p102, %s103, %s104
    %p108 = pneg %p102
    %p109 = scmp.eq.s32.totalorder %s12, 9
    %p110 = por %p108, %p109
    %p111 = scmp.ne.s32.totalorder %s103, %s106
    %p112 = scmp.eq.s32.totalorder %s12, 0
    %p113 = por %p111, %p112
    %p114 = scmp.ne.s32.totalorder %s103, %s106
    %p115 = scmp.eq.s32.totalorder %s17, 9
    %p116 = por %p114, %p115
    %p117 = scmp.ne.s32.totalorder %s106, %s107
    %p118 = scmp.eq.s32.totalorder %s17, 0
    %p119 = por %p117, %p118
    %p120 = scmp.ne.s32.totalorder %s106, %s107
    %p121 = scmp.eq.s32.totalorder %s18, 9
    %p122 = por %p120, %p121
    %p124 = scmp.ne.s32.totalorder %s107, %s123
    %p125 = scmp.eq.s32.totalorder %s18, 0
    %p126 = por %p124, %p125
    %s128 = sadd.s32 %s127, 1
    %p131 = scmp.eq.s32.totalorder %s12, 9
    %p132 = scmp.ne.s32.totalorder %s127, %s129
    %p133 = scmp.eq.s32.totalorder %s12, 0
    %p134 = por %p132, %p133
    %p135 = scmp.ne.s32.totalorder %s127, %s129
    %p136 = scmp.eq.s32.totalorder %s17, 9
    %p137 = por %p135, %p136
    %p138 = scmp.ne.s32.totalorder %s129, %s130
    %p139 = scmp.eq.s32.totalorder %s17, 0
    %p140 = por %p138, %p139
    %p141 = scmp.ne.s32.totalorder %s129, %s130
    %p142 = scmp.eq.s32.totalorder %s18, 9
    %p143 = por %p141, %p142
    %p145 = scmp.ne.s32.totalorder %s130, %s144
    %p146 = scmp.eq.s32.totalorder %s18, 0
    %p147 = por %p145, %p146
    %s149 = sadd.s32 %s148, 1
    %p152 = scmp.eq.s32.totalorder %s12, 9
    %p153 = scmp.ne.s32.totalorder %s148, %s150
    %p154 = scmp.eq.s32.totalorder %s12, 0
    %p155 = por %p153, %p154
    %p156 = scmp.ne.s32.totalorder %s148, %s150
    %p157 = scmp.eq.s32.totalorder %s17, 9
    %p158 = por %p156, %p157
    %p159 = scmp.ne.s32.totalorder %s150, %s151
    %p160 = scmp.eq.s32.totalorder %s17, 0
    %p161 = por %p159, %p160
    %p162 = scmp.ne.s32.totalorder %s150, %s151
    %p163 = scmp.eq.s32.totalorder %s18, 9
    %p164 = por %p162, %p163
    %p166 = scmp.ne.s32.totalorder %s151, %s165
    %p167 = scmp.eq.s32.totalorder %s18, 0
    %p168 = por %p166, %p167
    %s170 = sadd.s32 %s169, 1
    %p173 = scmp.eq.s32.totalorder %s12, 9
    %p174 = scmp.ne.s32.totalorder %s169, %s171
    %p175 = scmp.eq.s32.totalorder %s12, 0
    %p176 = por %p174, %p175
    %p177 = scmp.ne.s32.totalorder %s169, %s171
    %p178 = scmp.eq.s32.totalorder %s17, 9
    %p179 = por %p177, %p178
    %p180 = scmp.ne.s32.totalorder %s171, %s172
    %p181 = scmp.eq.s32.totalorder %s17, 0
    %p182 = por %p180, %p181
    %p183 = scmp.ne.s32.totalorder %s171, %s172
    %p184 = scmp.eq.s32.totalorder %s18, 9
    %p185 = por %p183, %p184
    %p187 = scmp.ne.s32.totalorder %s172, %s186
    %p188 = scmp.eq.s32.totalorder %s18, 0
    %p189 = por %p187, %p188
    %s190 = ssub.s32 %s19, %s38
    %s191 = ssub.s32 %s21, %s30
    %s192 = sor.u32 %s190, %s191
    %s193 = ssub.s32 %s20, %s34
    %s194 = sor.u32 %s192, %s193
    %p195 = scmp.eq.s32.totalorder %s194, 0
    %s197 = sadd.s32 %s196, 1
    %s198 = scalar_select %p195, %s196, %s197
    %p201 = pneg %p195
    %p202 = scmp.eq.s32.totalorder %s12, 9
    %p203 = por %p201, %p202
    %p204 = scmp.ne.s32.totalorder %s196, %s199
    %p205 = scmp.eq.s32.totalorder %s12, 0
    %p206 = por %p204, %p205
    %p207 = scmp.ne.s32.totalorder %s196, %s199
    %p208 = scmp.eq.s32.totalorder %s17, 9
    %p209 = por %p207, %p208
    %p210 = scmp.ne.s32.totalorder %s199, %s200
    %p211 = scmp.eq.s32.totalorder %s17, 0
    %p212 = por %p210, %p211
    %p213 = scmp.ne.s32.totalorder %s199, %s200
    %p214 = scmp.eq.s32.totalorder %s18, 9
    %p215 = por %p213, %p214
    %p217 = scmp.ne.s32.totalorder %s200, %s216
    %p218 = scmp.eq.s32.totalorder %s18, 0
    %p219 = por %p217, %p218
    %p220 = scmp.le.s32.totalorder 1, %s12
    %p221 = scmp.lt.s32.totalorder %s12, 11
    %p222 = pnand %p220, %p221
    %p223 = pneg %p222
    // Predicated region
    $region9: #{labind_forward.21} parent=5 // pred_check
      _
    $region10: #{labind_forward.21} parent=5 // pred_check_branch
      %225 = sbr.rel (%p222) target = $region12
    $region11: #{labind_forward.21} parent=5 // pred_region
      %s226 = ssub.s32 %s12, 1
      // Predicated region
      $region13: #{labind_forward.21} parent=11 // pred_check
        %p227 = pneg %p140
      $region14: #{labind_forward.21} parent=11 // pred_check_branch
        %229 = sbr.rel (%p227) target = $region16
      $region15: #{labind_forward.21} parent=11 // pred_region
        _
      $region16: #{labind_forward.21} parent=11 // pred_fallthru
        _
      // Predicated region
      $region17: #{labind_forward.21} parent=11 // pred_check
        %p230 = pneg %p161
      $region18: #{labind_forward.21} parent=11 // pred_check_branch
        %232 = sbr.rel (%p230) target = $region20
      $region19: #{labind_forward.21} parent=11 // pred_region
        _
      $region20: #{labind_forward.21} parent=11 // pred_fallthru
        _
      // Predicated region
      $region21: #{labind_forward.21} parent=11 // pred_check
        %p233 = pneg %p182
      $region22: #{labind_forward.21} parent=11 // pred_check_branch
        %235 = sbr.rel (%p233) target = $region24
      $region23: #{labind_forward.21} parent=11 // pred_region
        _
      $region24: #{labind_forward.21} parent=11 // pred_fallthru
        _
    $region12: #{labind_forward.21} parent=5 // pred_fallthru
      _
    %p236 = scmp.lt.s32.totalorder %s12, 10
    // Predicated region
    $region25: #{labind_forward.21} parent=5 // pred_check
      %p237 = pneg %p236
    $region26: #{labind_forward.21} parent=5 // pred_check_branch
      %239 = sbr.rel (%p237) target = $region28
    $region27: #{labind_forward.21} parent=5 // pred_region
      // Predicated region
      $region29: #{labind_forward.21} parent=27 // pred_check
        %p240 = pneg %p55
      $region30: #{labind_forward.21} parent=27 // pred_check_branch
        %242 = sbr.rel (%p240) target = $region32
      $region31: #{labind_forward.21} parent=27 // pred_region
        %p243 = scmp.lt.s32.totalorder %s19, 1
        %s244 = scalar_select %p243, %s19, 1
        %p245 = scmp.lt.s32.totalorder %s21, 4
        %s246 = scalar_select %p245, %s21, 4
        %p247 = scmp.lt.s32.totalorder %s20, 0
        %s248 = scalar_select %p247, %s20, 0
        %s249 = sadd.s32 %s248, %s246
        %s250 = smul.addr %s244, 5
        %s251 = sadd.s32 %s249, %s250
        %s252 = smul.addr %s251, 4
        %s253 = scalar_lea.vmem %s0, %s252
      $region32: #{labind_forward.21} parent=27 // pred_fallthru
        _
      // Predicated region
      $region33: #{labind_forward.21} parent=27 // pred_check
        %p254 = pneg %p85
      $region34: #{labind_forward.21} parent=27 // pred_check_branch
        %256 = sbr.rel (%p254) target = $region36
      $region35: #{labind_forward.21} parent=27 // pred_region
        %p257 = scmp.lt.s32.totalorder %s19, 1
        %s258 = scalar_select %p257, %s19, 1
        %p259 = scmp.lt.s32.totalorder %s21, 4
        %s260 = scalar_select %p259, %s21, 4
        %p261 = scmp.lt.s32.totalorder %s20, 0
        %s262 = scalar_select %p261, %s20, 0
        %s263 = sadd.s32 %s262, %s260
        %s264 = smul.addr %s258, 5
        %s265 = sadd.s32 %s263, %s264
        %s266 = smul.addr %s265, 4
        %s267 = scalar_lea.vmem %s1, %s266
      $region36: #{labind_forward.21} parent=27 // pred_fallthru
        _
      // Predicated region
      $region37: #{labind_forward.21} parent=27 // pred_check
        %p268 = pneg %p113
      $region38: #{labind_forward.21} parent=27 // pred_check_branch
        %270 = sbr.rel (%p268) target = $region40
      $region39: #{labind_forward.21} parent=27 // pred_region
        %p271 = scmp.lt.s32.totalorder %s19, 1
        %s272 = scalar_select %p271, %s19, 1
        %p273 = scmp.lt.s32.totalorder %s20, 0
        %s274 = scalar_select %p273, %s20, 0
        %s275 = sadd.s32 %s274, %s272
        %s276 = smul.addr %s275, 4
        %s277 = scalar_lea.vmem %s2, %s276
      $region40: #{labind_forward.21} parent=27 // pred_fallthru
        _
    $region28: #{labind_forward.21} parent=5 // pred_fallthru
      _
    %p278 = scmp.le.s32.totalorder 1, %s12
    %p279 = scmp.lt.s32.totalorder %s12, 11
    %p280 = pnand %p278, %p279
    %p281 = pneg %p280
    // Predicated region
    $region41: #{labind_forward.21} parent=5 // pred_check
      _
    $region42: #{labind_forward.21} parent=5 // pred_check_branch
      %283 = sbr.rel (%p280) target = $region44
    $region43: #{labind_forward.21} parent=5 // pred_region
      %s284 = ssub.s32 %s12, 1
      %p285 = scmp.lt.s32.totalorder %s22, 1
      %s286 = scalar_select %p285, %s22, 1
      %p287 = scmp.lt.s32.totalorder %s24, 4
      %s288 = scalar_select %p287, %s24, 4
      %p289 = scmp.lt.s32.totalorder %s23, 0
      %s290 = scalar_select %p289, %s23, 0
      %s291 = sadd.s32 %s290, %s288
      %s292 = smul.addr %s286, 5
      %s293 = sadd.s32 %s291, %s292
      %s294 = smul.addr %s293, 4
      %s295 = scalar_lea.vmem %s0, %s294
      %p296 = pneg %p61
      %p297 = pneg %p58
      %p298 = scmp.lt.s32.totalorder %s22, 1
      %s299 = scalar_select %p298, %s22, 1
      %p300 = scmp.lt.s32.totalorder %s24, 4
      %s301 = scalar_select %p300, %s24, 4
      %p302 = scmp.lt.s32.totalorder %s23, 0
      %s303 = scalar_select %p302, %s23, 0
      %s304 = sadd.s32 %s303, %s301
      %s305 = smul.addr %s299, 5
      %s306 = sadd.s32 %s304, %s305
      %s307 = smul.addr %s306, 4
      %s308 = scalar_lea.vmem %s1, %s307
      %p309 = pneg %p91
      %p310 = pneg %p88
      %p311 = scmp.lt.s32.totalorder %s22, 1
      %s312 = scalar_select %p311, %s22, 1
      %p313 = scmp.lt.s32.totalorder %s23, 0
      %s314 = scalar_select %p313, %s23, 0
      %s315 = sadd.s32 %s314, %s312
      %s316 = smul.addr %s315, 4
      %s317 = scalar_lea.vmem %s2, %s316
      %p318 = pneg %p119
      %p319 = pneg %p116
      %p320 = pneg %p140
      %p321 = pneg %p137
      %p322 = pneg %p161
      %p323 = pneg %p158
      %p324 = pneg %p182
      %p325 = pneg %p179
      %p326 = pneg %p212
      %p327 = pneg %p209
      %p328 = scmp.lt.s32.totalorder %s22, 1
      %s329 = scalar_select %p328, %s22, 1
      %p330 = scmp.lt.s32.totalorder %s24, 4
      %s331 = scalar_select %p330, %s24, 4
      %p332 = scmp.lt.s32.totalorder %s23, 0
      %s333 = scalar_select %p332, %s23, 0
      %s334 = sadd.s32 %s333, %s331
      %s335 = smul.addr %s329, 5
      %s336 = sadd.s32 %s334, %s335
      %s337 = smul.addr %s336, 4
      %s338 = scalar_lea.vmem %s6, %s337
      %p339 = scmp.lt.s32.totalorder %s22, 1
      %s340 = scalar_select %p339, %s22, 1
      %p341 = scmp.lt.s32.totalorder %s24, 4
      %s342 = scalar_select %p341, %s24, 4
      %p343 = scmp.lt.s32.totalorder %s23, 0
      %s344 = scalar_select %p343, %s23, 0
      %s345 = sadd.s32 %s344, %s342
      %s346 = smul.addr %s340, 5
      %s347 = sadd.s32 %s345, %s346
      %s348 = smul.addr %s347, 4
      %s349 = scalar_lea.vmem %s0, %s348
      %p350 = scmp.lt.s32.totalorder %s22, 1
      %s351 = scalar_select %p350, %s22, 1
      %p352 = scmp.lt.s32.totalorder %s24, 4
      %s353 = scalar_select %p352, %s24, 4
      %p354 = scmp.lt.s32.totalorder %s23, 0
      %s355 = scalar_select %p354, %s23, 0
      %s356 = sadd.s32 %s355, %s353
      %s357 = smul.addr %s351, 5
      %s358 = sadd.s32 %s356, %s357
      %s359 = smul.addr %s358, 4
      %s360 = scalar_lea.vmem %s1, %s359
      %p361 = scmp.lt.s32.totalorder %s22, 1
      %s362 = scalar_select %p361, %s22, 1
      %p363 = scmp.lt.s32.totalorder %s23, 0
      %s364 = scalar_select %p363, %s23, 0
      %s365 = sadd.s32 %s364, %s362
      %s366 = smul.addr %s365, 4
      %s367 = scalar_lea.vmem %s2, %s366
      %p368 = scmp.lt.s32.totalorder %s22, 1
      %s369 = scalar_select %p368, %s22, 1
      %p370 = scmp.lt.s32.totalorder %s24, 4
      %s371 = scalar_select %p370, %s24, 4
      %p372 = scmp.lt.s32.totalorder %s23, 0
      %s373 = scalar_select %p372, %s23, 0
      %s374 = sadd.s32 %s373, %s371
      %s375 = smul.addr %s369, 5
      %s376 = sadd.s32 %s374, %s375
      %s377 = smul.addr %s376, 4
      %s378 = scalar_lea.vmem %s6, %s377
      %v380 = vld [vmem:[%s349] sm:$0xf]
      %v381 = vld [vmem:[%s360] sm:$0xf]
      %v383 = vunpack.c.l.b16 %v381
      %v384 = vpack.c.b16 %v383, %v383
      %385 = vrot.lane.b32.xlu0 %v384, 32
      %v386 = vpop.permute.xlu0 %385
      %vm387 = vcmask 261120
      %v390 = vsel %vm387, %v380, %v386
      %v391 = vunpack.c.l.bf16 %v380
      %v392 = vld [vmem:[%s367] sm:$0xf]
      %v393 = vunpack.c.l.bf16 %v392
      %v394 = vadd.f32 %v391, %v393
      %v395 = vld [vmem:[%s3] sm:$0xf]
      %v396 = vld [vmem:[%s3 + $0x4] sm:$0xf]
      %v397 = vld [vmem:[%s3 + $0x8] sm:$0xf]
      %v398 = vld [vmem:[%s3 + $0xc] sm:$0xf]
      %v399 = vld [vmem:[%s3 + $0x10] sm:$0xf]
      %v400 = vld [vmem:[%s3 + $0x14] sm:$0xf]
      %v401 = vld [vmem:[%s3 + $0x18] sm:$0xf]
      %v402 = vld [vmem:[%s3 + $0x1c] sm:$0xf]
      %v411 = vunpack.c.l.b16 %v395
      %v412 = vunpack.c.l.b16 %v396
      %v413 = vunpack.c.l.b16 %v397
      %v414 = vunpack.c.l.b16 %v398
      %v415 = vunpack.c.l.b16 %v399
      %v416 = vunpack.c.l.b16 %v400
      %v417 = vunpack.c.l.b16 %v401
      %v418 = vunpack.c.l.b16 %v402
      %v419 = vpack.c.b16 %v412, %v411
      %v420 = vpack.c.b16 %v414, %v413
      %v421 = vpack.c.b16 %v416, %v415
      %v422 = vpack.c.b16 %v418, %v417
      %vm427 = vcmask 523264
      %v428 = vsel %vm427, %v390, 0
      %430 = vmatprep.subr.bf16.mxu0 0
      %431 = vmatpush1.bf16.msra.mxu0 %v419
      %432 = vmatprep.subr.bf16.mxu0 0
      %433 = vmatpush1.bf16.msra.mxu0 %v420
      %434 = vmatprep.subr.bf16.mxu0 0
      %435 = vmatpush1.bf16.msra.mxu0 %v421
      %436 = vmatprep.subr.bf16.mxu0 0
      %437 = vmatpush1.bf16.msra.mxu0 %v422
      %438 = vmatprep.subr.bf16.mxu0 0
      %439 = vmatpush1.bf16.msra.mxu0 0
      %440 = vmatprep.subr.bf16.mxu0 0
      %441 = vmatpush1.bf16.msra.mxu0 0
      %442 = vmatprep.subr.bf16.mxu0 0
      %443 = vmatpush1.bf16.msra.mxu0 0
      %444 = vmatprep.subr.bf16.mxu0 0
      %445 = vmatpush1.bf16.msra.mxu0 0
      %446 = vmatprep.subr.bf16.mxu0 0
      %447 = vmatpush1.bf16.msra.mxu0 0
      %448 = vmatprep.subr.bf16.mxu0 0
      %449 = vmatpush1.bf16.msra.mxu0 0
      %450 = vmatprep.subr.bf16.mxu0 0
      %451 = vmatpush1.bf16.msra.mxu0 0
      %452 = vmatprep.subr.bf16.mxu0 0
      %453 = vmatpush1.bf16.msra.mxu0 0
      %454 = vmatprep.subr.bf16.mxu0 0
      %455 = vmatpush1.bf16.msra.mxu0 0
      %456 = vmatprep.subr.bf16.mxu0 0
      %457 = vmatpush1.bf16.msra.mxu0 0
      %458 = vmatprep.subr.bf16.mxu0 0
      %459 = vmatpush1.bf16.msra.mxu0 0
      %460 = vmatprep.subr.bf16.mxu0 0
      %461 = vmatpush1.bf16.msra.mxu0 0
      %462 = vmatprep.mubr.bf16.mxu0 0
      %463 = vmatmul.mubr.bf16.gmra.mrb[0].mxu0 %v428
      %v464 = vpop.f32.mrb[0].mxu0
      %v465 = vadd.f32 0.0, %v464
      %v466 = vpop.f32.mrb[0].mxu0
      %v467 = vpop.f32.mrb[0].mxu0
      %v468 = vpop.f32.mrb[0].mxu0
      %469 = vdwg.mxu0
      %v470 = vadd.f32 %v394, %v465
      %v471 = vld [vmem:[%s4] sm:$0x1]
      %v472 = vld [vmem:[%s5] sm:$0x1]
      %v473 = vsel %vm387, %v470, 0.0
      %474 = vadd.xlane.f32.xlu0 %v473
      %v475 = vpop.xlane.xlu0 %474
      %v476 = vrcp.pop 32.0
      %v477 = vmul.f32 %v475, %v476
      %v478 = vsub.f32 %v470, %v477
      %v479 = vmul.f32 %v478, %v478
      %v480 = vsel %vm387, %v479, 0.0
      %481 = vadd.xlane.f32.xlu0 %v480
      %v482 = vpop.xlane.xlu0 %481
      %v483 = vmul.f32 %v482, %v476
      %v484 = vadd.f32 %v483, 1e-05
      %v485 = vrsqrt.pop %v484
      %v486 = vmul.f32 %v478, %v485
      %v488 = vlaneseq
      %v489 = vshrl.u32 %v488, 7
      %v490 = vsub.s32 0, %v489
      %v491 = vrot.slane %v471, %v490
      %v493 = vmul.f32 %v486, %v491
      %v495 = vlaneseq
      %v496 = vshrl.u32 %v495, 7
      %v497 = vsub.s32 0, %v496
      %v498 = vrot.slane %v472, %v497
      %v500 = vadd.f32 %v493, %v498
      %v501 = vpack.c.bf16 %v500, %v500
      %vm502 = vcmask 257024
      %503 = vst.msk [vmem:[%s378] sm:$0xf] %vm502, %v501
      %p504 = scmp.lt.s32.totalorder %s22, 1
      %s505 = scalar_select %p504, %s22, 1
      %p506 = scmp.lt.s32.totalorder %s24, 4
      %s507 = scalar_select %p506, %s24, 4
      %p508 = scmp.lt.s32.totalorder %s23, 0
      %s509 = scalar_select %p508, %s23, 0
      %s510 = sadd.s32 %s509, %s507
      %s511 = smul.addr %s505, 5
      %s512 = sadd.s32 %s510, %s511
      %s513 = smul.addr %s512, 4
      %s514 = scalar_lea.vmem %s6, %s513
      // Predicated region
      $region45: #{labind_forward.21} parent=43 // pred_check
        %p515 = pneg %p209
      $region46: #{labind_forward.21} parent=43 // pred_check_branch
        %517 = sbr.rel (%p515) target = $region48
      $region47: #{labind_forward.21} parent=43 // pred_region
        _
      $region48: #{labind_forward.21} parent=43 // pred_fallthru
        _
    $region44: #{labind_forward.21} parent=5 // pred_fallthru
      _
    %p518 = scmp.le.s32.totalorder 2, %s12
    // Predicated region
    $region49: #{labind_forward.21} parent=5 // pred_check
      %p519 = pneg %p518
    $region50: #{labind_forward.21} parent=5 // pred_check_branch
      %521 = sbr.rel (%p519) target = $region52
    $region51: #{labind_forward.21} parent=5 // pred_region
      %s522 = ssub.s32 %s12, 2
      // Predicated region
      $region53: #{labind_forward.21} parent=51 // pred_check
        %p523 = pneg %p215
      $region54: #{labind_forward.21} parent=51 // pred_check_branch
        %525 = sbr.rel (%p523) target = $region56
      $region55: #{labind_forward.21} parent=51 // pred_region
        %p526 = scmp.lt.s32.totalorder %s25, 1
        %s527 = scalar_select %p526, %s25, 1
        %p528 = scmp.lt.s32.totalorder %s27, 4
        %s529 = scalar_select %p528, %s27, 4
        %p530 = scmp.lt.s32.totalorder %s26, 0
        %s531 = scalar_select %p530, %s26, 0
        %s532 = sadd.s32 %s531, %s529
        %s533 = smul.addr %s527, 5
        %s534 = sadd.s32 %s532, %s533
        %s535 = smul.addr %s534, 4
        %s536 = scalar_lea.vmem %s6, %s535
      $region56: #{labind_forward.21} parent=51 // pred_fallthru
        _
    $region52: #{labind_forward.21} parent=5 // pred_fallthru
      _
  $region6: #{labind_forward.21} parent=0 // loop_footer
    %s16 = sadd.s32 1, %s12
  $region7: #{labind_forward.21} parent=0 // loop_footer_branch
    %11 = sbr.rel target = $region3
  $region8: #{labind_forward.21} parent=0 // loop_exit
    _

// kernel: labind_forward.25
$region0: #{labind_forward.25}
  #allocation0 [shape = 'u32[]', space=smem, size = 0x4, offset = 0x4, fixed_abs, tag = 'smem constant byte address 0x4 - core index']
  #allocation1 [shape = 'u32[144,128]{1,0:T(1,128)}', space=vmem, size = 0x12000, scoped, tag = 'internal scratch']
  #allocation2 [shape = 'f32[1,1]{1,0:T(1,128)S(1)}', space=vmem, size = 0x200, scoped, tag = 'scoped memory for labind_forward.25']
  %s0 = inlined_call_operand.vmem [shape: bf16[16,32], index: 0, kind: input, shape index: {}]
  %s1 = inlined_call_operand.vmem [shape: bf16[32,16], index: 1, kind: input, shape index: {}]
  %s2 = inlined_call_operand.vmem [shape: f32[1,16], index: 2, kind: input, shape index: {}]
  %s3 = inlined_call_operand.vmem [shape: f32[1,16], index: 3, kind: input, shape index: {}]
  %s4 = inlined_call_operand.<no memory space> [shape: f32[1,1], index: 4, kind: input, shape index: {}]
  %s5 = inlined_call_operand.vmem [shape: f32[16,1], index: 5, kind: output, shape index: {}]
  %s6 = sld [smem:[#allocation0]]
  $region30: #{labind_forward.25} parent=0
    _
  %s8 = ssub.s32 1, %s6
  %s9 = scalar_select 0, %s8, %s6
  %v10 = vstv %s4
  %11 = vst [vmem:[#allocation2] sm:$0x1] %v10
  // Predicated region
  $region2: #{labind_forward.25} parent=0 // pred_check
    _
  $region3: #{labind_forward.25} parent=0 // pred_check_branch
    %13 = sbr.rel (0) target = $region5
  $region4: #{labind_forward.25} parent=0 // pred_region
    _
  $region5: #{labind_forward.25} parent=0 // pred_fallthru
    _
  // Predicated region
  $region6: #{labind_forward.25} parent=0 // pred_check
    _
  $region7: #{labind_forward.25} parent=0 // pred_check_branch
    %15 = sbr.rel (0) target = $region9
  $region8: #{labind_forward.25} parent=0 // pred_region
    _
  $region9: #{labind_forward.25} parent=0 // pred_fallthru
    _
  // Predicated region
  $region10: #{labind_forward.25} parent=0 // pred_check
    _
  $region11: #{labind_forward.25} parent=0 // pred_check_branch
    %17 = sbr.rel (0) target = $region13
  $region12: #{labind_forward.25} parent=0 // pred_region
    _
  $region13: #{labind_forward.25} parent=0 // pred_fallthru
    _
  // Predicated region
  $region14: #{labind_forward.25} parent=0 // pred_check
    _
  $region15: #{labind_forward.25} parent=0 // pred_check_branch
    %19 = sbr.rel (0) target = $region17
  $region16: #{labind_forward.25} parent=0 // pred_region
    _
  $region17: #{labind_forward.25} parent=0 // pred_fallthru
    _
  // Predicated region
  $region18: #{labind_forward.25} parent=0 // pred_check
    _
  $region19: #{labind_forward.25} parent=0 // pred_check_branch
    %21 = sbr.rel (0) target = $region21
  $region20: #{labind_forward.25} parent=0 // pred_region
    _
  $region21: #{labind_forward.25} parent=0 // pred_fallthru
    _
  %v23 = vld [vmem:[%s0] sm:$0xf]
  %v24 = vld [vmem:[%s0 + $0x4] sm:$0xf]
  %v25 = vld [vmem:[%s1] sm:$0xf]
  %v26 = vld [vmem:[%s1 + $0x4] sm:$0xf]
  %v27 = vld [vmem:[%s1 + $0x8] sm:$0xf]
  %v28 = vld [vmem:[%s1 + $0xc] sm:$0xf]
  %v29 = vld [vmem:[%s2] sm:$0x1]
  %v31 = vlaneseq
  %v32 = vshrl.u32 %v31, 7
  %v33 = vsub.s32 0, %v32
  %v34 = vrot.slane %v29, %v33
  %v38 = vunpack.c.l.b16 %v23
  %v39 = vunpack.c.l.b16 %v24
  %v40 = vpack.c.b16 %v39, %v38
  %v45 = vunpack.c.l.b16 %v25
  %v46 = vunpack.c.l.b16 %v26
  %v47 = vunpack.c.l.b16 %v27
  %v48 = vunpack.c.l.b16 %v28
  %v49 = vpack.c.b16 %v46, %v45
  %v50 = vpack.c.b16 %v48, %v47
  %vm53 = vcmask 261120
  %v55 = vsel %vm53, %v40, 0
  %57 = vmatprep.subr.bf16.mxu0 0
  %58 = vmatpush1.bf16.msra.mxu0 %v49
  %59 = vmatprep.subr.bf16.mxu0 0
  %60 = vmatpush1.bf16.msra.mxu0 %v50
  %61 = vmatprep.subr.bf16.mxu0 0
  %62 = vmatpush1.bf16.msra.mxu0 0
  %63 = vmatprep.subr.bf16.mxu0 0
  %64 = vmatpush1.bf16.msra.mxu0 0
  %65 = vmatprep.subr.bf16.mxu0 0
  %66 = vmatpush1.bf16.msra.mxu0 0
  %67 = vmatprep.subr.bf16.mxu0 0
  %68 = vmatpush1.bf16.msra.mxu0 0
  %69 = vmatprep.subr.bf16.mxu0 0
  %70 = vmatpush1.bf16.msra.mxu0 0
  %71 = vmatprep.subr.bf16.mxu0 0
  %72 = vmatpush1.bf16.msra.mxu0 0
  %73 = vmatprep.subr.bf16.mxu0 0
  %74 = vmatpush1.bf16.msra.mxu0 0
  %75 = vmatprep.subr.bf16.mxu0 0
  %76 = vmatpush1.bf16.msra.mxu0 0
  %77 = vmatprep.subr.bf16.mxu0 0
  %78 = vmatpush1.bf16.msra.mxu0 0
  %79 = vmatprep.subr.bf16.mxu0 0
  %80 = vmatpush1.bf16.msra.mxu0 0
  %81 = vmatprep.subr.bf16.mxu0 0
  %82 = vmatpush1.bf16.msra.mxu0 0
  %83 = vmatprep.subr.bf16.mxu0 0
  %84 = vmatpush1.bf16.msra.mxu0 0
  %85 = vmatprep.subr.bf16.mxu0 0
  %86 = vmatpush1.bf16.msra.mxu0 0
  %87 = vmatprep.subr.bf16.mxu0 0
  %88 = vmatpush1.bf16.msra.mxu0 0
  %89 = vmatprep.mubr.bf16.mxu0 0
  %90 = vmatmul.mubr.bf16.gmra.mrb[0].mxu0 %v55
  %v91 = vpop.f32.mrb[0].mxu0
  %v92 = vadd.f32 %v34, %v91
  %v93 = vpop.f32.mrb[0].mxu0
  %v94 = vpop.f32.mrb[0].mxu0
  %v95 = vadd.f32 %v34, %v94
  %v96 = vpop.f32.mrb[0].mxu0
  %97 = vdwg.mxu0
  %v98 = vxor.u32 %v92, 2147483648
  %v99 = vxor.u32 %v95, 2147483648
  %v100 = vmul.f32 %v98, 1.442695
  %v101 = vpow.pop %v100
  %v102 = vmul.f32 %v99, 1.442695
  %v103 = vpow.pop %v102
  %v104 = vadd.f32 %v101, 1.0
  %v105 = vadd.f32 %v103, 1.0
  %v106 = vrcp.pop %v104
  %v107 = vmul.f32 1.0, %v106
  %v108 = vrcp.pop %v105
  %v109 = vmul.f32 1.0, %v108
  %v110 = vmul.f32 %v92, %v107
  %v111 = vmul.f32 %v95, %v109
  %v112 = vld [vmem:[%s3] sm:$0x1]
  %v114 = vlaneseq
  %v115 = vshrl.u32 %v114, 7
  %v116 = vsub.s32 0, %v115
  %v117 = vrot.slane %v112, %v116
  %v119 = vmul.f32 %v110, %v117
  %v120 = vmul.f32 %v111, %v117
  %vm121 = vcmask 130048
  %v122 = vsel %vm121, %v119, 0.0
  %123 = vadd.xlane.f32.xlu0 %v122
  %v124 = vpop.xlane.xlu0 %123
  %v125 = vsel %vm121, %v120, 0.0
  %126 = vadd.xlane.f32.xlu0 %v125
  %v127 = vpop.xlane.xlu0 %126
  %v128 = vld [vmem:[#allocation2] sm:$0x1]
  %v130 = vlaneseq
  %v131 = vshrl.u32 %v130, 7
  %v132 = vsub.s32 0, %v131
  %v133 = vrot.slane %v128, %v132
  %v135 = vadd.f32 %v124, %v133
  %v136 = vadd.f32 %v127, %v133
  %vm137 = vcmask 7168
  %138 = vst.msk [vmem:[%s5] sm:$0xff] %vm137, %v135
  %139 = vst.msk [vmem:[%s5 + $0x8] sm:$0xff] %vm137, %v136
  // Predicated region
  $region22: #{labind_forward.25} parent=0 // pred_check
    _
  $region23: #{labind_forward.25} parent=0 // pred_check_branch
    %141 = sbr.rel (0) target = $region25
  $region24: #{labind_forward.25} parent=0 // pred_region
    _
  $region25: #{labind_forward.25} parent=0 // pred_fallthru
    _
  // Predicated region
  $region26: #{labind_forward.25} parent=0 // pred_check
    _
  $region27: #{labind_forward.25} parent=0 // pred_check_branch
    %143 = sbr.rel (0) target = $region29
  $region28: #{labind_forward.25} parent=0 // pred_region
    _
  $region29: #{labind_forward.25} parent=0 // pred_fallthru
    _

// kernel: labind_forward.24
$region0: #{labind_forward.24}
  #allocation0 [shape = 'u32[]', space=smem, size = 0x4, offset = 0x4, fixed_abs, tag = 'smem constant byte address 0x4 - core index']
  #allocation1 [shape = 'u32[144,128]{1,0:T(1,128)}', space=vmem, size = 0x12000, scoped, tag = 'internal scratch']
  %s0 = inlined_call_operand.vmem [shape: bf16[16,32], index: 0, kind: input, shape index: {}]
  %s1 = inlined_call_operand.vmem [shape: f32[16,1], index: 1, kind: input, shape index: {}]
  %s2 = inlined_call_operand.vmem [shape: bf16[32,64], index: 2, kind: input, shape index: {}]
  %s3 = inlined_call_operand.vmem [shape: f32[1,64], index: 3, kind: input, shape index: {}]
  %s4 = inlined_call_operand.vmem [shape: bf16[64,32], index: 4, kind: input, shape index: {}]
  %s5 = inlined_call_operand.vmem [shape: f32[1,32], index: 5, kind: input, shape index: {}]
  %s6 = inlined_call_operand.vmem [shape: f32[1,32], index: 6, kind: input, shape index: {}]
  %s7 = inlined_call_operand.vmem [shape: f32[1,32], index: 7, kind: input, shape index: {}]
  %s8 = inlined_call_operand.vmem [shape: bf16[32,32], index: 8, kind: input, shape index: {}]
  %s9 = inlined_call_operand.vmem [shape: f32[1,32], index: 9, kind: input, shape index: {}]
  %s10 = inlined_call_operand.vmem [shape: bf16[16,32], index: 10, kind: output, shape index: {0}]
  %s11 = inlined_call_operand.hbm [shape: bf16[16,32], index: 11, kind: output, shape index: {1}]
  %12 = xla_tuple %s10, %s11
  %s13 = sld [smem:[#allocation0]]
  $region58: #{labind_forward.24} parent=0
    _
  %s15 = ssub.s32 1, %s13
  %s16 = scalar_select 0, %s15, %s13
  $region1: #{labind_forward.24} parent=0
    #allocation2 [shape = 'u8[4096]{0}', space=vmem, size = 0x1000, scoped, tag = 'output window, operand 1, single buffered']
    #allocation3 [shape = 's32[1]{0}', space=sflag, size = 0x4, scoped, tag = 'scoped memory for labind_forward.24']
    %17 = vsyncpa [#allocation3], 0
    // Predicated region
    $region2: #{labind_forward.24} parent=1 // pred_check
      _
    $region3: #{labind_forward.24} parent=1 // pred_check_branch
      %19 = sbr.rel (0) target = $region5
    $region4: #{labind_forward.24} parent=1 // pred_region
      _
    $region5: #{labind_forward.24} parent=1 // pred_fallthru
      _
    // Predicated region
    $region6: #{labind_forward.24} parent=1 // pred_check
      _
    $region7: #{labind_forward.24} parent=1 // pred_check_branch
      %21 = sbr.rel (0) target = $region9
    $region8: #{labind_forward.24} parent=1 // pred_region
      _
    $region9: #{labind_forward.24} parent=1 // pred_fallthru
      _
    // Predicated region
    $region10: #{labind_forward.24} parent=1 // pred_check
      _
    $region11: #{labind_forward.24} parent=1 // pred_check_branch
      %23 = sbr.rel (0) target = $region13
    $region12: #{labind_forward.24} parent=1 // pred_region
      _
    $region13: #{labind_forward.24} parent=1 // pred_fallthru
      _
    // Predicated region
    $region14: #{labind_forward.24} parent=1 // pred_check
      _
    $region15: #{labind_forward.24} parent=1 // pred_check_branch
      %25 = sbr.rel (0) target = $region17
    $region16: #{labind_forward.24} parent=1 // pred_region
      _
    $region17: #{labind_forward.24} parent=1 // pred_fallthru
      _
    // Predicated region
    $region18: #{labind_forward.24} parent=1 // pred_check
      _
    $region19: #{labind_forward.24} parent=1 // pred_check_branch
      %27 = sbr.rel (0) target = $region21
    $region20: #{labind_forward.24} parent=1 // pred_region
      _
    $region21: #{labind_forward.24} parent=1 // pred_fallthru
      _
    // Predicated region
    $region22: #{labind_forward.24} parent=1 // pred_check
      _
    $region23: #{labind_forward.24} parent=1 // pred_check_branch
      %29 = sbr.rel (0) target = $region25
    $region24: #{labind_forward.24} parent=1 // pred_region
      _
    $region25: #{labind_forward.24} parent=1 // pred_fallthru
      _
    // Predicated region
    $region26: #{labind_forward.24} parent=1 // pred_check
      _
    $region27: #{labind_forward.24} parent=1 // pred_check_branch
      %31 = sbr.rel (0) target = $region29
    $region28: #{labind_forward.24} parent=1 // pred_region
      _
    $region29: #{labind_forward.24} parent=1 // pred_fallthru
      _
    // Predicated region
    $region30: #{labind_forward.24} parent=1 // pred_check
      _
    $region31: #{labind_forward.24} parent=1 // pred_check_branch
      %33 = sbr.rel (0) target = $region33
    $region32: #{labind_forward.24} parent=1 // pred_region
      _
    $region33: #{labind_forward.24} parent=1 // pred_fallthru
      _
    // Predicated region
    $region34: #{labind_forward.24} parent=1 // pred_check
      _
    $region35: #{labind_forward.24} parent=1 // pred_check_branch
      %35 = sbr.rel (0) target = $region37
    $region36: #{labind_forward.24} parent=1 // pred_region
      _
    $region37: #{labind_forward.24} parent=1 // pred_fallthru
      _
    // Predicated region
    $region38: #{labind_forward.24} parent=1 // pred_check
      _
    $region39: #{labind_forward.24} parent=1 // pred_check_branch
      %37 = sbr.rel (0) target = $region41
    $region40: #{labind_forward.24} parent=1 // pred_region
      _
    $region41: #{labind_forward.24} parent=1 // pred_fallthru
      _
    %v39 = vld [vmem:[%s0] sm:$0xf]
    %v40 = vld [vmem:[%s0 + $0x4] sm:$0xf]
    %v41 = vunpack.c.l.bf16 %v39
    %v42 = vunpack.c.l.bf16 %v40
    %v43 = vld [vmem:[%s2] sm:$0xf]
    %v44 = vld [vmem:[%s2 + $0x4] sm:$0xf]
    %v45 = vld [vmem:[%s2 + $0x8] sm:$0xf]
    %v46 = vld [vmem:[%s2 + $0xc] sm:$0xf]
    %v47 = vld [vmem:[%s3] sm:$0x1]
    %v49 = vlaneseq
    %v50 = vshrl.u32 %v49, 7
    %v51 = vsub.s32 0, %v50
    %v52 = vrot.slane %v47, %v51
    %v56 = vunpack.c.l.b16 %v39
    %v57 = vunpack.c.l.b16 %v40
    %v58 = vpack.c.b16 %v57, %v56
    %v63 = vunpack.c.l.b16 %v43
    %v64 = vunpack.c.l.b16 %v44
    %v65 = vunpack.c.l.b16 %v45
    %v66 = vunpack.c.l.b16 %v46
    %v67 = vpack.c.b16 %v64, %v63
    %v68 = vpack.c.b16 %v66, %v65
    %vm71 = vcmask 261120
    %v73 = vsel %vm71, %v58, 0
    %75 = vmatprep.subr.bf16.mxu0 0
    %76 = vmatpush1.bf16.msra.mxu0 %v67
    %77 = vmatprep.subr.bf16.mxu0 0
    %78 = vmatpush1.bf16.msra.mxu0 %v68
    %79 = vmatprep.subr.bf16.mxu0 0
    %80 = vmatpush1.bf16.msra.mxu0 0
    %81 = vmatprep.subr.bf16.mxu0 0
    %82 = vmatpush1.bf16.msra.mxu0 0
    %83 = vmatprep.subr.bf16.mxu0 0
    %84 = vmatpush1.bf16.msra.mxu0 0
    %85 = vmatprep.subr.bf16.mxu0 0
    %86 = vmatpush1.bf16.msra.mxu0 0
    %87 = vmatprep.subr.bf16.mxu0 0
    %88 = vmatpush1.bf16.msra.mxu0 0
    %89 = vmatprep.subr.bf16.mxu0 0
    %90 = vmatpush1.bf16.msra.mxu0 0
    %91 = vmatprep.subr.bf16.mxu0 0
    %92 = vmatpush1.bf16.msra.mxu0 0
    %93 = vmatprep.subr.bf16.mxu0 0
    %94 = vmatpush1.bf16.msra.mxu0 0
    %95 = vmatprep.subr.bf16.mxu0 0
    %96 = vmatpush1.bf16.msra.mxu0 0
    %97 = vmatprep.subr.bf16.mxu0 0
    %98 = vmatpush1.bf16.msra.mxu0 0
    %99 = vmatprep.subr.bf16.mxu0 0
    %100 = vmatpush1.bf16.msra.mxu0 0
    %101 = vmatprep.subr.bf16.mxu0 0
    %102 = vmatpush1.bf16.msra.mxu0 0
    %103 = vmatprep.subr.bf16.mxu0 0
    %104 = vmatpush1.bf16.msra.mxu0 0
    %105 = vmatprep.subr.bf16.mxu0 0
    %106 = vmatpush1.bf16.msra.mxu0 0
    %107 = vmatprep.mubr.bf16.mxu0 0
    %108 = vmatmul.mubr.bf16.gmra.mrb[0].mxu0 %v73
    %v109 = vpop.f32.mrb[0].mxu0
    %v110 = vadd.f32 %v52, %v109
    %v111 = vpop.f32.mrb[0].mxu0
    %v112 = vpop.f32.mrb[0].mxu0
    %v113 = vadd.f32 %v52, %v112
    %v114 = vpop.f32.mrb[0].mxu0
    %115 = vdwg.mxu0
    %v116 = vxor.u32 %v110, 2147483648
    %v117 = vxor.u32 %v113, 2147483648
    %v118 = vmul.f32 %v116, 1.442695
    %v119 = vpow.pop %v118
    %v120 = vmul.f32 %v117, 1.442695
    %v121 = vpow.pop %v120
    %v122 = vadd.f32 %v119, 1.0
    %v123 = vadd.f32 %v121, 1.0
    %v124 = vrcp.pop %v122
    %v125 = vmul.f32 1.0, %v124
    %v126 = vrcp.pop %v123
    %v127 = vmul.f32 1.0, %v126
    %v128 = vmul.f32 %v110, %v125
    %v129 = vmul.f32 %v113, %v127
    %v130 = vld [vmem:[%s4] sm:$0xf]
    %v131 = vld [vmem:[%s4 + $0x4] sm:$0xf]
    %v132 = vld [vmem:[%s4 + $0x8] sm:$0xf]
    %v133 = vld [vmem:[%s4 + $0xc] sm:$0xf]
    %v134 = vld [vmem:[%s4 + $0x10] sm:$0xf]
    %v135 = vld [vmem:[%s4 + $0x14] sm:$0xf]
    %v136 = vld [vmem:[%s4 + $0x18] sm:$0xf]
    %v137 = vld [vmem:[%s4 + $0x1c] sm:$0xf]
    %v138 = vpack.c.bf16 %v129, %v128
    %v147 = vunpack.c.l.b16 %v130
    %v148 = vunpack.c.l.b16 %v131
    %v149 = vunpack.c.l.b16 %v132
    %v150 = vunpack.c.l.b16 %v133
    %v151 = vunpack.c.l.b16 %v134
    %v152 = vunpack.c.l.b16 %v135
    %v153 = vunpack.c.l.b16 %v136
    %v154 = vunpack.c.l.b16 %v137
    %v155 = vpack.c.b16 %v148, %v147
    %v156 = vpack.c.b16 %v150, %v149
    %v157 = vpack.c.b16 %v152, %v151
    %v158 = vpack.c.b16 %v154, %v153
    %vm163 = vcmask 523264
    %v165 = vsel %vm163, %v138, 0
    %167 = vmatprep.subr.bf16.mxu0 0
    %168 = vmatpush1.bf16.msra.mxu0 %v155
    %169 = vmatprep.subr.bf16.mxu0 0
    %170 = vmatpush1.bf16.msra.mxu0 %v156
    %171 = vmatprep.subr.bf16.mxu0 0
    %172 = vmatpush1.bf16.msra.mxu0 %v157
    %173 = vmatprep.subr.bf16.mxu0 0
    %174 = vmatpush1.bf16.msra.mxu0 %v158
    %175 = vmatprep.subr.bf16.mxu0 0
    %176 = vmatpush1.bf16.msra.mxu0 0
    %177 = vmatprep.subr.bf16.mxu0 0
    %178 = vmatpush1.bf16.msra.mxu0 0
    %179 = vmatprep.subr.bf16.mxu0 0
    %180 = vmatpush1.bf16.msra.mxu0 0
    %181 = vmatprep.subr.bf16.mxu0 0
    %182 = vmatpush1.bf16.msra.mxu0 0
    %183 = vmatprep.subr.bf16.mxu0 0
    %184 = vmatpush1.bf16.msra.mxu0 0
    %185 = vmatprep.subr.bf16.mxu0 0
    %186 = vmatpush1.bf16.msra.mxu0 0
    %187 = vmatprep.subr.bf16.mxu0 0
    %188 = vmatpush1.bf16.msra.mxu0 0
    %189 = vmatprep.subr.bf16.mxu0 0
    %190 = vmatpush1.bf16.msra.mxu0 0
    %191 = vmatprep.subr.bf16.mxu0 0
    %192 = vmatpush1.bf16.msra.mxu0 0
    %193 = vmatprep.subr.bf16.mxu0 0
    %194 = vmatpush1.bf16.msra.mxu0 0
    %195 = vmatprep.subr.bf16.mxu0 0
    %196 = vmatpush1.bf16.msra.mxu0 0
    %197 = vmatprep.subr.bf16.mxu0 0
    %198 = vmatpush1.bf16.msra.mxu0 0
    %199 = vmatprep.mubr.bf16.mxu0 0
    %200 = vmatmul.mubr.bf16.gmra.mrb[0].mxu0 %v165
    %v201 = vpop.f32.mrb[0].mxu0
    %v202 = vadd.f32 0.0, %v201
    %v203 = vpop.f32.mrb[0].mxu0
    %v204 = vpop.f32.mrb[0].mxu0
    %v205 = vadd.f32 0.0, %v204
    %v206 = vpop.f32.mrb[0].mxu0
    %207 = vdwg.mxu0
    %v208 = vadd.f32 %v41, %v202
    %v209 = vadd.f32 %v42, %v205
    %v210 = vld [vmem:[%s5] sm:$0x1]
    %v212 = vlaneseq
    %v213 = vshrl.u32 %v212, 7
    %v214 = vsub.s32 0, %v213
    %v215 = vrot.slane %v210, %v214
    %v217 = vadd.f32 %v208, %v215
    %v218 = vadd.f32 %v209, %v215
    %v219 = vld [vmem:[%s6] sm:$0x1]
    %v220 = vld [vmem:[%s7] sm:$0x1]
    %v221 = vsel %vm71, %v217, 0.0
    %222 = vadd.xlane.f32.xlu0 %v221
    %v223 = vpop.xlane.xlu0 %222
    %v224 = vsel %vm71, %v218, 0.0
    %225 = vadd.xlane.f32.xlu0 %v224
    %v226 = vpop.xlane.xlu0 %225
    %v227 = vrcp.pop 32.0
    %v228 = vmul.f32 %v223, %v227
    %v229 = vmul.f32 %v226, %v227
    %v230 = vsub.f32 %v217, %v228
    %v231 = vsub.f32 %v218, %v229
    %v232 = vmul.f32 %v230, %v230
    %v233 = vmul.f32 %v231, %v231
    %v234 = vsel %vm71, %v232, 0.0
    %235 = vadd.xlane.f32.xlu0 %v234
    %v236 = vpop.xlane.xlu0 %235
    %v237 = vsel %vm71, %v233, 0.0
    %238 = vadd.xlane.f32.xlu0 %v237
    %v239 = vpop.xlane.xlu0 %238
    %v240 = vmul.f32 %v236, %v227
    %v241 = vmul.f32 %v239, %v227
    %v242 = vadd.f32 %v240, 1e-05
    %v243 = vadd.f32 %v241, 1e-05
    %v244 = vrsqrt.pop %v242
    %v245 = vrsqrt.pop %v243
    %v246 = vmul.f32 %v230, %v244
    %v247 = vmul.f32 %v231, %v245
    %v249 = vlaneseq
    %v250 = vshrl.u32 %v249, 7
    %v251 = vsub.s32 0, %v250
    %v252 = vrot.slane %v219, %v251
    %v254 = vmul.f32 %v246, %v252
    %v255 = vmul.f32 %v247, %v252
    %v257 = vlaneseq
    %v258 = vshrl.u32 %v257, 7
    %v259 = vsub.s32 0, %v258
    %v260 = vrot.slane %v220, %v259
    %v262 = vadd.f32 %v254, %v260
    %v263 = vadd.f32 %v255, %v260
    %v264 = vld [vmem:[%s1] sm:$0xff]
    %v265 = vld [vmem:[%s1 + $0x8] sm:$0xff]
    %267 = vset.pattern.permute.xlu0 0
    %268 = vperm.xlu0 %267, %v264
    %v269 = vpop.permute.xlu0 %268
    %272 = vset.pattern.permute.xlu0 0
    %273 = vperm.xlu0 %272, %v265
    %v274 = vpop.permute.xlu0 %273
    %v276 = vmul.f32 %v262, %v269
    %v277 = vmul.f32 %v263, %v274
    %v278 = vpack.c.bf16 %v277, %v276
    %v280 = vunpack.c.l.b16 %v278
    %v281 = vunpack.c.h.b16 %v278
    %v282 = vpack.c.b16 %v280, %v280
    %v283 = vpack.c.b16 %v281, %v281
    %vm286 = vcmask 257024
    %287 = vst.msk [vmem:[%s10] sm:$0xf] %vm286, %v282
    %288 = vst.msk [vmem:[%s10 + $0x4] sm:$0xf] %vm286, %v283
    %v289 = vld [vmem:[%s8] sm:$0xf]
    %v290 = vld [vmem:[%s8 + $0x4] sm:$0xf]
    %v291 = vld [vmem:[%s8 + $0x8] sm:$0xf]
    %v292 = vld [vmem:[%s8 + $0xc] sm:$0xf]
    %v293 = vld [vmem:[%s9] sm:$0x1]
    %v295 = vlaneseq
    %v296 = vshrl.u32 %v295, 7
    %v297 = vsub.s32 0, %v296
    %v298 = vrot.slane %v293, %v297
    %v304 = vunpack.c.l.b16 %v289
    %v305 = vunpack.c.l.b16 %v290
    %v306 = vunpack.c.l.b16 %v291
    %v307 = vunpack.c.l.b16 %v292
    %v308 = vpack.c.b16 %v305, %v304
    %v309 = vpack.c.b16 %v307, %v306
    %v313 = vsel %vm71, %v278, 0
    %315 = vmatprep.subr.bf16.mxu0 0
    %316 = vmatpush1.bf16.msra.mxu0 %v308
    %317 = vmatprep.subr.bf16.mxu0 0
    %318 = vmatpush1.bf16.msra.mxu0 %v309
    %319 = vmatprep.subr.bf16.mxu0 0
    %320 = vmatpush1.bf16.msra.mxu0 0
    %321 = vmatprep.subr.bf16.mxu0 0
    %322 = vmatpush1.bf16.msra.mxu0 0
    %323 = vmatprep.subr.bf16.mxu0 0
    %324 = vmatpush1.bf16.msra.mxu0 0
    %325 = vmatprep.subr.bf16.mxu0 0
    %326 = vmatpush1.bf16.msra.mxu0 0
    %327 = vmatprep.subr.bf16.mxu0 0
    %328 = vmatpush1.bf16.msra.mxu0 0
    %329 = vmatprep.subr.bf16.mxu0 0
    %330 = vmatpush1.bf16.msra.mxu0 0
    %331 = vmatprep.subr.bf16.mxu0 0
    %332 = vmatpush1.bf16.msra.mxu0 0
    %333 = vmatprep.subr.bf16.mxu0 0
    %334 = vmatpush1.bf16.msra.mxu0 0
    %335 = vmatprep.subr.bf16.mxu0 0
    %336 = vmatpush1.bf16.msra.mxu0 0
    %337 = vmatprep.subr.bf16.mxu0 0
    %338 = vmatpush1.bf16.msra.mxu0 0
    %339 = vmatprep.subr.bf16.mxu0 0
    %340 = vmatpush1.bf16.msra.mxu0 0
    %341 = vmatprep.subr.bf16.mxu0 0
    %342 = vmatpush1.bf16.msra.mxu0 0
    %343 = vmatprep.subr.bf16.mxu0 0
    %344 = vmatpush1.bf16.msra.mxu0 0
    %345 = vmatprep.subr.bf16.mxu0 0
    %346 = vmatpush1.bf16.msra.mxu0 0
    %347 = vmatprep.mubr.bf16.mxu0 0
    %348 = vmatmul.mubr.bf16.gmra.mrb[0].mxu0 %v313
    %v349 = vpop.f32.mrb[0].mxu0
    %v350 = vadd.f32 %v298, %v349
    %v351 = vpop.f32.mrb[0].mxu0
    %v352 = vpop.f32.mrb[0].mxu0
    %v353 = vadd.f32 %v298, %v352
    %v354 = vpop.f32.mrb[0].mxu0
    %355 = vdwg.mxu0
    %v356 = vpack.c.bf16 %v353, %v350
    %v358 = vunpack.c.l.b16 %v356
    %v359 = vunpack.c.h.b16 %v356
    %v360 = vpack.c.b16 %v358, %v358
    %v361 = vpack.c.b16 %v359, %v359
    %364 = vst.msk [vmem:[#allocation2] sm:$0xf] %vm286, %v360
    %365 = vst.msk [vmem:[#allocation2 + $0x4] sm:$0xf] %vm286, %v361
    // Predicated region
    $region42: #{labind_forward.24} parent=1 // pred_check
      _
    $region43: #{labind_forward.24} parent=1 // pred_check_branch
      %367 = sbr.rel (0) target = $region45
    $region44: #{labind_forward.24} parent=1 // pred_region
      _
    $region45: #{labind_forward.24} parent=1 // pred_fallthru
      _
    // Predicated region
    $region46: #{labind_forward.24} parent=1 // pred_check
      _
    $region47: #{labind_forward.24} parent=1 // pred_check_branch
      %369 = sbr.rel (0) target = $region49
    $region48: #{labind_forward.24} parent=1 // pred_region
      %s371 = ssub.s32 128, 128
      %372 = vsyncadd [#allocation3], %s371
      %s373 = sshll.u32 [#allocation2], 4
      %s374 = int_to_ptr.vmem [resolvable:$true] %s373
      %379 = dma.vmem_to_hbm [thread:$0]  %s374, 128, %s11, [#allocation3], 64, 64, 4
    $region49: #{labind_forward.24} parent=1 // pred_fallthru
      _
    // Predicated region
    $region50: #{labind_forward.24} parent=1 // pred_check
      _
    $region51: #{labind_forward.24} parent=1 // pred_check_branch
      %381 = sbr.rel (0) target = $region53
    $region52: #{labind_forward.24} parent=1 // pred_region
      _
    $region53: #{labind_forward.24} parent=1 // pred_fallthru
      _
    // Predicated region
    $region54: #{labind_forward.24} parent=1 // pred_check
      _
    $region55: #{labind_forward.24} parent=1 // pred_check_branch
      %383 = sbr.rel (0) target = $region57
    $region56: #{labind_forward.24} parent=1 // pred_region
      %384 = dma.done [#allocation3], 128
    $region57: #{labind_forward.24} parent=1 // pred_fallthru
      _
    %385 = vsyncpa [#allocation3], 1

</llo_original>
